<compile_context>
chip_gen: v6e
topology: v6e:2x2x1
jax: 0.10.0
libtpu: 0.0.40
codegen_flags: <defaults>
</compile_context>

<pallas_src>
import math

import numpy as np
import jax
import jax.numpy as jnp
from jax.experimental import pallas as pl
from jax.experimental.pallas import tpu as pltpu  # noqa: F401  (TPU backend)

# ----------------------------- problem sizes -----------------------------
B = 2            # batch
V = 8            # number of nodes
H = 32           # hidden_dim
T = H // 2       # time_embed_dim
N_LAYERS = 3
OUT_CH = 1       # out_channels of the final Conv2d(hidden_dim, out_channels, 1)

BV = B * V
BVV = B * V * V

LN_EPS = 1e-5
GN_EPS = 1e-5
GN_GROUPS = min(32, H)       # GroupNorm(32, hidden_dim)
CPG = H // GN_GROUPS         # channels per group (1 for H == 32)

TEMPERATURE = 10000.0
SCALE = 2.0 * math.pi        # PositionEmbeddingSine(normalize=True) scale

# ----------------------------- packed-slab layout -----------------------------
# vecs slab rows (each row is an H-lane vector)
R_BNODE = 0      # node_embed bias
R_BEDGE = 1      # edge_embed bias
R_BT1 = 2        # time MLP bias 1 (padded T -> H)
R_BT2 = 3        # time MLP bias 2 (padded T -> H)
R_GN_G = 4       # GroupNorm gamma
R_GN_B = 5       # GroupNorm beta
R_CY = 6         # pos-embed: scale/dim_t for y coord (lanes 0..T-1, else 0)
R_CX = 7         # pos-embed: scale/dim_t for x coord (lanes T..H-1, else 0)
R_SINM = 8       # sin/cos parity mask (1.0 where sin)
R_INVE = 9       # edge scalar-embed: 1/dim_t
R_TFREQ = 10     # timestep-embedding freqs (half pattern repeated)
R_TCOS = 11      # timestep-embedding cos-half mask
R_WOUT = 12                          # OUT_CH rows: 1x1-conv weight
R_BOUT = R_WOUT + OUT_CH             # OUT_CH rows: 1x1-conv bias (lane 0)
R_LAYER = R_BOUT + OUT_CH            # per-layer blocks of 9 rows
LV_BC, LV_GH, LV_BH, LV_GE, LV_BE, LV_GP, LV_BP, LV_BPLO, LV_BTL = range(9)
N_VEC_ROWS = R_LAYER + 9 * N_LAYERS

# wmat slab entries (each an (H, H) matrix, zero-padded if smaller)
IW_NODE = 0
IW_EDGE = 1
IW_T1 = 2
IW_T2 = 3
IW_C = 4                     # + l : per-layer C linear
IW_P = IW_C + N_LAYERS       # + l : per-layer per_layer_out linear (zero_module)
IW_TL = IW_P + N_LAYERS      # + l : per-layer time_embed_layers linear (padded)
N_WMAT = IW_TL + N_LAYERS


# ----------------------------- fused Pallas kernel -----------------------------
def _layer_norm(x, gamma, beta):
    m = jnp.mean(x, axis=-1, keepdims=True)
    c = x - m
    v = jnp.mean(c * c, axis=-1, keepdims=True)
    return c * jax.lax.rsqrt(v + LN_EPS) * gamma + beta


def _pool_groups(s):  # (B, 1, H) per-channel stats -> per-group (only if CPG > 1)
    s = jnp.mean(s.reshape(B, 1, GN_GROUPS, CPG), axis=-1, keepdims=True)
    return jnp.broadcast_to(s, (B, 1, GN_GROUPS, CPG)).reshape(B, 1, H)


def gnn_encoder_kernel(x_ref, g_ref, ts_ref, wmat_ref, w4b_ref, vecs_ref, out_ref):
    """Whole dense forward in one invocation (no grid).

    Inputs (all resident in VMEM):
      x_ref   : (B*V, 2)        node coordinates
      g_ref   : (B*V*V, 1)      adjacency / distance values, row order (b, i, j)
      ts_ref  : (B, 1)          diffusion timesteps
      wmat_ref: (N_WMAT, H, H)  stacked square weights (see IW_* layout)
      w4b_ref : (L, H+1, 4H)    per layer [Wu|Wv|Wa|Wb] rows + bias row
      vecs_ref: (N_VEC_ROWS, H) packed vectors + embedding constants (see R_*)
    Output:
      out_ref : (OUT_CH, B*V*V) lane-dense, columns in (b, i, j) order
    """
    f32 = jnp.float32

    def row(r):                      # (1, H) slice of the vector slab
        return vecs_ref[r:r + 1, :]

    sin_m = row(R_SINM)
    cos_m = 1.0 - sin_m

    # ---- sinusoidal node / edge embeddings (coefficients precomputed) ----
    y_col = x_ref[:, 0:1]                                        # (BV, 1)
    x_col = x_ref[:, 1:2]
    val_p = y_col * row(R_CY) + x_col * row(R_CX)                # (BV, H)
    h0 = sin_m * jnp.sin(val_p) + cos_m * jnp.cos(val_p)

    val_e = g_ref[...] * row(R_INVE)                             # (BVV, H)
    e0 = sin_m * jnp.sin(val_e) + cos_m * jnp.cos(val_e)

    # ---- timestep embedding + time MLP (Linear -> ReLU -> Linear) ----
    args = ts_ref[...] * row(R_TFREQ)                            # (B, H)
    tc = row(R_TCOS)
    temb = tc * jnp.cos(args) + (1.0 - tc) * jnp.sin(args)
    temb = jax.nn.relu(jnp.dot(temb, wmat_ref[IW_T1], preferred_element_type=f32)
                       + row(R_BT1))
    temb = jnp.dot(temb, wmat_ref[IW_T2], preferred_element_type=f32) + row(R_BT2)
    t_relu = jax.nn.relu(temb)                                   # (B, H), cols T.. are 0

    # ---- node_embed / edge_embed linears ----
    h = jnp.dot(h0, wmat_ref[IW_NODE], preferred_element_type=f32) + row(R_BNODE)
    e = jnp.dot(e0, wmat_ref[IW_EDGE], preferred_element_type=f32) + row(R_BEDGE)
    # h: (BV, H)   e: (BVV, H), row order (b, i, j)

    # ---- GNN layers (statically unrolled; all weight indices static) ----
    for l in range(N_LAYERS):
        base = R_LAYER + 9 * l
        g_h, b_h = row(base + LV_GH), row(base + LV_BH)
        g_e, b_e = row(base + LV_GE), row(base + LV_BE)
        g_p, b_p = row(base + LV_GP), row(base + LV_BP)

        # single lane-dense (BV, 4H) projection, then lane slices
        w4b = w4b_ref[l]                                         # (H+1, 4H)
        proj = jnp.dot(h, w4b[:H, :], preferred_element_type=f32) + w4b[H:H + 1, :]
        Uh = proj[:, 0 * H:1 * H]
        Vh = proj[:, 1 * H:2 * H]
        Ah = proj[:, 2 * H:3 * H]
        Bh = proj[:, 3 * H:4 * H]

        Ce = jnp.dot(e, wmat_ref[IW_C + l], preferred_element_type=f32) + row(base + LV_BC)

        # e_new[b,i,j] = Ah[b,j] + Bh[b,i] + Ce[b,i,j]   (implicit broadcasts)
        e4 = (Ce.reshape(B, V, V, H)
              + Ah.reshape(B, 1, V, H)
              + Bh.reshape(B, V, 1, H))                          # (B, V, V, H)
        gates = jax.nn.sigmoid(e4)

        # gated sum aggregation over neighbors j: agg[b,i] = sum_j gate * Vh[b,j]
        agg = jnp.sum(gates * Vh.reshape(B, 1, V, H), axis=2)    # (B, V, H)
        h_new = Uh + agg.reshape(BV, H)

        # mode='direct': LayerNorm + ReLU, no in-layer residual
        h_act = jax.nn.relu(_layer_norm(h_new, g_h, b_h))        # (BV, H)
        e_act = jax.nn.relu(_layer_norm(e4.reshape(BVV, H), g_e, b_e))

        # e = e + time_layer(time_emb)[:, None, None, :]
        t_add = jnp.dot(t_relu, wmat_ref[IW_TL + l], preferred_element_type=f32) \
            + row(base + LV_BTL)                                 # (B, H)
        e_t = (e_act.reshape(B, V * V, H) + t_add.reshape(B, 1, H)).reshape(BVV, H)

        # x = x_in + x
        h = h + h_act

        # e = e_in + per_layer_out(e)   (LayerNorm -> SiLU -> zero Linear)
        e_p = _layer_norm(e_t, g_p, b_p)
        e_p = e_p * jax.nn.sigmoid(e_p)                          # SiLU
        e = e + jnp.dot(e_p, wmat_ref[IW_P + l], preferred_element_type=f32) \
            + row(base + LV_BPLO)

    # ---- output head: GroupNorm(32, H) -> ReLU -> 1x1 conv ----
    gamma, beta = row(R_GN_G), row(R_GN_B)
    e3 = e.reshape(B, V * V, H)
    mean_c = jnp.mean(e3, axis=1, keepdims=True)                 # (B, 1, H)
    if CPG > 1:   # general GroupNorm (e.g. hidden_dim=256); not traced for H=32
        mean_c = _pool_groups(mean_c)
    d = e3 - mean_c
    var_c = jnp.mean(d * d, axis=1, keepdims=True)               # (B, 1, H)
    if CPG > 1:
        var_c = _pool_groups(var_c)

    xn = (d * jax.lax.rsqrt(var_c + GN_EPS)).reshape(BVV, H)
    y = jax.nn.relu(xn * gamma + beta)                           # (BVV, H)

    # 1x1 conv as wout @ y^T : (OUT_CH, H) x (BVV, H)^T -> lane-dense (OUT_CH, BVV)
    wout = vecs_ref[R_WOUT:R_WOUT + OUT_CH, :]                   # (OUT_CH, H)
    bout = vecs_ref[R_BOUT:R_BOUT + OUT_CH, 0:1]                 # (OUT_CH, 1)
    out = jax.lax.dot_general(wout, y, (((1,), (1,)), ((), ())),
                              preferred_element_type=f32) + bout
    out_ref[...] = out


def run_gnn_encoder(x2d, g2d, ts2d, params):
    # No grid: everything is tiny and stays resident in VMEM for the whole forward.
    return pl.pallas_call(
        gnn_encoder_kernel,
        out_shape=jax.ShapeDtypeStruct((OUT_CH, BVV), jnp.float32),
    )(x2d, g2d, ts2d, params["wmat"], params["w4b"], params["vecs"])


# ----------------------------- params (packed at init time) -----------------------------
def init_params(key):
    kstate = [key]

    def lin(shape, scale=0.2):
        kstate[0], sub = jax.random.split(kstate[0])
        return (scale * jax.random.normal(sub, shape)).astype(jnp.float32)

    ones = jnp.ones((H,), jnp.float32)
    zeros = jnp.zeros((H,), jnp.float32)

    def pad_hh(w):   # zero-pad any (a, b) matrix into the top-left of (H, H)
        a, b = w.shape
        return jnp.zeros((H, H), jnp.float32).at[:a, :b].set(w)

    def pad_h(v):
        return jnp.zeros((H,), jnp.float32).at[:v.shape[0]].set(v)

    # raw weights
    Wn, bn = lin((H, H)), lin((H,))          # node_embed
    We, be = lin((H, H)), lin((H,))          # edge_embed
    Wt1, bt1 = lin((H, T)), lin((T,))        # time MLP
    Wt2, bt2 = lin((T, T)), lin((T,))
    Wout, bout = lin((OUT_CH, H)), lin((OUT_CH,))   # 1x1 conv head

    wmat_list = [Wn, We, pad_hh(Wt1), pad_hh(Wt2)]
    wc_list, wp_list, wtl_list = [], [], []
    w4b_list, layer_rows = [], []
    for _ in range(N_LAYERS):
        Wu, Wv, Wa, Wb = lin((H, H)), lin((H, H)), lin((H, H)), lin((H, H))
        bu, bv, ba, bb = lin((H,)), lin((H,)), lin((H,)), lin((H,))
        Wc, bc = lin((H, H)), lin((H,))
        Wtl, btl = lin((T, H)), lin((H,))    # time_embed_layers: ReLU -> Linear
        Wp = jnp.zeros((H, H), jnp.float32)  # zero_module
        bplo = zeros

        w4 = jnp.concatenate([Wu, Wv, Wa, Wb], axis=1)               # (H, 4H)
        b4 = jnp.concatenate([bu, bv, ba, bb]).reshape(1, 4 * H)     # (1, 4H)
        w4b_list.append(jnp.concatenate([w4, b4], axis=0))           # (H+1, 4H)

        wc_list.append(Wc)
        wp_list.append(Wp)
        wtl_list.append(pad_hh(Wtl))
        # [bc, g_h, b_h, g_e, b_e, g_p, b_p, b_plo, btl]
        layer_rows.append(jnp.stack([bc, ones, zeros, ones, zeros,
                                     ones, zeros, bplo, btl]))

    wmat = jnp.stack(wmat_list + wc_list + wp_list + wtl_list)       # (N_WMAT, H, H)
    w4b = jnp.stack(w4b_list)                                        # (L, H+1, 4H)
    assert wmat.shape == (N_WMAT, H, H)

    # --- sinusoid coefficients / masks (compile-time constants, ride in the slab) ---
    ar = np.arange(H)
    pos_dimt = TEMPERATURE ** (2.0 * (np.arange(T) // 2) / T)        # (T,)
    cy = np.zeros(H, np.float32); cy[:T] = SCALE / pos_dimt
    cx = np.zeros(H, np.float32); cx[T:] = SCALE / pos_dimt
    sin_mask = (ar % 2 == 0).astype(np.float32)
    inv_edge = (1.0 / (TEMPERATURE ** (2.0 * (ar // 2) / H))).astype(np.float32)
    half = H // 2
    tf_half = np.exp(-np.log(TEMPERATURE) * np.arange(half) / half)
    tfreq = np.concatenate([tf_half, tf_half]).astype(np.float32)
    tcos = (ar < half).astype(np.float32)

    bout_rows = jnp.zeros((OUT_CH, H), jnp.float32).at[:, 0].set(bout)

    vecs = jnp.concatenate([
        jnp.stack([bn, be, pad_h(bt1), pad_h(bt2), ones, zeros,
                   jnp.asarray(cy), jnp.asarray(cx), jnp.asarray(sin_mask),
                   jnp.asarray(inv_edge), jnp.asarray(tfreq), jnp.asarray(tcos)]),
        Wout,                      # R_WOUT rows
        bout_rows,                 # R_BOUT rows
        jnp.concatenate(layer_rows, axis=0),
    ], axis=0)
    assert vecs.shape == (N_VEC_ROWS, H)

    return {"wmat": wmat, "w4b": w4b, "vecs": vecs}


# ----------------------------- forward wrapper -----------------------------
def gnn_encoder_forward(params, x, graph, timesteps):
    """Dense forward of GNNEncoder.  Returns (B, OUT_CH, V, V) (NCHW, like PyTorch)."""
    x2d = x.reshape(BV, 2).astype(jnp.float32)
    g2d = graph.reshape(BVV, 1).astype(jnp.float32)
    ts2d = timesteps.reshape(B, 1).astype(jnp.float32)

    out = run_gnn_encoder(x2d, g2d, ts2d, params)      # (OUT_CH, BVV), lane-dense

    if OUT_CH == 1:
        # column order is (b, i, j); with one channel this reshapes straight to NCHW
        return out.reshape(B, OUT_CH, V, V)
    return jnp.transpose(out.reshape(OUT_CH, B, V, V), (1, 0, 2, 3))


if __name__ == "__main__":
    key = jax.random.PRNGKey(0)
    k1, k2, k3 = jax.random.split(key, 3)

    x = jax.random.uniform(k1, (B, V, 2), dtype=jnp.float32)         # node coordinates
    graph = jax.random.uniform(k2, (B, V, V), dtype=jnp.float32)     # dense adjacency / distances
    timesteps = jnp.array([5.0, 417.0], dtype=jnp.float32)           # (B,)

    params = init_params(k3)

    fwd = jax.jit(gnn_encoder_forward)
    out = jax.block_until_ready(fwd(params, x, graph, timesteps))
    assert out.shape == (B, OUT_CH, V, V), out.shape
    assert bool(jnp.all(jnp.isfinite(out)))
    print("KERNEL_OK")
</pallas_src>

<mosaic_0001>
module attributes {stable_mosaic.version = 11 : i64} {
  func.func @gnn_encoder_kernel(%arg0: memref<16x2xf32, #tpu.memory_space<vmem>>, %arg1: memref<128x1xf32, #tpu.memory_space<vmem>>, %arg2: memref<2x1xf32, #tpu.memory_space<vmem>>, %arg3: memref<13x32x32xf32, #tpu.memory_space<vmem>>, %arg4: memref<3x33x128xf32, #tpu.memory_space<vmem>>, %arg5: memref<41x32xf32, #tpu.memory_space<vmem>>, %arg6: memref<1x128xf32, #tpu.memory_space<vmem>>) attributes {dimension_semantics = [], scalar_prefetch = 0 : i64, scratch_operands = 0 : i64, tpu.core_type = #tpu.core_type<tc>} {
    %c8 = arith.constant 8 : index
    %c0 = arith.constant 0 : index
    %0 = vector.load %arg5[%c8, %c0] : memref<41x32xf32, #tpu.memory_space<vmem>>, vector<1x32xf32>
    %cst = arith.constant 1.000000e+00 : f32
    %1 = vector.broadcast %cst : f32 to vector<1x32xf32>
    %2 = arith.subf %1, %0 : vector<1x32xf32>
    %c0_0 = arith.constant 0 : index
    %c0_1 = arith.constant 0 : index
    %3 = vector.load %arg0[%c0_0, %c0_1] : memref<16x2xf32, #tpu.memory_space<vmem>>, vector<16x1xf32>
    %c0_2 = arith.constant 0 : index
    %c1 = arith.constant 1 : index
    %4 = vector.load %arg0[%c0_2, %c1] : memref<16x2xf32, #tpu.memory_space<vmem>>, vector<16x1xf32>
    %c6 = arith.constant 6 : index
    %c0_3 = arith.constant 0 : index
    %5 = vector.load %arg5[%c6, %c0_3] : memref<41x32xf32, #tpu.memory_space<vmem>>, vector<1x32xf32>
    %6 = vector.broadcast %3 : vector<16x1xf32> to vector<16x32xf32>
    %7 = vector.broadcast %5 : vector<1x32xf32> to vector<16x32xf32>
    %8 = arith.mulf %6, %7 : vector<16x32xf32>
    %c7 = arith.constant 7 : index
    %c0_4 = arith.constant 0 : index
    %9 = vector.load %arg5[%c7, %c0_4] : memref<41x32xf32, #tpu.memory_space<vmem>>, vector<1x32xf32>
    %10 = vector.broadcast %4 : vector<16x1xf32> to vector<16x32xf32>
    %11 = vector.broadcast %9 : vector<1x32xf32> to vector<16x32xf32>
    %12 = arith.mulf %10, %11 : vector<16x32xf32>
    %13 = arith.addf %8, %12 : vector<16x32xf32>
    %14 = math.sin %13 : vector<16x32xf32>
    %15 = vector.broadcast %0 : vector<1x32xf32> to vector<16x32xf32>
    %16 = arith.mulf %15, %14 : vector<16x32xf32>
    %17 = math.cos %13 : vector<16x32xf32>
    %18 = vector.broadcast %2 : vector<1x32xf32> to vector<16x32xf32>
    %19 = arith.mulf %18, %17 : vector<16x32xf32>
    %20 = arith.addf %16, %19 : vector<16x32xf32>
    %c0_5 = arith.constant 0 : index
    %c0_6 = arith.constant 0 : index
    %21 = vector.load %arg1[%c0_5, %c0_6] : memref<128x1xf32, #tpu.memory_space<vmem>>, vector<128x1xf32>
    %c9 = arith.constant 9 : index
    %c0_7 = arith.constant 0 : index
    %22 = vector.load %arg5[%c9, %c0_7] : memref<41x32xf32, #tpu.memory_space<vmem>>, vector<1x32xf32>
    %23 = vector.broadcast %21 : vector<128x1xf32> to vector<128x32xf32>
    %24 = vector.broadcast %22 : vector<1x32xf32> to vector<128x32xf32>
    %25 = arith.mulf %23, %24 : vector<128x32xf32>
    %26 = math.sin %25 : vector<128x32xf32>
    %27 = vector.broadcast %0 : vector<1x32xf32> to vector<128x32xf32>
    %28 = arith.mulf %27, %26 : vector<128x32xf32>
    %29 = math.cos %25 : vector<128x32xf32>
    %30 = vector.broadcast %2 : vector<1x32xf32> to vector<128x32xf32>
    %31 = arith.mulf %30, %29 : vector<128x32xf32>
    %32 = arith.addf %28, %31 : vector<128x32xf32>
    %c0_8 = arith.constant 0 : index
    %c0_9 = arith.constant 0 : index
    %33 = vector.load %arg2[%c0_8, %c0_9] : memref<2x1xf32, #tpu.memory_space<vmem>>, vector<2x1xf32>
    %c10 = arith.constant 10 : index
    %c0_10 = arith.constant 0 : index
    %34 = vector.load %arg5[%c10, %c0_10] : memref<41x32xf32, #tpu.memory_space<vmem>>, vector<1x32xf32>
    %35 = vector.broadcast %33 : vector<2x1xf32> to vector<2x32xf32>
    %36 = vector.broadcast %34 : vector<1x32xf32> to vector<2x32xf32>
    %37 = arith.mulf %35, %36 : vector<2x32xf32>
    %c11 = arith.constant 11 : index
    %c0_11 = arith.constant 0 : index
    %38 = vector.load %arg5[%c11, %c0_11] : memref<41x32xf32, #tpu.memory_space<vmem>>, vector<1x32xf32>
    %39 = math.cos %37 : vector<2x32xf32>
    %40 = vector.broadcast %38 : vector<1x32xf32> to vector<2x32xf32>
    %41 = arith.mulf %40, %39 : vector<2x32xf32>
    %cst_12 = arith.constant 1.000000e+00 : f32
    %42 = vector.broadcast %cst_12 : f32 to vector<1x32xf32>
    %43 = arith.subf %42, %38 : vector<1x32xf32>
    %44 = math.sin %37 : vector<2x32xf32>
    %45 = vector.broadcast %43 : vector<1x32xf32> to vector<2x32xf32>
    %46 = arith.mulf %45, %44 : vector<2x32xf32>
    %47 = arith.addf %41, %46 : vector<2x32xf32>
    %c2 = arith.constant 2 : index
    %c0_13 = arith.constant 0 : index
    %c0_14 = arith.constant 0 : index
    %48 = vector.load %arg3[%c2, %c0_13, %c0_14] : memref<13x32x32xf32, #tpu.memory_space<vmem>>, vector<1x32x32xf32>
    %49 = vector.shape_cast %48 : vector<1x32x32xf32> to vector<32x32xf32>
    %cst_15 = arith.constant dense<0.000000e+00> : vector<2x32xf32>
    %50 = tpu.matmul %47, %49, %cst_15 {dimension_numbers = #tpu.dot_dimension_numbers<[1], [0], [0], [1], [0, 0, 1, 1], [], []>} : vector<2x32xf32>, vector<32x32xf32>, vector<2x32xf32> -> vector<2x32xf32>
    %c2_16 = arith.constant 2 : index
    %c0_17 = arith.constant 0 : index
    %51 = vector.load %arg5[%c2_16, %c0_17] : memref<41x32xf32, #tpu.memory_space<vmem>>, vector<1x32xf32>
    %52 = vector.broadcast %51 : vector<1x32xf32> to vector<2x32xf32>
    %53 = arith.addf %50, %52 : vector<2x32xf32>
    %cst_18 = arith.constant 0.000000e+00 : f32
    %54 = vector.broadcast %cst_18 : f32 to vector<2x32xf32>
    %55 = arith.maximumf %53, %54 : vector<2x32xf32>
    %c3 = arith.constant 3 : index
    %c0_19 = arith.constant 0 : index
    %c0_20 = arith.constant 0 : index
    %56 = vector.load %arg3[%c3, %c0_19, %c0_20] : memref<13x32x32xf32, #tpu.memory_space<vmem>>, vector<1x32x32xf32>
    %57 = vector.shape_cast %56 : vector<1x32x32xf32> to vector<32x32xf32>
    %cst_21 = arith.constant dense<0.000000e+00> : vector<2x32xf32>
    %58 = tpu.matmul %55, %57, %cst_21 {dimension_numbers = #tpu.dot_dimension_numbers<[1], [0], [0], [1], [0, 0, 1, 1], [], []>} : vector<2x32xf32>, vector<32x32xf32>, vector<2x32xf32> -> vector<2x32xf32>
    %c3_22 = arith.constant 3 : index
    %c0_23 = arith.constant 0 : index
    %59 = vector.load %arg5[%c3_22, %c0_23] : memref<41x32xf32, #tpu.memory_space<vmem>>, vector<1x32xf32>
    %60 = vector.broadcast %59 : vector<1x32xf32> to vector<2x32xf32>
    %61 = arith.addf %58, %60 : vector<2x32xf32>
    %cst_24 = arith.constant 0.000000e+00 : f32
    %62 = vector.broadcast %cst_24 : f32 to vector<2x32xf32>
    %63 = arith.maximumf %61, %62 : vector<2x32xf32>
    %c0_25 = arith.constant 0 : index
    %c0_26 = arith.constant 0 : index
    %c0_27 = arith.constant 0 : index
    %64 = vector.load %arg3[%c0_25, %c0_26, %c0_27] : memref<13x32x32xf32, #tpu.memory_space<vmem>>, vector<1x32x32xf32>
    %65 = vector.shape_cast %64 : vector<1x32x32xf32> to vector<32x32xf32>
    %cst_28 = arith.constant dense<0.000000e+00> : vector<16x32xf32>
    %66 = tpu.matmul %20, %65, %cst_28 {dimension_numbers = #tpu.dot_dimension_numbers<[1], [0], [0], [1], [0, 0, 1, 1], [], []>} : vector<16x32xf32>, vector<32x32xf32>, vector<16x32xf32> -> vector<16x32xf32>
    %c0_29 = arith.constant 0 : index
    %c0_30 = arith.constant 0 : index
    %67 = vector.load %arg5[%c0_29, %c0_30] : memref<41x32xf32, #tpu.memory_space<vmem>>, vector<1x32xf32>
    %68 = vector.broadcast %67 : vector<1x32xf32> to vector<16x32xf32>
    %69 = arith.addf %66, %68 : vector<16x32xf32>
    %c1_31 = arith.constant 1 : index
    %c0_32 = arith.constant 0 : index
    %c0_33 = arith.constant 0 : index
    %70 = vector.load %arg3[%c1_31, %c0_32, %c0_33] : memref<13x32x32xf32, #tpu.memory_space<vmem>>, vector<1x32x32xf32>
    %71 = vector.shape_cast %70 : vector<1x32x32xf32> to vector<32x32xf32>
    %cst_34 = arith.constant dense<0.000000e+00> : vector<128x32xf32>
    %72 = tpu.matmul %32, %71, %cst_34 {dimension_numbers = #tpu.dot_dimension_numbers<[1], [0], [0], [1], [0, 0, 1, 1], [], []>} : vector<128x32xf32>, vector<32x32xf32>, vector<128x32xf32> -> vector<128x32xf32>
    %c1_35 = arith.constant 1 : index
    %c0_36 = arith.constant 0 : index
    %73 = vector.load %arg5[%c1_35, %c0_36] : memref<41x32xf32, #tpu.memory_space<vmem>>, vector<1x32xf32>
    %74 = vector.broadcast %73 : vector<1x32xf32> to vector<128x32xf32>
    %75 = arith.addf %72, %74 : vector<128x32xf32>
    %c15 = arith.constant 15 : index
    %c0_37 = arith.constant 0 : index
    %76 = vector.load %arg5[%c15, %c0_37] : memref<41x32xf32, #tpu.memory_space<vmem>>, vector<1x32xf32>
    %c16 = arith.constant 16 : index
    %c0_38 = arith.constant 0 : index
    %77 = vector.load %arg5[%c16, %c0_38] : memref<41x32xf32, #tpu.memory_space<vmem>>, vector<1x32xf32>
    %c17 = arith.constant 17 : index
    %c0_39 = arith.constant 0 : index
    %78 = vector.load %arg5[%c17, %c0_39] : memref<41x32xf32, #tpu.memory_space<vmem>>, vector<1x32xf32>
    %c18 = arith.constant 18 : index
    %c0_40 = arith.constant 0 : index
    %79 = vector.load %arg5[%c18, %c0_40] : memref<41x32xf32, #tpu.memory_space<vmem>>, vector<1x32xf32>
    %c19 = arith.constant 19 : index
    %c0_41 = arith.constant 0 : index
    %80 = vector.load %arg5[%c19, %c0_41] : memref<41x32xf32, #tpu.memory_space<vmem>>, vector<1x32xf32>
    %c20 = arith.constant 20 : index
    %c0_42 = arith.constant 0 : index
    %81 = vector.load %arg5[%c20, %c0_42] : memref<41x32xf32, #tpu.memory_space<vmem>>, vector<1x32xf32>
    %c0_43 = arith.constant 0 : index
    %c0_44 = arith.constant 0 : index
    %c0_45 = arith.constant 0 : index
    %82 = vector.load %arg4[%c0_43, %c0_44, %c0_45] : memref<3x33x128xf32, #tpu.memory_space<vmem>>, vector<1x33x128xf32>
    %83 = vector.shape_cast %82 : vector<1x33x128xf32> to vector<33x128xf32>
    %84 = vector.extract_strided_slice %83 {offsets = [0, 0], sizes = [32, 128], strides = [1, 1]} : vector<33x128xf32> to vector<32x128xf32>
    %cst_46 = arith.constant dense<0.000000e+00> : vector<16x128xf32>
    %85 = tpu.matmul %69, %84, %cst_46 {dimension_numbers = #tpu.dot_dimension_numbers<[1], [0], [0], [1], [0, 0, 1, 1], [], []>} : vector<16x32xf32>, vector<32x128xf32>, vector<16x128xf32> -> vector<16x128xf32>
    %86 = vector.extract_strided_slice %83 {offsets = [32, 0], sizes = [1, 128], strides = [1, 1]} : vector<33x128xf32> to vector<1x128xf32>
    %87 = vector.broadcast %86 : vector<1x128xf32> to vector<16x128xf32>
    %88 = arith.addf %85, %87 : vector<16x128xf32>
    %89 = vector.extract_strided_slice %88 {offsets = [0, 0], sizes = [16, 32], strides = [1, 1]} : vector<16x128xf32> to vector<16x32xf32>
    %90 = vector.extract_strided_slice %88 {offsets = [0, 32], sizes = [16, 32], strides = [1, 1]} : vector<16x128xf32> to vector<16x32xf32>
    %91 = vector.extract_strided_slice %88 {offsets = [0, 64], sizes = [16, 32], strides = [1, 1]} : vector<16x128xf32> to vector<16x32xf32>
    %92 = vector.extract_strided_slice %88 {offsets = [0, 96], sizes = [16, 32], strides = [1, 1]} : vector<16x128xf32> to vector<16x32xf32>
    %c4 = arith.constant 4 : index
    %c0_47 = arith.constant 0 : index
    %c0_48 = arith.constant 0 : index
    %93 = vector.load %arg3[%c4, %c0_47, %c0_48] : memref<13x32x32xf32, #tpu.memory_space<vmem>>, vector<1x32x32xf32>
    %94 = vector.shape_cast %93 : vector<1x32x32xf32> to vector<32x32xf32>
    %cst_49 = arith.constant dense<0.000000e+00> : vector<128x32xf32>
    %95 = tpu.matmul %75, %94, %cst_49 {dimension_numbers = #tpu.dot_dimension_numbers<[1], [0], [0], [1], [0, 0, 1, 1], [], []>} : vector<128x32xf32>, vector<32x32xf32>, vector<128x32xf32> -> vector<128x32xf32>
    %c14 = arith.constant 14 : index
    %c0_50 = arith.constant 0 : index
    %96 = vector.load %arg5[%c14, %c0_50] : memref<41x32xf32, #tpu.memory_space<vmem>>, vector<1x32xf32>
    %97 = vector.broadcast %96 : vector<1x32xf32> to vector<128x32xf32>
    %98 = arith.addf %95, %97 : vector<128x32xf32>
    %99 = vector.shape_cast %98 : vector<128x32xf32> to vector<2x8x8x32xf32>
    %100 = vector.shape_cast %91 : vector<16x32xf32> to vector<2x1x8x32xf32>
    %101 = vector.broadcast %100 : vector<2x1x8x32xf32> to vector<2x8x8x32xf32>
    %102 = arith.addf %99, %101 : vector<2x8x8x32xf32>
    %103 = vector.shape_cast %92 : vector<16x32xf32> to vector<2x8x1x32xf32>
    %104 = vector.broadcast %103 : vector<2x8x1x32xf32> to vector<2x8x8x32xf32>
    %105 = arith.addf %102, %104 : vector<2x8x8x32xf32>
    %106 = arith.negf %105 : vector<2x8x8x32xf32>
    %107 = math.exp %106 : vector<2x8x8x32xf32>
    %cst_51 = arith.constant 1.000000e+00 : f32
    %108 = vector.broadcast %cst_51 : f32 to vector<2x8x8x32xf32>
    %109 = arith.addf %108, %107 : vector<2x8x8x32xf32>
    %110 = arith.divf %108, %109 : vector<2x8x8x32xf32>
    %111 = vector.shape_cast %90 : vector<16x32xf32> to vector<2x1x8x32xf32>
    %112 = vector.broadcast %111 : vector<2x1x8x32xf32> to vector<2x8x8x32xf32>
    %113 = arith.mulf %110, %112 : vector<2x8x8x32xf32>
    %cst_52 = arith.constant dense<0.000000e+00> : vector<2x8x32xf32>
    %114 = vector.multi_reduction <add>, %113, %cst_52 [2] : vector<2x8x8x32xf32> to vector<2x8x32xf32>
    %115 = vector.shape_cast %114 : vector<2x8x32xf32> to vector<16x32xf32>
    %116 = arith.addf %89, %115 : vector<16x32xf32>
    %cst_53 = arith.constant dense<0.000000e+00> : vector<16xf32>
    %117 = vector.multi_reduction <add>, %116, %cst_53 [1] : vector<16x32xf32> to vector<16xf32>
    %118 = vector.shape_cast %117 : vector<16xf32> to vector<16x1xf32>
    %cst_54 = arith.constant 3.200000e+01 : f32
    %119 = vector.broadcast %cst_54 : f32 to vector<16x1xf32>
    %120 = arith.divf %118, %119 : vector<16x1xf32>
    %121 = vector.broadcast %120 : vector<16x1xf32> to vector<16x32xf32>
    %122 = arith.subf %116, %121 : vector<16x32xf32>
    %123 = arith.mulf %122, %122 : vector<16x32xf32>
    %cst_55 = arith.constant dense<0.000000e+00> : vector<16xf32>
    %124 = vector.multi_reduction <add>, %123, %cst_55 [1] : vector<16x32xf32> to vector<16xf32>
    %125 = vector.shape_cast %124 : vector<16xf32> to vector<16x1xf32>
    %cst_56 = arith.constant 3.200000e+01 : f32
    %126 = vector.broadcast %cst_56 : f32 to vector<16x1xf32>
    %127 = arith.divf %125, %126 : vector<16x1xf32>
    %cst_57 = arith.constant 9.99999974E-6 : f32
    %128 = vector.broadcast %cst_57 : f32 to vector<16x1xf32>
    %129 = arith.addf %127, %128 : vector<16x1xf32>
    %130 = math.rsqrt %129 : vector<16x1xf32>
    %131 = vector.broadcast %130 : vector<16x1xf32> to vector<16x32xf32>
    %132 = arith.mulf %122, %131 : vector<16x32xf32>
    %133 = vector.broadcast %76 : vector<1x32xf32> to vector<16x32xf32>
    %134 = arith.mulf %132, %133 : vector<16x32xf32>
    %135 = vector.broadcast %77 : vector<1x32xf32> to vector<16x32xf32>
    %136 = arith.addf %134, %135 : vector<16x32xf32>
    %cst_58 = arith.constant 0.000000e+00 : f32
    %137 = vector.broadcast %cst_58 : f32 to vector<16x32xf32>
    %138 = arith.maximumf %136, %137 : vector<16x32xf32>
    %139 = vector.shape_cast %105 : vector<2x8x8x32xf32> to vector<128x32xf32>
    %cst_59 = arith.constant dense<0.000000e+00> : vector<128xf32>
    %140 = vector.multi_reduction <add>, %139, %cst_59 [1] : vector<128x32xf32> to vector<128xf32>
    %141 = vector.shape_cast %140 : vector<128xf32> to vector<128x1xf32>
    %cst_60 = arith.constant 3.200000e+01 : f32
    %142 = vector.broadcast %cst_60 : f32 to vector<128x1xf32>
    %143 = arith.divf %141, %142 : vector<128x1xf32>
    %144 = vector.broadcast %143 : vector<128x1xf32> to vector<128x32xf32>
    %145 = arith.subf %139, %144 : vector<128x32xf32>
    %146 = arith.mulf %145, %145 : vector<128x32xf32>
    %cst_61 = arith.constant dense<0.000000e+00> : vector<128xf32>
    %147 = vector.multi_reduction <add>, %146, %cst_61 [1] : vector<128x32xf32> to vector<128xf32>
    %148 = vector.shape_cast %147 : vector<128xf32> to vector<128x1xf32>
    %cst_62 = arith.constant 3.200000e+01 : f32
    %149 = vector.broadcast %cst_62 : f32 to vector<128x1xf32>
    %150 = arith.divf %148, %149 : vector<128x1xf32>
    %cst_63 = arith.constant 9.99999974E-6 : f32
    %151 = vector.broadcast %cst_63 : f32 to vector<128x1xf32>
    %152 = arith.addf %150, %151 : vector<128x1xf32>
    %153 = math.rsqrt %152 : vector<128x1xf32>
    %154 = vector.broadcast %153 : vector<128x1xf32> to vector<128x32xf32>
    %155 = arith.mulf %145, %154 : vector<128x32xf32>
    %156 = vector.broadcast %78 : vector<1x32xf32> to vector<128x32xf32>
    %157 = arith.mulf %155, %156 : vector<128x32xf32>
    %158 = vector.broadcast %79 : vector<1x32xf32> to vector<128x32xf32>
    %159 = arith.addf %157, %158 : vector<128x32xf32>
    %cst_64 = arith.constant 0.000000e+00 : f32
    %160 = vector.broadcast %cst_64 : f32 to vector<128x32xf32>
    %161 = arith.maximumf %159, %160 : vector<128x32xf32>
    %c10_65 = arith.constant 10 : index
    %c0_66 = arith.constant 0 : index
    %c0_67 = arith.constant 0 : index
    %162 = vector.load %arg3[%c10_65, %c0_66, %c0_67] : memref<13x32x32xf32, #tpu.memory_space<vmem>>, vector<1x32x32xf32>
    %163 = vector.shape_cast %162 : vector<1x32x32xf32> to vector<32x32xf32>
    %cst_68 = arith.constant dense<0.000000e+00> : vector<2x32xf32>
    %164 = tpu.matmul %63, %163, %cst_68 {dimension_numbers = #tpu.dot_dimension_numbers<[1], [0], [0], [1], [0, 0, 1, 1], [], []>} : vector<2x32xf32>, vector<32x32xf32>, vector<2x32xf32> -> vector<2x32xf32>
    %c22 = arith.constant 22 : index
    %c0_69 = arith.constant 0 : index
    %165 = vector.load %arg5[%c22, %c0_69] : memref<41x32xf32, #tpu.memory_space<vmem>>, vector<1x32xf32>
    %166 = vector.broadcast %165 : vector<1x32xf32> to vector<2x32xf32>
    %167 = arith.addf %164, %166 : vector<2x32xf32>
    %168 = vector.shape_cast %161 : vector<128x32xf32> to vector<2x64x32xf32>
    %169 = vector.shape_cast %167 : vector<2x32xf32> to vector<2x1x32xf32>
    %170 = vector.broadcast %169 : vector<2x1x32xf32> to vector<2x64x32xf32>
    %171 = arith.addf %168, %170 : vector<2x64x32xf32>
    %172 = vector.shape_cast %171 : vector<2x64x32xf32> to vector<128x32xf32>
    %173 = arith.addf %69, %138 : vector<16x32xf32>
    %cst_70 = arith.constant dense<0.000000e+00> : vector<128xf32>
    %174 = vector.multi_reduction <add>, %172, %cst_70 [1] : vector<128x32xf32> to vector<128xf32>
    %175 = vector.shape_cast %174 : vector<128xf32> to vector<128x1xf32>
    %cst_71 = arith.constant 3.200000e+01 : f32
    %176 = vector.broadcast %cst_71 : f32 to vector<128x1xf32>
    %177 = arith.divf %175, %176 : vector<128x1xf32>
    %178 = vector.broadcast %177 : vector<128x1xf32> to vector<128x32xf32>
    %179 = arith.subf %172, %178 : vector<128x32xf32>
    %180 = arith.mulf %179, %179 : vector<128x32xf32>
    %cst_72 = arith.constant dense<0.000000e+00> : vector<128xf32>
    %181 = vector.multi_reduction <add>, %180, %cst_72 [1] : vector<128x32xf32> to vector<128xf32>
    %182 = vector.shape_cast %181 : vector<128xf32> to vector<128x1xf32>
    %cst_73 = arith.constant 3.200000e+01 : f32
    %183 = vector.broadcast %cst_73 : f32 to vector<128x1xf32>
    %184 = arith.divf %182, %183 : vector<128x1xf32>
    %cst_74 = arith.constant 9.99999974E-6 : f32
    %185 = vector.broadcast %cst_74 : f32 to vector<128x1xf32>
    %186 = arith.addf %184, %185 : vector<128x1xf32>
    %187 = math.rsqrt %186 : vector<128x1xf32>
    %188 = vector.broadcast %187 : vector<128x1xf32> to vector<128x32xf32>
    %189 = arith.mulf %179, %188 : vector<128x32xf32>
    %190 = vector.broadcast %80 : vector<1x32xf32> to vector<128x32xf32>
    %191 = arith.mulf %189, %190 : vector<128x32xf32>
    %192 = vector.broadcast %81 : vector<1x32xf32> to vector<128x32xf32>
    %193 = arith.addf %191, %192 : vector<128x32xf32>
    %194 = arith.negf %193 : vector<128x32xf32>
    %195 = math.exp %194 : vector<128x32xf32>
    %cst_75 = arith.constant 1.000000e+00 : f32
    %196 = vector.broadcast %cst_75 : f32 to vector<128x32xf32>
    %197 = arith.addf %196, %195 : vector<128x32xf32>
    %198 = arith.divf %196, %197 : vector<128x32xf32>
    %199 = arith.mulf %193, %198 : vector<128x32xf32>
    %c7_76 = arith.constant 7 : index
    %c0_77 = arith.constant 0 : index
    %c0_78 = arith.constant 0 : index
    %200 = vector.load %arg3[%c7_76, %c0_77, %c0_78] : memref<13x32x32xf32, #tpu.memory_space<vmem>>, vector<1x32x32xf32>
    %201 = vector.shape_cast %200 : vector<1x32x32xf32> to vector<32x32xf32>
    %cst_79 = arith.constant dense<0.000000e+00> : vector<128x32xf32>
    %202 = tpu.matmul %199, %201, %cst_79 {dimension_numbers = #tpu.dot_dimension_numbers<[1], [0], [0], [1], [0, 0, 1, 1], [], []>} : vector<128x32xf32>, vector<32x32xf32>, vector<128x32xf32> -> vector<128x32xf32>
    %203 = arith.addf %75, %202 : vector<128x32xf32>
    %c21 = arith.constant 21 : index
    %c0_80 = arith.constant 0 : index
    %204 = vector.load %arg5[%c21, %c0_80] : memref<41x32xf32, #tpu.memory_space<vmem>>, vector<1x32xf32>
    %205 = vector.broadcast %204 : vector<1x32xf32> to vector<128x32xf32>
    %206 = arith.addf %203, %205 : vector<128x32xf32>
    %c24 = arith.constant 24 : index
    %c0_81 = arith.constant 0 : index
    %207 = vector.load %arg5[%c24, %c0_81] : memref<41x32xf32, #tpu.memory_space<vmem>>, vector<1x32xf32>
    %c25 = arith.constant 25 : index
    %c0_82 = arith.constant 0 : index
    %208 = vector.load %arg5[%c25, %c0_82] : memref<41x32xf32, #tpu.memory_space<vmem>>, vector<1x32xf32>
    %c26 = arith.constant 26 : index
    %c0_83 = arith.constant 0 : index
    %209 = vector.load %arg5[%c26, %c0_83] : memref<41x32xf32, #tpu.memory_space<vmem>>, vector<1x32xf32>
    %c27 = arith.constant 27 : index
    %c0_84 = arith.constant 0 : index
    %210 = vector.load %arg5[%c27, %c0_84] : memref<41x32xf32, #tpu.memory_space<vmem>>, vector<1x32xf32>
    %c28 = arith.constant 28 : index
    %c0_85 = arith.constant 0 : index
    %211 = vector.load %arg5[%c28, %c0_85] : memref<41x32xf32, #tpu.memory_space<vmem>>, vector<1x32xf32>
    %c29 = arith.constant 29 : index
    %c0_86 = arith.constant 0 : index
    %212 = vector.load %arg5[%c29, %c0_86] : memref<41x32xf32, #tpu.memory_space<vmem>>, vector<1x32xf32>
    %c1_87 = arith.constant 1 : index
    %c0_88 = arith.constant 0 : index
    %c0_89 = arith.constant 0 : index
    %213 = vector.load %arg4[%c1_87, %c0_88, %c0_89] : memref<3x33x128xf32, #tpu.memory_space<vmem>>, vector<1x33x128xf32>
    %214 = vector.shape_cast %213 : vector<1x33x128xf32> to vector<33x128xf32>
    %215 = vector.extract_strided_slice %214 {offsets = [0, 0], sizes = [32, 128], strides = [1, 1]} : vector<33x128xf32> to vector<32x128xf32>
    %cst_90 = arith.constant dense<0.000000e+00> : vector<16x128xf32>
    %216 = tpu.matmul %173, %215, %cst_90 {dimension_numbers = #tpu.dot_dimension_numbers<[1], [0], [0], [1], [0, 0, 1, 1], [], []>} : vector<16x32xf32>, vector<32x128xf32>, vector<16x128xf32> -> vector<16x128xf32>
    %217 = vector.extract_strided_slice %214 {offsets = [32, 0], sizes = [1, 128], strides = [1, 1]} : vector<33x128xf32> to vector<1x128xf32>
    %218 = vector.broadcast %217 : vector<1x128xf32> to vector<16x128xf32>
    %219 = arith.addf %216, %218 : vector<16x128xf32>
    %220 = vector.extract_strided_slice %219 {offsets = [0, 0], sizes = [16, 32], strides = [1, 1]} : vector<16x128xf32> to vector<16x32xf32>
    %221 = vector.extract_strided_slice %219 {offsets = [0, 32], sizes = [16, 32], strides = [1, 1]} : vector<16x128xf32> to vector<16x32xf32>
    %222 = vector.extract_strided_slice %219 {offsets = [0, 64], sizes = [16, 32], strides = [1, 1]} : vector<16x128xf32> to vector<16x32xf32>
    %223 = vector.extract_strided_slice %219 {offsets = [0, 96], sizes = [16, 32], strides = [1, 1]} : vector<16x128xf32> to vector<16x32xf32>
    %c5 = arith.constant 5 : index
    %c0_91 = arith.constant 0 : index
    %c0_92 = arith.constant 0 : index
    %224 = vector.load %arg3[%c5, %c0_91, %c0_92] : memref<13x32x32xf32, #tpu.memory_space<vmem>>, vector<1x32x32xf32>
    %225 = vector.shape_cast %224 : vector<1x32x32xf32> to vector<32x32xf32>
    %cst_93 = arith.constant dense<0.000000e+00> : vector<128x32xf32>
    %226 = tpu.matmul %206, %225, %cst_93 {dimension_numbers = #tpu.dot_dimension_numbers<[1], [0], [0], [1], [0, 0, 1, 1], [], []>} : vector<128x32xf32>, vector<32x32xf32>, vector<128x32xf32> -> vector<128x32xf32>
    %c23 = arith.constant 23 : index
    %c0_94 = arith.constant 0 : index
    %227 = vector.load %arg5[%c23, %c0_94] : memref<41x32xf32, #tpu.memory_space<vmem>>, vector<1x32xf32>
    %228 = vector.broadcast %227 : vector<1x32xf32> to vector<128x32xf32>
    %229 = arith.addf %226, %228 : vector<128x32xf32>
    %230 = vector.shape_cast %229 : vector<128x32xf32> to vector<2x8x8x32xf32>
    %231 = vector.shape_cast %222 : vector<16x32xf32> to vector<2x1x8x32xf32>
    %232 = vector.broadcast %231 : vector<2x1x8x32xf32> to vector<2x8x8x32xf32>
    %233 = arith.addf %230, %232 : vector<2x8x8x32xf32>
    %234 = vector.shape_cast %223 : vector<16x32xf32> to vector<2x8x1x32xf32>
    %235 = vector.broadcast %234 : vector<2x8x1x32xf32> to vector<2x8x8x32xf32>
    %236 = arith.addf %233, %235 : vector<2x8x8x32xf32>
    %237 = arith.negf %236 : vector<2x8x8x32xf32>
    %238 = math.exp %237 : vector<2x8x8x32xf32>
    %cst_95 = arith.constant 1.000000e+00 : f32
    %239 = vector.broadcast %cst_95 : f32 to vector<2x8x8x32xf32>
    %240 = arith.addf %239, %238 : vector<2x8x8x32xf32>
    %241 = arith.divf %239, %240 : vector<2x8x8x32xf32>
    %242 = vector.shape_cast %221 : vector<16x32xf32> to vector<2x1x8x32xf32>
    %243 = vector.broadcast %242 : vector<2x1x8x32xf32> to vector<2x8x8x32xf32>
    %244 = arith.mulf %241, %243 : vector<2x8x8x32xf32>
    %cst_96 = arith.constant dense<0.000000e+00> : vector<2x8x32xf32>
    %245 = vector.multi_reduction <add>, %244, %cst_96 [2] : vector<2x8x8x32xf32> to vector<2x8x32xf32>
    %246 = vector.shape_cast %245 : vector<2x8x32xf32> to vector<16x32xf32>
    %247 = arith.addf %220, %246 : vector<16x32xf32>
    %cst_97 = arith.constant dense<0.000000e+00> : vector<16xf32>
    %248 = vector.multi_reduction <add>, %247, %cst_97 [1] : vector<16x32xf32> to vector<16xf32>
    %249 = vector.shape_cast %248 : vector<16xf32> to vector<16x1xf32>
    %cst_98 = arith.constant 3.200000e+01 : f32
    %250 = vector.broadcast %cst_98 : f32 to vector<16x1xf32>
    %251 = arith.divf %249, %250 : vector<16x1xf32>
    %252 = vector.broadcast %251 : vector<16x1xf32> to vector<16x32xf32>
    %253 = arith.subf %247, %252 : vector<16x32xf32>
    %254 = arith.mulf %253, %253 : vector<16x32xf32>
    %cst_99 = arith.constant dense<0.000000e+00> : vector<16xf32>
    %255 = vector.multi_reduction <add>, %254, %cst_99 [1] : vector<16x32xf32> to vector<16xf32>
    %256 = vector.shape_cast %255 : vector<16xf32> to vector<16x1xf32>
    %cst_100 = arith.constant 3.200000e+01 : f32
    %257 = vector.broadcast %cst_100 : f32 to vector<16x1xf32>
    %258 = arith.divf %256, %257 : vector<16x1xf32>
    %cst_101 = arith.constant 9.99999974E-6 : f32
    %259 = vector.broadcast %cst_101 : f32 to vector<16x1xf32>
    %260 = arith.addf %258, %259 : vector<16x1xf32>
    %261 = math.rsqrt %260 : vector<16x1xf32>
    %262 = vector.broadcast %261 : vector<16x1xf32> to vector<16x32xf32>
    %263 = arith.mulf %253, %262 : vector<16x32xf32>
    %264 = vector.broadcast %207 : vector<1x32xf32> to vector<16x32xf32>
    %265 = arith.mulf %263, %264 : vector<16x32xf32>
    %266 = vector.broadcast %208 : vector<1x32xf32> to vector<16x32xf32>
    %267 = arith.addf %265, %266 : vector<16x32xf32>
    %cst_102 = arith.constant 0.000000e+00 : f32
    %268 = vector.broadcast %cst_102 : f32 to vector<16x32xf32>
    %269 = arith.maximumf %267, %268 : vector<16x32xf32>
    %270 = vector.shape_cast %236 : vector<2x8x8x32xf32> to vector<128x32xf32>
    %cst_103 = arith.constant dense<0.000000e+00> : vector<128xf32>
    %271 = vector.multi_reduction <add>, %270, %cst_103 [1] : vector<128x32xf32> to vector<128xf32>
    %272 = vector.shape_cast %271 : vector<128xf32> to vector<128x1xf32>
    %cst_104 = arith.constant 3.200000e+01 : f32
    %273 = vector.broadcast %cst_104 : f32 to vector<128x1xf32>
    %274 = arith.divf %272, %273 : vector<128x1xf32>
    %275 = vector.broadcast %274 : vector<128x1xf32> to vector<128x32xf32>
    %276 = arith.subf %270, %275 : vector<128x32xf32>
    %277 = arith.mulf %276, %276 : vector<128x32xf32>
    %cst_105 = arith.constant dense<0.000000e+00> : vector<128xf32>
    %278 = vector.multi_reduction <add>, %277, %cst_105 [1] : vector<128x32xf32> to vector<128xf32>
    %279 = vector.shape_cast %278 : vector<128xf32> to vector<128x1xf32>
    %cst_106 = arith.constant 3.200000e+01 : f32
    %280 = vector.broadcast %cst_106 : f32 to vector<128x1xf32>
    %281 = arith.divf %279, %280 : vector<128x1xf32>
    %cst_107 = arith.constant 9.99999974E-6 : f32
    %282 = vector.broadcast %cst_107 : f32 to vector<128x1xf32>
    %283 = arith.addf %281, %282 : vector<128x1xf32>
    %284 = math.rsqrt %283 : vector<128x1xf32>
    %285 = vector.broadcast %284 : vector<128x1xf32> to vector<128x32xf32>
    %286 = arith.mulf %276, %285 : vector<128x32xf32>
    %287 = vector.broadcast %209 : vector<1x32xf32> to vector<128x32xf32>
    %288 = arith.mulf %286, %287 : vector<128x32xf32>
    %289 = vector.broadcast %210 : vector<1x32xf32> to vector<128x32xf32>
    %290 = arith.addf %288, %289 : vector<128x32xf32>
    %cst_108 = arith.constant 0.000000e+00 : f32
    %291 = vector.broadcast %cst_108 : f32 to vector<128x32xf32>
    %292 = arith.maximumf %290, %291 : vector<128x32xf32>
    %c11_109 = arith.constant 11 : index
    %c0_110 = arith.constant 0 : index
    %c0_111 = arith.constant 0 : index
    %293 = vector.load %arg3[%c11_109, %c0_110, %c0_111] : memref<13x32x32xf32, #tpu.memory_space<vmem>>, vector<1x32x32xf32>
    %294 = vector.shape_cast %293 : vector<1x32x32xf32> to vector<32x32xf32>
    %cst_112 = arith.constant dense<0.000000e+00> : vector<2x32xf32>
    %295 = tpu.matmul %63, %294, %cst_112 {dimension_numbers = #tpu.dot_dimension_numbers<[1], [0], [0], [1], [0, 0, 1, 1], [], []>} : vector<2x32xf32>, vector<32x32xf32>, vector<2x32xf32> -> vector<2x32xf32>
    %c31 = arith.constant 31 : index
    %c0_113 = arith.constant 0 : index
    %296 = vector.load %arg5[%c31, %c0_113] : memref<41x32xf32, #tpu.memory_space<vmem>>, vector<1x32xf32>
    %297 = vector.broadcast %296 : vector<1x32xf32> to vector<2x32xf32>
    %298 = arith.addf %295, %297 : vector<2x32xf32>
    %299 = vector.shape_cast %292 : vector<128x32xf32> to vector<2x64x32xf32>
    %300 = vector.shape_cast %298 : vector<2x32xf32> to vector<2x1x32xf32>
    %301 = vector.broadcast %300 : vector<2x1x32xf32> to vector<2x64x32xf32>
    %302 = arith.addf %299, %301 : vector<2x64x32xf32>
    %303 = vector.shape_cast %302 : vector<2x64x32xf32> to vector<128x32xf32>
    %304 = arith.addf %173, %269 : vector<16x32xf32>
    %cst_114 = arith.constant dense<0.000000e+00> : vector<128xf32>
    %305 = vector.multi_reduction <add>, %303, %cst_114 [1] : vector<128x32xf32> to vector<128xf32>
    %306 = vector.shape_cast %305 : vector<128xf32> to vector<128x1xf32>
    %cst_115 = arith.constant 3.200000e+01 : f32
    %307 = vector.broadcast %cst_115 : f32 to vector<128x1xf32>
    %308 = arith.divf %306, %307 : vector<128x1xf32>
    %309 = vector.broadcast %308 : vector<128x1xf32> to vector<128x32xf32>
    %310 = arith.subf %303, %309 : vector<128x32xf32>
    %311 = arith.mulf %310, %310 : vector<128x32xf32>
    %cst_116 = arith.constant dense<0.000000e+00> : vector<128xf32>
    %312 = vector.multi_reduction <add>, %311, %cst_116 [1] : vector<128x32xf32> to vector<128xf32>
    %313 = vector.shape_cast %312 : vector<128xf32> to vector<128x1xf32>
    %cst_117 = arith.constant 3.200000e+01 : f32
    %314 = vector.broadcast %cst_117 : f32 to vector<128x1xf32>
    %315 = arith.divf %313, %314 : vector<128x1xf32>
    %cst_118 = arith.constant 9.99999974E-6 : f32
    %316 = vector.broadcast %cst_118 : f32 to vector<128x1xf32>
    %317 = arith.addf %315, %316 : vector<128x1xf32>
    %318 = math.rsqrt %317 : vector<128x1xf32>
    %319 = vector.broadcast %318 : vector<128x1xf32> to vector<128x32xf32>
    %320 = arith.mulf %310, %319 : vector<128x32xf32>
    %321 = vector.broadcast %211 : vector<1x32xf32> to vector<128x32xf32>
    %322 = arith.mulf %320, %321 : vector<128x32xf32>
    %323 = vector.broadcast %212 : vector<1x32xf32> to vector<128x32xf32>
    %324 = arith.addf %322, %323 : vector<128x32xf32>
    %325 = arith.negf %324 : vector<128x32xf32>
    %326 = math.exp %325 : vector<128x32xf32>
    %cst_119 = arith.constant 1.000000e+00 : f32
    %327 = vector.broadcast %cst_119 : f32 to vector<128x32xf32>
    %328 = arith.addf %327, %326 : vector<128x32xf32>
    %329 = arith.divf %327, %328 : vector<128x32xf32>
    %330 = arith.mulf %324, %329 : vector<128x32xf32>
    %c8_120 = arith.constant 8 : index
    %c0_121 = arith.constant 0 : index
    %c0_122 = arith.constant 0 : index
    %331 = vector.load %arg3[%c8_120, %c0_121, %c0_122] : memref<13x32x32xf32, #tpu.memory_space<vmem>>, vector<1x32x32xf32>
    %332 = vector.shape_cast %331 : vector<1x32x32xf32> to vector<32x32xf32>
    %cst_123 = arith.constant dense<0.000000e+00> : vector<128x32xf32>
    %333 = tpu.matmul %330, %332, %cst_123 {dimension_numbers = #tpu.dot_dimension_numbers<[1], [0], [0], [1], [0, 0, 1, 1], [], []>} : vector<128x32xf32>, vector<32x32xf32>, vector<128x32xf32> -> vector<128x32xf32>
    %334 = arith.addf %206, %333 : vector<128x32xf32>
    %c30 = arith.constant 30 : index
    %c0_124 = arith.constant 0 : index
    %335 = vector.load %arg5[%c30, %c0_124] : memref<41x32xf32, #tpu.memory_space<vmem>>, vector<1x32xf32>
    %336 = vector.broadcast %335 : vector<1x32xf32> to vector<128x32xf32>
    %337 = arith.addf %334, %336 : vector<128x32xf32>
    %c35 = arith.constant 35 : index
    %c0_125 = arith.constant 0 : index
    %338 = vector.load %arg5[%c35, %c0_125] : memref<41x32xf32, #tpu.memory_space<vmem>>, vector<1x32xf32>
    %c36 = arith.constant 36 : index
    %c0_126 = arith.constant 0 : index
    %339 = vector.load %arg5[%c36, %c0_126] : memref<41x32xf32, #tpu.memory_space<vmem>>, vector<1x32xf32>
    %c37 = arith.constant 37 : index
    %c0_127 = arith.constant 0 : index
    %340 = vector.load %arg5[%c37, %c0_127] : memref<41x32xf32, #tpu.memory_space<vmem>>, vector<1x32xf32>
    %c38 = arith.constant 38 : index
    %c0_128 = arith.constant 0 : index
    %341 = vector.load %arg5[%c38, %c0_128] : memref<41x32xf32, #tpu.memory_space<vmem>>, vector<1x32xf32>
    %c2_129 = arith.constant 2 : index
    %c0_130 = arith.constant 0 : index
    %c0_131 = arith.constant 0 : index
    %342 = vector.load %arg4[%c2_129, %c0_130, %c0_131] : memref<3x33x128xf32, #tpu.memory_space<vmem>>, vector<1x33x128xf32>
    %343 = vector.shape_cast %342 : vector<1x33x128xf32> to vector<33x128xf32>
    %344 = vector.extract_strided_slice %343 {offsets = [0, 0], sizes = [32, 128], strides = [1, 1]} : vector<33x128xf32> to vector<32x128xf32>
    %cst_132 = arith.constant dense<0.000000e+00> : vector<16x128xf32>
    %345 = tpu.matmul %304, %344, %cst_132 {dimension_numbers = #tpu.dot_dimension_numbers<[1], [0], [0], [1], [0, 0, 1, 1], [], []>} : vector<16x32xf32>, vector<32x128xf32>, vector<16x128xf32> -> vector<16x128xf32>
    %346 = vector.extract_strided_slice %343 {offsets = [32, 0], sizes = [1, 128], strides = [1, 1]} : vector<33x128xf32> to vector<1x128xf32>
    %347 = vector.broadcast %346 : vector<1x128xf32> to vector<16x128xf32>
    %348 = arith.addf %345, %347 : vector<16x128xf32>
    %349 = vector.extract_strided_slice %348 {offsets = [0, 64], sizes = [16, 32], strides = [1, 1]} : vector<16x128xf32> to vector<16x32xf32>
    %350 = vector.extract_strided_slice %348 {offsets = [0, 96], sizes = [16, 32], strides = [1, 1]} : vector<16x128xf32> to vector<16x32xf32>
    %c6_133 = arith.constant 6 : index
    %c0_134 = arith.constant 0 : index
    %c0_135 = arith.constant 0 : index
    %351 = vector.load %arg3[%c6_133, %c0_134, %c0_135] : memref<13x32x32xf32, #tpu.memory_space<vmem>>, vector<1x32x32xf32>
    %352 = vector.shape_cast %351 : vector<1x32x32xf32> to vector<32x32xf32>
    %cst_136 = arith.constant dense<0.000000e+00> : vector<128x32xf32>
    %353 = tpu.matmul %337, %352, %cst_136 {dimension_numbers = #tpu.dot_dimension_numbers<[1], [0], [0], [1], [0, 0, 1, 1], [], []>} : vector<128x32xf32>, vector<32x32xf32>, vector<128x32xf32> -> vector<128x32xf32>
    %c32 = arith.constant 32 : index
    %c0_137 = arith.constant 0 : index
    %354 = vector.load %arg5[%c32, %c0_137] : memref<41x32xf32, #tpu.memory_space<vmem>>, vector<1x32xf32>
    %355 = vector.broadcast %354 : vector<1x32xf32> to vector<128x32xf32>
    %356 = arith.addf %353, %355 : vector<128x32xf32>
    %357 = vector.shape_cast %356 : vector<128x32xf32> to vector<2x8x8x32xf32>
    %358 = vector.shape_cast %349 : vector<16x32xf32> to vector<2x1x8x32xf32>
    %359 = vector.broadcast %358 : vector<2x1x8x32xf32> to vector<2x8x8x32xf32>
    %360 = arith.addf %357, %359 : vector<2x8x8x32xf32>
    %361 = vector.shape_cast %350 : vector<16x32xf32> to vector<2x8x1x32xf32>
    %362 = vector.broadcast %361 : vector<2x8x1x32xf32> to vector<2x8x8x32xf32>
    %363 = arith.addf %360, %362 : vector<2x8x8x32xf32>
    %364 = vector.shape_cast %363 : vector<2x8x8x32xf32> to vector<128x32xf32>
    %cst_138 = arith.constant dense<0.000000e+00> : vector<128xf32>
    %365 = vector.multi_reduction <add>, %364, %cst_138 [1] : vector<128x32xf32> to vector<128xf32>
    %366 = vector.shape_cast %365 : vector<128xf32> to vector<128x1xf32>
    %cst_139 = arith.constant 3.200000e+01 : f32
    %367 = vector.broadcast %cst_139 : f32 to vector<128x1xf32>
    %368 = arith.divf %366, %367 : vector<128x1xf32>
    %369 = vector.broadcast %368 : vector<128x1xf32> to vector<128x32xf32>
    %370 = arith.subf %364, %369 : vector<128x32xf32>
    %371 = arith.mulf %370, %370 : vector<128x32xf32>
    %cst_140 = arith.constant dense<0.000000e+00> : vector<128xf32>
    %372 = vector.multi_reduction <add>, %371, %cst_140 [1] : vector<128x32xf32> to vector<128xf32>
    %373 = vector.shape_cast %372 : vector<128xf32> to vector<128x1xf32>
    %cst_141 = arith.constant 3.200000e+01 : f32
    %374 = vector.broadcast %cst_141 : f32 to vector<128x1xf32>
    %375 = arith.divf %373, %374 : vector<128x1xf32>
    %cst_142 = arith.constant 9.99999974E-6 : f32
    %376 = vector.broadcast %cst_142 : f32 to vector<128x1xf32>
    %377 = arith.addf %375, %376 : vector<128x1xf32>
    %378 = math.rsqrt %377 : vector<128x1xf32>
    %379 = vector.broadcast %378 : vector<128x1xf32> to vector<128x32xf32>
    %380 = arith.mulf %370, %379 : vector<128x32xf32>
    %381 = vector.broadcast %338 : vector<1x32xf32> to vector<128x32xf32>
    %382 = arith.mulf %380, %381 : vector<128x32xf32>
    %383 = vector.broadcast %339 : vector<1x32xf32> to vector<128x32xf32>
    %384 = arith.addf %382, %383 : vector<128x32xf32>
    %cst_143 = arith.constant 0.000000e+00 : f32
    %385 = vector.broadcast %cst_143 : f32 to vector<128x32xf32>
    %386 = arith.maximumf %384, %385 : vector<128x32xf32>
    %c12 = arith.constant 12 : index
    %c0_144 = arith.constant 0 : index
    %c0_145 = arith.constant 0 : index
    %387 = vector.load %arg3[%c12, %c0_144, %c0_145] : memref<13x32x32xf32, #tpu.memory_space<vmem>>, vector<1x32x32xf32>
    %388 = vector.shape_cast %387 : vector<1x32x32xf32> to vector<32x32xf32>
    %cst_146 = arith.constant dense<0.000000e+00> : vector<2x32xf32>
    %389 = tpu.matmul %63, %388, %cst_146 {dimension_numbers = #tpu.dot_dimension_numbers<[1], [0], [0], [1], [0, 0, 1, 1], [], []>} : vector<2x32xf32>, vector<32x32xf32>, vector<2x32xf32> -> vector<2x32xf32>
    %c40 = arith.constant 40 : index
    %c0_147 = arith.constant 0 : index
    %390 = vector.load %arg5[%c40, %c0_147] : memref<41x32xf32, #tpu.memory_space<vmem>>, vector<1x32xf32>
    %391 = vector.broadcast %390 : vector<1x32xf32> to vector<2x32xf32>
    %392 = arith.addf %389, %391 : vector<2x32xf32>
    %393 = vector.shape_cast %386 : vector<128x32xf32> to vector<2x64x32xf32>
    %394 = vector.shape_cast %392 : vector<2x32xf32> to vector<2x1x32xf32>
    %395 = vector.broadcast %394 : vector<2x1x32xf32> to vector<2x64x32xf32>
    %396 = arith.addf %393, %395 : vector<2x64x32xf32>
    %397 = vector.shape_cast %396 : vector<2x64x32xf32> to vector<128x32xf32>
    %cst_148 = arith.constant dense<0.000000e+00> : vector<128xf32>
    %398 = vector.multi_reduction <add>, %397, %cst_148 [1] : vector<128x32xf32> to vector<128xf32>
    %399 = vector.shape_cast %398 : vector<128xf32> to vector<128x1xf32>
    %cst_149 = arith.constant 3.200000e+01 : f32
    %400 = vector.broadcast %cst_149 : f32 to vector<128x1xf32>
    %401 = arith.divf %399, %400 : vector<128x1xf32>
    %402 = vector.broadcast %401 : vector<128x1xf32> to vector<128x32xf32>
    %403 = arith.subf %397, %402 : vector<128x32xf32>
    %404 = arith.mulf %403, %403 : vector<128x32xf32>
    %cst_150 = arith.constant dense<0.000000e+00> : vector<128xf32>
    %405 = vector.multi_reduction <add>, %404, %cst_150 [1] : vector<128x32xf32> to vector<128xf32>
    %406 = vector.shape_cast %405 : vector<128xf32> to vector<128x1xf32>
    %cst_151 = arith.constant 3.200000e+01 : f32
    %407 = vector.broadcast %cst_151 : f32 to vector<128x1xf32>
    %408 = arith.divf %406, %407 : vector<128x1xf32>
    %cst_152 = arith.constant 9.99999974E-6 : f32
    %409 = vector.broadcast %cst_152 : f32 to vector<128x1xf32>
    %410 = arith.addf %408, %409 : vector<128x1xf32>
    %411 = math.rsqrt %410 : vector<128x1xf32>
    %412 = vector.broadcast %411 : vector<128x1xf32> to vector<128x32xf32>
    %413 = arith.mulf %403, %412 : vector<128x32xf32>
    %414 = vector.broadcast %340 : vector<1x32xf32> to vector<128x32xf32>
    %415 = arith.mulf %413, %414 : vector<128x32xf32>
    %416 = vector.broadcast %341 : vector<1x32xf32> to vector<128x32xf32>
    %417 = arith.addf %415, %416 : vector<128x32xf32>
    %418 = arith.negf %417 : vector<128x32xf32>
    %419 = math.exp %418 : vector<128x32xf32>
    %cst_153 = arith.constant 1.000000e+00 : f32
    %420 = vector.broadcast %cst_153 : f32 to vector<128x32xf32>
    %421 = arith.addf %420, %419 : vector<128x32xf32>
    %422 = arith.divf %420, %421 : vector<128x32xf32>
    %423 = arith.mulf %417, %422 : vector<128x32xf32>
    %c9_154 = arith.constant 9 : index
    %c0_155 = arith.constant 0 : index
    %c0_156 = arith.constant 0 : index
    %424 = vector.load %arg3[%c9_154, %c0_155, %c0_156] : memref<13x32x32xf32, #tpu.memory_space<vmem>>, vector<1x32x32xf32>
    %425 = vector.shape_cast %424 : vector<1x32x32xf32> to vector<32x32xf32>
    %cst_157 = arith.constant dense<0.000000e+00> : vector<128x32xf32>
    %426 = tpu.matmul %423, %425, %cst_157 {dimension_numbers = #tpu.dot_dimension_numbers<[1], [0], [0], [1], [0, 0, 1, 1], [], []>} : vector<128x32xf32>, vector<32x32xf32>, vector<128x32xf32> -> vector<128x32xf32>
    %427 = arith.addf %337, %426 : vector<128x32xf32>
    %c39 = arith.constant 39 : index
    %c0_158 = arith.constant 0 : index
    %428 = vector.load %arg5[%c39, %c0_158] : memref<41x32xf32, #tpu.memory_space<vmem>>, vector<1x32xf32>
    %429 = vector.broadcast %428 : vector<1x32xf32> to vector<128x32xf32>
    %430 = arith.addf %427, %429 : vector<128x32xf32>
    %c4_159 = arith.constant 4 : index
    %c0_160 = arith.constant 0 : index
    %431 = vector.load %arg5[%c4_159, %c0_160] : memref<41x32xf32, #tpu.memory_space<vmem>>, vector<1x32xf32>
    %c5_161 = arith.constant 5 : index
    %c0_162 = arith.constant 0 : index
    %432 = vector.load %arg5[%c5_161, %c0_162] : memref<41x32xf32, #tpu.memory_space<vmem>>, vector<1x32xf32>
    %433 = vector.shape_cast %430 : vector<128x32xf32> to vector<2x64x32xf32>
    %cst_163 = arith.constant dense<0.000000e+00> : vector<2x32xf32>
    %434 = vector.multi_reduction <add>, %433, %cst_163 [1] : vector<2x64x32xf32> to vector<2x32xf32>
    %435 = vector.shape_cast %434 : vector<2x32xf32> to vector<2x1x32xf32>
    %cst_164 = arith.constant 6.400000e+01 : f32
    %436 = vector.broadcast %cst_164 : f32 to vector<2x1x32xf32>
    %437 = arith.divf %435, %436 : vector<2x1x32xf32>
    %438 = vector.broadcast %437 : vector<2x1x32xf32> to vector<2x64x32xf32>
    %439 = arith.subf %433, %438 : vector<2x64x32xf32>
    %440 = arith.mulf %439, %439 : vector<2x64x32xf32>
    %cst_165 = arith.constant dense<0.000000e+00> : vector<2x32xf32>
    %441 = vector.multi_reduction <add>, %440, %cst_165 [1] : vector<2x64x32xf32> to vector<2x32xf32>
    %442 = vector.shape_cast %441 : vector<2x32xf32> to vector<2x1x32xf32>
    %cst_166 = arith.constant 6.400000e+01 : f32
    %443 = vector.broadcast %cst_166 : f32 to vector<2x1x32xf32>
    %444 = arith.divf %442, %443 : vector<2x1x32xf32>
    %cst_167 = arith.constant 9.99999974E-6 : f32
    %445 = vector.broadcast %cst_167 : f32 to vector<2x1x32xf32>
    %446 = arith.addf %444, %445 : vector<2x1x32xf32>
    %447 = math.rsqrt %446 : vector<2x1x32xf32>
    %448 = vector.broadcast %447 : vector<2x1x32xf32> to vector<2x64x32xf32>
    %449 = arith.mulf %439, %448 : vector<2x64x32xf32>
    %450 = vector.shape_cast %449 : vector<2x64x32xf32> to vector<128x32xf32>
    %451 = vector.broadcast %431 : vector<1x32xf32> to vector<128x32xf32>
    %452 = arith.mulf %450, %451 : vector<128x32xf32>
    %453 = vector.broadcast %432 : vector<1x32xf32> to vector<128x32xf32>
    %454 = arith.addf %452, %453 : vector<128x32xf32>
    %cst_168 = arith.constant 0.000000e+00 : f32
    %455 = vector.broadcast %cst_168 : f32 to vector<128x32xf32>
    %456 = arith.maximumf %454, %455 : vector<128x32xf32>
    %c12_169 = arith.constant 12 : index
    %c0_170 = arith.constant 0 : index
    %457 = vector.load %arg5[%c12_169, %c0_170] : memref<41x32xf32, #tpu.memory_space<vmem>>, vector<1x32xf32>
    %c13 = arith.constant 13 : index
    %c0_171 = arith.constant 0 : index
    %458 = vector.load %arg5[%c13, %c0_171] : memref<41x32xf32, #tpu.memory_space<vmem>>, vector<1x1xf32>
    %cst_172 = arith.constant dense<0.000000e+00> : vector<1x128xf32>
    %459 = tpu.matmul %457, %456, %cst_172 {dimension_numbers = #tpu.dot_dimension_numbers<[1], [1], [0], [0], [0, 0, 1, 0], [], []>} : vector<1x32xf32>, vector<128x32xf32>, vector<1x128xf32> -> vector<1x128xf32>
    %460 = vector.broadcast %458 : vector<1x1xf32> to vector<1x128xf32>
    %461 = arith.addf %459, %460 : vector<1x128xf32>
    %c0_173 = arith.constant 0 : index
    %c0_174 = arith.constant 0 : index
    %462 = vector.load %arg6[%c0_173, %c0_174] : memref<1x128xf32, #tpu.memory_space<vmem>>, vector<1x128xf32>
    tpu.vector_store %arg6[%c0_173, %c0_174], %461 {strides = array<i32>} : memref<1x128xf32, #tpu.memory_space<vmem>>, vector<1x128xf32>,
    return
  }
}

</mosaic_0001>

<llo_original>
// kernel: gnn_encoder_forward.1
$region0: #{gnn_encoder_forward.1}
  #allocation0 [shape = 'u32[]', space=smem, size = 0x4, offset = 0x4, fixed_abs, tag = 'smem constant byte address 0x4 - core index']
  #allocation1 [shape = 'u32[144,128]{1,0:T(1,128)}', space=vmem, size = 0x12000, scoped, tag = 'internal scratch']
  %s0 = inlined_call_operand.vmem [shape: f32[16,2], index: 0, kind: input, shape index: {}]
  %s1 = inlined_call_operand.vmem [shape: f32[128,1], index: 1, kind: input, shape index: {}]
  %s2 = inlined_call_operand.vmem [shape: f32[2,1], index: 2, kind: input, shape index: {}]
  %s3 = inlined_call_operand.hbm [shape: f32[13,32,32], index: 3, kind: input, shape index: {}]
  %s4 = inlined_call_operand.vmem [shape: f32[3,33,128], index: 4, kind: input, shape index: {}]
  %s5 = inlined_call_operand.vmem [shape: f32[41,32], index: 5, kind: input, shape index: {}]
  %s6 = inlined_call_operand.vmem [shape: f32[1,128], index: 6, kind: output, shape index: {}]
  %s7 = sld [smem:[#allocation0]]
  $region38: #{gnn_encoder_forward.1} parent=0
    _
  %s9 = ssub.s32 1, %s7
  %s10 = scalar_select 0, %s9, %s7
  $region1: #{gnn_encoder_forward.1} parent=0
    #allocation2 [shape = 'u8[212992]{0}', space=vmem, size = 0x34000, scoped, tag = 'input window, operand 3, single buffered']
    #allocation3 [shape = 's32[1]{0}', space=sflag, size = 0x4, scoped, tag = 'scoped memory for gnn_encoder_forward.1']
    %11 = vsyncpa [#allocation3], 0
    // Predicated region
    $region2: #{gnn_encoder_forward.1} parent=1 // pred_check
      _
    $region3: #{gnn_encoder_forward.1} parent=1 // pred_check_branch
      %13 = sbr.rel (0) target = $region5
    $region4: #{gnn_encoder_forward.1} parent=1 // pred_region
      _
    $region5: #{gnn_encoder_forward.1} parent=1 // pred_fallthru
      _
    // Predicated region
    $region6: #{gnn_encoder_forward.1} parent=1 // pred_check
      _
    $region7: #{gnn_encoder_forward.1} parent=1 // pred_check_branch
      %15 = sbr.rel (0) target = $region9
    $region8: #{gnn_encoder_forward.1} parent=1 // pred_region
      _
    $region9: #{gnn_encoder_forward.1} parent=1 // pred_fallthru
      _
    // Predicated region
    $region10: #{gnn_encoder_forward.1} parent=1 // pred_check
      _
    $region11: #{gnn_encoder_forward.1} parent=1 // pred_check_branch
      %17 = sbr.rel (0) target = $region13
    $region12: #{gnn_encoder_forward.1} parent=1 // pred_region
      _
    $region13: #{gnn_encoder_forward.1} parent=1 // pred_fallthru
      _
    // Predicated region
    $region14: #{gnn_encoder_forward.1} parent=1 // pred_check
      _
    $region15: #{gnn_encoder_forward.1} parent=1 // pred_check_branch
      %19 = sbr.rel (0) target = $region17
    $region16: #{gnn_encoder_forward.1} parent=1 // pred_region
      %s21 = ssub.s32 6656, 6656
      %22 = vsyncadd [#allocation3], %s21
      %s23 = sshll.u32 [#allocation2], 4
      %s24 = int_to_ptr.vmem [resolvable:$true] %s23
      %29 = dma.hbm_to_vmem [thread:$0]  %s3, 6656, %s24, [#allocation3], 128, 128, 8
    $region17: #{gnn_encoder_forward.1} parent=1 // pred_fallthru
      _
    // Predicated region
    $region18: #{gnn_encoder_forward.1} parent=1 // pred_check
      _
    $region19: #{gnn_encoder_forward.1} parent=1 // pred_check_branch
      %31 = sbr.rel (0) target = $region21
    $region20: #{gnn_encoder_forward.1} parent=1 // pred_region
      _
    $region21: #{gnn_encoder_forward.1} parent=1 // pred_fallthru
      _
    // Predicated region
    $region22: #{gnn_encoder_forward.1} parent=1 // pred_check
      _
    $region23: #{gnn_encoder_forward.1} parent=1 // pred_check_branch
      %33 = sbr.rel (0) target = $region25
    $region24: #{gnn_encoder_forward.1} parent=1 // pred_region
      _
    $region25: #{gnn_encoder_forward.1} parent=1 // pred_fallthru
      _
    // Predicated region
    $region26: #{gnn_encoder_forward.1} parent=1 // pred_check
      _
    $region27: #{gnn_encoder_forward.1} parent=1 // pred_check_branch
      %35 = sbr.rel (0) target = $region29
    $region28: #{gnn_encoder_forward.1} parent=1 // pred_region
      %36 = dma.done [#allocation3], 6656
    $region29: #{gnn_encoder_forward.1} parent=1 // pred_fallthru
      _
    %v37 = vld [vmem:[%s5 + $0x8] sm:$0x1]
    %v38 = vsub.f32 1.0, %v37
    %v39 = vld [vmem:[%s0] sm:$0xff]
    %v40 = vld [vmem:[%s0 + $0x8] sm:$0xff]
    %v41 = vld [vmem:[%s5 + $0x6] sm:$0x1]
    %43 = vset.pattern.permute.xlu0 0
    %44 = vperm.xlu0 %43, %v39
    %v45 = vpop.permute.xlu0 %44
    %48 = vset.pattern.permute.xlu0 0
    %49 = vperm.xlu0 %48, %v40
    %v50 = vpop.permute.xlu0 %49
    %v52 = vlaneseq
    %v53 = vshrl.u32 %v52, 7
    %v54 = vsub.s32 0, %v53
    %v55 = vrot.slane %v41, %v54
    %v56 = vmul.f32 %v45, %v55
    %v57 = vmul.f32 %v50, %v55
    %v58 = vld [vmem:[%s5 + $0x7] sm:$0x1]
    %59 = vset.pattern.permute.xlu0 1
    %60 = vperm.xlu0 %59, %v39
    %v61 = vpop.permute.xlu0 %60
    %63 = vset.pattern.permute.xlu0 1
    %64 = vperm.xlu0 %63, %v40
    %v65 = vpop.permute.xlu0 %64
    %v67 = vlaneseq
    %v68 = vshrl.u32 %v67, 7
    %v69 = vsub.s32 0, %v68
    %v70 = vrot.slane %v58, %v69
    %v71 = vmul.f32 %v61, %v70
    %v72 = vmul.f32 %v65, %v70
    %v73 = vadd.f32 %v56, %v71
    %v74 = vadd.f32 %v57, %v72
    %v75 = vand.u32 2147483647, %v73
    %vm76 = vcmp.le.f32.partialorder %v75, 0.7853982
    %vm77 = vcmp.lt.s32.totalorder %v73, 0
    %v78 = vand.u32 %v73, 2139095040
    %v79 = vshrl.u32 %v78, 23
    %v80 = vsub.s32 %v79, 127
    %v81 = vand.u32 2147483647, %v73
    %v82 = vand.u32 %v81, 8388607
    %v83 = vor.u32 %v82, 8388608
    %v84 = vsub.s32 0, %v83
    %v85 = vadd.s32 %v80, 1
    %vm86 = vcmp.gt.s32.totalorder %v85, 0
    %v87 = vsel %vm86, %v85, 0
    %v88 = vshrl.u32 %v87, 5
    %v89 = vand.u32 %v87, 31
    %v90 = vsub.s32 32, %v89
    %v91 = vshrl.u32 683565275, %v90
    %v92 = vshll.u32 683565275, %v89
    %v93 = vshrl.u32 2475754826, %v90
    %v94 = vor.u32 %v92, %v93
    %v95 = vshll.u32 2475754826, %v89
    %v96 = vshrl.u32 2131351028, %v90
    %v97 = vor.u32 %v95, %v96
    %v98 = vshll.u32 2131351028, %v89
    %v99 = vshrl.u32 2102212464, %v90
    %v100 = vor.u32 %v98, %v99
    %v101 = vshll.u32 2102212464, %v89
    %v102 = vshrl.u32 920167782, %v90
    %v103 = vor.u32 %v101, %v102
    %v104 = vshll.u32 920167782, %v89
    %v105 = vshrl.u32 1326507024, %v90
    %v106 = vor.u32 %v104, %v105
    %vm107 = vcmp.lt.s32.totalorder %v88, 1
    %vm108 = vcmp.lt.s32.totalorder %v88, 2
    %vm109 = vcmp.lt.s32.totalorder %v88, 3
    %vm110 = vcmp.lt.s32.totalorder %v88, 4
    %v111 = vsel %vm107, %v91, %v94
    %v112 = vsel %vm110, %v100, 2102212464
    %v113 = vsel %vm109, %v97, %v112
    %v114 = vsel %vm108, %v111, %v113
    %v115 = vsel %vm107, %v94, %v97
    %v116 = vsel %vm110, %v103, 920167782
    %v117 = vsel %vm109, %v100, %v116
    %v118 = vsel %vm108, %v115, %v117
    %v119 = vsel %vm107, %v97, %v100
    %v120 = vsel %vm110, %v106, 1326507024
    %v121 = vsel %vm109, %v103, %v120
    %v122 = vsel %vm108, %v119, %v121
    %v123 = vshll.u32 %v83, 8
    %v124 = vmul.u32.u64.compose %v123, %v122
    %v125 = vextract.low.u32 %v124
    %v126 = vextract.high.u32 %v124
    %v127 = vmul.u32.u64.compose %v123, %v118
    %v128 = vextract.low.u32 %v127
    %v129 = vextract.high.u32 %v127
    %v130 = vmul.u32 %v123, %v114
    %v131 = vadd.s32 %v126, %v128
    %vm132 = vc.u32 %v126, %v128
    %v133 = vadd.s32 %v129, 1
    %v134 = vsel %vm132, %v133, %v129
    %v135 = vadd.s32 %v130, %v134
    %v136 = vadd.s32 %v135, 536870912
    %v137 = vshrl.u32 %v136, 30
    %v138 = vshll.u32 %v137, 30
    %v139 = vsub.s32 %v135, %v138
    %vm140 = vcmp.lt.s32.totalorder %v139, 0
    %v141 = vsub.s32 0, %v139
    %v142 = vsel %vm140, %v141, %v139
    %v143 = vclz %v142
    %v144 = vsub.s32 %v143, 2
    %vm145 = vcmp.gt.s32.totalorder 0, %v144
    %v146 = vsel %vm145, 0, %v144
    %v147 = vsub.s32 32, %v146
    %v148 = vshll.u32 %v139, %v146
    %v149 = vshrl.u32 %v131, %v147
    %v150 = vor.u32 %v148, %v149
    %v151 = vsub.s32 4294967266, %v146
    %v152 = vadd.s32 %v151, 127
    %v153 = vshll.u32 %v152, 23
    %v154 = vor.u32 4788187, %v153
    %v155 = vand.u32 2147483647, %v154
    %v157 = vcvt.s32.f32 %v150
    %v158 = vmul.f32 %v157, %v155
    %v159 = vxor.u32 %v158, 2147483648
    %v160 = vsel %vm77, %v159, %v158
    %v161 = vsub.s32 4, %v137
    %v162 = vsel %vm77, %v161, %v137
    %v163 = vsel %vm76, %v73, %v160
    %v164 = vsel %vm76, 0, %v162
    %v165 = vcosq.f32.pop %v163
    %v166 = vsinq.f32.pop %v163
    %vm167 = vweird.f32 %v73
    %v168 = vadd.s32 %v164, 3
    %v169 = vand.u32 %v168, 3
    %vm170 = vcmp.lt.s32.totalorder %v169, 2
    %vm171 = vcmp.eq.s32.totalorder %v169, 0
    %v172 = vxor.u32 %v166, 2147483648
    %v173 = vsel %vm171, %v165, %v172
    %vm174 = vcmp.eq.s32.totalorder %v169, 2
    %v175 = vxor.u32 %v165, 2147483648
    %v176 = vsel %vm174, %v175, %v166
    %v177 = vsel %vm170, %v173, %v176
    %v178 = vsel %vm167, nan, %v177
    %v179 = vand.u32 2147483647, %v74
    %vm180 = vcmp.le.f32.partialorder %v179, 0.7853982
    %vm181 = vcmp.lt.s32.totalorder %v74, 0
    %v182 = vand.u32 %v74, 2139095040
    %v183 = vshrl.u32 %v182, 23
    %v184 = vsub.s32 %v183, 127
    %v185 = vand.u32 2147483647, %v74
    %v186 = vand.u32 %v185, 8388607
    %v187 = vor.u32 %v186, 8388608
    %v188 = vsub.s32 0, %v187
    %v189 = vadd.s32 %v184, 1
    %vm190 = vcmp.gt.s32.totalorder %v189, 0
    %v191 = vsel %vm190, %v189, 0
    %v192 = vshrl.u32 %v191, 5
    %v193 = vand.u32 %v191, 31
    %v194 = vsub.s32 32, %v193
    %v195 = vshrl.u32 683565275, %v194
    %v196 = vshll.u32 683565275, %v193
    %v197 = vshrl.u32 2475754826, %v194
    %v198 = vor.u32 %v196, %v197
    %v199 = vshll.u32 2475754826, %v193
    %v200 = vshrl.u32 2131351028, %v194
    %v201 = vor.u32 %v199, %v200
    %v202 = vshll.u32 2131351028, %v193
    %v203 = vshrl.u32 2102212464, %v194
    %v204 = vor.u32 %v202, %v203
    %v205 = vshll.u32 2102212464, %v193
    %v206 = vshrl.u32 920167782, %v194
    %v207 = vor.u32 %v205, %v206
    %v208 = vshll.u32 920167782, %v193
    %v209 = vshrl.u32 1326507024, %v194
    %v210 = vor.u32 %v208, %v209
    %vm211 = vcmp.lt.s32.totalorder %v192, 1
    %vm212 = vcmp.lt.s32.totalorder %v192, 2
    %vm213 = vcmp.lt.s32.totalorder %v192, 3
    %vm214 = vcmp.lt.s32.totalorder %v192, 4
    %v215 = vsel %vm211, %v195, %v198
    %v216 = vsel %vm214, %v204, 2102212464
    %v217 = vsel %vm213, %v201, %v216
    %v218 = vsel %vm212, %v215, %v217
    %v219 = vsel %vm211, %v198, %v201
    %v220 = vsel %vm214, %v207, 920167782
    %v221 = vsel %vm213, %v204, %v220
    %v222 = vsel %vm212, %v219, %v221
    %v223 = vsel %vm211, %v201, %v204
    %v224 = vsel %vm214, %v210, 1326507024
    %v225 = vsel %vm213, %v207, %v224
    %v226 = vsel %vm212, %v223, %v225
    %v227 = vshll.u32 %v187, 8
    %v228 = vmul.u32.u64.compose %v227, %v226
    %v229 = vextract.low.u32 %v228
    %v230 = vextract.high.u32 %v228
    %v231 = vmul.u32.u64.compose %v227, %v222
    %v232 = vextract.low.u32 %v231
    %v233 = vextract.high.u32 %v231
    %v234 = vmul.u32 %v227, %v218
    %v235 = vadd.s32 %v230, %v232
    %vm236 = vc.u32 %v230, %v232
    %v237 = vadd.s32 %v233, 1
    %v238 = vsel %vm236, %v237, %v233
    %v239 = vadd.s32 %v234, %v238
    %v240 = vadd.s32 %v239, 536870912
    %v241 = vshrl.u32 %v240, 30
    %v242 = vshll.u32 %v241, 30
    %v243 = vsub.s32 %v239, %v242
    %vm244 = vcmp.lt.s32.totalorder %v243, 0
    %v245 = vsub.s32 0, %v243
    %v246 = vsel %vm244, %v245, %v243
    %v247 = vclz %v246
    %v248 = vsub.s32 %v247, 2
    %vm249 = vcmp.gt.s32.totalorder 0, %v248
    %v250 = vsel %vm249, 0, %v248
    %v251 = vsub.s32 32, %v250
    %v252 = vshll.u32 %v243, %v250
    %v253 = vshrl.u32 %v235, %v251
    %v254 = vor.u32 %v252, %v253
    %v255 = vsub.s32 4294967266, %v250
    %v256 = vadd.s32 %v255, 127
    %v257 = vshll.u32 %v256, 23
    %v258 = vor.u32 4788187, %v257
    %v259 = vand.u32 2147483647, %v258
    %v261 = vcvt.s32.f32 %v254
    %v262 = vmul.f32 %v261, %v259
    %v263 = vxor.u32 %v262, 2147483648
    %v264 = vsel %vm181, %v263, %v262
    %v265 = vsub.s32 4, %v241
    %v266 = vsel %vm181, %v265, %v241
    %v267 = vsel %vm180, %v74, %v264
    %v268 = vsel %vm180, 0, %v266
    %v269 = vcosq.f32.pop %v267
    %v270 = vsinq.f32.pop %v267
    %vm271 = vweird.f32 %v74
    %v272 = vadd.s32 %v268, 3
    %v273 = vand.u32 %v272, 3
    %vm274 = vcmp.lt.s32.totalorder %v273, 2
    %vm275 = vcmp.eq.s32.totalorder %v273, 0
    %v276 = vxor.u32 %v270, 2147483648
    %v277 = vsel %vm275, %v269, %v276
    %vm278 = vcmp.eq.s32.totalorder %v273, 2
    %v279 = vxor.u32 %v269, 2147483648
    %v280 = vsel %vm278, %v279, %v270
    %v281 = vsel %vm274, %v277, %v280
    %v282 = vsel %vm271, nan, %v281
    %v283 = vlaneseq
    %v284 = vshrl.u32 %v283, 7
    %v285 = vsub.s32 0, %v284
    %v286 = vrot.slane %v37, %v285
    %v287 = vmul.f32 %v286, %v178
    %v288 = vmul.f32 %v286, %v282
    %v289 = vand.u32 2147483647, %v73
    %vm290 = vcmp.le.f32.partialorder %v289, 0.7853982
    %vm291 = vcmp.lt.s32.totalorder %v73, 0
    %v292 = vand.u32 %v73, 2139095040
    %v293 = vshrl.u32 %v292, 23
    %v294 = vsub.s32 %v293, 127
    %v295 = vand.u32 2147483647, %v73
    %v296 = vand.u32 %v295, 8388607
    %v297 = vor.u32 %v296, 8388608
    %v298 = vsub.s32 0, %v297
    %v299 = vadd.s32 %v294, 1
    %vm300 = vcmp.gt.s32.totalorder %v299, 0
    %v301 = vsel %vm300, %v299, 0
    %v302 = vshrl.u32 %v301, 5
    %v303 = vand.u32 %v301, 31
    %v304 = vsub.s32 32, %v303
    %v305 = vshrl.u32 683565275, %v304
    %v306 = vshll.u32 683565275, %v303
    %v307 = vshrl.u32 2475754826, %v304
    %v308 = vor.u32 %v306, %v307
    %v309 = vshll.u32 2475754826, %v303
    %v310 = vshrl.u32 2131351028, %v304
    %v311 = vor.u32 %v309, %v310
    %v312 = vshll.u32 2131351028, %v303
    %v313 = vshrl.u32 2102212464, %v304
    %v314 = vor.u32 %v312, %v313
    %v315 = vshll.u32 2102212464, %v303
    %v316 = vshrl.u32 920167782, %v304
    %v317 = vor.u32 %v315, %v316
    %v318 = vshll.u32 920167782, %v303
    %v319 = vshrl.u32 1326507024, %v304
    %v320 = vor.u32 %v318, %v319
    %vm321 = vcmp.lt.s32.totalorder %v302, 1
    %vm322 = vcmp.lt.s32.totalorder %v302, 2
    %vm323 = vcmp.lt.s32.totalorder %v302, 3
    %vm324 = vcmp.lt.s32.totalorder %v302, 4
    %v325 = vsel %vm321, %v305, %v308
    %v326 = vsel %vm324, %v314, 2102212464
    %v327 = vsel %vm323, %v311, %v326
    %v328 = vsel %vm322, %v325, %v327
    %v329 = vsel %vm321, %v308, %v311
    %v330 = vsel %vm324, %v317, 920167782
    %v331 = vsel %vm323, %v314, %v330
    %v332 = vsel %vm322, %v329, %v331
    %v333 = vsel %vm321, %v311, %v314
    %v334 = vsel %vm324, %v320, 1326507024
    %v335 = vsel %vm323, %v317, %v334
    %v336 = vsel %vm322, %v333, %v335
    %v337 = vshll.u32 %v297, 8
    %v338 = vmul.u32.u64.compose %v337, %v336
    %v339 = vextract.low.u32 %v338
    %v340 = vextract.high.u32 %v338
    %v341 = vmul.u32.u64.compose %v337, %v332
    %v342 = vextract.low.u32 %v341
    %v343 = vextract.high.u32 %v341
    %v344 = vmul.u32 %v337, %v328
    %v345 = vadd.s32 %v340, %v342
    %vm346 = vc.u32 %v340, %v342
    %v347 = vadd.s32 %v343, 1
    %v348 = vsel %vm346, %v347, %v343
    %v349 = vadd.s32 %v344, %v348
    %v350 = vadd.s32 %v349, 536870912
    %v351 = vshrl.u32 %v350, 30
    %v352 = vshll.u32 %v351, 30
    %v353 = vsub.s32 %v349, %v352
    %vm354 = vcmp.lt.s32.totalorder %v353, 0
    %v355 = vsub.s32 0, %v353
    %v356 = vsel %vm354, %v355, %v353
    %v357 = vclz %v356
    %v358 = vsub.s32 %v357, 2
    %vm359 = vcmp.gt.s32.totalorder 0, %v358
    %v360 = vsel %vm359, 0, %v358
    %v361 = vsub.s32 32, %v360
    %v362 = vshll.u32 %v353, %v360
    %v363 = vshrl.u32 %v345, %v361
    %v364 = vor.u32 %v362, %v363
    %v365 = vsub.s32 4294967266, %v360
    %v366 = vadd.s32 %v365, 127
    %v367 = vshll.u32 %v366, 23
    %v368 = vor.u32 4788187, %v367
    %v369 = vand.u32 2147483647, %v368
    %v371 = vcvt.s32.f32 %v364
    %v372 = vmul.f32 %v371, %v369
    %v373 = vxor.u32 %v372, 2147483648
    %v374 = vsel %vm291, %v373, %v372
    %v375 = vsub.s32 4, %v351
    %v376 = vsel %vm291, %v375, %v351
    %v377 = vsel %vm290, %v73, %v374
    %v378 = vsel %vm290, 0, %v376
    %v379 = vcosq.f32.pop %v377
    %v380 = vsinq.f32.pop %v377
    %vm381 = vweird.f32 %v73
    %v382 = vand.u32 %v378, 3
    %vm383 = vcmp.lt.s32.totalorder %v382, 2
    %vm384 = vcmp.eq.s32.totalorder %v382, 0
    %v385 = vxor.u32 %v380, 2147483648
    %v386 = vsel %vm384, %v379, %v385
    %vm387 = vcmp.eq.s32.totalorder %v382, 2
    %v388 = vxor.u32 %v379, 2147483648
    %v389 = vsel %vm387, %v388, %v380
    %v390 = vsel %vm383, %v386, %v389
    %v391 = vsel %vm381, nan, %v390
    %v392 = vand.u32 2147483647, %v74
    %vm393 = vcmp.le.f32.partialorder %v392, 0.7853982
    %vm394 = vcmp.lt.s32.totalorder %v74, 0
    %v395 = vand.u32 %v74, 2139095040
    %v396 = vshrl.u32 %v395, 23
    %v397 = vsub.s32 %v396, 127
    %v398 = vand.u32 2147483647, %v74
    %v399 = vand.u32 %v398, 8388607
    %v400 = vor.u32 %v399, 8388608
    %v401 = vsub.s32 0, %v400
    %v402 = vadd.s32 %v397, 1
    %vm403 = vcmp.gt.s32.totalorder %v402, 0
    %v404 = vsel %vm403, %v402, 0
    %v405 = vshrl.u32 %v404, 5
    %v406 = vand.u32 %v404, 31
    %v407 = vsub.s32 32, %v406
    %v408 = vshrl.u32 683565275, %v407
    %v409 = vshll.u32 683565275, %v406
    %v410 = vshrl.u32 2475754826, %v407
    %v411 = vor.u32 %v409, %v410
    %v412 = vshll.u32 2475754826, %v406
    %v413 = vshrl.u32 2131351028, %v407
    %v414 = vor.u32 %v412, %v413
    %v415 = vshll.u32 2131351028, %v406
    %v416 = vshrl.u32 2102212464, %v407
    %v417 = vor.u32 %v415, %v416
    %v418 = vshll.u32 2102212464, %v406
    %v419 = vshrl.u32 920167782, %v407
    %v420 = vor.u32 %v418, %v419
    %v421 = vshll.u32 920167782, %v406
    %v422 = vshrl.u32 1326507024, %v407
    %v423 = vor.u32 %v421, %v422
    %vm424 = vcmp.lt.s32.totalorder %v405, 1
    %vm425 = vcmp.lt.s32.totalorder %v405, 2
    %vm426 = vcmp.lt.s32.totalorder %v405, 3
    %vm427 = vcmp.lt.s32.totalorder %v405, 4
    %v428 = vsel %vm424, %v408, %v411
    %v429 = vsel %vm427, %v417, 2102212464
    %v430 = vsel %vm426, %v414, %v429
    %v431 = vsel %vm425, %v428, %v430
    %v432 = vsel %vm424, %v411, %v414
    %v433 = vsel %vm427, %v420, 920167782
    %v434 = vsel %vm426, %v417, %v433
    %v435 = vsel %vm425, %v432, %v434
    %v436 = vsel %vm424, %v414, %v417
    %v437 = vsel %vm427, %v423, 1326507024
    %v438 = vsel %vm426, %v420, %v437
    %v439 = vsel %vm425, %v436, %v438
    %v440 = vshll.u32 %v400, 8
    %v441 = vmul.u32.u64.compose %v440, %v439
    %v442 = vextract.low.u32 %v441
    %v443 = vextract.high.u32 %v441
    %v444 = vmul.u32.u64.compose %v440, %v435
    %v445 = vextract.low.u32 %v444
    %v446 = vextract.high.u32 %v444
    %v447 = vmul.u32 %v440, %v431
    %v448 = vadd.s32 %v443, %v445
    %vm449 = vc.u32 %v443, %v445
    %v450 = vadd.s32 %v446, 1
    %v451 = vsel %vm449, %v450, %v446
    %v452 = vadd.s32 %v447, %v451
    %v453 = vadd.s32 %v452, 536870912
    %v454 = vshrl.u32 %v453, 30
    %v455 = vshll.u32 %v454, 30
    %v456 = vsub.s32 %v452, %v455
    %vm457 = vcmp.lt.s32.totalorder %v456, 0
    %v458 = vsub.s32 0, %v456
    %v459 = vsel %vm457, %v458, %v456
    %v460 = vclz %v459
    %v461 = vsub.s32 %v460, 2
    %vm462 = vcmp.gt.s32.totalorder 0, %v461
    %v463 = vsel %vm462, 0, %v461
    %v464 = vsub.s32 32, %v463
    %v465 = vshll.u32 %v456, %v463
    %v466 = vshrl.u32 %v448, %v464
    %v467 = vor.u32 %v465, %v466
    %v468 = vsub.s32 4294967266, %v463
    %v469 = vadd.s32 %v468, 127
    %v470 = vshll.u32 %v469, 23
    %v471 = vor.u32 4788187, %v470
    %v472 = vand.u32 2147483647, %v471
    %v474 = vcvt.s32.f32 %v467
    %v475 = vmul.f32 %v474, %v472
    %v476 = vxor.u32 %v475, 2147483648
    %v477 = vsel %vm394, %v476, %v475
    %v478 = vsub.s32 4, %v454
    %v479 = vsel %vm394, %v478, %v454
    %v480 = vsel %vm393, %v74, %v477
    %v481 = vsel %vm393, 0, %v479
    %v482 = vcosq.f32.pop %v480
    %v483 = vsinq.f32.pop %v480
    %vm484 = vweird.f32 %v74
    %v485 = vand.u32 %v481, 3
    %vm486 = vcmp.lt.s32.totalorder %v485, 2
    %vm487 = vcmp.eq.s32.totalorder %v485, 0
    %v488 = vxor.u32 %v483, 2147483648
    %v489 = vsel %vm487, %v482, %v488
    %vm490 = vcmp.eq.s32.totalorder %v485, 2
    %v491 = vxor.u32 %v482, 2147483648
    %v492 = vsel %vm490, %v491, %v483
    %v493 = vsel %vm486, %v489, %v492
    %v494 = vsel %vm484, nan, %v493
    %v495 = vlaneseq
    %v496 = vshrl.u32 %v495, 7
    %v497 = vsub.s32 0, %v496
    %v498 = vrot.slane %v38, %v497
    %v499 = vmul.f32 %v498, %v391
    %v500 = vmul.f32 %v498, %v494
    %v501 = vadd.f32 %v287, %v499
    %v502 = vadd.f32 %v288, %v500
    %v503 = vld [vmem:[%s1] sm:$0xff]
    %v504 = vld [vmem:[%s1 + $0x8] sm:$0xff]
    %v505 = vld [vmem:[%s1 + $0x10] sm:$0xff]
    %v506 = vld [vmem:[%s1 + $0x18] sm:$0xff]
    %v507 = vld [vmem:[%s1 + $0x20] sm:$0xff]
    %v508 = vld [vmem:[%s1 + $0x28] sm:$0xff]
    %v509 = vld [vmem:[%s1 + $0x30] sm:$0xff]
    %v510 = vld [vmem:[%s1 + $0x38] sm:$0xff]
    %v511 = vld [vmem:[%s1 + $0x40] sm:$0xff]
    %v512 = vld [vmem:[%s1 + $0x48] sm:$0xff]
    %v513 = vld [vmem:[%s1 + $0x50] sm:$0xff]
    %v514 = vld [vmem:[%s1 + $0x58] sm:$0xff]
    %v515 = vld [vmem:[%s1 + $0x60] sm:$0xff]
    %v516 = vld [vmem:[%s1 + $0x68] sm:$0xff]
    %v517 = vld [vmem:[%s1 + $0x70] sm:$0xff]
    %v518 = vld [vmem:[%s1 + $0x78] sm:$0xff]
    %v519 = vld [vmem:[%s5 + $0x9] sm:$0x1]
    %521 = vset.pattern.permute.xlu0 0
    %522 = vperm.xlu0 %521, %v503
    %v523 = vpop.permute.xlu0 %522
    %526 = vset.pattern.permute.xlu0 0
    %527 = vperm.xlu0 %526, %v504
    %v528 = vpop.permute.xlu0 %527
    %531 = vset.pattern.permute.xlu0 0
    %532 = vperm.xlu0 %531, %v505
    %v533 = vpop.permute.xlu0 %532
    %536 = vset.pattern.permute.xlu0 0
    %537 = vperm.xlu0 %536, %v506
    %v538 = vpop.permute.xlu0 %537
    %541 = vset.pattern.permute.xlu0 0
    %542 = vperm.xlu0 %541, %v507
    %v543 = vpop.permute.xlu0 %542
    %546 = vset.pattern.permute.xlu0 0
    %547 = vperm.xlu0 %546, %v508
    %v548 = vpop.permute.xlu0 %547
    %551 = vset.pattern.permute.xlu0 0
    %552 = vperm.xlu0 %551, %v509
    %v553 = vpop.permute.xlu0 %552
    %556 = vset.pattern.permute.xlu0 0
    %557 = vperm.xlu0 %556, %v510
    %v558 = vpop.permute.xlu0 %557
    %561 = vset.pattern.permute.xlu0 0
    %562 = vperm.xlu0 %561, %v511
    %v563 = vpop.permute.xlu0 %562
    %566 = vset.pattern.permute.xlu0 0
    %567 = vperm.xlu0 %566, %v512
    %v568 = vpop.permute.xlu0 %567
    %571 = vset.pattern.permute.xlu0 0
    %572 = vperm.xlu0 %571, %v513
    %v573 = vpop.permute.xlu0 %572
    %576 = vset.pattern.permute.xlu0 0
    %577 = vperm.xlu0 %576, %v514
    %v578 = vpop.permute.xlu0 %577
    %581 = vset.pattern.permute.xlu0 0
    %582 = vperm.xlu0 %581, %v515
    %v583 = vpop.permute.xlu0 %582
    %586 = vset.pattern.permute.xlu0 0
    %587 = vperm.xlu0 %586, %v516
    %v588 = vpop.permute.xlu0 %587
    %591 = vset.pattern.permute.xlu0 0
    %592 = vperm.xlu0 %591, %v517
    %v593 = vpop.permute.xlu0 %592
    %596 = vset.pattern.permute.xlu0 0
    %597 = vperm.xlu0 %596, %v518
    %v598 = vpop.permute.xlu0 %597
    %v600 = vlaneseq
    %v601 = vshrl.u32 %v600, 7
    %v602 = vsub.s32 0, %v601
    %v603 = vrot.slane %v519, %v602
    %v604 = vmul.f32 %v523, %v603
    %v605 = vmul.f32 %v528, %v603
    %v606 = vmul.f32 %v533, %v603
    %v607 = vmul.f32 %v538, %v603
    %v608 = vmul.f32 %v543, %v603
    %v609 = vmul.f32 %v548, %v603
    %v610 = vmul.f32 %v553, %v603
    %v611 = vmul.f32 %v558, %v603
    %v612 = vmul.f32 %v563, %v603
    %v613 = vmul.f32 %v568, %v603
    %v614 = vmul.f32 %v573, %v603
    %v615 = vmul.f32 %v578, %v603
    %v616 = vmul.f32 %v583, %v603
    %v617 = vmul.f32 %v588, %v603
    %v618 = vmul.f32 %v593, %v603
    %v619 = vmul.f32 %v598, %v603
    %v620 = vand.u32 2147483647, %v604
    %vm621 = vcmp.le.f32.partialorder %v620, 0.7853982
    %vm622 = vcmp.lt.s32.totalorder %v604, 0
    %v623 = vand.u32 %v604, 2139095040
    %v624 = vshrl.u32 %v623, 23
    %v625 = vsub.s32 %v624, 127
    %v626 = vand.u32 2147483647, %v604
    %v627 = vand.u32 %v626, 8388607
    %v628 = vor.u32 %v627, 8388608
    %v629 = vsub.s32 0, %v628
    %v630 = vadd.s32 %v625, 1
    %vm631 = vcmp.gt.s32.totalorder %v630, 0
    %v632 = vsel %vm631, %v630, 0
    %v633 = vshrl.u32 %v632, 5
    %v634 = vand.u32 %v632, 31
    %v635 = vsub.s32 32, %v634
    %v636 = vshrl.u32 683565275, %v635
    %v637 = vshll.u32 683565275, %v634
    %v638 = vshrl.u32 2475754826, %v635
    %v639 = vor.u32 %v637, %v638
    %v640 = vshll.u32 2475754826, %v634
    %v641 = vshrl.u32 2131351028, %v635
    %v642 = vor.u32 %v640, %v641
    %v643 = vshll.u32 2131351028, %v634
    %v644 = vshrl.u32 2102212464, %v635
    %v645 = vor.u32 %v643, %v644
    %v646 = vshll.u32 2102212464, %v634
    %v647 = vshrl.u32 920167782, %v635
    %v648 = vor.u32 %v646, %v647
    %v649 = vshll.u32 920167782, %v634
    %v650 = vshrl.u32 1326507024, %v635
    %v651 = vor.u32 %v649, %v650
    %vm652 = vcmp.lt.s32.totalorder %v633, 1
    %vm653 = vcmp.lt.s32.totalorder %v633, 2
    %vm654 = vcmp.lt.s32.totalorder %v633, 3
    %vm655 = vcmp.lt.s32.totalorder %v633, 4
    %v656 = vsel %vm652, %v636, %v639
    %v657 = vsel %vm655, %v645, 2102212464
    %v658 = vsel %vm654, %v642, %v657
    %v659 = vsel %vm653, %v656, %v658
    %v660 = vsel %vm652, %v639, %v642
    %v661 = vsel %vm655, %v648, 920167782
    %v662 = vsel %vm654, %v645, %v661
    %v663 = vsel %vm653, %v660, %v662
    %v664 = vsel %vm652, %v642, %v645
    %v665 = vsel %vm655, %v651, 1326507024
    %v666 = vsel %vm654, %v648, %v665
    %v667 = vsel %vm653, %v664, %v666
    %v668 = vshll.u32 %v628, 8
    %v669 = vmul.u32.u64.compose %v668, %v667
    %v670 = vextract.low.u32 %v669
    %v671 = vextract.high.u32 %v669
    %v672 = vmul.u32.u64.compose %v668, %v663
    %v673 = vextract.low.u32 %v672
    %v674 = vextract.high.u32 %v672
    %v675 = vmul.u32 %v668, %v659
    %v676 = vadd.s32 %v671, %v673
    %vm677 = vc.u32 %v671, %v673
    %v678 = vadd.s32 %v674, 1
    %v679 = vsel %vm677, %v678, %v674
    %v680 = vadd.s32 %v675, %v679
    %v681 = vadd.s32 %v680, 536870912
    %v682 = vshrl.u32 %v681, 30
    %v683 = vshll.u32 %v682, 30
    %v684 = vsub.s32 %v680, %v683
    %vm685 = vcmp.lt.s32.totalorder %v684, 0
    %v686 = vsub.s32 0, %v684
    %v687 = vsel %vm685, %v686, %v684
    %v688 = vclz %v687
    %v689 = vsub.s32 %v688, 2
    %vm690 = vcmp.gt.s32.totalorder 0, %v689
    %v691 = vsel %vm690, 0, %v689
    %v692 = vsub.s32 32, %v691
    %v693 = vshll.u32 %v684, %v691
    %v694 = vshrl.u32 %v676, %v692
    %v695 = vor.u32 %v693, %v694
    %v696 = vsub.s32 4294967266, %v691
    %v697 = vadd.s32 %v696, 127
    %v698 = vshll.u32 %v697, 23
    %v699 = vor.u32 4788187, %v698
    %v700 = vand.u32 2147483647, %v699
    %v702 = vcvt.s32.f32 %v695
    %v703 = vmul.f32 %v702, %v700
    %v704 = vxor.u32 %v703, 2147483648
    %v705 = vsel %vm622, %v704, %v703
    %v706 = vsub.s32 4, %v682
    %v707 = vsel %vm622, %v706, %v682
    %v708 = vsel %vm621, %v604, %v705
    %v709 = vsel %vm621, 0, %v707
    %v710 = vcosq.f32.pop %v708
    %v711 = vsinq.f32.pop %v708
    %vm712 = vweird.f32 %v604
    %v713 = vadd.s32 %v709, 3
    %v714 = vand.u32 %v713, 3
    %vm715 = vcmp.lt.s32.totalorder %v714, 2
    %vm716 = vcmp.eq.s32.totalorder %v714, 0
    %v717 = vxor.u32 %v711, 2147483648
    %v718 = vsel %vm716, %v710, %v717
    %vm719 = vcmp.eq.s32.totalorder %v714, 2
    %v720 = vxor.u32 %v710, 2147483648
    %v721 = vsel %vm719, %v720, %v711
    %v722 = vsel %vm715, %v718, %v721
    %v723 = vsel %vm712, nan, %v722
    %v724 = vand.u32 2147483647, %v605
    %vm725 = vcmp.le.f32.partialorder %v724, 0.7853982
    %vm726 = vcmp.lt.s32.totalorder %v605, 0
    %v727 = vand.u32 %v605, 2139095040
    %v728 = vshrl.u32 %v727, 23
    %v729 = vsub.s32 %v728, 127
    %v730 = vand.u32 2147483647, %v605
    %v731 = vand.u32 %v730, 8388607
    %v732 = vor.u32 %v731, 8388608
    %v733 = vsub.s32 0, %v732
    %v734 = vadd.s32 %v729, 1
    %vm735 = vcmp.gt.s32.totalorder %v734, 0
    %v736 = vsel %vm735, %v734, 0
    %v737 = vshrl.u32 %v736, 5
    %v738 = vand.u32 %v736, 31
    %v739 = vsub.s32 32, %v738
    %v740 = vshrl.u32 683565275, %v739
    %v741 = vshll.u32 683565275, %v738
    %v742 = vshrl.u32 2475754826, %v739
    %v743 = vor.u32 %v741, %v742
    %v744 = vshll.u32 2475754826, %v738
    %v745 = vshrl.u32 2131351028, %v739
    %v746 = vor.u32 %v744, %v745
    %v747 = vshll.u32 2131351028, %v738
    %v748 = vshrl.u32 2102212464, %v739
    %v749 = vor.u32 %v747, %v748
    %v750 = vshll.u32 2102212464, %v738
    %v751 = vshrl.u32 920167782, %v739
    %v752 = vor.u32 %v750, %v751
    %v753 = vshll.u32 920167782, %v738
    %v754 = vshrl.u32 1326507024, %v739
    %v755 = vor.u32 %v753, %v754
    %vm756 = vcmp.lt.s32.totalorder %v737, 1
    %vm757 = vcmp.lt.s32.totalorder %v737, 2
    %vm758 = vcmp.lt.s32.totalorder %v737, 3
    %vm759 = vcmp.lt.s32.totalorder %v737, 4
    %v760 = vsel %vm756, %v740, %v743
    %v761 = vsel %vm759, %v749, 2102212464
    %v762 = vsel %vm758, %v746, %v761
    %v763 = vsel %vm757, %v760, %v762
    %v764 = vsel %vm756, %v743, %v746
    %v765 = vsel %vm759, %v752, 920167782
    %v766 = vsel %vm758, %v749, %v765
    %v767 = vsel %vm757, %v764, %v766
    %v768 = vsel %vm756, %v746, %v749
    %v769 = vsel %vm759, %v755, 1326507024
    %v770 = vsel %vm758, %v752, %v769
    %v771 = vsel %vm757, %v768, %v770
    %v772 = vshll.u32 %v732, 8
    %v773 = vmul.u32.u64.compose %v772, %v771
    %v774 = vextract.low.u32 %v773
    %v775 = vextract.high.u32 %v773
    %v776 = vmul.u32.u64.compose %v772, %v767
    %v777 = vextract.low.u32 %v776
    %v778 = vextract.high.u32 %v776
    %v779 = vmul.u32 %v772, %v763
    %v780 = vadd.s32 %v775, %v777
    %vm781 = vc.u32 %v775, %v777
    %v782 = vadd.s32 %v778, 1
    %v783 = vsel %vm781, %v782, %v778
    %v784 = vadd.s32 %v779, %v783
    %v785 = vadd.s32 %v784, 536870912
    %v786 = vshrl.u32 %v785, 30
    %v787 = vshll.u32 %v786, 30
    %v788 = vsub.s32 %v784, %v787
    %vm789 = vcmp.lt.s32.totalorder %v788, 0
    %v790 = vsub.s32 0, %v788
    %v791 = vsel %vm789, %v790, %v788
    %v792 = vclz %v791
    %v793 = vsub.s32 %v792, 2
    %vm794 = vcmp.gt.s32.totalorder 0, %v793
    %v795 = vsel %vm794, 0, %v793
    %v796 = vsub.s32 32, %v795
    %v797 = vshll.u32 %v788, %v795
    %v798 = vshrl.u32 %v780, %v796
    %v799 = vor.u32 %v797, %v798
    %v800 = vsub.s32 4294967266, %v795
    %v801 = vadd.s32 %v800, 127
    %v802 = vshll.u32 %v801, 23
    %v803 = vor.u32 4788187, %v802
    %v804 = vand.u32 2147483647, %v803
    %v806 = vcvt.s32.f32 %v799
    %v807 = vmul.f32 %v806, %v804
    %v808 = vxor.u32 %v807, 2147483648
    %v809 = vsel %vm726, %v808, %v807
    %v810 = vsub.s32 4, %v786
    %v811 = vsel %vm726, %v810, %v786
    %v812 = vsel %vm725, %v605, %v809
    %v813 = vsel %vm725, 0, %v811
    %v814 = vcosq.f32.pop %v812
    %v815 = vsinq.f32.pop %v812
    %vm816 = vweird.f32 %v605
    %v817 = vadd.s32 %v813, 3
    %v818 = vand.u32 %v817, 3
    %vm819 = vcmp.lt.s32.totalorder %v818, 2
    %vm820 = vcmp.eq.s32.totalorder %v818, 0
    %v821 = vxor.u32 %v815, 2147483648
    %v822 = vsel %vm820, %v814, %v821
    %vm823 = vcmp.eq.s32.totalorder %v818, 2
    %v824 = vxor.u32 %v814, 2147483648
    %v825 = vsel %vm823, %v824, %v815
    %v826 = vsel %vm819, %v822, %v825
    %v827 = vsel %vm816, nan, %v826
    %v828 = vand.u32 2147483647, %v606
    %vm829 = vcmp.le.f32.partialorder %v828, 0.7853982
    %vm830 = vcmp.lt.s32.totalorder %v606, 0
    %v831 = vand.u32 %v606, 2139095040
    %v832 = vshrl.u32 %v831, 23
    %v833 = vsub.s32 %v832, 127
    %v834 = vand.u32 2147483647, %v606
    %v835 = vand.u32 %v834, 8388607
    %v836 = vor.u32 %v835, 8388608
    %v837 = vsub.s32 0, %v836
    %v838 = vadd.s32 %v833, 1
    %vm839 = vcmp.gt.s32.totalorder %v838, 0
    %v840 = vsel %vm839, %v838, 0
    %v841 = vshrl.u32 %v840, 5
    %v842 = vand.u32 %v840, 31
    %v843 = vsub.s32 32, %v842
    %v844 = vshrl.u32 683565275, %v843
    %v845 = vshll.u32 683565275, %v842
    %v846 = vshrl.u32 2475754826, %v843
    %v847 = vor.u32 %v845, %v846
    %v848 = vshll.u32 2475754826, %v842
    %v849 = vshrl.u32 2131351028, %v843
    %v850 = vor.u32 %v848, %v849
    %v851 = vshll.u32 2131351028, %v842
    %v852 = vshrl.u32 2102212464, %v843
    %v853 = vor.u32 %v851, %v852
    %v854 = vshll.u32 2102212464, %v842
    %v855 = vshrl.u32 920167782, %v843
    %v856 = vor.u32 %v854, %v855
    %v857 = vshll.u32 920167782, %v842
    %v858 = vshrl.u32 1326507024, %v843
    %v859 = vor.u32 %v857, %v858
    %vm860 = vcmp.lt.s32.totalorder %v841, 1
    %vm861 = vcmp.lt.s32.totalorder %v841, 2
    %vm862 = vcmp.lt.s32.totalorder %v841, 3
    %vm863 = vcmp.lt.s32.totalorder %v841, 4
    %v864 = vsel %vm860, %v844, %v847
    %v865 = vsel %vm863, %v853, 2102212464
    %v866 = vsel %vm862, %v850, %v865
    %v867 = vsel %vm861, %v864, %v866
    %v868 = vsel %vm860, %v847, %v850
    %v869 = vsel %vm863, %v856, 920167782
    %v870 = vsel %vm862, %v853, %v869
    %v871 = vsel %vm861, %v868, %v870
    %v872 = vsel %vm860, %v850, %v853
    %v873 = vsel %vm863, %v859, 1326507024
    %v874 = vsel %vm862, %v856, %v873
    %v875 = vsel %vm861, %v872, %v874
    %v876 = vshll.u32 %v836, 8
    %v877 = vmul.u32.u64.compose %v876, %v875
    %v878 = vextract.low.u32 %v877
    %v879 = vextract.high.u32 %v877
    %v880 = vmul.u32.u64.compose %v876, %v871
    %v881 = vextract.low.u32 %v880
    %v882 = vextract.high.u32 %v880
    %v883 = vmul.u32 %v876, %v867
    %v884 = vadd.s32 %v879, %v881
    %vm885 = vc.u32 %v879, %v881
    %v886 = vadd.s32 %v882, 1
    %v887 = vsel %vm885, %v886, %v882
    %v888 = vadd.s32 %v883, %v887
    %v889 = vadd.s32 %v888, 536870912
    %v890 = vshrl.u32 %v889, 30
    %v891 = vshll.u32 %v890, 30
    %v892 = vsub.s32 %v888, %v891
    %vm893 = vcmp.lt.s32.totalorder %v892, 0
    %v894 = vsub.s32 0, %v892
    %v895 = vsel %vm893, %v894, %v892
    %v896 = vclz %v895
    %v897 = vsub.s32 %v896, 2
    %vm898 = vcmp.gt.s32.totalorder 0, %v897
    %v899 = vsel %vm898, 0, %v897
    %v900 = vsub.s32 32, %v899
    %v901 = vshll.u32 %v892, %v899
    %v902 = vshrl.u32 %v884, %v900
    %v903 = vor.u32 %v901, %v902
    %v904 = vsub.s32 4294967266, %v899
    %v905 = vadd.s32 %v904, 127
    %v906 = vshll.u32 %v905, 23
    %v907 = vor.u32 4788187, %v906
    %v908 = vand.u32 2147483647, %v907
    %v910 = vcvt.s32.f32 %v903
    %v911 = vmul.f32 %v910, %v908
    %v912 = vxor.u32 %v911, 2147483648
    %v913 = vsel %vm830, %v912, %v911
    %v914 = vsub.s32 4, %v890
    %v915 = vsel %vm830, %v914, %v890
    %v916 = vsel %vm829, %v606, %v913
    %v917 = vsel %vm829, 0, %v915
    %v918 = vcosq.f32.pop %v916
    %v919 = vsinq.f32.pop %v916
    %vm920 = vweird.f32 %v606
    %v921 = vadd.s32 %v917, 3
    %v922 = vand.u32 %v921, 3
    %vm923 = vcmp.lt.s32.totalorder %v922, 2
    %vm924 = vcmp.eq.s32.totalorder %v922, 0
    %v925 = vxor.u32 %v919, 2147483648
    %v926 = vsel %vm924, %v918, %v925
    %vm927 = vcmp.eq.s32.totalorder %v922, 2
    %v928 = vxor.u32 %v918, 2147483648
    %v929 = vsel %vm927, %v928, %v919
    %v930 = vsel %vm923, %v926, %v929
    %v931 = vsel %vm920, nan, %v930
    %v932 = vand.u32 2147483647, %v607
    %vm933 = vcmp.le.f32.partialorder %v932, 0.7853982
    %vm934 = vcmp.lt.s32.totalorder %v607, 0
    %v935 = vand.u32 %v607, 2139095040
    %v936 = vshrl.u32 %v935, 23
    %v937 = vsub.s32 %v936, 127
    %v938 = vand.u32 2147483647, %v607
    %v939 = vand.u32 %v938, 8388607
    %v940 = vor.u32 %v939, 8388608
    %v941 = vsub.s32 0, %v940
    %v942 = vadd.s32 %v937, 1
    %vm943 = vcmp.gt.s32.totalorder %v942, 0
    %v944 = vsel %vm943, %v942, 0
    %v945 = vshrl.u32 %v944, 5
    %v946 = vand.u32 %v944, 31
    %v947 = vsub.s32 32, %v946
    %v948 = vshrl.u32 683565275, %v947
    %v949 = vshll.u32 683565275, %v946
    %v950 = vshrl.u32 2475754826, %v947
    %v951 = vor.u32 %v949, %v950
    %v952 = vshll.u32 2475754826, %v946
    %v953 = vshrl.u32 2131351028, %v947
    %v954 = vor.u32 %v952, %v953
    %v955 = vshll.u32 2131351028, %v946
    %v956 = vshrl.u32 2102212464, %v947
    %v957 = vor.u32 %v955, %v956
    %v958 = vshll.u32 2102212464, %v946
    %v959 = vshrl.u32 920167782, %v947
    %v960 = vor.u32 %v958, %v959
    %v961 = vshll.u32 920167782, %v946
    %v962 = vshrl.u32 1326507024, %v947
    %v963 = vor.u32 %v961, %v962
    %vm964 = vcmp.lt.s32.totalorder %v945, 1
    %vm965 = vcmp.lt.s32.totalorder %v945, 2
    %vm966 = vcmp.lt.s32.totalorder %v945, 3
    %vm967 = vcmp.lt.s32.totalorder %v945, 4
    %v968 = vsel %vm964, %v948, %v951
    %v969 = vsel %vm967, %v957, 2102212464
    %v970 = vsel %vm966, %v954, %v969
    %v971 = vsel %vm965, %v968, %v970
    %v972 = vsel %vm964, %v951, %v954
    %v973 = vsel %vm967, %v960, 920167782
    %v974 = vsel %vm966, %v957, %v973
    %v975 = vsel %vm965, %v972, %v974
    %v976 = vsel %vm964, %v954, %v957
    %v977 = vsel %vm967, %v963, 1326507024
    %v978 = vsel %vm966, %v960, %v977
    %v979 = vsel %vm965, %v976, %v978
    %v980 = vshll.u32 %v940, 8
    %v981 = vmul.u32.u64.compose %v980, %v979
    %v982 = vextract.low.u32 %v981
    %v983 = vextract.high.u32 %v981
    %v984 = vmul.u32.u64.compose %v980, %v975
    %v985 = vextract.low.u32 %v984
    %v986 = vextract.high.u32 %v984
    %v987 = vmul.u32 %v980, %v971
    %v988 = vadd.s32 %v983, %v985
    %vm989 = vc.u32 %v983, %v985
    %v990 = vadd.s32 %v986, 1
    %v991 = vsel %vm989, %v990, %v986
    %v992 = vadd.s32 %v987, %v991
    %v993 = vadd.s32 %v992, 536870912
    %v994 = vshrl.u32 %v993, 30
    %v995 = vshll.u32 %v994, 30
    %v996 = vsub.s32 %v992, %v995
    %vm997 = vcmp.lt.s32.totalorder %v996, 0
    %v998 = vsub.s32 0, %v996
    %v999 = vsel %vm997, %v998, %v996
    %v1000 = vclz %v999
    %v1001 = vsub.s32 %v1000, 2
    %vm1002 = vcmp.gt.s32.totalorder 0, %v1001
    %v1003 = vsel %vm1002, 0, %v1001
    %v1004 = vsub.s32 32, %v1003
    %v1005 = vshll.u32 %v996, %v1003
    %v1006 = vshrl.u32 %v988, %v1004
    %v1007 = vor.u32 %v1005, %v1006
    %v1008 = vsub.s32 4294967266, %v1003
    %v1009 = vadd.s32 %v1008, 127
    %v1010 = vshll.u32 %v1009, 23
    %v1011 = vor.u32 4788187, %v1010
    %v1012 = vand.u32 2147483647, %v1011
    %v1014 = vcvt.s32.f32 %v1007
    %v1015 = vmul.f32 %v1014, %v1012
    %v1016 = vxor.u32 %v1015, 2147483648
    %v1017 = vsel %vm934, %v1016, %v1015
    %v1018 = vsub.s32 4, %v994
    %v1019 = vsel %vm934, %v1018, %v994
    %v1020 = vsel %vm933, %v607, %v1017
    %v1021 = vsel %vm933, 0, %v1019
    %v1022 = vcosq.f32.pop %v1020
    %v1023 = vsinq.f32.pop %v1020
    %vm1024 = vweird.f32 %v607
    %v1025 = vadd.s32 %v1021, 3
    %v1026 = vand.u32 %v1025, 3
    %vm1027 = vcmp.lt.s32.totalorder %v1026, 2
    %vm1028 = vcmp.eq.s32.totalorder %v1026, 0
    %v1029 = vxor.u32 %v1023, 2147483648
    %v1030 = vsel %vm1028, %v1022, %v1029
    %vm1031 = vcmp.eq.s32.totalorder %v1026, 2
    %v1032 = vxor.u32 %v1022, 2147483648
    %v1033 = vsel %vm1031, %v1032, %v1023
    %v1034 = vsel %vm1027, %v1030, %v1033
    %v1035 = vsel %vm1024, nan, %v1034
    %v1036 = vand.u32 2147483647, %v608
    %vm1037 = vcmp.le.f32.partialorder %v1036, 0.7853982
    %vm1038 = vcmp.lt.s32.totalorder %v608, 0
    %v1039 = vand.u32 %v608, 2139095040
    %v1040 = vshrl.u32 %v1039, 23
    %v1041 = vsub.s32 %v1040, 127
    %v1042 = vand.u32 2147483647, %v608
    %v1043 = vand.u32 %v1042, 8388607
    %v1044 = vor.u32 %v1043, 8388608
    %v1045 = vsub.s32 0, %v1044
    %v1046 = vadd.s32 %v1041, 1
    %vm1047 = vcmp.gt.s32.totalorder %v1046, 0
    %v1048 = vsel %vm1047, %v1046, 0
    %v1049 = vshrl.u32 %v1048, 5
    %v1050 = vand.u32 %v1048, 31
    %v1051 = vsub.s32 32, %v1050
    %v1052 = vshrl.u32 683565275, %v1051
    %v1053 = vshll.u32 683565275, %v1050
    %v1054 = vshrl.u32 2475754826, %v1051
    %v1055 = vor.u32 %v1053, %v1054
    %v1056 = vshll.u32 2475754826, %v1050
    %v1057 = vshrl.u32 2131351028, %v1051
    %v1058 = vor.u32 %v1056, %v1057
    %v1059 = vshll.u32 2131351028, %v1050
    %v1060 = vshrl.u32 2102212464, %v1051
    %v1061 = vor.u32 %v1059, %v1060
    %v1062 = vshll.u32 2102212464, %v1050
    %v1063 = vshrl.u32 920167782, %v1051
    %v1064 = vor.u32 %v1062, %v1063
    %v1065 = vshll.u32 920167782, %v1050
    %v1066 = vshrl.u32 1326507024, %v1051
    %v1067 = vor.u32 %v1065, %v1066
    %vm1068 = vcmp.lt.s32.totalorder %v1049, 1
    %vm1069 = vcmp.lt.s32.totalorder %v1049, 2
    %vm1070 = vcmp.lt.s32.totalorder %v1049, 3
    %vm1071 = vcmp.lt.s32.totalorder %v1049, 4
    %v1072 = vsel %vm1068, %v1052, %v1055
    %v1073 = vsel %vm1071, %v1061, 2102212464
    %v1074 = vsel %vm1070, %v1058, %v1073
    %v1075 = vsel %vm1069, %v1072, %v1074
    %v1076 = vsel %vm1068, %v1055, %v1058
    %v1077 = vsel %vm1071, %v1064, 920167782
    %v1078 = vsel %vm1070, %v1061, %v1077
    %v1079 = vsel %vm1069, %v1076, %v1078
    %v1080 = vsel %vm1068, %v1058, %v1061
    %v1081 = vsel %vm1071, %v1067, 1326507024
    %v1082 = vsel %vm1070, %v1064, %v1081
    %v1083 = vsel %vm1069, %v1080, %v1082
    %v1084 = vshll.u32 %v1044, 8
    %v1085 = vmul.u32.u64.compose %v1084, %v1083
    %v1086 = vextract.low.u32 %v1085
    %v1087 = vextract.high.u32 %v1085
    %v1088 = vmul.u32.u64.compose %v1084, %v1079
    %v1089 = vextract.low.u32 %v1088
    %v1090 = vextract.high.u32 %v1088
    %v1091 = vmul.u32 %v1084, %v1075
    %v1092 = vadd.s32 %v1087, %v1089
    %vm1093 = vc.u32 %v1087, %v1089
    %v1094 = vadd.s32 %v1090, 1
    %v1095 = vsel %vm1093, %v1094, %v1090
    %v1096 = vadd.s32 %v1091, %v1095
    %v1097 = vadd.s32 %v1096, 536870912
    %v1098 = vshrl.u32 %v1097, 30
    %v1099 = vshll.u32 %v1098, 30
    %v1100 = vsub.s32 %v1096, %v1099
    %vm1101 = vcmp.lt.s32.totalorder %v1100, 0
    %v1102 = vsub.s32 0, %v1100
    %v1103 = vsel %vm1101, %v1102, %v1100
    %v1104 = vclz %v1103
    %v1105 = vsub.s32 %v1104, 2
    %vm1106 = vcmp.gt.s32.totalorder 0, %v1105
    %v1107 = vsel %vm1106, 0, %v1105
    %v1108 = vsub.s32 32, %v1107
    %v1109 = vshll.u32 %v1100, %v1107
    %v1110 = vshrl.u32 %v1092, %v1108
    %v1111 = vor.u32 %v1109, %v1110
    %v1112 = vsub.s32 4294967266, %v1107
    %v1113 = vadd.s32 %v1112, 127
    %v1114 = vshll.u32 %v1113, 23
    %v1115 = vor.u32 4788187, %v1114
    %v1116 = vand.u32 2147483647, %v1115
    %v1118 = vcvt.s32.f32 %v1111
    %v1119 = vmul.f32 %v1118, %v1116
    %v1120 = vxor.u32 %v1119, 2147483648
    %v1121 = vsel %vm1038, %v1120, %v1119
    %v1122 = vsub.s32 4, %v1098
    %v1123 = vsel %vm1038, %v1122, %v1098
    %v1124 = vsel %vm1037, %v608, %v1121
    %v1125 = vsel %vm1037, 0, %v1123
    %v1126 = vcosq.f32.pop %v1124
    %v1127 = vsinq.f32.pop %v1124
    %vm1128 = vweird.f32 %v608
    %v1129 = vadd.s32 %v1125, 3
    %v1130 = vand.u32 %v1129, 3
    %vm1131 = vcmp.lt.s32.totalorder %v1130, 2
    %vm1132 = vcmp.eq.s32.totalorder %v1130, 0
    %v1133 = vxor.u32 %v1127, 2147483648
    %v1134 = vsel %vm1132, %v1126, %v1133
    %vm1135 = vcmp.eq.s32.totalorder %v1130, 2
    %v1136 = vxor.u32 %v1126, 2147483648
    %v1137 = vsel %vm1135, %v1136, %v1127
    %v1138 = vsel %vm1131, %v1134, %v1137
    %v1139 = vsel %vm1128, nan, %v1138
    %v1140 = vand.u32 2147483647, %v609
    %vm1141 = vcmp.le.f32.partialorder %v1140, 0.7853982
    %vm1142 = vcmp.lt.s32.totalorder %v609, 0
    %v1143 = vand.u32 %v609, 2139095040
    %v1144 = vshrl.u32 %v1143, 23
    %v1145 = vsub.s32 %v1144, 127
    %v1146 = vand.u32 2147483647, %v609
    %v1147 = vand.u32 %v1146, 8388607
    %v1148 = vor.u32 %v1147, 8388608
    %v1149 = vsub.s32 0, %v1148
    %v1150 = vadd.s32 %v1145, 1
    %vm1151 = vcmp.gt.s32.totalorder %v1150, 0
    %v1152 = vsel %vm1151, %v1150, 0
    %v1153 = vshrl.u32 %v1152, 5
    %v1154 = vand.u32 %v1152, 31
    %v1155 = vsub.s32 32, %v1154
    %v1156 = vshrl.u32 683565275, %v1155
    %v1157 = vshll.u32 683565275, %v1154
    %v1158 = vshrl.u32 2475754826, %v1155
    %v1159 = vor.u32 %v1157, %v1158
    %v1160 = vshll.u32 2475754826, %v1154
    %v1161 = vshrl.u32 2131351028, %v1155
    %v1162 = vor.u32 %v1160, %v1161
    %v1163 = vshll.u32 2131351028, %v1154
    %v1164 = vshrl.u32 2102212464, %v1155
    %v1165 = vor.u32 %v1163, %v1164
    %v1166 = vshll.u32 2102212464, %v1154
    %v1167 = vshrl.u32 920167782, %v1155
    %v1168 = vor.u32 %v1166, %v1167
    %v1169 = vshll.u32 920167782, %v1154
    %v1170 = vshrl.u32 1326507024, %v1155
    %v1171 = vor.u32 %v1169, %v1170
    %vm1172 = vcmp.lt.s32.totalorder %v1153, 1
    %vm1173 = vcmp.lt.s32.totalorder %v1153, 2
    %vm1174 = vcmp.lt.s32.totalorder %v1153, 3
    %vm1175 = vcmp.lt.s32.totalorder %v1153, 4
    %v1176 = vsel %vm1172, %v1156, %v1159
    %v1177 = vsel %vm1175, %v1165, 2102212464
    %v1178 = vsel %vm1174, %v1162, %v1177
    %v1179 = vsel %vm1173, %v1176, %v1178
    %v1180 = vsel %vm1172, %v1159, %v1162
    %v1181 = vsel %vm1175, %v1168, 920167782
    %v1182 = vsel %vm1174, %v1165, %v1181
    %v1183 = vsel %vm1173, %v1180, %v1182
    %v1184 = vsel %vm1172, %v1162, %v1165
    %v1185 = vsel %vm1175, %v1171, 1326507024
    %v1186 = vsel %vm1174, %v1168, %v1185
    %v1187 = vsel %vm1173, %v1184, %v1186
    %v1188 = vshll.u32 %v1148, 8
    %v1189 = vmul.u32.u64.compose %v1188, %v1187
    %v1190 = vextract.low.u32 %v1189
    %v1191 = vextract.high.u32 %v1189
    %v1192 = vmul.u32.u64.compose %v1188, %v1183
    %v1193 = vextract.low.u32 %v1192
    %v1194 = vextract.high.u32 %v1192
    %v1195 = vmul.u32 %v1188, %v1179
    %v1196 = vadd.s32 %v1191, %v1193
    %vm1197 = vc.u32 %v1191, %v1193
    %v1198 = vadd.s32 %v1194, 1
    %v1199 = vsel %vm1197, %v1198, %v1194
    %v1200 = vadd.s32 %v1195, %v1199
    %v1201 = vadd.s32 %v1200, 536870912
    %v1202 = vshrl.u32 %v1201, 30
    %v1203 = vshll.u32 %v1202, 30
    %v1204 = vsub.s32 %v1200, %v1203
    %vm1205 = vcmp.lt.s32.totalorder %v1204, 0
    %v1206 = vsub.s32 0, %v1204
    %v1207 = vsel %vm1205, %v1206, %v1204
    %v1208 = vclz %v1207
    %v1209 = vsub.s32 %v1208, 2
    %vm1210 = vcmp.gt.s32.totalorder 0, %v1209
    %v1211 = vsel %vm1210, 0, %v1209
    %v1212 = vsub.s32 32, %v1211
    %v1213 = vshll.u32 %v1204, %v1211
    %v1214 = vshrl.u32 %v1196, %v1212
    %v1215 = vor.u32 %v1213, %v1214
    %v1216 = vsub.s32 4294967266, %v1211
    %v1217 = vadd.s32 %v1216, 127
    %v1218 = vshll.u32 %v1217, 23
    %v1219 = vor.u32 4788187, %v1218
    %v1220 = vand.u32 2147483647, %v1219
    %v1222 = vcvt.s32.f32 %v1215
    %v1223 = vmul.f32 %v1222, %v1220
    %v1224 = vxor.u32 %v1223, 2147483648
    %v1225 = vsel %vm1142, %v1224, %v1223
    %v1226 = vsub.s32 4, %v1202
    %v1227 = vsel %vm1142, %v1226, %v1202
    %v1228 = vsel %vm1141, %v609, %v1225
    %v1229 = vsel %vm1141, 0, %v1227
    %v1230 = vcosq.f32.pop %v1228
    %v1231 = vsinq.f32.pop %v1228
    %vm1232 = vweird.f32 %v609
    %v1233 = vadd.s32 %v1229, 3
    %v1234 = vand.u32 %v1233, 3
    %vm1235 = vcmp.lt.s32.totalorder %v1234, 2
    %vm1236 = vcmp.eq.s32.totalorder %v1234, 0
    %v1237 = vxor.u32 %v1231, 2147483648
    %v1238 = vsel %vm1236, %v1230, %v1237
    %vm1239 = vcmp.eq.s32.totalorder %v1234, 2
    %v1240 = vxor.u32 %v1230, 2147483648
    %v1241 = vsel %vm1239, %v1240, %v1231
    %v1242 = vsel %vm1235, %v1238, %v1241
    %v1243 = vsel %vm1232, nan, %v1242
    %v1244 = vand.u32 2147483647, %v610
    %vm1245 = vcmp.le.f32.partialorder %v1244, 0.7853982
    %vm1246 = vcmp.lt.s32.totalorder %v610, 0
    %v1247 = vand.u32 %v610, 2139095040
    %v1248 = vshrl.u32 %v1247, 23
    %v1249 = vsub.s32 %v1248, 127
    %v1250 = vand.u32 2147483647, %v610
    %v1251 = vand.u32 %v1250, 8388607
    %v1252 = vor.u32 %v1251, 8388608
    %v1253 = vsub.s32 0, %v1252
    %v1254 = vadd.s32 %v1249, 1
    %vm1255 = vcmp.gt.s32.totalorder %v1254, 0
    %v1256 = vsel %vm1255, %v1254, 0
    %v1257 = vshrl.u32 %v1256, 5
    %v1258 = vand.u32 %v1256, 31
    %v1259 = vsub.s32 32, %v1258
    %v1260 = vshrl.u32 683565275, %v1259
    %v1261 = vshll.u32 683565275, %v1258
    %v1262 = vshrl.u32 2475754826, %v1259
    %v1263 = vor.u32 %v1261, %v1262
    %v1264 = vshll.u32 2475754826, %v1258
    %v1265 = vshrl.u32 2131351028, %v1259
    %v1266 = vor.u32 %v1264, %v1265
    %v1267 = vshll.u32 2131351028, %v1258
    %v1268 = vshrl.u32 2102212464, %v1259
    %v1269 = vor.u32 %v1267, %v1268
    %v1270 = vshll.u32 2102212464, %v1258
    %v1271 = vshrl.u32 920167782, %v1259
    %v1272 = vor.u32 %v1270, %v1271
    %v1273 = vshll.u32 920167782, %v1258
    %v1274 = vshrl.u32 1326507024, %v1259
    %v1275 = vor.u32 %v1273, %v1274
    %vm1276 = vcmp.lt.s32.totalorder %v1257, 1
    %vm1277 = vcmp.lt.s32.totalorder %v1257, 2
    %vm1278 = vcmp.lt.s32.totalorder %v1257, 3
    %vm1279 = vcmp.lt.s32.totalorder %v1257, 4
    %v1280 = vsel %vm1276, %v1260, %v1263
    %v1281 = vsel %vm1279, %v1269, 2102212464
    %v1282 = vsel %vm1278, %v1266, %v1281
    %v1283 = vsel %vm1277, %v1280, %v1282
    %v1284 = vsel %vm1276, %v1263, %v1266
    %v1285 = vsel %vm1279, %v1272, 920167782
    %v1286 = vsel %vm1278, %v1269, %v1285
    %v1287 = vsel %vm1277, %v1284, %v1286
    %v1288 = vsel %vm1276, %v1266, %v1269
    %v1289 = vsel %vm1279, %v1275, 1326507024
    %v1290 = vsel %vm1278, %v1272, %v1289
    %v1291 = vsel %vm1277, %v1288, %v1290
    %v1292 = vshll.u32 %v1252, 8
    %v1293 = vmul.u32.u64.compose %v1292, %v1291
    %v1294 = vextract.low.u32 %v1293
    %v1295 = vextract.high.u32 %v1293
    %v1296 = vmul.u32.u64.compose %v1292, %v1287
    %v1297 = vextract.low.u32 %v1296
    %v1298 = vextract.high.u32 %v1296
    %v1299 = vmul.u32 %v1292, %v1283
    %v1300 = vadd.s32 %v1295, %v1297
    %vm1301 = vc.u32 %v1295, %v1297
    %v1302 = vadd.s32 %v1298, 1
    %v1303 = vsel %vm1301, %v1302, %v1298
    %v1304 = vadd.s32 %v1299, %v1303
    %v1305 = vadd.s32 %v1304, 536870912
    %v1306 = vshrl.u32 %v1305, 30
    %v1307 = vshll.u32 %v1306, 30
    %v1308 = vsub.s32 %v1304, %v1307
    %vm1309 = vcmp.lt.s32.totalorder %v1308, 0
    %v1310 = vsub.s32 0, %v1308
    %v1311 = vsel %vm1309, %v1310, %v1308
    %v1312 = vclz %v1311
    %v1313 = vsub.s32 %v1312, 2
    %vm1314 = vcmp.gt.s32.totalorder 0, %v1313
    %v1315 = vsel %vm1314, 0, %v1313
    %v1316 = vsub.s32 32, %v1315
    %v1317 = vshll.u32 %v1308, %v1315
    %v1318 = vshrl.u32 %v1300, %v1316
    %v1319 = vor.u32 %v1317, %v1318
    %v1320 = vsub.s32 4294967266, %v1315
    %v1321 = vadd.s32 %v1320, 127
    %v1322 = vshll.u32 %v1321, 23
    %v1323 = vor.u32 4788187, %v1322
    %v1324 = vand.u32 2147483647, %v1323
    %v1326 = vcvt.s32.f32 %v1319
    %v1327 = vmul.f32 %v1326, %v1324
    %v1328 = vxor.u32 %v1327, 2147483648
    %v1329 = vsel %vm1246, %v1328, %v1327
    %v1330 = vsub.s32 4, %v1306
    %v1331 = vsel %vm1246, %v1330, %v1306
    %v1332 = vsel %vm1245, %v610, %v1329
    %v1333 = vsel %vm1245, 0, %v1331
    %v1334 = vcosq.f32.pop %v1332
    %v1335 = vsinq.f32.pop %v1332
    %vm1336 = vweird.f32 %v610
    %v1337 = vadd.s32 %v1333, 3
    %v1338 = vand.u32 %v1337, 3
    %vm1339 = vcmp.lt.s32.totalorder %v1338, 2
    %vm1340 = vcmp.eq.s32.totalorder %v1338, 0
    %v1341 = vxor.u32 %v1335, 2147483648
    %v1342 = vsel %vm1340, %v1334, %v1341
    %vm1343 = vcmp.eq.s32.totalorder %v1338, 2
    %v1344 = vxor.u32 %v1334, 2147483648
    %v1345 = vsel %vm1343, %v1344, %v1335
    %v1346 = vsel %vm1339, %v1342, %v1345
    %v1347 = vsel %vm1336, nan, %v1346
    %v1348 = vand.u32 2147483647, %v611
    %vm1349 = vcmp.le.f32.partialorder %v1348, 0.7853982
    %vm1350 = vcmp.lt.s32.totalorder %v611, 0
    %v1351 = vand.u32 %v611, 2139095040
    %v1352 = vshrl.u32 %v1351, 23
    %v1353 = vsub.s32 %v1352, 127
    %v1354 = vand.u32 2147483647, %v611
    %v1355 = vand.u32 %v1354, 8388607
    %v1356 = vor.u32 %v1355, 8388608
    %v1357 = vsub.s32 0, %v1356
    %v1358 = vadd.s32 %v1353, 1
    %vm1359 = vcmp.gt.s32.totalorder %v1358, 0
    %v1360 = vsel %vm1359, %v1358, 0
    %v1361 = vshrl.u32 %v1360, 5
    %v1362 = vand.u32 %v1360, 31
    %v1363 = vsub.s32 32, %v1362
    %v1364 = vshrl.u32 683565275, %v1363
    %v1365 = vshll.u32 683565275, %v1362
    %v1366 = vshrl.u32 2475754826, %v1363
    %v1367 = vor.u32 %v1365, %v1366
    %v1368 = vshll.u32 2475754826, %v1362
    %v1369 = vshrl.u32 2131351028, %v1363
    %v1370 = vor.u32 %v1368, %v1369
    %v1371 = vshll.u32 2131351028, %v1362
    %v1372 = vshrl.u32 2102212464, %v1363
    %v1373 = vor.u32 %v1371, %v1372
    %v1374 = vshll.u32 2102212464, %v1362
    %v1375 = vshrl.u32 920167782, %v1363
    %v1376 = vor.u32 %v1374, %v1375
    %v1377 = vshll.u32 920167782, %v1362
    %v1378 = vshrl.u32 1326507024, %v1363
    %v1379 = vor.u32 %v1377, %v1378
    %vm1380 = vcmp.lt.s32.totalorder %v1361, 1
    %vm1381 = vcmp.lt.s32.totalorder %v1361, 2
    %vm1382 = vcmp.lt.s32.totalorder %v1361, 3
    %vm1383 = vcmp.lt.s32.totalorder %v1361, 4
    %v1384 = vsel %vm1380, %v1364, %v1367
    %v1385 = vsel %vm1383, %v1373, 2102212464
    %v1386 = vsel %vm1382, %v1370, %v1385
    %v1387 = vsel %vm1381, %v1384, %v1386
    %v1388 = vsel %vm1380, %v1367, %v1370
    %v1389 = vsel %vm1383, %v1376, 920167782
    %v1390 = vsel %vm1382, %v1373, %v1389
    %v1391 = vsel %vm1381, %v1388, %v1390
    %v1392 = vsel %vm1380, %v1370, %v1373
    %v1393 = vsel %vm1383, %v1379, 1326507024
    %v1394 = vsel %vm1382, %v1376, %v1393
    %v1395 = vsel %vm1381, %v1392, %v1394
    %v1396 = vshll.u32 %v1356, 8
    %v1397 = vmul.u32.u64.compose %v1396, %v1395
    %v1398 = vextract.low.u32 %v1397
    %v1399 = vextract.high.u32 %v1397
    %v1400 = vmul.u32.u64.compose %v1396, %v1391
    %v1401 = vextract.low.u32 %v1400
    %v1402 = vextract.high.u32 %v1400
    %v1403 = vmul.u32 %v1396, %v1387
    %v1404 = vadd.s32 %v1399, %v1401
    %vm1405 = vc.u32 %v1399, %v1401
    %v1406 = vadd.s32 %v1402, 1
    %v1407 = vsel %vm1405, %v1406, %v1402
    %v1408 = vadd.s32 %v1403, %v1407
    %v1409 = vadd.s32 %v1408, 536870912
    %v1410 = vshrl.u32 %v1409, 30
    %v1411 = vshll.u32 %v1410, 30
    %v1412 = vsub.s32 %v1408, %v1411
    %vm1413 = vcmp.lt.s32.totalorder %v1412, 0
    %v1414 = vsub.s32 0, %v1412
    %v1415 = vsel %vm1413, %v1414, %v1412
    %v1416 = vclz %v1415
    %v1417 = vsub.s32 %v1416, 2
    %vm1418 = vcmp.gt.s32.totalorder 0, %v1417
    %v1419 = vsel %vm1418, 0, %v1417
    %v1420 = vsub.s32 32, %v1419
    %v1421 = vshll.u32 %v1412, %v1419
    %v1422 = vshrl.u32 %v1404, %v1420
    %v1423 = vor.u32 %v1421, %v1422
    %v1424 = vsub.s32 4294967266, %v1419
    %v1425 = vadd.s32 %v1424, 127
    %v1426 = vshll.u32 %v1425, 23
    %v1427 = vor.u32 4788187, %v1426
    %v1428 = vand.u32 2147483647, %v1427
    %v1430 = vcvt.s32.f32 %v1423
    %v1431 = vmul.f32 %v1430, %v1428
    %v1432 = vxor.u32 %v1431, 2147483648
    %v1433 = vsel %vm1350, %v1432, %v1431
    %v1434 = vsub.s32 4, %v1410
    %v1435 = vsel %vm1350, %v1434, %v1410
    %v1436 = vsel %vm1349, %v611, %v1433
    %v1437 = vsel %vm1349, 0, %v1435
    %v1438 = vcosq.f32.pop %v1436
    %v1439 = vsinq.f32.pop %v1436
    %vm1440 = vweird.f32 %v611
    %v1441 = vadd.s32 %v1437, 3
    %v1442 = vand.u32 %v1441, 3
    %vm1443 = vcmp.lt.s32.totalorder %v1442, 2
    %vm1444 = vcmp.eq.s32.totalorder %v1442, 0
    %v1445 = vxor.u32 %v1439, 2147483648
    %v1446 = vsel %vm1444, %v1438, %v1445
    %vm1447 = vcmp.eq.s32.totalorder %v1442, 2
    %v1448 = vxor.u32 %v1438, 2147483648
    %v1449 = vsel %vm1447, %v1448, %v1439
    %v1450 = vsel %vm1443, %v1446, %v1449
    %v1451 = vsel %vm1440, nan, %v1450
    %v1452 = vand.u32 2147483647, %v612
    %vm1453 = vcmp.le.f32.partialorder %v1452, 0.7853982
    %vm1454 = vcmp.lt.s32.totalorder %v612, 0
    %v1455 = vand.u32 %v612, 2139095040
    %v1456 = vshrl.u32 %v1455, 23
    %v1457 = vsub.s32 %v1456, 127
    %v1458 = vand.u32 2147483647, %v612
    %v1459 = vand.u32 %v1458, 8388607
    %v1460 = vor.u32 %v1459, 8388608
    %v1461 = vsub.s32 0, %v1460
    %v1462 = vadd.s32 %v1457, 1
    %vm1463 = vcmp.gt.s32.totalorder %v1462, 0
    %v1464 = vsel %vm1463, %v1462, 0
    %v1465 = vshrl.u32 %v1464, 5
    %v1466 = vand.u32 %v1464, 31
    %v1467 = vsub.s32 32, %v1466
    %v1468 = vshrl.u32 683565275, %v1467
    %v1469 = vshll.u32 683565275, %v1466
    %v1470 = vshrl.u32 2475754826, %v1467
    %v1471 = vor.u32 %v1469, %v1470
    %v1472 = vshll.u32 2475754826, %v1466
    %v1473 = vshrl.u32 2131351028, %v1467
    %v1474 = vor.u32 %v1472, %v1473
    %v1475 = vshll.u32 2131351028, %v1466
    %v1476 = vshrl.u32 2102212464, %v1467
    %v1477 = vor.u32 %v1475, %v1476
    %v1478 = vshll.u32 2102212464, %v1466
    %v1479 = vshrl.u32 920167782, %v1467
    %v1480 = vor.u32 %v1478, %v1479
    %v1481 = vshll.u32 920167782, %v1466
    %v1482 = vshrl.u32 1326507024, %v1467
    %v1483 = vor.u32 %v1481, %v1482
    %vm1484 = vcmp.lt.s32.totalorder %v1465, 1
    %vm1485 = vcmp.lt.s32.totalorder %v1465, 2
    %vm1486 = vcmp.lt.s32.totalorder %v1465, 3
    %vm1487 = vcmp.lt.s32.totalorder %v1465, 4
    %v1488 = vsel %vm1484, %v1468, %v1471
    %v1489 = vsel %vm1487, %v1477, 2102212464
    %v1490 = vsel %vm1486, %v1474, %v1489
    %v1491 = vsel %vm1485, %v1488, %v1490
    %v1492 = vsel %vm1484, %v1471, %v1474
    %v1493 = vsel %vm1487, %v1480, 920167782
    %v1494 = vsel %vm1486, %v1477, %v1493
    %v1495 = vsel %vm1485, %v1492, %v1494
    %v1496 = vsel %vm1484, %v1474, %v1477
    %v1497 = vsel %vm1487, %v1483, 1326507024
    %v1498 = vsel %vm1486, %v1480, %v1497
    %v1499 = vsel %vm1485, %v1496, %v1498
    %v1500 = vshll.u32 %v1460, 8
    %v1501 = vmul.u32.u64.compose %v1500, %v1499
    %v1502 = vextract.low.u32 %v1501
    %v1503 = vextract.high.u32 %v1501
    %v1504 = vmul.u32.u64.compose %v1500, %v1495
    %v1505 = vextract.low.u32 %v1504
    %v1506 = vextract.high.u32 %v1504
    %v1507 = vmul.u32 %v1500, %v1491
    %v1508 = vadd.s32 %v1503, %v1505
    %vm1509 = vc.u32 %v1503, %v1505
    %v1510 = vadd.s32 %v1506, 1
    %v1511 = vsel %vm1509, %v1510, %v1506
    %v1512 = vadd.s32 %v1507, %v1511
    %v1513 = vadd.s32 %v1512, 536870912
    %v1514 = vshrl.u32 %v1513, 30
    %v1515 = vshll.u32 %v1514, 30
    %v1516 = vsub.s32 %v1512, %v1515
    %vm1517 = vcmp.lt.s32.totalorder %v1516, 0
    %v1518 = vsub.s32 0, %v1516
    %v1519 = vsel %vm1517, %v1518, %v1516
    %v1520 = vclz %v1519
    %v1521 = vsub.s32 %v1520, 2
    %vm1522 = vcmp.gt.s32.totalorder 0, %v1521
    %v1523 = vsel %vm1522, 0, %v1521
    %v1524 = vsub.s32 32, %v1523
    %v1525 = vshll.u32 %v1516, %v1523
    %v1526 = vshrl.u32 %v1508, %v1524
    %v1527 = vor.u32 %v1525, %v1526
    %v1528 = vsub.s32 4294967266, %v1523
    %v1529 = vadd.s32 %v1528, 127
    %v1530 = vshll.u32 %v1529, 23
    %v1531 = vor.u32 4788187, %v1530
    %v1532 = vand.u32 2147483647, %v1531
    %v1534 = vcvt.s32.f32 %v1527
    %v1535 = vmul.f32 %v1534, %v1532
    %v1536 = vxor.u32 %v1535, 2147483648
    %v1537 = vsel %vm1454, %v1536, %v1535
    %v1538 = vsub.s32 4, %v1514
    %v1539 = vsel %vm1454, %v1538, %v1514
    %v1540 = vsel %vm1453, %v612, %v1537
    %v1541 = vsel %vm1453, 0, %v1539
    %v1542 = vcosq.f32.pop %v1540
    %v1543 = vsinq.f32.pop %v1540
    %vm1544 = vweird.f32 %v612
    %v1545 = vadd.s32 %v1541, 3
    %v1546 = vand.u32 %v1545, 3
    %vm1547 = vcmp.lt.s32.totalorder %v1546, 2
    %vm1548 = vcmp.eq.s32.totalorder %v1546, 0
    %v1549 = vxor.u32 %v1543, 2147483648
    %v1550 = vsel %vm1548, %v1542, %v1549
    %vm1551 = vcmp.eq.s32.totalorder %v1546, 2
    %v1552 = vxor.u32 %v1542, 2147483648
    %v1553 = vsel %vm1551, %v1552, %v1543
    %v1554 = vsel %vm1547, %v1550, %v1553
    %v1555 = vsel %vm1544, nan, %v1554
    %v1556 = vand.u32 2147483647, %v613
    %vm1557 = vcmp.le.f32.partialorder %v1556, 0.7853982
    %vm1558 = vcmp.lt.s32.totalorder %v613, 0
    %v1559 = vand.u32 %v613, 2139095040
    %v1560 = vshrl.u32 %v1559, 23
    %v1561 = vsub.s32 %v1560, 127
    %v1562 = vand.u32 2147483647, %v613
    %v1563 = vand.u32 %v1562, 8388607
    %v1564 = vor.u32 %v1563, 8388608
    %v1565 = vsub.s32 0, %v1564
    %v1566 = vadd.s32 %v1561, 1
    %vm1567 = vcmp.gt.s32.totalorder %v1566, 0
    %v1568 = vsel %vm1567, %v1566, 0
    %v1569 = vshrl.u32 %v1568, 5
    %v1570 = vand.u32 %v1568, 31
    %v1571 = vsub.s32 32, %v1570
    %v1572 = vshrl.u32 683565275, %v1571
    %v1573 = vshll.u32 683565275, %v1570
    %v1574 = vshrl.u32 2475754826, %v1571
    %v1575 = vor.u32 %v1573, %v1574
    %v1576 = vshll.u32 2475754826, %v1570
    %v1577 = vshrl.u32 2131351028, %v1571
    %v1578 = vor.u32 %v1576, %v1577
    %v1579 = vshll.u32 2131351028, %v1570
    %v1580 = vshrl.u32 2102212464, %v1571
    %v1581 = vor.u32 %v1579, %v1580
    %v1582 = vshll.u32 2102212464, %v1570
    %v1583 = vshrl.u32 920167782, %v1571
    %v1584 = vor.u32 %v1582, %v1583
    %v1585 = vshll.u32 920167782, %v1570
    %v1586 = vshrl.u32 1326507024, %v1571
    %v1587 = vor.u32 %v1585, %v1586
    %vm1588 = vcmp.lt.s32.totalorder %v1569, 1
    %vm1589 = vcmp.lt.s32.totalorder %v1569, 2
    %vm1590 = vcmp.lt.s32.totalorder %v1569, 3
    %vm1591 = vcmp.lt.s32.totalorder %v1569, 4
    %v1592 = vsel %vm1588, %v1572, %v1575
    %v1593 = vsel %vm1591, %v1581, 2102212464
    %v1594 = vsel %vm1590, %v1578, %v1593
    %v1595 = vsel %vm1589, %v1592, %v1594
    %v1596 = vsel %vm1588, %v1575, %v1578
    %v1597 = vsel %vm1591, %v1584, 920167782
    %v1598 = vsel %vm1590, %v1581, %v1597
    %v1599 = vsel %vm1589, %v1596, %v1598
    %v1600 = vsel %vm1588, %v1578, %v1581
    %v1601 = vsel %vm1591, %v1587, 1326507024
    %v1602 = vsel %vm1590, %v1584, %v1601
    %v1603 = vsel %vm1589, %v1600, %v1602
    %v1604 = vshll.u32 %v1564, 8
    %v1605 = vmul.u32.u64.compose %v1604, %v1603
    %v1606 = vextract.low.u32 %v1605
    %v1607 = vextract.high.u32 %v1605
    %v1608 = vmul.u32.u64.compose %v1604, %v1599
    %v1609 = vextract.low.u32 %v1608
    %v1610 = vextract.high.u32 %v1608
    %v1611 = vmul.u32 %v1604, %v1595
    %v1612 = vadd.s32 %v1607, %v1609
    %vm1613 = vc.u32 %v1607, %v1609
    %v1614 = vadd.s32 %v1610, 1
    %v1615 = vsel %vm1613, %v1614, %v1610
    %v1616 = vadd.s32 %v1611, %v1615
    %v1617 = vadd.s32 %v1616, 536870912
    %v1618 = vshrl.u32 %v1617, 30
    %v1619 = vshll.u32 %v1618, 30
    %v1620 = vsub.s32 %v1616, %v1619
    %vm1621 = vcmp.lt.s32.totalorder %v1620, 0
    %v1622 = vsub.s32 0, %v1620
    %v1623 = vsel %vm1621, %v1622, %v1620
    %v1624 = vclz %v1623
    %v1625 = vsub.s32 %v1624, 2
    %vm1626 = vcmp.gt.s32.totalorder 0, %v1625
    %v1627 = vsel %vm1626, 0, %v1625
    %v1628 = vsub.s32 32, %v1627
    %v1629 = vshll.u32 %v1620, %v1627
    %v1630 = vshrl.u32 %v1612, %v1628
    %v1631 = vor.u32 %v1629, %v1630
    %v1632 = vsub.s32 4294967266, %v1627
    %v1633 = vadd.s32 %v1632, 127
    %v1634 = vshll.u32 %v1633, 23
    %v1635 = vor.u32 4788187, %v1634
    %v1636 = vand.u32 2147483647, %v1635
    %v1638 = vcvt.s32.f32 %v1631
    %v1639 = vmul.f32 %v1638, %v1636
    %v1640 = vxor.u32 %v1639, 2147483648
    %v1641 = vsel %vm1558, %v1640, %v1639
    %v1642 = vsub.s32 4, %v1618
    %v1643 = vsel %vm1558, %v1642, %v1618
    %v1644 = vsel %vm1557, %v613, %v1641
    %v1645 = vsel %vm1557, 0, %v1643
    %v1646 = vcosq.f32.pop %v1644
    %v1647 = vsinq.f32.pop %v1644
    %vm1648 = vweird.f32 %v613
    %v1649 = vadd.s32 %v1645, 3
    %v1650 = vand.u32 %v1649, 3
    %vm1651 = vcmp.lt.s32.totalorder %v1650, 2
    %vm1652 = vcmp.eq.s32.totalorder %v1650, 0
    %v1653 = vxor.u32 %v1647, 2147483648
    %v1654 = vsel %vm1652, %v1646, %v1653
    %vm1655 = vcmp.eq.s32.totalorder %v1650, 2
    %v1656 = vxor.u32 %v1646, 2147483648
    %v1657 = vsel %vm1655, %v1656, %v1647
    %v1658 = vsel %vm1651, %v1654, %v1657
    %v1659 = vsel %vm1648, nan, %v1658
    %v1660 = vand.u32 2147483647, %v614
    %vm1661 = vcmp.le.f32.partialorder %v1660, 0.7853982
    %vm1662 = vcmp.lt.s32.totalorder %v614, 0
    %v1663 = vand.u32 %v614, 2139095040
    %v1664 = vshrl.u32 %v1663, 23
    %v1665 = vsub.s32 %v1664, 127
    %v1666 = vand.u32 2147483647, %v614
    %v1667 = vand.u32 %v1666, 8388607
    %v1668 = vor.u32 %v1667, 8388608
    %v1669 = vsub.s32 0, %v1668
    %v1670 = vadd.s32 %v1665, 1
    %vm1671 = vcmp.gt.s32.totalorder %v1670, 0
    %v1672 = vsel %vm1671, %v1670, 0
    %v1673 = vshrl.u32 %v1672, 5
    %v1674 = vand.u32 %v1672, 31
    %v1675 = vsub.s32 32, %v1674
    %v1676 = vshrl.u32 683565275, %v1675
    %v1677 = vshll.u32 683565275, %v1674
    %v1678 = vshrl.u32 2475754826, %v1675
    %v1679 = vor.u32 %v1677, %v1678
    %v1680 = vshll.u32 2475754826, %v1674
    %v1681 = vshrl.u32 2131351028, %v1675
    %v1682 = vor.u32 %v1680, %v1681
    %v1683 = vshll.u32 2131351028, %v1674
    %v1684 = vshrl.u32 2102212464, %v1675
    %v1685 = vor.u32 %v1683, %v1684
    %v1686 = vshll.u32 2102212464, %v1674
    %v1687 = vshrl.u32 920167782, %v1675
    %v1688 = vor.u32 %v1686, %v1687
    %v1689 = vshll.u32 920167782, %v1674
    %v1690 = vshrl.u32 1326507024, %v1675
    %v1691 = vor.u32 %v1689, %v1690
    %vm1692 = vcmp.lt.s32.totalorder %v1673, 1
    %vm1693 = vcmp.lt.s32.totalorder %v1673, 2
    %vm1694 = vcmp.lt.s32.totalorder %v1673, 3
    %vm1695 = vcmp.lt.s32.totalorder %v1673, 4
    %v1696 = vsel %vm1692, %v1676, %v1679
    %v1697 = vsel %vm1695, %v1685, 2102212464
    %v1698 = vsel %vm1694, %v1682, %v1697
    %v1699 = vsel %vm1693, %v1696, %v1698
    %v1700 = vsel %vm1692, %v1679, %v1682
    %v1701 = vsel %vm1695, %v1688, 920167782
    %v1702 = vsel %vm1694, %v1685, %v1701
    %v1703 = vsel %vm1693, %v1700, %v1702
    %v1704 = vsel %vm1692, %v1682, %v1685
    %v1705 = vsel %vm1695, %v1691, 1326507024
    %v1706 = vsel %vm1694, %v1688, %v1705
    %v1707 = vsel %vm1693, %v1704, %v1706
    %v1708 = vshll.u32 %v1668, 8
    %v1709 = vmul.u32.u64.compose %v1708, %v1707
    %v1710 = vextract.low.u32 %v1709
    %v1711 = vextract.high.u32 %v1709
    %v1712 = vmul.u32.u64.compose %v1708, %v1703
    %v1713 = vextract.low.u32 %v1712
    %v1714 = vextract.high.u32 %v1712
    %v1715 = vmul.u32 %v1708, %v1699
    %v1716 = vadd.s32 %v1711, %v1713
    %vm1717 = vc.u32 %v1711, %v1713
    %v1718 = vadd.s32 %v1714, 1
    %v1719 = vsel %vm1717, %v1718, %v1714
    %v1720 = vadd.s32 %v1715, %v1719
    %v1721 = vadd.s32 %v1720, 536870912
    %v1722 = vshrl.u32 %v1721, 30
    %v1723 = vshll.u32 %v1722, 30
    %v1724 = vsub.s32 %v1720, %v1723
    %vm1725 = vcmp.lt.s32.totalorder %v1724, 0
    %v1726 = vsub.s32 0, %v1724
    %v1727 = vsel %vm1725, %v1726, %v1724
    %v1728 = vclz %v1727
    %v1729 = vsub.s32 %v1728, 2
    %vm1730 = vcmp.gt.s32.totalorder 0, %v1729
    %v1731 = vsel %vm1730, 0, %v1729
    %v1732 = vsub.s32 32, %v1731
    %v1733 = vshll.u32 %v1724, %v1731
    %v1734 = vshrl.u32 %v1716, %v1732
    %v1735 = vor.u32 %v1733, %v1734
    %v1736 = vsub.s32 4294967266, %v1731
    %v1737 = vadd.s32 %v1736, 127
    %v1738 = vshll.u32 %v1737, 23
    %v1739 = vor.u32 4788187, %v1738
    %v1740 = vand.u32 2147483647, %v1739
    %v1742 = vcvt.s32.f32 %v1735
    %v1743 = vmul.f32 %v1742, %v1740
    %v1744 = vxor.u32 %v1743, 2147483648
    %v1745 = vsel %vm1662, %v1744, %v1743
    %v1746 = vsub.s32 4, %v1722
    %v1747 = vsel %vm1662, %v1746, %v1722
    %v1748 = vsel %vm1661, %v614, %v1745
    %v1749 = vsel %vm1661, 0, %v1747
    %v1750 = vcosq.f32.pop %v1748
    %v1751 = vsinq.f32.pop %v1748
    %vm1752 = vweird.f32 %v614
    %v1753 = vadd.s32 %v1749, 3
    %v1754 = vand.u32 %v1753, 3
    %vm1755 = vcmp.lt.s32.totalorder %v1754, 2
    %vm1756 = vcmp.eq.s32.totalorder %v1754, 0
    %v1757 = vxor.u32 %v1751, 2147483648
    %v1758 = vsel %vm1756, %v1750, %v1757
    %vm1759 = vcmp.eq.s32.totalorder %v1754, 2
    %v1760 = vxor.u32 %v1750, 2147483648
    %v1761 = vsel %vm1759, %v1760, %v1751
    %v1762 = vsel %vm1755, %v1758, %v1761
    %v1763 = vsel %vm1752, nan, %v1762
    %v1764 = vand.u32 2147483647, %v615
    %vm1765 = vcmp.le.f32.partialorder %v1764, 0.7853982
    %vm1766 = vcmp.lt.s32.totalorder %v615, 0
    %v1767 = vand.u32 %v615, 2139095040
    %v1768 = vshrl.u32 %v1767, 23
    %v1769 = vsub.s32 %v1768, 127
    %v1770 = vand.u32 2147483647, %v615
    %v1771 = vand.u32 %v1770, 8388607
    %v1772 = vor.u32 %v1771, 8388608
    %v1773 = vsub.s32 0, %v1772
    %v1774 = vadd.s32 %v1769, 1
    %vm1775 = vcmp.gt.s32.totalorder %v1774, 0
    %v1776 = vsel %vm1775, %v1774, 0
    %v1777 = vshrl.u32 %v1776, 5
    %v1778 = vand.u32 %v1776, 31
    %v1779 = vsub.s32 32, %v1778
    %v1780 = vshrl.u32 683565275, %v1779
    %v1781 = vshll.u32 683565275, %v1778
    %v1782 = vshrl.u32 2475754826, %v1779
    %v1783 = vor.u32 %v1781, %v1782
    %v1784 = vshll.u32 2475754826, %v1778
    %v1785 = vshrl.u32 2131351028, %v1779
    %v1786 = vor.u32 %v1784, %v1785
    %v1787 = vshll.u32 2131351028, %v1778
    %v1788 = vshrl.u32 2102212464, %v1779
    %v1789 = vor.u32 %v1787, %v1788
    %v1790 = vshll.u32 2102212464, %v1778
    %v1791 = vshrl.u32 920167782, %v1779
    %v1792 = vor.u32 %v1790, %v1791
    %v1793 = vshll.u32 920167782, %v1778
    %v1794 = vshrl.u32 1326507024, %v1779
    %v1795 = vor.u32 %v1793, %v1794
    %vm1796 = vcmp.lt.s32.totalorder %v1777, 1
    %vm1797 = vcmp.lt.s32.totalorder %v1777, 2
    %vm1798 = vcmp.lt.s32.totalorder %v1777, 3
    %vm1799 = vcmp.lt.s32.totalorder %v1777, 4
    %v1800 = vsel %vm1796, %v1780, %v1783
    %v1801 = vsel %vm1799, %v1789, 2102212464
    %v1802 = vsel %vm1798, %v1786, %v1801
    %v1803 = vsel %vm1797, %v1800, %v1802
    %v1804 = vsel %vm1796, %v1783, %v1786
    %v1805 = vsel %vm1799, %v1792, 920167782
    %v1806 = vsel %vm1798, %v1789, %v1805
    %v1807 = vsel %vm1797, %v1804, %v1806
    %v1808 = vsel %vm1796, %v1786, %v1789
    %v1809 = vsel %vm1799, %v1795, 1326507024
    %v1810 = vsel %vm1798, %v1792, %v1809
    %v1811 = vsel %vm1797, %v1808, %v1810
    %v1812 = vshll.u32 %v1772, 8
    %v1813 = vmul.u32.u64.compose %v1812, %v1811
    %v1814 = vextract.low.u32 %v1813
    %v1815 = vextract.high.u32 %v1813
    %v1816 = vmul.u32.u64.compose %v1812, %v1807
    %v1817 = vextract.low.u32 %v1816
    %v1818 = vextract.high.u32 %v1816
    %v1819 = vmul.u32 %v1812, %v1803
    %v1820 = vadd.s32 %v1815, %v1817
    %vm1821 = vc.u32 %v1815, %v1817
    %v1822 = vadd.s32 %v1818, 1
    %v1823 = vsel %vm1821, %v1822, %v1818
    %v1824 = vadd.s32 %v1819, %v1823
    %v1825 = vadd.s32 %v1824, 536870912
    %v1826 = vshrl.u32 %v1825, 30
    %v1827 = vshll.u32 %v1826, 30
    %v1828 = vsub.s32 %v1824, %v1827
    %vm1829 = vcmp.lt.s32.totalorder %v1828, 0
    %v1830 = vsub.s32 0, %v1828
    %v1831 = vsel %vm1829, %v1830, %v1828
    %v1832 = vclz %v1831
    %v1833 = vsub.s32 %v1832, 2
    %vm1834 = vcmp.gt.s32.totalorder 0, %v1833
    %v1835 = vsel %vm1834, 0, %v1833
    %v1836 = vsub.s32 32, %v1835
    %v1837 = vshll.u32 %v1828, %v1835
    %v1838 = vshrl.u32 %v1820, %v1836
    %v1839 = vor.u32 %v1837, %v1838
    %v1840 = vsub.s32 4294967266, %v1835
    %v1841 = vadd.s32 %v1840, 127
    %v1842 = vshll.u32 %v1841, 23
    %v1843 = vor.u32 4788187, %v1842
    %v1844 = vand.u32 2147483647, %v1843
    %v1846 = vcvt.s32.f32 %v1839
    %v1847 = vmul.f32 %v1846, %v1844
    %v1848 = vxor.u32 %v1847, 2147483648
    %v1849 = vsel %vm1766, %v1848, %v1847
    %v1850 = vsub.s32 4, %v1826
    %v1851 = vsel %vm1766, %v1850, %v1826
    %v1852 = vsel %vm1765, %v615, %v1849
    %v1853 = vsel %vm1765, 0, %v1851
    %v1854 = vcosq.f32.pop %v1852
    %v1855 = vsinq.f32.pop %v1852
    %vm1856 = vweird.f32 %v615
    %v1857 = vadd.s32 %v1853, 3
    %v1858 = vand.u32 %v1857, 3
    %vm1859 = vcmp.lt.s32.totalorder %v1858, 2
    %vm1860 = vcmp.eq.s32.totalorder %v1858, 0
    %v1861 = vxor.u32 %v1855, 2147483648
    %v1862 = vsel %vm1860, %v1854, %v1861
    %vm1863 = vcmp.eq.s32.totalorder %v1858, 2
    %v1864 = vxor.u32 %v1854, 2147483648
    %v1865 = vsel %vm1863, %v1864, %v1855
    %v1866 = vsel %vm1859, %v1862, %v1865
    %v1867 = vsel %vm1856, nan, %v1866
    %v1868 = vand.u32 2147483647, %v616
    %vm1869 = vcmp.le.f32.partialorder %v1868, 0.7853982
    %vm1870 = vcmp.lt.s32.totalorder %v616, 0
    %v1871 = vand.u32 %v616, 2139095040
    %v1872 = vshrl.u32 %v1871, 23
    %v1873 = vsub.s32 %v1872, 127
    %v1874 = vand.u32 2147483647, %v616
    %v1875 = vand.u32 %v1874, 8388607
    %v1876 = vor.u32 %v1875, 8388608
    %v1877 = vsub.s32 0, %v1876
    %v1878 = vadd.s32 %v1873, 1
    %vm1879 = vcmp.gt.s32.totalorder %v1878, 0
    %v1880 = vsel %vm1879, %v1878, 0
    %v1881 = vshrl.u32 %v1880, 5
    %v1882 = vand.u32 %v1880, 31
    %v1883 = vsub.s32 32, %v1882
    %v1884 = vshrl.u32 683565275, %v1883
    %v1885 = vshll.u32 683565275, %v1882
    %v1886 = vshrl.u32 2475754826, %v1883
    %v1887 = vor.u32 %v1885, %v1886
    %v1888 = vshll.u32 2475754826, %v1882
    %v1889 = vshrl.u32 2131351028, %v1883
    %v1890 = vor.u32 %v1888, %v1889
    %v1891 = vshll.u32 2131351028, %v1882
    %v1892 = vshrl.u32 2102212464, %v1883
    %v1893 = vor.u32 %v1891, %v1892
    %v1894 = vshll.u32 2102212464, %v1882
    %v1895 = vshrl.u32 920167782, %v1883
    %v1896 = vor.u32 %v1894, %v1895
    %v1897 = vshll.u32 920167782, %v1882
    %v1898 = vshrl.u32 1326507024, %v1883
    %v1899 = vor.u32 %v1897, %v1898
    %vm1900 = vcmp.lt.s32.totalorder %v1881, 1
    %vm1901 = vcmp.lt.s32.totalorder %v1881, 2
    %vm1902 = vcmp.lt.s32.totalorder %v1881, 3
    %vm1903 = vcmp.lt.s32.totalorder %v1881, 4
    %v1904 = vsel %vm1900, %v1884, %v1887
    %v1905 = vsel %vm1903, %v1893, 2102212464
    %v1906 = vsel %vm1902, %v1890, %v1905
    %v1907 = vsel %vm1901, %v1904, %v1906
    %v1908 = vsel %vm1900, %v1887, %v1890
    %v1909 = vsel %vm1903, %v1896, 920167782
    %v1910 = vsel %vm1902, %v1893, %v1909
    %v1911 = vsel %vm1901, %v1908, %v1910
    %v1912 = vsel %vm1900, %v1890, %v1893
    %v1913 = vsel %vm1903, %v1899, 1326507024
    %v1914 = vsel %vm1902, %v1896, %v1913
    %v1915 = vsel %vm1901, %v1912, %v1914
    %v1916 = vshll.u32 %v1876, 8
    %v1917 = vmul.u32.u64.compose %v1916, %v1915
    %v1918 = vextract.low.u32 %v1917
    %v1919 = vextract.high.u32 %v1917
    %v1920 = vmul.u32.u64.compose %v1916, %v1911
    %v1921 = vextract.low.u32 %v1920
    %v1922 = vextract.high.u32 %v1920
    %v1923 = vmul.u32 %v1916, %v1907
    %v1924 = vadd.s32 %v1919, %v1921
    %vm1925 = vc.u32 %v1919, %v1921
    %v1926 = vadd.s32 %v1922, 1
    %v1927 = vsel %vm1925, %v1926, %v1922
    %v1928 = vadd.s32 %v1923, %v1927
    %v1929 = vadd.s32 %v1928, 536870912
    %v1930 = vshrl.u32 %v1929, 30
    %v1931 = vshll.u32 %v1930, 30
    %v1932 = vsub.s32 %v1928, %v1931
    %vm1933 = vcmp.lt.s32.totalorder %v1932, 0
    %v1934 = vsub.s32 0, %v1932
    %v1935 = vsel %vm1933, %v1934, %v1932
    %v1936 = vclz %v1935
    %v1937 = vsub.s32 %v1936, 2
    %vm1938 = vcmp.gt.s32.totalorder 0, %v1937
    %v1939 = vsel %vm1938, 0, %v1937
    %v1940 = vsub.s32 32, %v1939
    %v1941 = vshll.u32 %v1932, %v1939
    %v1942 = vshrl.u32 %v1924, %v1940
    %v1943 = vor.u32 %v1941, %v1942
    %v1944 = vsub.s32 4294967266, %v1939
    %v1945 = vadd.s32 %v1944, 127
    %v1946 = vshll.u32 %v1945, 23
    %v1947 = vor.u32 4788187, %v1946
    %v1948 = vand.u32 2147483647, %v1947
    %v1950 = vcvt.s32.f32 %v1943
    %v1951 = vmul.f32 %v1950, %v1948
    %v1952 = vxor.u32 %v1951, 2147483648
    %v1953 = vsel %vm1870, %v1952, %v1951
    %v1954 = vsub.s32 4, %v1930
    %v1955 = vsel %vm1870, %v1954, %v1930
    %v1956 = vsel %vm1869, %v616, %v1953
    %v1957 = vsel %vm1869, 0, %v1955
    %v1958 = vcosq.f32.pop %v1956
    %v1959 = vsinq.f32.pop %v1956
    %vm1960 = vweird.f32 %v616
    %v1961 = vadd.s32 %v1957, 3
    %v1962 = vand.u32 %v1961, 3
    %vm1963 = vcmp.lt.s32.totalorder %v1962, 2
    %vm1964 = vcmp.eq.s32.totalorder %v1962, 0
    %v1965 = vxor.u32 %v1959, 2147483648
    %v1966 = vsel %vm1964, %v1958, %v1965
    %vm1967 = vcmp.eq.s32.totalorder %v1962, 2
    %v1968 = vxor.u32 %v1958, 2147483648
    %v1969 = vsel %vm1967, %v1968, %v1959
    %v1970 = vsel %vm1963, %v1966, %v1969
    %v1971 = vsel %vm1960, nan, %v1970
    %v1972 = vand.u32 2147483647, %v617
    %vm1973 = vcmp.le.f32.partialorder %v1972, 0.7853982
    %vm1974 = vcmp.lt.s32.totalorder %v617, 0
    %v1975 = vand.u32 %v617, 2139095040
    %v1976 = vshrl.u32 %v1975, 23
    %v1977 = vsub.s32 %v1976, 127
    %v1978 = vand.u32 2147483647, %v617
    %v1979 = vand.u32 %v1978, 8388607
    %v1980 = vor.u32 %v1979, 8388608
    %v1981 = vsub.s32 0, %v1980
    %v1982 = vadd.s32 %v1977, 1
    %vm1983 = vcmp.gt.s32.totalorder %v1982, 0
    %v1984 = vsel %vm1983, %v1982, 0
    %v1985 = vshrl.u32 %v1984, 5
    %v1986 = vand.u32 %v1984, 31
    %v1987 = vsub.s32 32, %v1986
    %v1988 = vshrl.u32 683565275, %v1987
    %v1989 = vshll.u32 683565275, %v1986
    %v1990 = vshrl.u32 2475754826, %v1987
    %v1991 = vor.u32 %v1989, %v1990
    %v1992 = vshll.u32 2475754826, %v1986
    %v1993 = vshrl.u32 2131351028, %v1987
    %v1994 = vor.u32 %v1992, %v1993
    %v1995 = vshll.u32 2131351028, %v1986
    %v1996 = vshrl.u32 2102212464, %v1987
    %v1997 = vor.u32 %v1995, %v1996
    %v1998 = vshll.u32 2102212464, %v1986
    %v1999 = vshrl.u32 920167782, %v1987
    %v2000 = vor.u32 %v1998, %v1999
    %v2001 = vshll.u32 920167782, %v1986
    %v2002 = vshrl.u32 1326507024, %v1987
    %v2003 = vor.u32 %v2001, %v2002
    %vm2004 = vcmp.lt.s32.totalorder %v1985, 1
    %vm2005 = vcmp.lt.s32.totalorder %v1985, 2
    %vm2006 = vcmp.lt.s32.totalorder %v1985, 3
    %vm2007 = vcmp.lt.s32.totalorder %v1985, 4
    %v2008 = vsel %vm2004, %v1988, %v1991
    %v2009 = vsel %vm2007, %v1997, 2102212464
    %v2010 = vsel %vm2006, %v1994, %v2009
    %v2011 = vsel %vm2005, %v2008, %v2010
    %v2012 = vsel %vm2004, %v1991, %v1994
    %v2013 = vsel %vm2007, %v2000, 920167782
    %v2014 = vsel %vm2006, %v1997, %v2013
    %v2015 = vsel %vm2005, %v2012, %v2014
    %v2016 = vsel %vm2004, %v1994, %v1997
    %v2017 = vsel %vm2007, %v2003, 1326507024
    %v2018 = vsel %vm2006, %v2000, %v2017
    %v2019 = vsel %vm2005, %v2016, %v2018
    %v2020 = vshll.u32 %v1980, 8
    %v2021 = vmul.u32.u64.compose %v2020, %v2019
    %v2022 = vextract.low.u32 %v2021
    %v2023 = vextract.high.u32 %v2021
    %v2024 = vmul.u32.u64.compose %v2020, %v2015
    %v2025 = vextract.low.u32 %v2024
    %v2026 = vextract.high.u32 %v2024
    %v2027 = vmul.u32 %v2020, %v2011
    %v2028 = vadd.s32 %v2023, %v2025
    %vm2029 = vc.u32 %v2023, %v2025
    %v2030 = vadd.s32 %v2026, 1
    %v2031 = vsel %vm2029, %v2030, %v2026
    %v2032 = vadd.s32 %v2027, %v2031
    %v2033 = vadd.s32 %v2032, 536870912
    %v2034 = vshrl.u32 %v2033, 30
    %v2035 = vshll.u32 %v2034, 30
    %v2036 = vsub.s32 %v2032, %v2035
    %vm2037 = vcmp.lt.s32.totalorder %v2036, 0
    %v2038 = vsub.s32 0, %v2036
    %v2039 = vsel %vm2037, %v2038, %v2036
    %v2040 = vclz %v2039
    %v2041 = vsub.s32 %v2040, 2
    %vm2042 = vcmp.gt.s32.totalorder 0, %v2041
    %v2043 = vsel %vm2042, 0, %v2041
    %v2044 = vsub.s32 32, %v2043
    %v2045 = vshll.u32 %v2036, %v2043
    %v2046 = vshrl.u32 %v2028, %v2044
    %v2047 = vor.u32 %v2045, %v2046
    %v2048 = vsub.s32 4294967266, %v2043
    %v2049 = vadd.s32 %v2048, 127
    %v2050 = vshll.u32 %v2049, 23
    %v2051 = vor.u32 4788187, %v2050
    %v2052 = vand.u32 2147483647, %v2051
    %v2054 = vcvt.s32.f32 %v2047
    %v2055 = vmul.f32 %v2054, %v2052
    %v2056 = vxor.u32 %v2055, 2147483648
    %v2057 = vsel %vm1974, %v2056, %v2055
    %v2058 = vsub.s32 4, %v2034
    %v2059 = vsel %vm1974, %v2058, %v2034
    %v2060 = vsel %vm1973, %v617, %v2057
    %v2061 = vsel %vm1973, 0, %v2059
    %v2062 = vcosq.f32.pop %v2060
    %v2063 = vsinq.f32.pop %v2060
    %vm2064 = vweird.f32 %v617
    %v2065 = vadd.s32 %v2061, 3
    %v2066 = vand.u32 %v2065, 3
    %vm2067 = vcmp.lt.s32.totalorder %v2066, 2
    %vm2068 = vcmp.eq.s32.totalorder %v2066, 0
    %v2069 = vxor.u32 %v2063, 2147483648
    %v2070 = vsel %vm2068, %v2062, %v2069
    %vm2071 = vcmp.eq.s32.totalorder %v2066, 2
    %v2072 = vxor.u32 %v2062, 2147483648
    %v2073 = vsel %vm2071, %v2072, %v2063
    %v2074 = vsel %vm2067, %v2070, %v2073
    %v2075 = vsel %vm2064, nan, %v2074
    %v2076 = vand.u32 2147483647, %v618
    %vm2077 = vcmp.le.f32.partialorder %v2076, 0.7853982
    %vm2078 = vcmp.lt.s32.totalorder %v618, 0
    %v2079 = vand.u32 %v618, 2139095040
    %v2080 = vshrl.u32 %v2079, 23
    %v2081 = vsub.s32 %v2080, 127
    %v2082 = vand.u32 2147483647, %v618
    %v2083 = vand.u32 %v2082, 8388607
    %v2084 = vor.u32 %v2083, 8388608
    %v2085 = vsub.s32 0, %v2084
    %v2086 = vadd.s32 %v2081, 1
    %vm2087 = vcmp.gt.s32.totalorder %v2086, 0
    %v2088 = vsel %vm2087, %v2086, 0
    %v2089 = vshrl.u32 %v2088, 5
    %v2090 = vand.u32 %v2088, 31
    %v2091 = vsub.s32 32, %v2090
    %v2092 = vshrl.u32 683565275, %v2091
    %v2093 = vshll.u32 683565275, %v2090
    %v2094 = vshrl.u32 2475754826, %v2091
    %v2095 = vor.u32 %v2093, %v2094
    %v2096 = vshll.u32 2475754826, %v2090
    %v2097 = vshrl.u32 2131351028, %v2091
    %v2098 = vor.u32 %v2096, %v2097
    %v2099 = vshll.u32 2131351028, %v2090
    %v2100 = vshrl.u32 2102212464, %v2091
    %v2101 = vor.u32 %v2099, %v2100
    %v2102 = vshll.u32 2102212464, %v2090
    %v2103 = vshrl.u32 920167782, %v2091
    %v2104 = vor.u32 %v2102, %v2103
    %v2105 = vshll.u32 920167782, %v2090
    %v2106 = vshrl.u32 1326507024, %v2091
    %v2107 = vor.u32 %v2105, %v2106
    %vm2108 = vcmp.lt.s32.totalorder %v2089, 1
    %vm2109 = vcmp.lt.s32.totalorder %v2089, 2
    %vm2110 = vcmp.lt.s32.totalorder %v2089, 3
    %vm2111 = vcmp.lt.s32.totalorder %v2089, 4
    %v2112 = vsel %vm2108, %v2092, %v2095
    %v2113 = vsel %vm2111, %v2101, 2102212464
    %v2114 = vsel %vm2110, %v2098, %v2113
    %v2115 = vsel %vm2109, %v2112, %v2114
    %v2116 = vsel %vm2108, %v2095, %v2098
    %v2117 = vsel %vm2111, %v2104, 920167782
    %v2118 = vsel %vm2110, %v2101, %v2117
    %v2119 = vsel %vm2109, %v2116, %v2118
    %v2120 = vsel %vm2108, %v2098, %v2101
    %v2121 = vsel %vm2111, %v2107, 1326507024
    %v2122 = vsel %vm2110, %v2104, %v2121
    %v2123 = vsel %vm2109, %v2120, %v2122
    %v2124 = vshll.u32 %v2084, 8
    %v2125 = vmul.u32.u64.compose %v2124, %v2123
    %v2126 = vextract.low.u32 %v2125
    %v2127 = vextract.high.u32 %v2125
    %v2128 = vmul.u32.u64.compose %v2124, %v2119
    %v2129 = vextract.low.u32 %v2128
    %v2130 = vextract.high.u32 %v2128
    %v2131 = vmul.u32 %v2124, %v2115
    %v2132 = vadd.s32 %v2127, %v2129
    %vm2133 = vc.u32 %v2127, %v2129
    %v2134 = vadd.s32 %v2130, 1
    %v2135 = vsel %vm2133, %v2134, %v2130
    %v2136 = vadd.s32 %v2131, %v2135
    %v2137 = vadd.s32 %v2136, 536870912
    %v2138 = vshrl.u32 %v2137, 30
    %v2139 = vshll.u32 %v2138, 30
    %v2140 = vsub.s32 %v2136, %v2139
    %vm2141 = vcmp.lt.s32.totalorder %v2140, 0
    %v2142 = vsub.s32 0, %v2140
    %v2143 = vsel %vm2141, %v2142, %v2140
    %v2144 = vclz %v2143
    %v2145 = vsub.s32 %v2144, 2
    %vm2146 = vcmp.gt.s32.totalorder 0, %v2145
    %v2147 = vsel %vm2146, 0, %v2145
    %v2148 = vsub.s32 32, %v2147
    %v2149 = vshll.u32 %v2140, %v2147
    %v2150 = vshrl.u32 %v2132, %v2148
    %v2151 = vor.u32 %v2149, %v2150
    %v2152 = vsub.s32 4294967266, %v2147
    %v2153 = vadd.s32 %v2152, 127
    %v2154 = vshll.u32 %v2153, 23
    %v2155 = vor.u32 4788187, %v2154
    %v2156 = vand.u32 2147483647, %v2155
    %v2158 = vcvt.s32.f32 %v2151
    %v2159 = vmul.f32 %v2158, %v2156
    %v2160 = vxor.u32 %v2159, 2147483648
    %v2161 = vsel %vm2078, %v2160, %v2159
    %v2162 = vsub.s32 4, %v2138
    %v2163 = vsel %vm2078, %v2162, %v2138
    %v2164 = vsel %vm2077, %v618, %v2161
    %v2165 = vsel %vm2077, 0, %v2163
    %v2166 = vcosq.f32.pop %v2164
    %v2167 = vsinq.f32.pop %v2164
    %vm2168 = vweird.f32 %v618
    %v2169 = vadd.s32 %v2165, 3
    %v2170 = vand.u32 %v2169, 3
    %vm2171 = vcmp.lt.s32.totalorder %v2170, 2
    %vm2172 = vcmp.eq.s32.totalorder %v2170, 0
    %v2173 = vxor.u32 %v2167, 2147483648
    %v2174 = vsel %vm2172, %v2166, %v2173
    %vm2175 = vcmp.eq.s32.totalorder %v2170, 2
    %v2176 = vxor.u32 %v2166, 2147483648
    %v2177 = vsel %vm2175, %v2176, %v2167
    %v2178 = vsel %vm2171, %v2174, %v2177
    %v2179 = vsel %vm2168, nan, %v2178
    %v2180 = vand.u32 2147483647, %v619
    %vm2181 = vcmp.le.f32.partialorder %v2180, 0.7853982
    %vm2182 = vcmp.lt.s32.totalorder %v619, 0
    %v2183 = vand.u32 %v619, 2139095040
    %v2184 = vshrl.u32 %v2183, 23
    %v2185 = vsub.s32 %v2184, 127
    %v2186 = vand.u32 2147483647, %v619
    %v2187 = vand.u32 %v2186, 8388607
    %v2188 = vor.u32 %v2187, 8388608
    %v2189 = vsub.s32 0, %v2188
    %v2190 = vadd.s32 %v2185, 1
    %vm2191 = vcmp.gt.s32.totalorder %v2190, 0
    %v2192 = vsel %vm2191, %v2190, 0
    %v2193 = vshrl.u32 %v2192, 5
    %v2194 = vand.u32 %v2192, 31
    %v2195 = vsub.s32 32, %v2194
    %v2196 = vshrl.u32 683565275, %v2195
    %v2197 = vshll.u32 683565275, %v2194
    %v2198 = vshrl.u32 2475754826, %v2195
    %v2199 = vor.u32 %v2197, %v2198
    %v2200 = vshll.u32 2475754826, %v2194
    %v2201 = vshrl.u32 2131351028, %v2195
    %v2202 = vor.u32 %v2200, %v2201
    %v2203 = vshll.u32 2131351028, %v2194
    %v2204 = vshrl.u32 2102212464, %v2195
    %v2205 = vor.u32 %v2203, %v2204
    %v2206 = vshll.u32 2102212464, %v2194
    %v2207 = vshrl.u32 920167782, %v2195
    %v2208 = vor.u32 %v2206, %v2207
    %v2209 = vshll.u32 920167782, %v2194
    %v2210 = vshrl.u32 1326507024, %v2195
    %v2211 = vor.u32 %v2209, %v2210
    %vm2212 = vcmp.lt.s32.totalorder %v2193, 1
    %vm2213 = vcmp.lt.s32.totalorder %v2193, 2
    %vm2214 = vcmp.lt.s32.totalorder %v2193, 3
    %vm2215 = vcmp.lt.s32.totalorder %v2193, 4
    %v2216 = vsel %vm2212, %v2196, %v2199
    %v2217 = vsel %vm2215, %v2205, 2102212464
    %v2218 = vsel %vm2214, %v2202, %v2217
    %v2219 = vsel %vm2213, %v2216, %v2218
    %v2220 = vsel %vm2212, %v2199, %v2202
    %v2221 = vsel %vm2215, %v2208, 920167782
    %v2222 = vsel %vm2214, %v2205, %v2221
    %v2223 = vsel %vm2213, %v2220, %v2222
    %v2224 = vsel %vm2212, %v2202, %v2205
    %v2225 = vsel %vm2215, %v2211, 1326507024
    %v2226 = vsel %vm2214, %v2208, %v2225
    %v2227 = vsel %vm2213, %v2224, %v2226
    %v2228 = vshll.u32 %v2188, 8
    %v2229 = vmul.u32.u64.compose %v2228, %v2227
    %v2230 = vextract.low.u32 %v2229
    %v2231 = vextract.high.u32 %v2229
    %v2232 = vmul.u32.u64.compose %v2228, %v2223
    %v2233 = vextract.low.u32 %v2232
    %v2234 = vextract.high.u32 %v2232
    %v2235 = vmul.u32 %v2228, %v2219
    %v2236 = vadd.s32 %v2231, %v2233
    %vm2237 = vc.u32 %v2231, %v2233
    %v2238 = vadd.s32 %v2234, 1
    %v2239 = vsel %vm2237, %v2238, %v2234
    %v2240 = vadd.s32 %v2235, %v2239
    %v2241 = vadd.s32 %v2240, 536870912
    %v2242 = vshrl.u32 %v2241, 30
    %v2243 = vshll.u32 %v2242, 30
    %v2244 = vsub.s32 %v2240, %v2243
    %vm2245 = vcmp.lt.s32.totalorder %v2244, 0
    %v2246 = vsub.s32 0, %v2244
    %v2247 = vsel %vm2245, %v2246, %v2244
    %v2248 = vclz %v2247
    %v2249 = vsub.s32 %v2248, 2
    %vm2250 = vcmp.gt.s32.totalorder 0, %v2249
    %v2251 = vsel %vm2250, 0, %v2249
    %v2252 = vsub.s32 32, %v2251
    %v2253 = vshll.u32 %v2244, %v2251
    %v2254 = vshrl.u32 %v2236, %v2252
    %v2255 = vor.u32 %v2253, %v2254
    %v2256 = vsub.s32 4294967266, %v2251
    %v2257 = vadd.s32 %v2256, 127
    %v2258 = vshll.u32 %v2257, 23
    %v2259 = vor.u32 4788187, %v2258
    %v2260 = vand.u32 2147483647, %v2259
    %v2262 = vcvt.s32.f32 %v2255
    %v2263 = vmul.f32 %v2262, %v2260
    %v2264 = vxor.u32 %v2263, 2147483648
    %v2265 = vsel %vm2182, %v2264, %v2263
    %v2266 = vsub.s32 4, %v2242
    %v2267 = vsel %vm2182, %v2266, %v2242
    %v2268 = vsel %vm2181, %v619, %v2265
    %v2269 = vsel %vm2181, 0, %v2267
    %v2270 = vcosq.f32.pop %v2268
    %v2271 = vsinq.f32.pop %v2268
    %vm2272 = vweird.f32 %v619
    %v2273 = vadd.s32 %v2269, 3
    %v2274 = vand.u32 %v2273, 3
    %vm2275 = vcmp.lt.s32.totalorder %v2274, 2
    %vm2276 = vcmp.eq.s32.totalorder %v2274, 0
    %v2277 = vxor.u32 %v2271, 2147483648
    %v2278 = vsel %vm2276, %v2270, %v2277
    %vm2279 = vcmp.eq.s32.totalorder %v2274, 2
    %v2280 = vxor.u32 %v2270, 2147483648
    %v2281 = vsel %vm2279, %v2280, %v2271
    %v2282 = vsel %vm2275, %v2278, %v2281
    %v2283 = vsel %vm2272, nan, %v2282
    %v2284 = vmul.f32 %v286, %v723
    %v2285 = vmul.f32 %v286, %v827
    %v2286 = vmul.f32 %v286, %v931
    %v2287 = vmul.f32 %v286, %v1035
    %v2288 = vmul.f32 %v286, %v1139
    %v2289 = vmul.f32 %v286, %v1243
    %v2290 = vmul.f32 %v286, %v1347
    %v2291 = vmul.f32 %v286, %v1451
    %v2292 = vmul.f32 %v286, %v1555
    %v2293 = vmul.f32 %v286, %v1659
    %v2294 = vmul.f32 %v286, %v1763
    %v2295 = vmul.f32 %v286, %v1867
    %v2296 = vmul.f32 %v286, %v1971
    %v2297 = vmul.f32 %v286, %v2075
    %v2298 = vmul.f32 %v286, %v2179
    %v2299 = vmul.f32 %v286, %v2283
    %v2300 = vand.u32 2147483647, %v604
    %vm2301 = vcmp.le.f32.partialorder %v2300, 0.7853982
    %vm2302 = vcmp.lt.s32.totalorder %v604, 0
    %v2303 = vand.u32 %v604, 2139095040
    %v2304 = vshrl.u32 %v2303, 23
    %v2305 = vsub.s32 %v2304, 127
    %v2306 = vand.u32 2147483647, %v604
    %v2307 = vand.u32 %v2306, 8388607
    %v2308 = vor.u32 %v2307, 8388608
    %v2309 = vsub.s32 0, %v2308
    %v2310 = vadd.s32 %v2305, 1
    %vm2311 = vcmp.gt.s32.totalorder %v2310, 0
    %v2312 = vsel %vm2311, %v2310, 0
    %v2313 = vshrl.u32 %v2312, 5
    %v2314 = vand.u32 %v2312, 31
    %v2315 = vsub.s32 32, %v2314
    %v2316 = vshrl.u32 683565275, %v2315
    %v2317 = vshll.u32 683565275, %v2314
    %v2318 = vshrl.u32 2475754826, %v2315
    %v2319 = vor.u32 %v2317, %v2318
    %v2320 = vshll.u32 2475754826, %v2314
    %v2321 = vshrl.u32 2131351028, %v2315
    %v2322 = vor.u32 %v2320, %v2321
    %v2323 = vshll.u32 2131351028, %v2314
    %v2324 = vshrl.u32 2102212464, %v2315
    %v2325 = vor.u32 %v2323, %v2324
    %v2326 = vshll.u32 2102212464, %v2314
    %v2327 = vshrl.u32 920167782, %v2315
    %v2328 = vor.u32 %v2326, %v2327
    %v2329 = vshll.u32 920167782, %v2314
    %v2330 = vshrl.u32 1326507024, %v2315
    %v2331 = vor.u32 %v2329, %v2330
    %vm2332 = vcmp.lt.s32.totalorder %v2313, 1
    %vm2333 = vcmp.lt.s32.totalorder %v2313, 2
    %vm2334 = vcmp.lt.s32.totalorder %v2313, 3
    %vm2335 = vcmp.lt.s32.totalorder %v2313, 4
    %v2336 = vsel %vm2332, %v2316, %v2319
    %v2337 = vsel %vm2335, %v2325, 2102212464
    %v2338 = vsel %vm2334, %v2322, %v2337
    %v2339 = vsel %vm2333, %v2336, %v2338
    %v2340 = vsel %vm2332, %v2319, %v2322
    %v2341 = vsel %vm2335, %v2328, 920167782
    %v2342 = vsel %vm2334, %v2325, %v2341
    %v2343 = vsel %vm2333, %v2340, %v2342
    %v2344 = vsel %vm2332, %v2322, %v2325
    %v2345 = vsel %vm2335, %v2331, 1326507024
    %v2346 = vsel %vm2334, %v2328, %v2345
    %v2347 = vsel %vm2333, %v2344, %v2346
    %v2348 = vshll.u32 %v2308, 8
    %v2349 = vmul.u32.u64.compose %v2348, %v2347
    %v2350 = vextract.low.u32 %v2349
    %v2351 = vextract.high.u32 %v2349
    %v2352 = vmul.u32.u64.compose %v2348, %v2343
    %v2353 = vextract.low.u32 %v2352
    %v2354 = vextract.high.u32 %v2352
    %v2355 = vmul.u32 %v2348, %v2339
    %v2356 = vadd.s32 %v2351, %v2353
    %vm2357 = vc.u32 %v2351, %v2353
    %v2358 = vadd.s32 %v2354, 1
    %v2359 = vsel %vm2357, %v2358, %v2354
    %v2360 = vadd.s32 %v2355, %v2359
    %v2361 = vadd.s32 %v2360, 536870912
    %v2362 = vshrl.u32 %v2361, 30
    %v2363 = vshll.u32 %v2362, 30
    %v2364 = vsub.s32 %v2360, %v2363
    %vm2365 = vcmp.lt.s32.totalorder %v2364, 0
    %v2366 = vsub.s32 0, %v2364
    %v2367 = vsel %vm2365, %v2366, %v2364
    %v2368 = vclz %v2367
    %v2369 = vsub.s32 %v2368, 2
    %vm2370 = vcmp.gt.s32.totalorder 0, %v2369
    %v2371 = vsel %vm2370, 0, %v2369
    %v2372 = vsub.s32 32, %v2371
    %v2373 = vshll.u32 %v2364, %v2371
    %v2374 = vshrl.u32 %v2356, %v2372
    %v2375 = vor.u32 %v2373, %v2374
    %v2376 = vsub.s32 4294967266, %v2371
    %v2377 = vadd.s32 %v2376, 127
    %v2378 = vshll.u32 %v2377, 23
    %v2379 = vor.u32 4788187, %v2378
    %v2380 = vand.u32 2147483647, %v2379
    %v2382 = vcvt.s32.f32 %v2375
    %v2383 = vmul.f32 %v2382, %v2380
    %v2384 = vxor.u32 %v2383, 2147483648
    %v2385 = vsel %vm2302, %v2384, %v2383
    %v2386 = vsub.s32 4, %v2362
    %v2387 = vsel %vm2302, %v2386, %v2362
    %v2388 = vsel %vm2301, %v604, %v2385
    %v2389 = vsel %vm2301, 0, %v2387
    %v2390 = vcosq.f32.pop %v2388
    %v2391 = vsinq.f32.pop %v2388
    %vm2392 = vweird.f32 %v604
    %v2393 = vand.u32 %v2389, 3
    %vm2394 = vcmp.lt.s32.totalorder %v2393, 2
    %vm2395 = vcmp.eq.s32.totalorder %v2393, 0
    %v2396 = vxor.u32 %v2391, 2147483648
    %v2397 = vsel %vm2395, %v2390, %v2396
    %vm2398 = vcmp.eq.s32.totalorder %v2393, 2
    %v2399 = vxor.u32 %v2390, 2147483648
    %v2400 = vsel %vm2398, %v2399, %v2391
    %v2401 = vsel %vm2394, %v2397, %v2400
    %v2402 = vsel %vm2392, nan, %v2401
    %v2403 = vand.u32 2147483647, %v605
    %vm2404 = vcmp.le.f32.partialorder %v2403, 0.7853982
    %vm2405 = vcmp.lt.s32.totalorder %v605, 0
    %v2406 = vand.u32 %v605, 2139095040
    %v2407 = vshrl.u32 %v2406, 23
    %v2408 = vsub.s32 %v2407, 127
    %v2409 = vand.u32 2147483647, %v605
    %v2410 = vand.u32 %v2409, 8388607
    %v2411 = vor.u32 %v2410, 8388608
    %v2412 = vsub.s32 0, %v2411
    %v2413 = vadd.s32 %v2408, 1
    %vm2414 = vcmp.gt.s32.totalorder %v2413, 0
    %v2415 = vsel %vm2414, %v2413, 0
    %v2416 = vshrl.u32 %v2415, 5
    %v2417 = vand.u32 %v2415, 31
    %v2418 = vsub.s32 32, %v2417
    %v2419 = vshrl.u32 683565275, %v2418
    %v2420 = vshll.u32 683565275, %v2417
    %v2421 = vshrl.u32 2475754826, %v2418
    %v2422 = vor.u32 %v2420, %v2421
    %v2423 = vshll.u32 2475754826, %v2417
    %v2424 = vshrl.u32 2131351028, %v2418
    %v2425 = vor.u32 %v2423, %v2424
    %v2426 = vshll.u32 2131351028, %v2417
    %v2427 = vshrl.u32 2102212464, %v2418
    %v2428 = vor.u32 %v2426, %v2427
    %v2429 = vshll.u32 2102212464, %v2417
    %v2430 = vshrl.u32 920167782, %v2418
    %v2431 = vor.u32 %v2429, %v2430
    %v2432 = vshll.u32 920167782, %v2417
    %v2433 = vshrl.u32 1326507024, %v2418
    %v2434 = vor.u32 %v2432, %v2433
    %vm2435 = vcmp.lt.s32.totalorder %v2416, 1
    %vm2436 = vcmp.lt.s32.totalorder %v2416, 2
    %vm2437 = vcmp.lt.s32.totalorder %v2416, 3
    %vm2438 = vcmp.lt.s32.totalorder %v2416, 4
    %v2439 = vsel %vm2435, %v2419, %v2422
    %v2440 = vsel %vm2438, %v2428, 2102212464
    %v2441 = vsel %vm2437, %v2425, %v2440
    %v2442 = vsel %vm2436, %v2439, %v2441
    %v2443 = vsel %vm2435, %v2422, %v2425
    %v2444 = vsel %vm2438, %v2431, 920167782
    %v2445 = vsel %vm2437, %v2428, %v2444
    %v2446 = vsel %vm2436, %v2443, %v2445
    %v2447 = vsel %vm2435, %v2425, %v2428
    %v2448 = vsel %vm2438, %v2434, 1326507024
    %v2449 = vsel %vm2437, %v2431, %v2448
    %v2450 = vsel %vm2436, %v2447, %v2449
    %v2451 = vshll.u32 %v2411, 8
    %v2452 = vmul.u32.u64.compose %v2451, %v2450
    %v2453 = vextract.low.u32 %v2452
    %v2454 = vextract.high.u32 %v2452
    %v2455 = vmul.u32.u64.compose %v2451, %v2446
    %v2456 = vextract.low.u32 %v2455
    %v2457 = vextract.high.u32 %v2455
    %v2458 = vmul.u32 %v2451, %v2442
    %v2459 = vadd.s32 %v2454, %v2456
    %vm2460 = vc.u32 %v2454, %v2456
    %v2461 = vadd.s32 %v2457, 1
    %v2462 = vsel %vm2460, %v2461, %v2457
    %v2463 = vadd.s32 %v2458, %v2462
    %v2464 = vadd.s32 %v2463, 536870912
    %v2465 = vshrl.u32 %v2464, 30
    %v2466 = vshll.u32 %v2465, 30
    %v2467 = vsub.s32 %v2463, %v2466
    %vm2468 = vcmp.lt.s32.totalorder %v2467, 0
    %v2469 = vsub.s32 0, %v2467
    %v2470 = vsel %vm2468, %v2469, %v2467
    %v2471 = vclz %v2470
    %v2472 = vsub.s32 %v2471, 2
    %vm2473 = vcmp.gt.s32.totalorder 0, %v2472
    %v2474 = vsel %vm2473, 0, %v2472
    %v2475 = vsub.s32 32, %v2474
    %v2476 = vshll.u32 %v2467, %v2474
    %v2477 = vshrl.u32 %v2459, %v2475
    %v2478 = vor.u32 %v2476, %v2477
    %v2479 = vsub.s32 4294967266, %v2474
    %v2480 = vadd.s32 %v2479, 127
    %v2481 = vshll.u32 %v2480, 23
    %v2482 = vor.u32 4788187, %v2481
    %v2483 = vand.u32 2147483647, %v2482
    %v2485 = vcvt.s32.f32 %v2478
    %v2486 = vmul.f32 %v2485, %v2483
    %v2487 = vxor.u32 %v2486, 2147483648
    %v2488 = vsel %vm2405, %v2487, %v2486
    %v2489 = vsub.s32 4, %v2465
    %v2490 = vsel %vm2405, %v2489, %v2465
    %v2491 = vsel %vm2404, %v605, %v2488
    %v2492 = vsel %vm2404, 0, %v2490
    %v2493 = vcosq.f32.pop %v2491
    %v2494 = vsinq.f32.pop %v2491
    %vm2495 = vweird.f32 %v605
    %v2496 = vand.u32 %v2492, 3
    %vm2497 = vcmp.lt.s32.totalorder %v2496, 2
    %vm2498 = vcmp.eq.s32.totalorder %v2496, 0
    %v2499 = vxor.u32 %v2494, 2147483648
    %v2500 = vsel %vm2498, %v2493, %v2499
    %vm2501 = vcmp.eq.s32.totalorder %v2496, 2
    %v2502 = vxor.u32 %v2493, 2147483648
    %v2503 = vsel %vm2501, %v2502, %v2494
    %v2504 = vsel %vm2497, %v2500, %v2503
    %v2505 = vsel %vm2495, nan, %v2504
    %v2506 = vand.u32 2147483647, %v606
    %vm2507 = vcmp.le.f32.partialorder %v2506, 0.7853982
    %vm2508 = vcmp.lt.s32.totalorder %v606, 0
    %v2509 = vand.u32 %v606, 2139095040
    %v2510 = vshrl.u32 %v2509, 23
    %v2511 = vsub.s32 %v2510, 127
    %v2512 = vand.u32 2147483647, %v606
    %v2513 = vand.u32 %v2512, 8388607
    %v2514 = vor.u32 %v2513, 8388608
    %v2515 = vsub.s32 0, %v2514
    %v2516 = vadd.s32 %v2511, 1
    %vm2517 = vcmp.gt.s32.totalorder %v2516, 0
    %v2518 = vsel %vm2517, %v2516, 0
    %v2519 = vshrl.u32 %v2518, 5
    %v2520 = vand.u32 %v2518, 31
    %v2521 = vsub.s32 32, %v2520
    %v2522 = vshrl.u32 683565275, %v2521
    %v2523 = vshll.u32 683565275, %v2520
    %v2524 = vshrl.u32 2475754826, %v2521
    %v2525 = vor.u32 %v2523, %v2524
    %v2526 = vshll.u32 2475754826, %v2520
    %v2527 = vshrl.u32 2131351028, %v2521
    %v2528 = vor.u32 %v2526, %v2527
    %v2529 = vshll.u32 2131351028, %v2520
    %v2530 = vshrl.u32 2102212464, %v2521
    %v2531 = vor.u32 %v2529, %v2530
    %v2532 = vshll.u32 2102212464, %v2520
    %v2533 = vshrl.u32 920167782, %v2521
    %v2534 = vor.u32 %v2532, %v2533
    %v2535 = vshll.u32 920167782, %v2520
    %v2536 = vshrl.u32 1326507024, %v2521
    %v2537 = vor.u32 %v2535, %v2536
    %vm2538 = vcmp.lt.s32.totalorder %v2519, 1
    %vm2539 = vcmp.lt.s32.totalorder %v2519, 2
    %vm2540 = vcmp.lt.s32.totalorder %v2519, 3
    %vm2541 = vcmp.lt.s32.totalorder %v2519, 4
    %v2542 = vsel %vm2538, %v2522, %v2525
    %v2543 = vsel %vm2541, %v2531, 2102212464
    %v2544 = vsel %vm2540, %v2528, %v2543
    %v2545 = vsel %vm2539, %v2542, %v2544
    %v2546 = vsel %vm2538, %v2525, %v2528
    %v2547 = vsel %vm2541, %v2534, 920167782
    %v2548 = vsel %vm2540, %v2531, %v2547
    %v2549 = vsel %vm2539, %v2546, %v2548
    %v2550 = vsel %vm2538, %v2528, %v2531
    %v2551 = vsel %vm2541, %v2537, 1326507024
    %v2552 = vsel %vm2540, %v2534, %v2551
    %v2553 = vsel %vm2539, %v2550, %v2552
    %v2554 = vshll.u32 %v2514, 8
    %v2555 = vmul.u32.u64.compose %v2554, %v2553
    %v2556 = vextract.low.u32 %v2555
    %v2557 = vextract.high.u32 %v2555
    %v2558 = vmul.u32.u64.compose %v2554, %v2549
    %v2559 = vextract.low.u32 %v2558
    %v2560 = vextract.high.u32 %v2558
    %v2561 = vmul.u32 %v2554, %v2545
    %v2562 = vadd.s32 %v2557, %v2559
    %vm2563 = vc.u32 %v2557, %v2559
    %v2564 = vadd.s32 %v2560, 1
    %v2565 = vsel %vm2563, %v2564, %v2560
    %v2566 = vadd.s32 %v2561, %v2565
    %v2567 = vadd.s32 %v2566, 536870912
    %v2568 = vshrl.u32 %v2567, 30
    %v2569 = vshll.u32 %v2568, 30
    %v2570 = vsub.s32 %v2566, %v2569
    %vm2571 = vcmp.lt.s32.totalorder %v2570, 0
    %v2572 = vsub.s32 0, %v2570
    %v2573 = vsel %vm2571, %v2572, %v2570
    %v2574 = vclz %v2573
    %v2575 = vsub.s32 %v2574, 2
    %vm2576 = vcmp.gt.s32.totalorder 0, %v2575
    %v2577 = vsel %vm2576, 0, %v2575
    %v2578 = vsub.s32 32, %v2577
    %v2579 = vshll.u32 %v2570, %v2577
    %v2580 = vshrl.u32 %v2562, %v2578
    %v2581 = vor.u32 %v2579, %v2580
    %v2582 = vsub.s32 4294967266, %v2577
    %v2583 = vadd.s32 %v2582, 127
    %v2584 = vshll.u32 %v2583, 23
    %v2585 = vor.u32 4788187, %v2584
    %v2586 = vand.u32 2147483647, %v2585
    %v2588 = vcvt.s32.f32 %v2581
    %v2589 = vmul.f32 %v2588, %v2586
    %v2590 = vxor.u32 %v2589, 2147483648
    %v2591 = vsel %vm2508, %v2590, %v2589
    %v2592 = vsub.s32 4, %v2568
    %v2593 = vsel %vm2508, %v2592, %v2568
    %v2594 = vsel %vm2507, %v606, %v2591
    %v2595 = vsel %vm2507, 0, %v2593
    %v2596 = vcosq.f32.pop %v2594
    %v2597 = vsinq.f32.pop %v2594
    %vm2598 = vweird.f32 %v606
    %v2599 = vand.u32 %v2595, 3
    %vm2600 = vcmp.lt.s32.totalorder %v2599, 2
    %vm2601 = vcmp.eq.s32.totalorder %v2599, 0
    %v2602 = vxor.u32 %v2597, 2147483648
    %v2603 = vsel %vm2601, %v2596, %v2602
    %vm2604 = vcmp.eq.s32.totalorder %v2599, 2
    %v2605 = vxor.u32 %v2596, 2147483648
    %v2606 = vsel %vm2604, %v2605, %v2597
    %v2607 = vsel %vm2600, %v2603, %v2606
    %v2608 = vsel %vm2598, nan, %v2607
    %v2609 = vand.u32 2147483647, %v607
    %vm2610 = vcmp.le.f32.partialorder %v2609, 0.7853982
    %vm2611 = vcmp.lt.s32.totalorder %v607, 0
    %v2612 = vand.u32 %v607, 2139095040
    %v2613 = vshrl.u32 %v2612, 23
    %v2614 = vsub.s32 %v2613, 127
    %v2615 = vand.u32 2147483647, %v607
    %v2616 = vand.u32 %v2615, 8388607
    %v2617 = vor.u32 %v2616, 8388608
    %v2618 = vsub.s32 0, %v2617
    %v2619 = vadd.s32 %v2614, 1
    %vm2620 = vcmp.gt.s32.totalorder %v2619, 0
    %v2621 = vsel %vm2620, %v2619, 0
    %v2622 = vshrl.u32 %v2621, 5
    %v2623 = vand.u32 %v2621, 31
    %v2624 = vsub.s32 32, %v2623
    %v2625 = vshrl.u32 683565275, %v2624
    %v2626 = vshll.u32 683565275, %v2623
    %v2627 = vshrl.u32 2475754826, %v2624
    %v2628 = vor.u32 %v2626, %v2627
    %v2629 = vshll.u32 2475754826, %v2623
    %v2630 = vshrl.u32 2131351028, %v2624
    %v2631 = vor.u32 %v2629, %v2630
    %v2632 = vshll.u32 2131351028, %v2623
    %v2633 = vshrl.u32 2102212464, %v2624
    %v2634 = vor.u32 %v2632, %v2633
    %v2635 = vshll.u32 2102212464, %v2623
    %v2636 = vshrl.u32 920167782, %v2624
    %v2637 = vor.u32 %v2635, %v2636
    %v2638 = vshll.u32 920167782, %v2623
    %v2639 = vshrl.u32 1326507024, %v2624
    %v2640 = vor.u32 %v2638, %v2639
    %vm2641 = vcmp.lt.s32.totalorder %v2622, 1
    %vm2642 = vcmp.lt.s32.totalorder %v2622, 2
    %vm2643 = vcmp.lt.s32.totalorder %v2622, 3
    %vm2644 = vcmp.lt.s32.totalorder %v2622, 4
    %v2645 = vsel %vm2641, %v2625, %v2628
    %v2646 = vsel %vm2644, %v2634, 2102212464
    %v2647 = vsel %vm2643, %v2631, %v2646
    %v2648 = vsel %vm2642, %v2645, %v2647
    %v2649 = vsel %vm2641, %v2628, %v2631
    %v2650 = vsel %vm2644, %v2637, 920167782
    %v2651 = vsel %vm2643, %v2634, %v2650
    %v2652 = vsel %vm2642, %v2649, %v2651
    %v2653 = vsel %vm2641, %v2631, %v2634
    %v2654 = vsel %vm2644, %v2640, 1326507024
    %v2655 = vsel %vm2643, %v2637, %v2654
    %v2656 = vsel %vm2642, %v2653, %v2655
    %v2657 = vshll.u32 %v2617, 8
    %v2658 = vmul.u32.u64.compose %v2657, %v2656
    %v2659 = vextract.low.u32 %v2658
    %v2660 = vextract.high.u32 %v2658
    %v2661 = vmul.u32.u64.compose %v2657, %v2652
    %v2662 = vextract.low.u32 %v2661
    %v2663 = vextract.high.u32 %v2661
    %v2664 = vmul.u32 %v2657, %v2648
    %v2665 = vadd.s32 %v2660, %v2662
    %vm2666 = vc.u32 %v2660, %v2662
    %v2667 = vadd.s32 %v2663, 1
    %v2668 = vsel %vm2666, %v2667, %v2663
    %v2669 = vadd.s32 %v2664, %v2668
    %v2670 = vadd.s32 %v2669, 536870912
    %v2671 = vshrl.u32 %v2670, 30
    %v2672 = vshll.u32 %v2671, 30
    %v2673 = vsub.s32 %v2669, %v2672
    %vm2674 = vcmp.lt.s32.totalorder %v2673, 0
    %v2675 = vsub.s32 0, %v2673
    %v2676 = vsel %vm2674, %v2675, %v2673
    %v2677 = vclz %v2676
    %v2678 = vsub.s32 %v2677, 2
    %vm2679 = vcmp.gt.s32.totalorder 0, %v2678
    %v2680 = vsel %vm2679, 0, %v2678
    %v2681 = vsub.s32 32, %v2680
    %v2682 = vshll.u32 %v2673, %v2680
    %v2683 = vshrl.u32 %v2665, %v2681
    %v2684 = vor.u32 %v2682, %v2683
    %v2685 = vsub.s32 4294967266, %v2680
    %v2686 = vadd.s32 %v2685, 127
    %v2687 = vshll.u32 %v2686, 23
    %v2688 = vor.u32 4788187, %v2687
    %v2689 = vand.u32 2147483647, %v2688
    %v2691 = vcvt.s32.f32 %v2684
    %v2692 = vmul.f32 %v2691, %v2689
    %v2693 = vxor.u32 %v2692, 2147483648
    %v2694 = vsel %vm2611, %v2693, %v2692
    %v2695 = vsub.s32 4, %v2671
    %v2696 = vsel %vm2611, %v2695, %v2671
    %v2697 = vsel %vm2610, %v607, %v2694
    %v2698 = vsel %vm2610, 0, %v2696
    %v2699 = vcosq.f32.pop %v2697
    %v2700 = vsinq.f32.pop %v2697
    %vm2701 = vweird.f32 %v607
    %v2702 = vand.u32 %v2698, 3
    %vm2703 = vcmp.lt.s32.totalorder %v2702, 2
    %vm2704 = vcmp.eq.s32.totalorder %v2702, 0
    %v2705 = vxor.u32 %v2700, 2147483648
    %v2706 = vsel %vm2704, %v2699, %v2705
    %vm2707 = vcmp.eq.s32.totalorder %v2702, 2
    %v2708 = vxor.u32 %v2699, 2147483648
    %v2709 = vsel %vm2707, %v2708, %v2700
    %v2710 = vsel %vm2703, %v2706, %v2709
    %v2711 = vsel %vm2701, nan, %v2710
    %v2712 = vand.u32 2147483647, %v608
    %vm2713 = vcmp.le.f32.partialorder %v2712, 0.7853982
    %vm2714 = vcmp.lt.s32.totalorder %v608, 0
    %v2715 = vand.u32 %v608, 2139095040
    %v2716 = vshrl.u32 %v2715, 23
    %v2717 = vsub.s32 %v2716, 127
    %v2718 = vand.u32 2147483647, %v608
    %v2719 = vand.u32 %v2718, 8388607
    %v2720 = vor.u32 %v2719, 8388608
    %v2721 = vsub.s32 0, %v2720
    %v2722 = vadd.s32 %v2717, 1
    %vm2723 = vcmp.gt.s32.totalorder %v2722, 0
    %v2724 = vsel %vm2723, %v2722, 0
    %v2725 = vshrl.u32 %v2724, 5
    %v2726 = vand.u32 %v2724, 31
    %v2727 = vsub.s32 32, %v2726
    %v2728 = vshrl.u32 683565275, %v2727
    %v2729 = vshll.u32 683565275, %v2726
    %v2730 = vshrl.u32 2475754826, %v2727
    %v2731 = vor.u32 %v2729, %v2730
    %v2732 = vshll.u32 2475754826, %v2726
    %v2733 = vshrl.u32 2131351028, %v2727
    %v2734 = vor.u32 %v2732, %v2733
    %v2735 = vshll.u32 2131351028, %v2726
    %v2736 = vshrl.u32 2102212464, %v2727
    %v2737 = vor.u32 %v2735, %v2736
    %v2738 = vshll.u32 2102212464, %v2726
    %v2739 = vshrl.u32 920167782, %v2727
    %v2740 = vor.u32 %v2738, %v2739
    %v2741 = vshll.u32 920167782, %v2726
    %v2742 = vshrl.u32 1326507024, %v2727
    %v2743 = vor.u32 %v2741, %v2742
    %vm2744 = vcmp.lt.s32.totalorder %v2725, 1
    %vm2745 = vcmp.lt.s32.totalorder %v2725, 2
    %vm2746 = vcmp.lt.s32.totalorder %v2725, 3
    %vm2747 = vcmp.lt.s32.totalorder %v2725, 4
    %v2748 = vsel %vm2744, %v2728, %v2731
    %v2749 = vsel %vm2747, %v2737, 2102212464
    %v2750 = vsel %vm2746, %v2734, %v2749
    %v2751 = vsel %vm2745, %v2748, %v2750
    %v2752 = vsel %vm2744, %v2731, %v2734
    %v2753 = vsel %vm2747, %v2740, 920167782
    %v2754 = vsel %vm2746, %v2737, %v2753
    %v2755 = vsel %vm2745, %v2752, %v2754
    %v2756 = vsel %vm2744, %v2734, %v2737
    %v2757 = vsel %vm2747, %v2743, 1326507024
    %v2758 = vsel %vm2746, %v2740, %v2757
    %v2759 = vsel %vm2745, %v2756, %v2758
    %v2760 = vshll.u32 %v2720, 8
    %v2761 = vmul.u32.u64.compose %v2760, %v2759
    %v2762 = vextract.low.u32 %v2761
    %v2763 = vextract.high.u32 %v2761
    %v2764 = vmul.u32.u64.compose %v2760, %v2755
    %v2765 = vextract.low.u32 %v2764
    %v2766 = vextract.high.u32 %v2764
    %v2767 = vmul.u32 %v2760, %v2751
    %v2768 = vadd.s32 %v2763, %v2765
    %vm2769 = vc.u32 %v2763, %v2765
    %v2770 = vadd.s32 %v2766, 1
    %v2771 = vsel %vm2769, %v2770, %v2766
    %v2772 = vadd.s32 %v2767, %v2771
    %v2773 = vadd.s32 %v2772, 536870912
    %v2774 = vshrl.u32 %v2773, 30
    %v2775 = vshll.u32 %v2774, 30
    %v2776 = vsub.s32 %v2772, %v2775
    %vm2777 = vcmp.lt.s32.totalorder %v2776, 0
    %v2778 = vsub.s32 0, %v2776
    %v2779 = vsel %vm2777, %v2778, %v2776
    %v2780 = vclz %v2779
    %v2781 = vsub.s32 %v2780, 2
    %vm2782 = vcmp.gt.s32.totalorder 0, %v2781
    %v2783 = vsel %vm2782, 0, %v2781
    %v2784 = vsub.s32 32, %v2783
    %v2785 = vshll.u32 %v2776, %v2783
    %v2786 = vshrl.u32 %v2768, %v2784
    %v2787 = vor.u32 %v2785, %v2786
    %v2788 = vsub.s32 4294967266, %v2783
    %v2789 = vadd.s32 %v2788, 127
    %v2790 = vshll.u32 %v2789, 23
    %v2791 = vor.u32 4788187, %v2790
    %v2792 = vand.u32 2147483647, %v2791
    %v2794 = vcvt.s32.f32 %v2787
    %v2795 = vmul.f32 %v2794, %v2792
    %v2796 = vxor.u32 %v2795, 2147483648
    %v2797 = vsel %vm2714, %v2796, %v2795
    %v2798 = vsub.s32 4, %v2774
    %v2799 = vsel %vm2714, %v2798, %v2774
    %v2800 = vsel %vm2713, %v608, %v2797
    %v2801 = vsel %vm2713, 0, %v2799
    %v2802 = vcosq.f32.pop %v2800
    %v2803 = vsinq.f32.pop %v2800
    %vm2804 = vweird.f32 %v608
    %v2805 = vand.u32 %v2801, 3
    %vm2806 = vcmp.lt.s32.totalorder %v2805, 2
    %vm2807 = vcmp.eq.s32.totalorder %v2805, 0
    %v2808 = vxor.u32 %v2803, 2147483648
    %v2809 = vsel %vm2807, %v2802, %v2808
    %vm2810 = vcmp.eq.s32.totalorder %v2805, 2
    %v2811 = vxor.u32 %v2802, 2147483648
    %v2812 = vsel %vm2810, %v2811, %v2803
    %v2813 = vsel %vm2806, %v2809, %v2812
    %v2814 = vsel %vm2804, nan, %v2813
    %v2815 = vand.u32 2147483647, %v609
    %vm2816 = vcmp.le.f32.partialorder %v2815, 0.7853982
    %vm2817 = vcmp.lt.s32.totalorder %v609, 0
    %v2818 = vand.u32 %v609, 2139095040
    %v2819 = vshrl.u32 %v2818, 23
    %v2820 = vsub.s32 %v2819, 127
    %v2821 = vand.u32 2147483647, %v609
    %v2822 = vand.u32 %v2821, 8388607
    %v2823 = vor.u32 %v2822, 8388608
    %v2824 = vsub.s32 0, %v2823
    %v2825 = vadd.s32 %v2820, 1
    %vm2826 = vcmp.gt.s32.totalorder %v2825, 0
    %v2827 = vsel %vm2826, %v2825, 0
    %v2828 = vshrl.u32 %v2827, 5
    %v2829 = vand.u32 %v2827, 31
    %v2830 = vsub.s32 32, %v2829
    %v2831 = vshrl.u32 683565275, %v2830
    %v2832 = vshll.u32 683565275, %v2829
    %v2833 = vshrl.u32 2475754826, %v2830
    %v2834 = vor.u32 %v2832, %v2833
    %v2835 = vshll.u32 2475754826, %v2829
    %v2836 = vshrl.u32 2131351028, %v2830
    %v2837 = vor.u32 %v2835, %v2836
    %v2838 = vshll.u32 2131351028, %v2829
    %v2839 = vshrl.u32 2102212464, %v2830
    %v2840 = vor.u32 %v2838, %v2839
    %v2841 = vshll.u32 2102212464, %v2829
    %v2842 = vshrl.u32 920167782, %v2830
    %v2843 = vor.u32 %v2841, %v2842
    %v2844 = vshll.u32 920167782, %v2829
    %v2845 = vshrl.u32 1326507024, %v2830
    %v2846 = vor.u32 %v2844, %v2845
    %vm2847 = vcmp.lt.s32.totalorder %v2828, 1
    %vm2848 = vcmp.lt.s32.totalorder %v2828, 2
    %vm2849 = vcmp.lt.s32.totalorder %v2828, 3
    %vm2850 = vcmp.lt.s32.totalorder %v2828, 4
    %v2851 = vsel %vm2847, %v2831, %v2834
    %v2852 = vsel %vm2850, %v2840, 2102212464
    %v2853 = vsel %vm2849, %v2837, %v2852
    %v2854 = vsel %vm2848, %v2851, %v2853
    %v2855 = vsel %vm2847, %v2834, %v2837
    %v2856 = vsel %vm2850, %v2843, 920167782
    %v2857 = vsel %vm2849, %v2840, %v2856
    %v2858 = vsel %vm2848, %v2855, %v2857
    %v2859 = vsel %vm2847, %v2837, %v2840
    %v2860 = vsel %vm2850, %v2846, 1326507024
    %v2861 = vsel %vm2849, %v2843, %v2860
    %v2862 = vsel %vm2848, %v2859, %v2861
    %v2863 = vshll.u32 %v2823, 8
    %v2864 = vmul.u32.u64.compose %v2863, %v2862
    %v2865 = vextract.low.u32 %v2864
    %v2866 = vextract.high.u32 %v2864
    %v2867 = vmul.u32.u64.compose %v2863, %v2858
    %v2868 = vextract.low.u32 %v2867
    %v2869 = vextract.high.u32 %v2867
    %v2870 = vmul.u32 %v2863, %v2854
    %v2871 = vadd.s32 %v2866, %v2868
    %vm2872 = vc.u32 %v2866, %v2868
    %v2873 = vadd.s32 %v2869, 1
    %v2874 = vsel %vm2872, %v2873, %v2869
    %v2875 = vadd.s32 %v2870, %v2874
    %v2876 = vadd.s32 %v2875, 536870912
    %v2877 = vshrl.u32 %v2876, 30
    %v2878 = vshll.u32 %v2877, 30
    %v2879 = vsub.s32 %v2875, %v2878
    %vm2880 = vcmp.lt.s32.totalorder %v2879, 0
    %v2881 = vsub.s32 0, %v2879
    %v2882 = vsel %vm2880, %v2881, %v2879
    %v2883 = vclz %v2882
    %v2884 = vsub.s32 %v2883, 2
    %vm2885 = vcmp.gt.s32.totalorder 0, %v2884
    %v2886 = vsel %vm2885, 0, %v2884
    %v2887 = vsub.s32 32, %v2886
    %v2888 = vshll.u32 %v2879, %v2886
    %v2889 = vshrl.u32 %v2871, %v2887
    %v2890 = vor.u32 %v2888, %v2889
    %v2891 = vsub.s32 4294967266, %v2886
    %v2892 = vadd.s32 %v2891, 127
    %v2893 = vshll.u32 %v2892, 23
    %v2894 = vor.u32 4788187, %v2893
    %v2895 = vand.u32 2147483647, %v2894
    %v2897 = vcvt.s32.f32 %v2890
    %v2898 = vmul.f32 %v2897, %v2895
    %v2899 = vxor.u32 %v2898, 2147483648
    %v2900 = vsel %vm2817, %v2899, %v2898
    %v2901 = vsub.s32 4, %v2877
    %v2902 = vsel %vm2817, %v2901, %v2877
    %v2903 = vsel %vm2816, %v609, %v2900
    %v2904 = vsel %vm2816, 0, %v2902
    %v2905 = vcosq.f32.pop %v2903
    %v2906 = vsinq.f32.pop %v2903
    %vm2907 = vweird.f32 %v609
    %v2908 = vand.u32 %v2904, 3
    %vm2909 = vcmp.lt.s32.totalorder %v2908, 2
    %vm2910 = vcmp.eq.s32.totalorder %v2908, 0
    %v2911 = vxor.u32 %v2906, 2147483648
    %v2912 = vsel %vm2910, %v2905, %v2911
    %vm2913 = vcmp.eq.s32.totalorder %v2908, 2
    %v2914 = vxor.u32 %v2905, 2147483648
    %v2915 = vsel %vm2913, %v2914, %v2906
    %v2916 = vsel %vm2909, %v2912, %v2915
    %v2917 = vsel %vm2907, nan, %v2916
    %v2918 = vand.u32 2147483647, %v610
    %vm2919 = vcmp.le.f32.partialorder %v2918, 0.7853982
    %vm2920 = vcmp.lt.s32.totalorder %v610, 0
    %v2921 = vand.u32 %v610, 2139095040
    %v2922 = vshrl.u32 %v2921, 23
    %v2923 = vsub.s32 %v2922, 127
    %v2924 = vand.u32 2147483647, %v610
    %v2925 = vand.u32 %v2924, 8388607
    %v2926 = vor.u32 %v2925, 8388608
    %v2927 = vsub.s32 0, %v2926
    %v2928 = vadd.s32 %v2923, 1
    %vm2929 = vcmp.gt.s32.totalorder %v2928, 0
    %v2930 = vsel %vm2929, %v2928, 0
    %v2931 = vshrl.u32 %v2930, 5
    %v2932 = vand.u32 %v2930, 31
    %v2933 = vsub.s32 32, %v2932
    %v2934 = vshrl.u32 683565275, %v2933
    %v2935 = vshll.u32 683565275, %v2932
    %v2936 = vshrl.u32 2475754826, %v2933
    %v2937 = vor.u32 %v2935, %v2936
    %v2938 = vshll.u32 2475754826, %v2932
    %v2939 = vshrl.u32 2131351028, %v2933
    %v2940 = vor.u32 %v2938, %v2939
    %v2941 = vshll.u32 2131351028, %v2932
    %v2942 = vshrl.u32 2102212464, %v2933
    %v2943 = vor.u32 %v2941, %v2942
    %v2944 = vshll.u32 2102212464, %v2932
    %v2945 = vshrl.u32 920167782, %v2933
    %v2946 = vor.u32 %v2944, %v2945
    %v2947 = vshll.u32 920167782, %v2932
    %v2948 = vshrl.u32 1326507024, %v2933
    %v2949 = vor.u32 %v2947, %v2948
    %vm2950 = vcmp.lt.s32.totalorder %v2931, 1
    %vm2951 = vcmp.lt.s32.totalorder %v2931, 2
    %vm2952 = vcmp.lt.s32.totalorder %v2931, 3
    %vm2953 = vcmp.lt.s32.totalorder %v2931, 4
    %v2954 = vsel %vm2950, %v2934, %v2937
    %v2955 = vsel %vm2953, %v2943, 2102212464
    %v2956 = vsel %vm2952, %v2940, %v2955
    %v2957 = vsel %vm2951, %v2954, %v2956
    %v2958 = vsel %vm2950, %v2937, %v2940
    %v2959 = vsel %vm2953, %v2946, 920167782
    %v2960 = vsel %vm2952, %v2943, %v2959
    %v2961 = vsel %vm2951, %v2958, %v2960
    %v2962 = vsel %vm2950, %v2940, %v2943
    %v2963 = vsel %vm2953, %v2949, 1326507024
    %v2964 = vsel %vm2952, %v2946, %v2963
    %v2965 = vsel %vm2951, %v2962, %v2964
    %v2966 = vshll.u32 %v2926, 8
    %v2967 = vmul.u32.u64.compose %v2966, %v2965
    %v2968 = vextract.low.u32 %v2967
    %v2969 = vextract.high.u32 %v2967
    %v2970 = vmul.u32.u64.compose %v2966, %v2961
    %v2971 = vextract.low.u32 %v2970
    %v2972 = vextract.high.u32 %v2970
    %v2973 = vmul.u32 %v2966, %v2957
    %v2974 = vadd.s32 %v2969, %v2971
    %vm2975 = vc.u32 %v2969, %v2971
    %v2976 = vadd.s32 %v2972, 1
    %v2977 = vsel %vm2975, %v2976, %v2972
    %v2978 = vadd.s32 %v2973, %v2977
    %v2979 = vadd.s32 %v2978, 536870912
    %v2980 = vshrl.u32 %v2979, 30
    %v2981 = vshll.u32 %v2980, 30
    %v2982 = vsub.s32 %v2978, %v2981
    %vm2983 = vcmp.lt.s32.totalorder %v2982, 0
    %v2984 = vsub.s32 0, %v2982
    %v2985 = vsel %vm2983, %v2984, %v2982
    %v2986 = vclz %v2985
    %v2987 = vsub.s32 %v2986, 2
    %vm2988 = vcmp.gt.s32.totalorder 0, %v2987
    %v2989 = vsel %vm2988, 0, %v2987
    %v2990 = vsub.s32 32, %v2989
    %v2991 = vshll.u32 %v2982, %v2989
    %v2992 = vshrl.u32 %v2974, %v2990
    %v2993 = vor.u32 %v2991, %v2992
    %v2994 = vsub.s32 4294967266, %v2989
    %v2995 = vadd.s32 %v2994, 127
    %v2996 = vshll.u32 %v2995, 23
    %v2997 = vor.u32 4788187, %v2996
    %v2998 = vand.u32 2147483647, %v2997
    %v3000 = vcvt.s32.f32 %v2993
    %v3001 = vmul.f32 %v3000, %v2998
    %v3002 = vxor.u32 %v3001, 2147483648
    %v3003 = vsel %vm2920, %v3002, %v3001
    %v3004 = vsub.s32 4, %v2980
    %v3005 = vsel %vm2920, %v3004, %v2980
    %v3006 = vsel %vm2919, %v610, %v3003
    %v3007 = vsel %vm2919, 0, %v3005
    %v3008 = vcosq.f32.pop %v3006
    %v3009 = vsinq.f32.pop %v3006
    %vm3010 = vweird.f32 %v610
    %v3011 = vand.u32 %v3007, 3
    %vm3012 = vcmp.lt.s32.totalorder %v3011, 2
    %vm3013 = vcmp.eq.s32.totalorder %v3011, 0
    %v3014 = vxor.u32 %v3009, 2147483648
    %v3015 = vsel %vm3013, %v3008, %v3014
    %vm3016 = vcmp.eq.s32.totalorder %v3011, 2
    %v3017 = vxor.u32 %v3008, 2147483648
    %v3018 = vsel %vm3016, %v3017, %v3009
    %v3019 = vsel %vm3012, %v3015, %v3018
    %v3020 = vsel %vm3010, nan, %v3019
    %v3021 = vand.u32 2147483647, %v611
    %vm3022 = vcmp.le.f32.partialorder %v3021, 0.7853982
    %vm3023 = vcmp.lt.s32.totalorder %v611, 0
    %v3024 = vand.u32 %v611, 2139095040
    %v3025 = vshrl.u32 %v3024, 23
    %v3026 = vsub.s32 %v3025, 127
    %v3027 = vand.u32 2147483647, %v611
    %v3028 = vand.u32 %v3027, 8388607
    %v3029 = vor.u32 %v3028, 8388608
    %v3030 = vsub.s32 0, %v3029
    %v3031 = vadd.s32 %v3026, 1
    %vm3032 = vcmp.gt.s32.totalorder %v3031, 0
    %v3033 = vsel %vm3032, %v3031, 0
    %v3034 = vshrl.u32 %v3033, 5
    %v3035 = vand.u32 %v3033, 31
    %v3036 = vsub.s32 32, %v3035
    %v3037 = vshrl.u32 683565275, %v3036
    %v3038 = vshll.u32 683565275, %v3035
    %v3039 = vshrl.u32 2475754826, %v3036
    %v3040 = vor.u32 %v3038, %v3039
    %v3041 = vshll.u32 2475754826, %v3035
    %v3042 = vshrl.u32 2131351028, %v3036
    %v3043 = vor.u32 %v3041, %v3042
    %v3044 = vshll.u32 2131351028, %v3035
    %v3045 = vshrl.u32 2102212464, %v3036
    %v3046 = vor.u32 %v3044, %v3045
    %v3047 = vshll.u32 2102212464, %v3035
    %v3048 = vshrl.u32 920167782, %v3036
    %v3049 = vor.u32 %v3047, %v3048
    %v3050 = vshll.u32 920167782, %v3035
    %v3051 = vshrl.u32 1326507024, %v3036
    %v3052 = vor.u32 %v3050, %v3051
    %vm3053 = vcmp.lt.s32.totalorder %v3034, 1
    %vm3054 = vcmp.lt.s32.totalorder %v3034, 2
    %vm3055 = vcmp.lt.s32.totalorder %v3034, 3
    %vm3056 = vcmp.lt.s32.totalorder %v3034, 4
    %v3057 = vsel %vm3053, %v3037, %v3040
    %v3058 = vsel %vm3056, %v3046, 2102212464
    %v3059 = vsel %vm3055, %v3043, %v3058
    %v3060 = vsel %vm3054, %v3057, %v3059
    %v3061 = vsel %vm3053, %v3040, %v3043
    %v3062 = vsel %vm3056, %v3049, 920167782
    %v3063 = vsel %vm3055, %v3046, %v3062
    %v3064 = vsel %vm3054, %v3061, %v3063
    %v3065 = vsel %vm3053, %v3043, %v3046
    %v3066 = vsel %vm3056, %v3052, 1326507024
    %v3067 = vsel %vm3055, %v3049, %v3066
    %v3068 = vsel %vm3054, %v3065, %v3067
    %v3069 = vshll.u32 %v3029, 8
    %v3070 = vmul.u32.u64.compose %v3069, %v3068
    %v3071 = vextract.low.u32 %v3070
    %v3072 = vextract.high.u32 %v3070
    %v3073 = vmul.u32.u64.compose %v3069, %v3064
    %v3074 = vextract.low.u32 %v3073
    %v3075 = vextract.high.u32 %v3073
    %v3076 = vmul.u32 %v3069, %v3060
    %v3077 = vadd.s32 %v3072, %v3074
    %vm3078 = vc.u32 %v3072, %v3074
    %v3079 = vadd.s32 %v3075, 1
    %v3080 = vsel %vm3078, %v3079, %v3075
    %v3081 = vadd.s32 %v3076, %v3080
    %v3082 = vadd.s32 %v3081, 536870912
    %v3083 = vshrl.u32 %v3082, 30
    %v3084 = vshll.u32 %v3083, 30
    %v3085 = vsub.s32 %v3081, %v3084
    %vm3086 = vcmp.lt.s32.totalorder %v3085, 0
    %v3087 = vsub.s32 0, %v3085
    %v3088 = vsel %vm3086, %v3087, %v3085
    %v3089 = vclz %v3088
    %v3090 = vsub.s32 %v3089, 2
    %vm3091 = vcmp.gt.s32.totalorder 0, %v3090
    %v3092 = vsel %vm3091, 0, %v3090
    %v3093 = vsub.s32 32, %v3092
    %v3094 = vshll.u32 %v3085, %v3092
    %v3095 = vshrl.u32 %v3077, %v3093
    %v3096 = vor.u32 %v3094, %v3095
    %v3097 = vsub.s32 4294967266, %v3092
    %v3098 = vadd.s32 %v3097, 127
    %v3099 = vshll.u32 %v3098, 23
    %v3100 = vor.u32 4788187, %v3099
    %v3101 = vand.u32 2147483647, %v3100
    %v3103 = vcvt.s32.f32 %v3096
    %v3104 = vmul.f32 %v3103, %v3101
    %v3105 = vxor.u32 %v3104, 2147483648
    %v3106 = vsel %vm3023, %v3105, %v3104
    %v3107 = vsub.s32 4, %v3083
    %v3108 = vsel %vm3023, %v3107, %v3083
    %v3109 = vsel %vm3022, %v611, %v3106
    %v3110 = vsel %vm3022, 0, %v3108
    %v3111 = vcosq.f32.pop %v3109
    %v3112 = vsinq.f32.pop %v3109
    %vm3113 = vweird.f32 %v611
    %v3114 = vand.u32 %v3110, 3
    %vm3115 = vcmp.lt.s32.totalorder %v3114, 2
    %vm3116 = vcmp.eq.s32.totalorder %v3114, 0
    %v3117 = vxor.u32 %v3112, 2147483648
    %v3118 = vsel %vm3116, %v3111, %v3117
    %vm3119 = vcmp.eq.s32.totalorder %v3114, 2
    %v3120 = vxor.u32 %v3111, 2147483648
    %v3121 = vsel %vm3119, %v3120, %v3112
    %v3122 = vsel %vm3115, %v3118, %v3121
    %v3123 = vsel %vm3113, nan, %v3122
    %v3124 = vand.u32 2147483647, %v612
    %vm3125 = vcmp.le.f32.partialorder %v3124, 0.7853982
    %vm3126 = vcmp.lt.s32.totalorder %v612, 0
    %v3127 = vand.u32 %v612, 2139095040
    %v3128 = vshrl.u32 %v3127, 23
    %v3129 = vsub.s32 %v3128, 127
    %v3130 = vand.u32 2147483647, %v612
    %v3131 = vand.u32 %v3130, 8388607
    %v3132 = vor.u32 %v3131, 8388608
    %v3133 = vsub.s32 0, %v3132
    %v3134 = vadd.s32 %v3129, 1
    %vm3135 = vcmp.gt.s32.totalorder %v3134, 0
    %v3136 = vsel %vm3135, %v3134, 0
    %v3137 = vshrl.u32 %v3136, 5
    %v3138 = vand.u32 %v3136, 31
    %v3139 = vsub.s32 32, %v3138
    %v3140 = vshrl.u32 683565275, %v3139
    %v3141 = vshll.u32 683565275, %v3138
    %v3142 = vshrl.u32 2475754826, %v3139
    %v3143 = vor.u32 %v3141, %v3142
    %v3144 = vshll.u32 2475754826, %v3138
    %v3145 = vshrl.u32 2131351028, %v3139
    %v3146 = vor.u32 %v3144, %v3145
    %v3147 = vshll.u32 2131351028, %v3138
    %v3148 = vshrl.u32 2102212464, %v3139
    %v3149 = vor.u32 %v3147, %v3148
    %v3150 = vshll.u32 2102212464, %v3138
    %v3151 = vshrl.u32 920167782, %v3139
    %v3152 = vor.u32 %v3150, %v3151
    %v3153 = vshll.u32 920167782, %v3138
    %v3154 = vshrl.u32 1326507024, %v3139
    %v3155 = vor.u32 %v3153, %v3154
    %vm3156 = vcmp.lt.s32.totalorder %v3137, 1
    %vm3157 = vcmp.lt.s32.totalorder %v3137, 2
    %vm3158 = vcmp.lt.s32.totalorder %v3137, 3
    %vm3159 = vcmp.lt.s32.totalorder %v3137, 4
    %v3160 = vsel %vm3156, %v3140, %v3143
    %v3161 = vsel %vm3159, %v3149, 2102212464
    %v3162 = vsel %vm3158, %v3146, %v3161
    %v3163 = vsel %vm3157, %v3160, %v3162
    %v3164 = vsel %vm3156, %v3143, %v3146
    %v3165 = vsel %vm3159, %v3152, 920167782
    %v3166 = vsel %vm3158, %v3149, %v3165
    %v3167 = vsel %vm3157, %v3164, %v3166
    %v3168 = vsel %vm3156, %v3146, %v3149
    %v3169 = vsel %vm3159, %v3155, 1326507024
    %v3170 = vsel %vm3158, %v3152, %v3169
    %v3171 = vsel %vm3157, %v3168, %v3170
    %v3172 = vshll.u32 %v3132, 8
    %v3173 = vmul.u32.u64.compose %v3172, %v3171
    %v3174 = vextract.low.u32 %v3173
    %v3175 = vextract.high.u32 %v3173
    %v3176 = vmul.u32.u64.compose %v3172, %v3167
    %v3177 = vextract.low.u32 %v3176
    %v3178 = vextract.high.u32 %v3176
    %v3179 = vmul.u32 %v3172, %v3163
    %v3180 = vadd.s32 %v3175, %v3177
    %vm3181 = vc.u32 %v3175, %v3177
    %v3182 = vadd.s32 %v3178, 1
    %v3183 = vsel %vm3181, %v3182, %v3178
    %v3184 = vadd.s32 %v3179, %v3183
    %v3185 = vadd.s32 %v3184, 536870912
    %v3186 = vshrl.u32 %v3185, 30
    %v3187 = vshll.u32 %v3186, 30
    %v3188 = vsub.s32 %v3184, %v3187
    %vm3189 = vcmp.lt.s32.totalorder %v3188, 0
    %v3190 = vsub.s32 0, %v3188
    %v3191 = vsel %vm3189, %v3190, %v3188
    %v3192 = vclz %v3191
    %v3193 = vsub.s32 %v3192, 2
    %vm3194 = vcmp.gt.s32.totalorder 0, %v3193
    %v3195 = vsel %vm3194, 0, %v3193
    %v3196 = vsub.s32 32, %v3195
    %v3197 = vshll.u32 %v3188, %v3195
    %v3198 = vshrl.u32 %v3180, %v3196
    %v3199 = vor.u32 %v3197, %v3198
    %v3200 = vsub.s32 4294967266, %v3195
    %v3201 = vadd.s32 %v3200, 127
    %v3202 = vshll.u32 %v3201, 23
    %v3203 = vor.u32 4788187, %v3202
    %v3204 = vand.u32 2147483647, %v3203
    %v3206 = vcvt.s32.f32 %v3199
    %v3207 = vmul.f32 %v3206, %v3204
    %v3208 = vxor.u32 %v3207, 2147483648
    %v3209 = vsel %vm3126, %v3208, %v3207
    %v3210 = vsub.s32 4, %v3186
    %v3211 = vsel %vm3126, %v3210, %v3186
    %v3212 = vsel %vm3125, %v612, %v3209
    %v3213 = vsel %vm3125, 0, %v3211
    %v3214 = vcosq.f32.pop %v3212
    %v3215 = vsinq.f32.pop %v3212
    %vm3216 = vweird.f32 %v612
    %v3217 = vand.u32 %v3213, 3
    %vm3218 = vcmp.lt.s32.totalorder %v3217, 2
    %vm3219 = vcmp.eq.s32.totalorder %v3217, 0
    %v3220 = vxor.u32 %v3215, 2147483648
    %v3221 = vsel %vm3219, %v3214, %v3220
    %vm3222 = vcmp.eq.s32.totalorder %v3217, 2
    %v3223 = vxor.u32 %v3214, 2147483648
    %v3224 = vsel %vm3222, %v3223, %v3215
    %v3225 = vsel %vm3218, %v3221, %v3224
    %v3226 = vsel %vm3216, nan, %v3225
    %v3227 = vand.u32 2147483647, %v613
    %vm3228 = vcmp.le.f32.partialorder %v3227, 0.7853982
    %vm3229 = vcmp.lt.s32.totalorder %v613, 0
    %v3230 = vand.u32 %v613, 2139095040
    %v3231 = vshrl.u32 %v3230, 23
    %v3232 = vsub.s32 %v3231, 127
    %v3233 = vand.u32 2147483647, %v613
    %v3234 = vand.u32 %v3233, 8388607
    %v3235 = vor.u32 %v3234, 8388608
    %v3236 = vsub.s32 0, %v3235
    %v3237 = vadd.s32 %v3232, 1
    %vm3238 = vcmp.gt.s32.totalorder %v3237, 0
    %v3239 = vsel %vm3238, %v3237, 0
    %v3240 = vshrl.u32 %v3239, 5
    %v3241 = vand.u32 %v3239, 31
    %v3242 = vsub.s32 32, %v3241
    %v3243 = vshrl.u32 683565275, %v3242
    %v3244 = vshll.u32 683565275, %v3241
    %v3245 = vshrl.u32 2475754826, %v3242
    %v3246 = vor.u32 %v3244, %v3245
    %v3247 = vshll.u32 2475754826, %v3241
    %v3248 = vshrl.u32 2131351028, %v3242
    %v3249 = vor.u32 %v3247, %v3248
    %v3250 = vshll.u32 2131351028, %v3241
    %v3251 = vshrl.u32 2102212464, %v3242
    %v3252 = vor.u32 %v3250, %v3251
    %v3253 = vshll.u32 2102212464, %v3241
    %v3254 = vshrl.u32 920167782, %v3242
    %v3255 = vor.u32 %v3253, %v3254
    %v3256 = vshll.u32 920167782, %v3241
    %v3257 = vshrl.u32 1326507024, %v3242
    %v3258 = vor.u32 %v3256, %v3257
    %vm3259 = vcmp.lt.s32.totalorder %v3240, 1
    %vm3260 = vcmp.lt.s32.totalorder %v3240, 2
    %vm3261 = vcmp.lt.s32.totalorder %v3240, 3
    %vm3262 = vcmp.lt.s32.totalorder %v3240, 4
    %v3263 = vsel %vm3259, %v3243, %v3246
    %v3264 = vsel %vm3262, %v3252, 2102212464
    %v3265 = vsel %vm3261, %v3249, %v3264
    %v3266 = vsel %vm3260, %v3263, %v3265
    %v3267 = vsel %vm3259, %v3246, %v3249
    %v3268 = vsel %vm3262, %v3255, 920167782
    %v3269 = vsel %vm3261, %v3252, %v3268
    %v3270 = vsel %vm3260, %v3267, %v3269
    %v3271 = vsel %vm3259, %v3249, %v3252
    %v3272 = vsel %vm3262, %v3258, 1326507024
    %v3273 = vsel %vm3261, %v3255, %v3272
    %v3274 = vsel %vm3260, %v3271, %v3273
    %v3275 = vshll.u32 %v3235, 8
    %v3276 = vmul.u32.u64.compose %v3275, %v3274
    %v3277 = vextract.low.u32 %v3276
    %v3278 = vextract.high.u32 %v3276
    %v3279 = vmul.u32.u64.compose %v3275, %v3270
    %v3280 = vextract.low.u32 %v3279
    %v3281 = vextract.high.u32 %v3279
    %v3282 = vmul.u32 %v3275, %v3266
    %v3283 = vadd.s32 %v3278, %v3280
    %vm3284 = vc.u32 %v3278, %v3280
    %v3285 = vadd.s32 %v3281, 1
    %v3286 = vsel %vm3284, %v3285, %v3281
    %v3287 = vadd.s32 %v3282, %v3286
    %v3288 = vadd.s32 %v3287, 536870912
    %v3289 = vshrl.u32 %v3288, 30
    %v3290 = vshll.u32 %v3289, 30
    %v3291 = vsub.s32 %v3287, %v3290
    %vm3292 = vcmp.lt.s32.totalorder %v3291, 0
    %v3293 = vsub.s32 0, %v3291
    %v3294 = vsel %vm3292, %v3293, %v3291
    %v3295 = vclz %v3294
    %v3296 = vsub.s32 %v3295, 2
    %vm3297 = vcmp.gt.s32.totalorder 0, %v3296
    %v3298 = vsel %vm3297, 0, %v3296
    %v3299 = vsub.s32 32, %v3298
    %v3300 = vshll.u32 %v3291, %v3298
    %v3301 = vshrl.u32 %v3283, %v3299
    %v3302 = vor.u32 %v3300, %v3301
    %v3303 = vsub.s32 4294967266, %v3298
    %v3304 = vadd.s32 %v3303, 127
    %v3305 = vshll.u32 %v3304, 23
    %v3306 = vor.u32 4788187, %v3305
    %v3307 = vand.u32 2147483647, %v3306
    %v3309 = vcvt.s32.f32 %v3302
    %v3310 = vmul.f32 %v3309, %v3307
    %v3311 = vxor.u32 %v3310, 2147483648
    %v3312 = vsel %vm3229, %v3311, %v3310
    %v3313 = vsub.s32 4, %v3289
    %v3314 = vsel %vm3229, %v3313, %v3289
    %v3315 = vsel %vm3228, %v613, %v3312
    %v3316 = vsel %vm3228, 0, %v3314
    %v3317 = vcosq.f32.pop %v3315
    %v3318 = vsinq.f32.pop %v3315
    %vm3319 = vweird.f32 %v613
    %v3320 = vand.u32 %v3316, 3
    %vm3321 = vcmp.lt.s32.totalorder %v3320, 2
    %vm3322 = vcmp.eq.s32.totalorder %v3320, 0
    %v3323 = vxor.u32 %v3318, 2147483648
    %v3324 = vsel %vm3322, %v3317, %v3323
    %vm3325 = vcmp.eq.s32.totalorder %v3320, 2
    %v3326 = vxor.u32 %v3317, 2147483648
    %v3327 = vsel %vm3325, %v3326, %v3318
    %v3328 = vsel %vm3321, %v3324, %v3327
    %v3329 = vsel %vm3319, nan, %v3328
    %v3330 = vand.u32 2147483647, %v614
    %vm3331 = vcmp.le.f32.partialorder %v3330, 0.7853982
    %vm3332 = vcmp.lt.s32.totalorder %v614, 0
    %v3333 = vand.u32 %v614, 2139095040
    %v3334 = vshrl.u32 %v3333, 23
    %v3335 = vsub.s32 %v3334, 127
    %v3336 = vand.u32 2147483647, %v614
    %v3337 = vand.u32 %v3336, 8388607
    %v3338 = vor.u32 %v3337, 8388608
    %v3339 = vsub.s32 0, %v3338
    %v3340 = vadd.s32 %v3335, 1
    %vm3341 = vcmp.gt.s32.totalorder %v3340, 0
    %v3342 = vsel %vm3341, %v3340, 0
    %v3343 = vshrl.u32 %v3342, 5
    %v3344 = vand.u32 %v3342, 31
    %v3345 = vsub.s32 32, %v3344
    %v3346 = vshrl.u32 683565275, %v3345
    %v3347 = vshll.u32 683565275, %v3344
    %v3348 = vshrl.u32 2475754826, %v3345
    %v3349 = vor.u32 %v3347, %v3348
    %v3350 = vshll.u32 2475754826, %v3344
    %v3351 = vshrl.u32 2131351028, %v3345
    %v3352 = vor.u32 %v3350, %v3351
    %v3353 = vshll.u32 2131351028, %v3344
    %v3354 = vshrl.u32 2102212464, %v3345
    %v3355 = vor.u32 %v3353, %v3354
    %v3356 = vshll.u32 2102212464, %v3344
    %v3357 = vshrl.u32 920167782, %v3345
    %v3358 = vor.u32 %v3356, %v3357
    %v3359 = vshll.u32 920167782, %v3344
    %v3360 = vshrl.u32 1326507024, %v3345
    %v3361 = vor.u32 %v3359, %v3360
    %vm3362 = vcmp.lt.s32.totalorder %v3343, 1
    %vm3363 = vcmp.lt.s32.totalorder %v3343, 2
    %vm3364 = vcmp.lt.s32.totalorder %v3343, 3
    %vm3365 = vcmp.lt.s32.totalorder %v3343, 4
    %v3366 = vsel %vm3362, %v3346, %v3349
    %v3367 = vsel %vm3365, %v3355, 2102212464
    %v3368 = vsel %vm3364, %v3352, %v3367
    %v3369 = vsel %vm3363, %v3366, %v3368
    %v3370 = vsel %vm3362, %v3349, %v3352
    %v3371 = vsel %vm3365, %v3358, 920167782
    %v3372 = vsel %vm3364, %v3355, %v3371
    %v3373 = vsel %vm3363, %v3370, %v3372
    %v3374 = vsel %vm3362, %v3352, %v3355
    %v3375 = vsel %vm3365, %v3361, 1326507024
    %v3376 = vsel %vm3364, %v3358, %v3375
    %v3377 = vsel %vm3363, %v3374, %v3376
    %v3378 = vshll.u32 %v3338, 8
    %v3379 = vmul.u32.u64.compose %v3378, %v3377
    %v3380 = vextract.low.u32 %v3379
    %v3381 = vextract.high.u32 %v3379
    %v3382 = vmul.u32.u64.compose %v3378, %v3373
    %v3383 = vextract.low.u32 %v3382
    %v3384 = vextract.high.u32 %v3382
    %v3385 = vmul.u32 %v3378, %v3369
    %v3386 = vadd.s32 %v3381, %v3383
    %vm3387 = vc.u32 %v3381, %v3383
    %v3388 = vadd.s32 %v3384, 1
    %v3389 = vsel %vm3387, %v3388, %v3384
    %v3390 = vadd.s32 %v3385, %v3389
    %v3391 = vadd.s32 %v3390, 536870912
    %v3392 = vshrl.u32 %v3391, 30
    %v3393 = vshll.u32 %v3392, 30
    %v3394 = vsub.s32 %v3390, %v3393
    %vm3395 = vcmp.lt.s32.totalorder %v3394, 0
    %v3396 = vsub.s32 0, %v3394
    %v3397 = vsel %vm3395, %v3396, %v3394
    %v3398 = vclz %v3397
    %v3399 = vsub.s32 %v3398, 2
    %vm3400 = vcmp.gt.s32.totalorder 0, %v3399
    %v3401 = vsel %vm3400, 0, %v3399
    %v3402 = vsub.s32 32, %v3401
    %v3403 = vshll.u32 %v3394, %v3401
    %v3404 = vshrl.u32 %v3386, %v3402
    %v3405 = vor.u32 %v3403, %v3404
    %v3406 = vsub.s32 4294967266, %v3401
    %v3407 = vadd.s32 %v3406, 127
    %v3408 = vshll.u32 %v3407, 23
    %v3409 = vor.u32 4788187, %v3408
    %v3410 = vand.u32 2147483647, %v3409
    %v3412 = vcvt.s32.f32 %v3405
    %v3413 = vmul.f32 %v3412, %v3410
    %v3414 = vxor.u32 %v3413, 2147483648
    %v3415 = vsel %vm3332, %v3414, %v3413
    %v3416 = vsub.s32 4, %v3392
    %v3417 = vsel %vm3332, %v3416, %v3392
    %v3418 = vsel %vm3331, %v614, %v3415
    %v3419 = vsel %vm3331, 0, %v3417
    %v3420 = vcosq.f32.pop %v3418
    %v3421 = vsinq.f32.pop %v3418
    %vm3422 = vweird.f32 %v614
    %v3423 = vand.u32 %v3419, 3
    %vm3424 = vcmp.lt.s32.totalorder %v3423, 2
    %vm3425 = vcmp.eq.s32.totalorder %v3423, 0
    %v3426 = vxor.u32 %v3421, 2147483648
    %v3427 = vsel %vm3425, %v3420, %v3426
    %vm3428 = vcmp.eq.s32.totalorder %v3423, 2
    %v3429 = vxor.u32 %v3420, 2147483648
    %v3430 = vsel %vm3428, %v3429, %v3421
    %v3431 = vsel %vm3424, %v3427, %v3430
    %v3432 = vsel %vm3422, nan, %v3431
    %v3433 = vand.u32 2147483647, %v615
    %vm3434 = vcmp.le.f32.partialorder %v3433, 0.7853982
    %vm3435 = vcmp.lt.s32.totalorder %v615, 0
    %v3436 = vand.u32 %v615, 2139095040
    %v3437 = vshrl.u32 %v3436, 23
    %v3438 = vsub.s32 %v3437, 127
    %v3439 = vand.u32 2147483647, %v615
    %v3440 = vand.u32 %v3439, 8388607
    %v3441 = vor.u32 %v3440, 8388608
    %v3442 = vsub.s32 0, %v3441
    %v3443 = vadd.s32 %v3438, 1
    %vm3444 = vcmp.gt.s32.totalorder %v3443, 0
    %v3445 = vsel %vm3444, %v3443, 0
    %v3446 = vshrl.u32 %v3445, 5
    %v3447 = vand.u32 %v3445, 31
    %v3448 = vsub.s32 32, %v3447
    %v3449 = vshrl.u32 683565275, %v3448
    %v3450 = vshll.u32 683565275, %v3447
    %v3451 = vshrl.u32 2475754826, %v3448
    %v3452 = vor.u32 %v3450, %v3451
    %v3453 = vshll.u32 2475754826, %v3447
    %v3454 = vshrl.u32 2131351028, %v3448
    %v3455 = vor.u32 %v3453, %v3454
    %v3456 = vshll.u32 2131351028, %v3447
    %v3457 = vshrl.u32 2102212464, %v3448
    %v3458 = vor.u32 %v3456, %v3457
    %v3459 = vshll.u32 2102212464, %v3447
    %v3460 = vshrl.u32 920167782, %v3448
    %v3461 = vor.u32 %v3459, %v3460
    %v3462 = vshll.u32 920167782, %v3447
    %v3463 = vshrl.u32 1326507024, %v3448
    %v3464 = vor.u32 %v3462, %v3463
    %vm3465 = vcmp.lt.s32.totalorder %v3446, 1
    %vm3466 = vcmp.lt.s32.totalorder %v3446, 2
    %vm3467 = vcmp.lt.s32.totalorder %v3446, 3
    %vm3468 = vcmp.lt.s32.totalorder %v3446, 4
    %v3469 = vsel %vm3465, %v3449, %v3452
    %v3470 = vsel %vm3468, %v3458, 2102212464
    %v3471 = vsel %vm3467, %v3455, %v3470
    %v3472 = vsel %vm3466, %v3469, %v3471
    %v3473 = vsel %vm3465, %v3452, %v3455
    %v3474 = vsel %vm3468, %v3461, 920167782
    %v3475 = vsel %vm3467, %v3458, %v3474
    %v3476 = vsel %vm3466, %v3473, %v3475
    %v3477 = vsel %vm3465, %v3455, %v3458
    %v3478 = vsel %vm3468, %v3464, 1326507024
    %v3479 = vsel %vm3467, %v3461, %v3478
    %v3480 = vsel %vm3466, %v3477, %v3479
    %v3481 = vshll.u32 %v3441, 8
    %v3482 = vmul.u32.u64.compose %v3481, %v3480
    %v3483 = vextract.low.u32 %v3482
    %v3484 = vextract.high.u32 %v3482
    %v3485 = vmul.u32.u64.compose %v3481, %v3476
    %v3486 = vextract.low.u32 %v3485
    %v3487 = vextract.high.u32 %v3485
    %v3488 = vmul.u32 %v3481, %v3472
    %v3489 = vadd.s32 %v3484, %v3486
    %vm3490 = vc.u32 %v3484, %v3486
    %v3491 = vadd.s32 %v3487, 1
    %v3492 = vsel %vm3490, %v3491, %v3487
    %v3493 = vadd.s32 %v3488, %v3492
    %v3494 = vadd.s32 %v3493, 536870912
    %v3495 = vshrl.u32 %v3494, 30
    %v3496 = vshll.u32 %v3495, 30
    %v3497 = vsub.s32 %v3493, %v3496
    %vm3498 = vcmp.lt.s32.totalorder %v3497, 0
    %v3499 = vsub.s32 0, %v3497
    %v3500 = vsel %vm3498, %v3499, %v3497
    %v3501 = vclz %v3500
    %v3502 = vsub.s32 %v3501, 2
    %vm3503 = vcmp.gt.s32.totalorder 0, %v3502
    %v3504 = vsel %vm3503, 0, %v3502
    %v3505 = vsub.s32 32, %v3504
    %v3506 = vshll.u32 %v3497, %v3504
    %v3507 = vshrl.u32 %v3489, %v3505
    %v3508 = vor.u32 %v3506, %v3507
    %v3509 = vsub.s32 4294967266, %v3504
    %v3510 = vadd.s32 %v3509, 127
    %v3511 = vshll.u32 %v3510, 23
    %v3512 = vor.u32 4788187, %v3511
    %v3513 = vand.u32 2147483647, %v3512
    %v3515 = vcvt.s32.f32 %v3508
    %v3516 = vmul.f32 %v3515, %v3513
    %v3517 = vxor.u32 %v3516, 2147483648
    %v3518 = vsel %vm3435, %v3517, %v3516
    %v3519 = vsub.s32 4, %v3495
    %v3520 = vsel %vm3435, %v3519, %v3495
    %v3521 = vsel %vm3434, %v615, %v3518
    %v3522 = vsel %vm3434, 0, %v3520
    %v3523 = vcosq.f32.pop %v3521
    %v3524 = vsinq.f32.pop %v3521
    %vm3525 = vweird.f32 %v615
    %v3526 = vand.u32 %v3522, 3
    %vm3527 = vcmp.lt.s32.totalorder %v3526, 2
    %vm3528 = vcmp.eq.s32.totalorder %v3526, 0
    %v3529 = vxor.u32 %v3524, 2147483648
    %v3530 = vsel %vm3528, %v3523, %v3529
    %vm3531 = vcmp.eq.s32.totalorder %v3526, 2
    %v3532 = vxor.u32 %v3523, 2147483648
    %v3533 = vsel %vm3531, %v3532, %v3524
    %v3534 = vsel %vm3527, %v3530, %v3533
    %v3535 = vsel %vm3525, nan, %v3534
    %v3536 = vand.u32 2147483647, %v616
    %vm3537 = vcmp.le.f32.partialorder %v3536, 0.7853982
    %vm3538 = vcmp.lt.s32.totalorder %v616, 0
    %v3539 = vand.u32 %v616, 2139095040
    %v3540 = vshrl.u32 %v3539, 23
    %v3541 = vsub.s32 %v3540, 127
    %v3542 = vand.u32 2147483647, %v616
    %v3543 = vand.u32 %v3542, 8388607
    %v3544 = vor.u32 %v3543, 8388608
    %v3545 = vsub.s32 0, %v3544
    %v3546 = vadd.s32 %v3541, 1
    %vm3547 = vcmp.gt.s32.totalorder %v3546, 0
    %v3548 = vsel %vm3547, %v3546, 0
    %v3549 = vshrl.u32 %v3548, 5
    %v3550 = vand.u32 %v3548, 31
    %v3551 = vsub.s32 32, %v3550
    %v3552 = vshrl.u32 683565275, %v3551
    %v3553 = vshll.u32 683565275, %v3550
    %v3554 = vshrl.u32 2475754826, %v3551
    %v3555 = vor.u32 %v3553, %v3554
    %v3556 = vshll.u32 2475754826, %v3550
    %v3557 = vshrl.u32 2131351028, %v3551
    %v3558 = vor.u32 %v3556, %v3557
    %v3559 = vshll.u32 2131351028, %v3550
    %v3560 = vshrl.u32 2102212464, %v3551
    %v3561 = vor.u32 %v3559, %v3560
    %v3562 = vshll.u32 2102212464, %v3550
    %v3563 = vshrl.u32 920167782, %v3551
    %v3564 = vor.u32 %v3562, %v3563
    %v3565 = vshll.u32 920167782, %v3550
    %v3566 = vshrl.u32 1326507024, %v3551
    %v3567 = vor.u32 %v3565, %v3566
    %vm3568 = vcmp.lt.s32.totalorder %v3549, 1
    %vm3569 = vcmp.lt.s32.totalorder %v3549, 2
    %vm3570 = vcmp.lt.s32.totalorder %v3549, 3
    %vm3571 = vcmp.lt.s32.totalorder %v3549, 4
    %v3572 = vsel %vm3568, %v3552, %v3555
    %v3573 = vsel %vm3571, %v3561, 2102212464
    %v3574 = vsel %vm3570, %v3558, %v3573
    %v3575 = vsel %vm3569, %v3572, %v3574
    %v3576 = vsel %vm3568, %v3555, %v3558
    %v3577 = vsel %vm3571, %v3564, 920167782
    %v3578 = vsel %vm3570, %v3561, %v3577
    %v3579 = vsel %vm3569, %v3576, %v3578
    %v3580 = vsel %vm3568, %v3558, %v3561
    %v3581 = vsel %vm3571, %v3567, 1326507024
    %v3582 = vsel %vm3570, %v3564, %v3581
    %v3583 = vsel %vm3569, %v3580, %v3582
    %v3584 = vshll.u32 %v3544, 8
    %v3585 = vmul.u32.u64.compose %v3584, %v3583
    %v3586 = vextract.low.u32 %v3585
    %v3587 = vextract.high.u32 %v3585
    %v3588 = vmul.u32.u64.compose %v3584, %v3579
    %v3589 = vextract.low.u32 %v3588
    %v3590 = vextract.high.u32 %v3588
    %v3591 = vmul.u32 %v3584, %v3575
    %v3592 = vadd.s32 %v3587, %v3589
    %vm3593 = vc.u32 %v3587, %v3589
    %v3594 = vadd.s32 %v3590, 1
    %v3595 = vsel %vm3593, %v3594, %v3590
    %v3596 = vadd.s32 %v3591, %v3595
    %v3597 = vadd.s32 %v3596, 536870912
    %v3598 = vshrl.u32 %v3597, 30
    %v3599 = vshll.u32 %v3598, 30
    %v3600 = vsub.s32 %v3596, %v3599
    %vm3601 = vcmp.lt.s32.totalorder %v3600, 0
    %v3602 = vsub.s32 0, %v3600
    %v3603 = vsel %vm3601, %v3602, %v3600
    %v3604 = vclz %v3603
    %v3605 = vsub.s32 %v3604, 2
    %vm3606 = vcmp.gt.s32.totalorder 0, %v3605
    %v3607 = vsel %vm3606, 0, %v3605
    %v3608 = vsub.s32 32, %v3607
    %v3609 = vshll.u32 %v3600, %v3607
    %v3610 = vshrl.u32 %v3592, %v3608
    %v3611 = vor.u32 %v3609, %v3610
    %v3612 = vsub.s32 4294967266, %v3607
    %v3613 = vadd.s32 %v3612, 127
    %v3614 = vshll.u32 %v3613, 23
    %v3615 = vor.u32 4788187, %v3614
    %v3616 = vand.u32 2147483647, %v3615
    %v3618 = vcvt.s32.f32 %v3611
    %v3619 = vmul.f32 %v3618, %v3616
    %v3620 = vxor.u32 %v3619, 2147483648
    %v3621 = vsel %vm3538, %v3620, %v3619
    %v3622 = vsub.s32 4, %v3598
    %v3623 = vsel %vm3538, %v3622, %v3598
    %v3624 = vsel %vm3537, %v616, %v3621
    %v3625 = vsel %vm3537, 0, %v3623
    %v3626 = vcosq.f32.pop %v3624
    %v3627 = vsinq.f32.pop %v3624
    %vm3628 = vweird.f32 %v616
    %v3629 = vand.u32 %v3625, 3
    %vm3630 = vcmp.lt.s32.totalorder %v3629, 2
    %vm3631 = vcmp.eq.s32.totalorder %v3629, 0
    %v3632 = vxor.u32 %v3627, 2147483648
    %v3633 = vsel %vm3631, %v3626, %v3632
    %vm3634 = vcmp.eq.s32.totalorder %v3629, 2
    %v3635 = vxor.u32 %v3626, 2147483648
    %v3636 = vsel %vm3634, %v3635, %v3627
    %v3637 = vsel %vm3630, %v3633, %v3636
    %v3638 = vsel %vm3628, nan, %v3637
    %v3639 = vand.u32 2147483647, %v617
    %vm3640 = vcmp.le.f32.partialorder %v3639, 0.7853982
    %vm3641 = vcmp.lt.s32.totalorder %v617, 0
    %v3642 = vand.u32 %v617, 2139095040
    %v3643 = vshrl.u32 %v3642, 23
    %v3644 = vsub.s32 %v3643, 127
    %v3645 = vand.u32 2147483647, %v617
    %v3646 = vand.u32 %v3645, 8388607
    %v3647 = vor.u32 %v3646, 8388608
    %v3648 = vsub.s32 0, %v3647
    %v3649 = vadd.s32 %v3644, 1
    %vm3650 = vcmp.gt.s32.totalorder %v3649, 0
    %v3651 = vsel %vm3650, %v3649, 0
    %v3652 = vshrl.u32 %v3651, 5
    %v3653 = vand.u32 %v3651, 31
    %v3654 = vsub.s32 32, %v3653
    %v3655 = vshrl.u32 683565275, %v3654
    %v3656 = vshll.u32 683565275, %v3653
    %v3657 = vshrl.u32 2475754826, %v3654
    %v3658 = vor.u32 %v3656, %v3657
    %v3659 = vshll.u32 2475754826, %v3653
    %v3660 = vshrl.u32 2131351028, %v3654
    %v3661 = vor.u32 %v3659, %v3660
    %v3662 = vshll.u32 2131351028, %v3653
    %v3663 = vshrl.u32 2102212464, %v3654
    %v3664 = vor.u32 %v3662, %v3663
    %v3665 = vshll.u32 2102212464, %v3653
    %v3666 = vshrl.u32 920167782, %v3654
    %v3667 = vor.u32 %v3665, %v3666
    %v3668 = vshll.u32 920167782, %v3653
    %v3669 = vshrl.u32 1326507024, %v3654
    %v3670 = vor.u32 %v3668, %v3669
    %vm3671 = vcmp.lt.s32.totalorder %v3652, 1
    %vm3672 = vcmp.lt.s32.totalorder %v3652, 2
    %vm3673 = vcmp.lt.s32.totalorder %v3652, 3
    %vm3674 = vcmp.lt.s32.totalorder %v3652, 4
    %v3675 = vsel %vm3671, %v3655, %v3658
    %v3676 = vsel %vm3674, %v3664, 2102212464
    %v3677 = vsel %vm3673, %v3661, %v3676
    %v3678 = vsel %vm3672, %v3675, %v3677
    %v3679 = vsel %vm3671, %v3658, %v3661
    %v3680 = vsel %vm3674, %v3667, 920167782
    %v3681 = vsel %vm3673, %v3664, %v3680
    %v3682 = vsel %vm3672, %v3679, %v3681
    %v3683 = vsel %vm3671, %v3661, %v3664
    %v3684 = vsel %vm3674, %v3670, 1326507024
    %v3685 = vsel %vm3673, %v3667, %v3684
    %v3686 = vsel %vm3672, %v3683, %v3685
    %v3687 = vshll.u32 %v3647, 8
    %v3688 = vmul.u32.u64.compose %v3687, %v3686
    %v3689 = vextract.low.u32 %v3688
    %v3690 = vextract.high.u32 %v3688
    %v3691 = vmul.u32.u64.compose %v3687, %v3682
    %v3692 = vextract.low.u32 %v3691
    %v3693 = vextract.high.u32 %v3691
    %v3694 = vmul.u32 %v3687, %v3678
    %v3695 = vadd.s32 %v3690, %v3692
    %vm3696 = vc.u32 %v3690, %v3692
    %v3697 = vadd.s32 %v3693, 1
    %v3698 = vsel %vm3696, %v3697, %v3693
    %v3699 = vadd.s32 %v3694, %v3698
    %v3700 = vadd.s32 %v3699, 536870912
    %v3701 = vshrl.u32 %v3700, 30
    %v3702 = vshll.u32 %v3701, 30
    %v3703 = vsub.s32 %v3699, %v3702
    %vm3704 = vcmp.lt.s32.totalorder %v3703, 0
    %v3705 = vsub.s32 0, %v3703
    %v3706 = vsel %vm3704, %v3705, %v3703
    %v3707 = vclz %v3706
    %v3708 = vsub.s32 %v3707, 2
    %vm3709 = vcmp.gt.s32.totalorder 0, %v3708
    %v3710 = vsel %vm3709, 0, %v3708
    %v3711 = vsub.s32 32, %v3710
    %v3712 = vshll.u32 %v3703, %v3710
    %v3713 = vshrl.u32 %v3695, %v3711
    %v3714 = vor.u32 %v3712, %v3713
    %v3715 = vsub.s32 4294967266, %v3710
    %v3716 = vadd.s32 %v3715, 127
    %v3717 = vshll.u32 %v3716, 23
    %v3718 = vor.u32 4788187, %v3717
    %v3719 = vand.u32 2147483647, %v3718
    %v3721 = vcvt.s32.f32 %v3714
    %v3722 = vmul.f32 %v3721, %v3719
    %v3723 = vxor.u32 %v3722, 2147483648
    %v3724 = vsel %vm3641, %v3723, %v3722
    %v3725 = vsub.s32 4, %v3701
    %v3726 = vsel %vm3641, %v3725, %v3701
    %v3727 = vsel %vm3640, %v617, %v3724
    %v3728 = vsel %vm3640, 0, %v3726
    %v3729 = vcosq.f32.pop %v3727
    %v3730 = vsinq.f32.pop %v3727
    %vm3731 = vweird.f32 %v617
    %v3732 = vand.u32 %v3728, 3
    %vm3733 = vcmp.lt.s32.totalorder %v3732, 2
    %vm3734 = vcmp.eq.s32.totalorder %v3732, 0
    %v3735 = vxor.u32 %v3730, 2147483648
    %v3736 = vsel %vm3734, %v3729, %v3735
    %vm3737 = vcmp.eq.s32.totalorder %v3732, 2
    %v3738 = vxor.u32 %v3729, 2147483648
    %v3739 = vsel %vm3737, %v3738, %v3730
    %v3740 = vsel %vm3733, %v3736, %v3739
    %v3741 = vsel %vm3731, nan, %v3740
    %v3742 = vand.u32 2147483647, %v618
    %vm3743 = vcmp.le.f32.partialorder %v3742, 0.7853982
    %vm3744 = vcmp.lt.s32.totalorder %v618, 0
    %v3745 = vand.u32 %v618, 2139095040
    %v3746 = vshrl.u32 %v3745, 23
    %v3747 = vsub.s32 %v3746, 127
    %v3748 = vand.u32 2147483647, %v618
    %v3749 = vand.u32 %v3748, 8388607
    %v3750 = vor.u32 %v3749, 8388608
    %v3751 = vsub.s32 0, %v3750
    %v3752 = vadd.s32 %v3747, 1
    %vm3753 = vcmp.gt.s32.totalorder %v3752, 0
    %v3754 = vsel %vm3753, %v3752, 0
    %v3755 = vshrl.u32 %v3754, 5
    %v3756 = vand.u32 %v3754, 31
    %v3757 = vsub.s32 32, %v3756
    %v3758 = vshrl.u32 683565275, %v3757
    %v3759 = vshll.u32 683565275, %v3756
    %v3760 = vshrl.u32 2475754826, %v3757
    %v3761 = vor.u32 %v3759, %v3760
    %v3762 = vshll.u32 2475754826, %v3756
    %v3763 = vshrl.u32 2131351028, %v3757
    %v3764 = vor.u32 %v3762, %v3763
    %v3765 = vshll.u32 2131351028, %v3756
    %v3766 = vshrl.u32 2102212464, %v3757
    %v3767 = vor.u32 %v3765, %v3766
    %v3768 = vshll.u32 2102212464, %v3756
    %v3769 = vshrl.u32 920167782, %v3757
    %v3770 = vor.u32 %v3768, %v3769
    %v3771 = vshll.u32 920167782, %v3756
    %v3772 = vshrl.u32 1326507024, %v3757
    %v3773 = vor.u32 %v3771, %v3772
    %vm3774 = vcmp.lt.s32.totalorder %v3755, 1
    %vm3775 = vcmp.lt.s32.totalorder %v3755, 2
    %vm3776 = vcmp.lt.s32.totalorder %v3755, 3
    %vm3777 = vcmp.lt.s32.totalorder %v3755, 4
    %v3778 = vsel %vm3774, %v3758, %v3761
    %v3779 = vsel %vm3777, %v3767, 2102212464
    %v3780 = vsel %vm3776, %v3764, %v3779
    %v3781 = vsel %vm3775, %v3778, %v3780
    %v3782 = vsel %vm3774, %v3761, %v3764
    %v3783 = vsel %vm3777, %v3770, 920167782
    %v3784 = vsel %vm3776, %v3767, %v3783
    %v3785 = vsel %vm3775, %v3782, %v3784
    %v3786 = vsel %vm3774, %v3764, %v3767
    %v3787 = vsel %vm3777, %v3773, 1326507024
    %v3788 = vsel %vm3776, %v3770, %v3787
    %v3789 = vsel %vm3775, %v3786, %v3788
    %v3790 = vshll.u32 %v3750, 8
    %v3791 = vmul.u32.u64.compose %v3790, %v3789
    %v3792 = vextract.low.u32 %v3791
    %v3793 = vextract.high.u32 %v3791
    %v3794 = vmul.u32.u64.compose %v3790, %v3785
    %v3795 = vextract.low.u32 %v3794
    %v3796 = vextract.high.u32 %v3794
    %v3797 = vmul.u32 %v3790, %v3781
    %v3798 = vadd.s32 %v3793, %v3795
    %vm3799 = vc.u32 %v3793, %v3795
    %v3800 = vadd.s32 %v3796, 1
    %v3801 = vsel %vm3799, %v3800, %v3796
    %v3802 = vadd.s32 %v3797, %v3801
    %v3803 = vadd.s32 %v3802, 536870912
    %v3804 = vshrl.u32 %v3803, 30
    %v3805 = vshll.u32 %v3804, 30
    %v3806 = vsub.s32 %v3802, %v3805
    %vm3807 = vcmp.lt.s32.totalorder %v3806, 0
    %v3808 = vsub.s32 0, %v3806
    %v3809 = vsel %vm3807, %v3808, %v3806
    %v3810 = vclz %v3809
    %v3811 = vsub.s32 %v3810, 2
    %vm3812 = vcmp.gt.s32.totalorder 0, %v3811
    %v3813 = vsel %vm3812, 0, %v3811
    %v3814 = vsub.s32 32, %v3813
    %v3815 = vshll.u32 %v3806, %v3813
    %v3816 = vshrl.u32 %v3798, %v3814
    %v3817 = vor.u32 %v3815, %v3816
    %v3818 = vsub.s32 4294967266, %v3813
    %v3819 = vadd.s32 %v3818, 127
    %v3820 = vshll.u32 %v3819, 23
    %v3821 = vor.u32 4788187, %v3820
    %v3822 = vand.u32 2147483647, %v3821
    %v3824 = vcvt.s32.f32 %v3817
    %v3825 = vmul.f32 %v3824, %v3822
    %v3826 = vxor.u32 %v3825, 2147483648
    %v3827 = vsel %vm3744, %v3826, %v3825
    %v3828 = vsub.s32 4, %v3804
    %v3829 = vsel %vm3744, %v3828, %v3804
    %v3830 = vsel %vm3743, %v618, %v3827
    %v3831 = vsel %vm3743, 0, %v3829
    %v3832 = vcosq.f32.pop %v3830
    %v3833 = vsinq.f32.pop %v3830
    %vm3834 = vweird.f32 %v618
    %v3835 = vand.u32 %v3831, 3
    %vm3836 = vcmp.lt.s32.totalorder %v3835, 2
    %vm3837 = vcmp.eq.s32.totalorder %v3835, 0
    %v3838 = vxor.u32 %v3833, 2147483648
    %v3839 = vsel %vm3837, %v3832, %v3838
    %vm3840 = vcmp.eq.s32.totalorder %v3835, 2
    %v3841 = vxor.u32 %v3832, 2147483648
    %v3842 = vsel %vm3840, %v3841, %v3833
    %v3843 = vsel %vm3836, %v3839, %v3842
    %v3844 = vsel %vm3834, nan, %v3843
    %v3845 = vand.u32 2147483647, %v619
    %vm3846 = vcmp.le.f32.partialorder %v3845, 0.7853982
    %vm3847 = vcmp.lt.s32.totalorder %v619, 0
    %v3848 = vand.u32 %v619, 2139095040
    %v3849 = vshrl.u32 %v3848, 23
    %v3850 = vsub.s32 %v3849, 127
    %v3851 = vand.u32 2147483647, %v619
    %v3852 = vand.u32 %v3851, 8388607
    %v3853 = vor.u32 %v3852, 8388608
    %v3854 = vsub.s32 0, %v3853
    %v3855 = vadd.s32 %v3850, 1
    %vm3856 = vcmp.gt.s32.totalorder %v3855, 0
    %v3857 = vsel %vm3856, %v3855, 0
    %v3858 = vshrl.u32 %v3857, 5
    %v3859 = vand.u32 %v3857, 31
    %v3860 = vsub.s32 32, %v3859
    %v3861 = vshrl.u32 683565275, %v3860
    %v3862 = vshll.u32 683565275, %v3859
    %v3863 = vshrl.u32 2475754826, %v3860
    %v3864 = vor.u32 %v3862, %v3863
    %v3865 = vshll.u32 2475754826, %v3859
    %v3866 = vshrl.u32 2131351028, %v3860
    %v3867 = vor.u32 %v3865, %v3866
    %v3868 = vshll.u32 2131351028, %v3859
    %v3869 = vshrl.u32 2102212464, %v3860
    %v3870 = vor.u32 %v3868, %v3869
    %v3871 = vshll.u32 2102212464, %v3859
    %v3872 = vshrl.u32 920167782, %v3860
    %v3873 = vor.u32 %v3871, %v3872
    %v3874 = vshll.u32 920167782, %v3859
    %v3875 = vshrl.u32 1326507024, %v3860
    %v3876 = vor.u32 %v3874, %v3875
    %vm3877 = vcmp.lt.s32.totalorder %v3858, 1
    %vm3878 = vcmp.lt.s32.totalorder %v3858, 2
    %vm3879 = vcmp.lt.s32.totalorder %v3858, 3
    %vm3880 = vcmp.lt.s32.totalorder %v3858, 4
    %v3881 = vsel %vm3877, %v3861, %v3864
    %v3882 = vsel %vm3880, %v3870, 2102212464
    %v3883 = vsel %vm3879, %v3867, %v3882
    %v3884 = vsel %vm3878, %v3881, %v3883
    %v3885 = vsel %vm3877, %v3864, %v3867
    %v3886 = vsel %vm3880, %v3873, 920167782
    %v3887 = vsel %vm3879, %v3870, %v3886
    %v3888 = vsel %vm3878, %v3885, %v3887
    %v3889 = vsel %vm3877, %v3867, %v3870
    %v3890 = vsel %vm3880, %v3876, 1326507024
    %v3891 = vsel %vm3879, %v3873, %v3890
    %v3892 = vsel %vm3878, %v3889, %v3891
    %v3893 = vshll.u32 %v3853, 8
    %v3894 = vmul.u32.u64.compose %v3893, %v3892
    %v3895 = vextract.low.u32 %v3894
    %v3896 = vextract.high.u32 %v3894
    %v3897 = vmul.u32.u64.compose %v3893, %v3888
    %v3898 = vextract.low.u32 %v3897
    %v3899 = vextract.high.u32 %v3897
    %v3900 = vmul.u32 %v3893, %v3884
    %v3901 = vadd.s32 %v3896, %v3898
    %vm3902 = vc.u32 %v3896, %v3898
    %v3903 = vadd.s32 %v3899, 1
    %v3904 = vsel %vm3902, %v3903, %v3899
    %v3905 = vadd.s32 %v3900, %v3904
    %v3906 = vadd.s32 %v3905, 536870912
    %v3907 = vshrl.u32 %v3906, 30
    %v3908 = vshll.u32 %v3907, 30
    %v3909 = vsub.s32 %v3905, %v3908
    %vm3910 = vcmp.lt.s32.totalorder %v3909, 0
    %v3911 = vsub.s32 0, %v3909
    %v3912 = vsel %vm3910, %v3911, %v3909
    %v3913 = vclz %v3912
    %v3914 = vsub.s32 %v3913, 2
    %vm3915 = vcmp.gt.s32.totalorder 0, %v3914
    %v3916 = vsel %vm3915, 0, %v3914
    %v3917 = vsub.s32 32, %v3916
    %v3918 = vshll.u32 %v3909, %v3916
    %v3919 = vshrl.u32 %v3901, %v3917
    %v3920 = vor.u32 %v3918, %v3919
    %v3921 = vsub.s32 4294967266, %v3916
    %v3922 = vadd.s32 %v3921, 127
    %v3923 = vshll.u32 %v3922, 23
    %v3924 = vor.u32 4788187, %v3923
    %v3925 = vand.u32 2147483647, %v3924
    %v3927 = vcvt.s32.f32 %v3920
    %v3928 = vmul.f32 %v3927, %v3925
    %v3929 = vxor.u32 %v3928, 2147483648
    %v3930 = vsel %vm3847, %v3929, %v3928
    %v3931 = vsub.s32 4, %v3907
    %v3932 = vsel %vm3847, %v3931, %v3907
    %v3933 = vsel %vm3846, %v619, %v3930
    %v3934 = vsel %vm3846, 0, %v3932
    %v3935 = vcosq.f32.pop %v3933
    %v3936 = vsinq.f32.pop %v3933
    %vm3937 = vweird.f32 %v619
    %v3938 = vand.u32 %v3934, 3
    %vm3939 = vcmp.lt.s32.totalorder %v3938, 2
    %vm3940 = vcmp.eq.s32.totalorder %v3938, 0
    %v3941 = vxor.u32 %v3936, 2147483648
    %v3942 = vsel %vm3940, %v3935, %v3941
    %vm3943 = vcmp.eq.s32.totalorder %v3938, 2
    %v3944 = vxor.u32 %v3935, 2147483648
    %v3945 = vsel %vm3943, %v3944, %v3936
    %v3946 = vsel %vm3939, %v3942, %v3945
    %v3947 = vsel %vm3937, nan, %v3946
    %v3948 = vmul.f32 %v498, %v2402
    %v3949 = vmul.f32 %v498, %v2505
    %v3950 = vmul.f32 %v498, %v2608
    %v3951 = vmul.f32 %v498, %v2711
    %v3952 = vmul.f32 %v498, %v2814
    %v3953 = vmul.f32 %v498, %v2917
    %v3954 = vmul.f32 %v498, %v3020
    %v3955 = vmul.f32 %v498, %v3123
    %v3956 = vmul.f32 %v498, %v3226
    %v3957 = vmul.f32 %v498, %v3329
    %v3958 = vmul.f32 %v498, %v3432
    %v3959 = vmul.f32 %v498, %v3535
    %v3960 = vmul.f32 %v498, %v3638
    %v3961 = vmul.f32 %v498, %v3741
    %v3962 = vmul.f32 %v498, %v3844
    %v3963 = vmul.f32 %v498, %v3947
    %v3964 = vadd.f32 %v2284, %v3948
    %v3965 = vadd.f32 %v2285, %v3949
    %v3966 = vadd.f32 %v2286, %v3950
    %v3967 = vadd.f32 %v2287, %v3951
    %v3968 = vadd.f32 %v2288, %v3952
    %v3969 = vadd.f32 %v2289, %v3953
    %v3970 = vadd.f32 %v2290, %v3954
    %v3971 = vadd.f32 %v2291, %v3955
    %v3972 = vadd.f32 %v2292, %v3956
    %v3973 = vadd.f32 %v2293, %v3957
    %v3974 = vadd.f32 %v2294, %v3958
    %v3975 = vadd.f32 %v2295, %v3959
    %v3976 = vadd.f32 %v2296, %v3960
    %v3977 = vadd.f32 %v2297, %v3961
    %v3978 = vadd.f32 %v2298, %v3962
    %v3979 = vadd.f32 %v2299, %v3963
    %v3980 = vld [vmem:[%s2] sm:$0x3]
    %v3981 = vld [vmem:[%s5 + $0xa] sm:$0x1]
    %3983 = vset.pattern.permute.xlu0 0
    %3984 = vperm.xlu0 %3983, %v3980
    %v3985 = vpop.permute.xlu0 %3984
    %v3987 = vlaneseq
    %v3988 = vshrl.u32 %v3987, 7
    %v3989 = vsub.s32 0, %v3988
    %v3990 = vrot.slane %v3981, %v3989
    %v3991 = vmul.f32 %v3985, %v3990
    %v3992 = vld [vmem:[%s5 + $0xb] sm:$0x1]
    %v3993 = vand.u32 2147483647, %v3991
    %vm3994 = vcmp.le.f32.partialorder %v3993, 0.7853982
    %vm3995 = vcmp.lt.s32.totalorder %v3991, 0
    %v3996 = vand.u32 %v3991, 2139095040
    %v3997 = vshrl.u32 %v3996, 23
    %v3998 = vsub.s32 %v3997, 127
    %v3999 = vand.u32 2147483647, %v3991
    %v4000 = vand.u32 %v3999, 8388607
    %v4001 = vor.u32 %v4000, 8388608
    %v4002 = vsub.s32 0, %v4001
    %v4003 = vadd.s32 %v3998, 1
    %vm4004 = vcmp.gt.s32.totalorder %v4003, 0
    %v4005 = vsel %vm4004, %v4003, 0
    %v4006 = vshrl.u32 %v4005, 5
    %v4007 = vand.u32 %v4005, 31
    %v4008 = vsub.s32 32, %v4007
    %v4009 = vshrl.u32 683565275, %v4008
    %v4010 = vshll.u32 683565275, %v4007
    %v4011 = vshrl.u32 2475754826, %v4008
    %v4012 = vor.u32 %v4010, %v4011
    %v4013 = vshll.u32 2475754826, %v4007
    %v4014 = vshrl.u32 2131351028, %v4008
    %v4015 = vor.u32 %v4013, %v4014
    %v4016 = vshll.u32 2131351028, %v4007
    %v4017 = vshrl.u32 2102212464, %v4008
    %v4018 = vor.u32 %v4016, %v4017
    %v4019 = vshll.u32 2102212464, %v4007
    %v4020 = vshrl.u32 920167782, %v4008
    %v4021 = vor.u32 %v4019, %v4020
    %v4022 = vshll.u32 920167782, %v4007
    %v4023 = vshrl.u32 1326507024, %v4008
    %v4024 = vor.u32 %v4022, %v4023
    %vm4025 = vcmp.lt.s32.totalorder %v4006, 1
    %vm4026 = vcmp.lt.s32.totalorder %v4006, 2
    %vm4027 = vcmp.lt.s32.totalorder %v4006, 3
    %vm4028 = vcmp.lt.s32.totalorder %v4006, 4
    %v4029 = vsel %vm4025, %v4009, %v4012
    %v4030 = vsel %vm4028, %v4018, 2102212464
    %v4031 = vsel %vm4027, %v4015, %v4030
    %v4032 = vsel %vm4026, %v4029, %v4031
    %v4033 = vsel %vm4025, %v4012, %v4015
    %v4034 = vsel %vm4028, %v4021, 920167782
    %v4035 = vsel %vm4027, %v4018, %v4034
    %v4036 = vsel %vm4026, %v4033, %v4035
    %v4037 = vsel %vm4025, %v4015, %v4018
    %v4038 = vsel %vm4028, %v4024, 1326507024
    %v4039 = vsel %vm4027, %v4021, %v4038
    %v4040 = vsel %vm4026, %v4037, %v4039
    %v4041 = vshll.u32 %v4001, 8
    %v4042 = vmul.u32.u64.compose %v4041, %v4040
    %v4043 = vextract.low.u32 %v4042
    %v4044 = vextract.high.u32 %v4042
    %v4045 = vmul.u32.u64.compose %v4041, %v4036
    %v4046 = vextract.low.u32 %v4045
    %v4047 = vextract.high.u32 %v4045
    %v4048 = vmul.u32 %v4041, %v4032
    %v4049 = vadd.s32 %v4044, %v4046
    %vm4050 = vc.u32 %v4044, %v4046
    %v4051 = vadd.s32 %v4047, 1
    %v4052 = vsel %vm4050, %v4051, %v4047
    %v4053 = vadd.s32 %v4048, %v4052
    %v4054 = vadd.s32 %v4053, 536870912
    %v4055 = vshrl.u32 %v4054, 30
    %v4056 = vshll.u32 %v4055, 30
    %v4057 = vsub.s32 %v4053, %v4056
    %vm4058 = vcmp.lt.s32.totalorder %v4057, 0
    %v4059 = vsub.s32 0, %v4057
    %v4060 = vsel %vm4058, %v4059, %v4057
    %v4061 = vclz %v4060
    %v4062 = vsub.s32 %v4061, 2
    %vm4063 = vcmp.gt.s32.totalorder 0, %v4062
    %v4064 = vsel %vm4063, 0, %v4062
    %v4065 = vsub.s32 32, %v4064
    %v4066 = vshll.u32 %v4057, %v4064
    %v4067 = vshrl.u32 %v4049, %v4065
    %v4068 = vor.u32 %v4066, %v4067
    %v4069 = vsub.s32 4294967266, %v4064
    %v4070 = vadd.s32 %v4069, 127
    %v4071 = vshll.u32 %v4070, 23
    %v4072 = vor.u32 4788187, %v4071
    %v4073 = vand.u32 2147483647, %v4072
    %v4075 = vcvt.s32.f32 %v4068
    %v4076 = vmul.f32 %v4075, %v4073
    %v4077 = vxor.u32 %v4076, 2147483648
    %v4078 = vsel %vm3995, %v4077, %v4076
    %v4079 = vsub.s32 4, %v4055
    %v4080 = vsel %vm3995, %v4079, %v4055
    %v4081 = vsel %vm3994, %v3991, %v4078
    %v4082 = vsel %vm3994, 0, %v4080
    %v4083 = vcosq.f32.pop %v4081
    %v4084 = vsinq.f32.pop %v4081
    %vm4085 = vweird.f32 %v3991
    %v4086 = vand.u32 %v4082, 3
    %vm4087 = vcmp.lt.s32.totalorder %v4086, 2
    %vm4088 = vcmp.eq.s32.totalorder %v4086, 0
    %v4089 = vxor.u32 %v4084, 2147483648
    %v4090 = vsel %vm4088, %v4083, %v4089
    %vm4091 = vcmp.eq.s32.totalorder %v4086, 2
    %v4092 = vxor.u32 %v4083, 2147483648
    %v4093 = vsel %vm4091, %v4092, %v4084
    %v4094 = vsel %vm4087, %v4090, %v4093
    %v4095 = vsel %vm4085, nan, %v4094
    %v4096 = vlaneseq
    %v4097 = vshrl.u32 %v4096, 7
    %v4098 = vsub.s32 0, %v4097
    %v4099 = vrot.slane %v3992, %v4098
    %v4100 = vmul.f32 %v4099, %v4095
    %v4101 = vsub.f32 1.0, %v3992
    %v4102 = vand.u32 2147483647, %v3991
    %vm4103 = vcmp.le.f32.partialorder %v4102, 0.7853982
    %vm4104 = vcmp.lt.s32.totalorder %v3991, 0
    %v4105 = vand.u32 %v3991, 2139095040
    %v4106 = vshrl.u32 %v4105, 23
    %v4107 = vsub.s32 %v4106, 127
    %v4108 = vand.u32 2147483647, %v3991
    %v4109 = vand.u32 %v4108, 8388607
    %v4110 = vor.u32 %v4109, 8388608
    %v4111 = vsub.s32 0, %v4110
    %v4112 = vadd.s32 %v4107, 1
    %vm4113 = vcmp.gt.s32.totalorder %v4112, 0
    %v4114 = vsel %vm4113, %v4112, 0
    %v4115 = vshrl.u32 %v4114, 5
    %v4116 = vand.u32 %v4114, 31
    %v4117 = vsub.s32 32, %v4116
    %v4118 = vshrl.u32 683565275, %v4117
    %v4119 = vshll.u32 683565275, %v4116
    %v4120 = vshrl.u32 2475754826, %v4117
    %v4121 = vor.u32 %v4119, %v4120
    %v4122 = vshll.u32 2475754826, %v4116
    %v4123 = vshrl.u32 2131351028, %v4117
    %v4124 = vor.u32 %v4122, %v4123
    %v4125 = vshll.u32 2131351028, %v4116
    %v4126 = vshrl.u32 2102212464, %v4117
    %v4127 = vor.u32 %v4125, %v4126
    %v4128 = vshll.u32 2102212464, %v4116
    %v4129 = vshrl.u32 920167782, %v4117
    %v4130 = vor.u32 %v4128, %v4129
    %v4131 = vshll.u32 920167782, %v4116
    %v4132 = vshrl.u32 1326507024, %v4117
    %v4133 = vor.u32 %v4131, %v4132
    %vm4134 = vcmp.lt.s32.totalorder %v4115, 1
    %vm4135 = vcmp.lt.s32.totalorder %v4115, 2
    %vm4136 = vcmp.lt.s32.totalorder %v4115, 3
    %vm4137 = vcmp.lt.s32.totalorder %v4115, 4
    %v4138 = vsel %vm4134, %v4118, %v4121
    %v4139 = vsel %vm4137, %v4127, 2102212464
    %v4140 = vsel %vm4136, %v4124, %v4139
    %v4141 = vsel %vm4135, %v4138, %v4140
    %v4142 = vsel %vm4134, %v4121, %v4124
    %v4143 = vsel %vm4137, %v4130, 920167782
    %v4144 = vsel %vm4136, %v4127, %v4143
    %v4145 = vsel %vm4135, %v4142, %v4144
    %v4146 = vsel %vm4134, %v4124, %v4127
    %v4147 = vsel %vm4137, %v4133, 1326507024
    %v4148 = vsel %vm4136, %v4130, %v4147
    %v4149 = vsel %vm4135, %v4146, %v4148
    %v4150 = vshll.u32 %v4110, 8
    %v4151 = vmul.u32.u64.compose %v4150, %v4149
    %v4152 = vextract.low.u32 %v4151
    %v4153 = vextract.high.u32 %v4151
    %v4154 = vmul.u32.u64.compose %v4150, %v4145
    %v4155 = vextract.low.u32 %v4154
    %v4156 = vextract.high.u32 %v4154
    %v4157 = vmul.u32 %v4150, %v4141
    %v4158 = vadd.s32 %v4153, %v4155
    %vm4159 = vc.u32 %v4153, %v4155
    %v4160 = vadd.s32 %v4156, 1
    %v4161 = vsel %vm4159, %v4160, %v4156
    %v4162 = vadd.s32 %v4157, %v4161
    %v4163 = vadd.s32 %v4162, 536870912
    %v4164 = vshrl.u32 %v4163, 30
    %v4165 = vshll.u32 %v4164, 30
    %v4166 = vsub.s32 %v4162, %v4165
    %vm4167 = vcmp.lt.s32.totalorder %v4166, 0
    %v4168 = vsub.s32 0, %v4166
    %v4169 = vsel %vm4167, %v4168, %v4166
    %v4170 = vclz %v4169
    %v4171 = vsub.s32 %v4170, 2
    %vm4172 = vcmp.gt.s32.totalorder 0, %v4171
    %v4173 = vsel %vm4172, 0, %v4171
    %v4174 = vsub.s32 32, %v4173
    %v4175 = vshll.u32 %v4166, %v4173
    %v4176 = vshrl.u32 %v4158, %v4174
    %v4177 = vor.u32 %v4175, %v4176
    %v4178 = vsub.s32 4294967266, %v4173
    %v4179 = vadd.s32 %v4178, 127
    %v4180 = vshll.u32 %v4179, 23
    %v4181 = vor.u32 4788187, %v4180
    %v4182 = vand.u32 2147483647, %v4181
    %v4184 = vcvt.s32.f32 %v4177
    %v4185 = vmul.f32 %v4184, %v4182
    %v4186 = vxor.u32 %v4185, 2147483648
    %v4187 = vsel %vm4104, %v4186, %v4185
    %v4188 = vsub.s32 4, %v4164
    %v4189 = vsel %vm4104, %v4188, %v4164
    %v4190 = vsel %vm4103, %v3991, %v4187
    %v4191 = vsel %vm4103, 0, %v4189
    %v4192 = vcosq.f32.pop %v4190
    %v4193 = vsinq.f32.pop %v4190
    %vm4194 = vweird.f32 %v3991
    %v4195 = vadd.s32 %v4191, 3
    %v4196 = vand.u32 %v4195, 3
    %vm4197 = vcmp.lt.s32.totalorder %v4196, 2
    %vm4198 = vcmp.eq.s32.totalorder %v4196, 0
    %v4199 = vxor.u32 %v4193, 2147483648
    %v4200 = vsel %vm4198, %v4192, %v4199
    %vm4201 = vcmp.eq.s32.totalorder %v4196, 2
    %v4202 = vxor.u32 %v4192, 2147483648
    %v4203 = vsel %vm4201, %v4202, %v4193
    %v4204 = vsel %vm4197, %v4200, %v4203
    %v4205 = vsel %vm4194, nan, %v4204
    %v4206 = vlaneseq
    %v4207 = vshrl.u32 %v4206, 7
    %v4208 = vsub.s32 0, %v4207
    %v4209 = vrot.slane %v4101, %v4208
    %v4210 = vmul.f32 %v4209, %v4205
    %v4211 = vadd.f32 %v4100, %v4210
    %s4212 = scalar_lea.vmem [#allocation2], 64
    %v4213 = vld [vmem:[%s4212] sm:$0xff]
    %v4214 = vld [vmem:[%s4212 + $0x8] sm:$0xff]
    %v4215 = vld [vmem:[%s4212 + $0x10] sm:$0xff]
    %v4216 = vld [vmem:[%s4212 + $0x18] sm:$0xff]
    %v4217 = vld [vmem:[%s5 + $0x2] sm:$0x1]
    %v4218 = vlaneseq
    %v4219 = vshrl.u32 %v4218, 7
    %v4220 = vsub.s32 0, %v4219
    %v4221 = vrot.slane %v4217, %v4220
    %vm4222 = vcmask 261120
    %v4224 = vsel %vm4222, %v4211, 0
    %4226 = vmatprep.subr.mxu0 0.0
    %4227 = vmatpush1.msra.mxu0 0.0
    %4228 = vmatprep.subr.mxu0 0.0
    %4229 = vmatpush1.msra.mxu0 0.0
    %4230 = vmatprep.subr.mxu0 0.0
    %4231 = vmatpush1.msra.mxu0 0.0
    %4232 = vmatprep.subr.mxu0 0.0
    %4233 = vmatpush1.msra.mxu0 0.0
    %4234 = vmatprep.subr.mxu0 0.0
    %4235 = vmatpush1.msra.mxu0 0.0
    %4236 = vmatprep.subr.mxu0 0.0
    %4237 = vmatpush1.msra.mxu0 0.0
    %4238 = vmatprep.subr.mxu0 0.0
    %4239 = vmatpush1.msra.mxu0 0.0
    %4240 = vmatprep.subr.mxu0 0.0
    %4241 = vmatpush1.msra.mxu0 0.0
    %4242 = vmatprep.subr.mxu0 0.0
    %4243 = vmatpush1.msra.mxu0 0.0
    %4244 = vmatprep.subr.mxu0 0.0
    %4245 = vmatpush1.msra.mxu0 0.0
    %4246 = vmatprep.subr.mxu0 0.0
    %4247 = vmatpush1.msra.mxu0 0.0
    %4248 = vmatprep.subr.mxu0 0.0
    %4249 = vmatpush1.msra.mxu0 0.0
    %4250 = vmatprep.subr.mxu0 0.0
    %4251 = vmatpush1.msra.mxu0 %v4216
    %4252 = vmatprep.subr.mxu0 0.0
    %4253 = vmatpush1.msra.mxu0 %v4215
    %4254 = vmatprep.subr.mxu0 0.0
    %4255 = vmatpush1.msra.mxu0 %v4214
    %4256 = vmatprep.subr.mxu0 0.0
    %4257 = vmatpush1.msra.mxu0 %v4213
    %4258 = vmatprep.subr.mxu0 0.0
    %4259 = vmatpush2.msra.mxu0 0.0
    %4260 = vmatprep.subr.mxu0 0.0
    %4261 = vmatpush2.msra.mxu0 0.0
    %4262 = vmatprep.subr.mxu0 0.0
    %4263 = vmatpush2.msra.mxu0 0.0
    %4264 = vmatprep.subr.mxu0 0.0
    %4265 = vmatpush2.msra.mxu0 0.0
    %4266 = vmatprep.subr.mxu0 0.0
    %4267 = vmatpush2.msra.mxu0 0.0
    %4268 = vmatprep.subr.mxu0 0.0
    %4269 = vmatpush2.msra.mxu0 0.0
    %4270 = vmatprep.subr.mxu0 0.0
    %4271 = vmatpush2.msra.mxu0 0.0
    %4272 = vmatprep.subr.mxu0 0.0
    %4273 = vmatpush2.msra.mxu0 0.0
    %4274 = vmatprep.subr.mxu0 0.0
    %4275 = vmatpush2.msra.mxu0 0.0
    %4276 = vmatprep.subr.mxu0 0.0
    %4277 = vmatpush2.msra.mxu0 0.0
    %4278 = vmatprep.subr.mxu0 0.0
    %4279 = vmatpush2.msra.mxu0 0.0
    %4280 = vmatprep.subr.mxu0 0.0
    %4281 = vmatpush2.msra.mxu0 0.0
    %4282 = vmatprep.subr.mxu0 0.0
    %4283 = vmatpush2.msra.mxu0 0.0
    %4284 = vmatprep.subr.mxu0 0.0
    %4285 = vmatpush2.msra.mxu0 0.0
    %4286 = vmatprep.subr.mxu0 0.0
    %4287 = vmatpush2.msra.mxu0 0.0
    %4288 = vmatprep.subr.mxu0 0.0
    %4289 = vmatpush2.msra.mxu0 0.0
    %4290 = vmatprep.mubr.f32.mxu0 0.0
    %4291 = vmatmul.mubr.f32.gmra.mxu0 %v4224
    %v4292 = vpop.f32.mrf.mxu0
    %v4293 = vadd.f32 %v4221, %v4292
    %v4294 = vpop.f32.mrf.mxu0
    %4295 = vdwg.mxu0
    %v4296 = vmax.f32 %v4293, 0.0
    %s4297 = scalar_lea.vmem [#allocation2], 96
    %v4298 = vld [vmem:[%s4297] sm:$0xff]
    %v4299 = vld [vmem:[%s4297 + $0x8] sm:$0xff]
    %v4300 = vld [vmem:[%s4297 + $0x10] sm:$0xff]
    %v4301 = vld [vmem:[%s4297 + $0x18] sm:$0xff]
    %v4302 = vld [vmem:[%s5 + $0x3] sm:$0x1]
    %v4303 = vlaneseq
    %v4304 = vshrl.u32 %v4303, 7
    %v4305 = vsub.s32 0, %v4304
    %v4306 = vrot.slane %v4302, %v4305
    %v4308 = vsel %vm4222, %v4296, 0
    %4310 = vmatprep.subr.mxu0 0.0
    %4311 = vmatpush1.msra.mxu0 0.0
    %4312 = vmatprep.subr.mxu0 0.0
    %4313 = vmatpush1.msra.mxu0 0.0
    %4314 = vmatprep.subr.mxu0 0.0
    %4315 = vmatpush1.msra.mxu0 0.0
    %4316 = vmatprep.subr.mxu0 0.0
    %4317 = vmatpush1.msra.mxu0 0.0
    %4318 = vmatprep.subr.mxu0 0.0
    %4319 = vmatpush1.msra.mxu0 0.0
    %4320 = vmatprep.subr.mxu0 0.0
    %4321 = vmatpush1.msra.mxu0 0.0
    %4322 = vmatprep.subr.mxu0 0.0
    %4323 = vmatpush1.msra.mxu0 0.0
    %4324 = vmatprep.subr.mxu0 0.0
    %4325 = vmatpush1.msra.mxu0 0.0
    %4326 = vmatprep.subr.mxu0 0.0
    %4327 = vmatpush1.msra.mxu0 0.0
    %4328 = vmatprep.subr.mxu0 0.0
    %4329 = vmatpush1.msra.mxu0 0.0
    %4330 = vmatprep.subr.mxu0 0.0
    %4331 = vmatpush1.msra.mxu0 0.0
    %4332 = vmatprep.subr.mxu0 0.0
    %4333 = vmatpush1.msra.mxu0 0.0
    %4334 = vmatprep.subr.mxu0 0.0
    %4335 = vmatpush1.msra.mxu0 %v4301
    %4336 = vmatprep.subr.mxu0 0.0
    %4337 = vmatpush1.msra.mxu0 %v4300
    %4338 = vmatprep.subr.mxu0 0.0
    %4339 = vmatpush1.msra.mxu0 %v4299
    %4340 = vmatprep.subr.mxu0 0.0
    %4341 = vmatpush1.msra.mxu0 %v4298
    %4342 = vmatprep.subr.mxu0 0.0
    %4343 = vmatpush2.msra.mxu0 0.0
    %4344 = vmatprep.subr.mxu0 0.0
    %4345 = vmatpush2.msra.mxu0 0.0
    %4346 = vmatprep.subr.mxu0 0.0
    %4347 = vmatpush2.msra.mxu0 0.0
    %4348 = vmatprep.subr.mxu0 0.0
    %4349 = vmatpush2.msra.mxu0 0.0
    %4350 = vmatprep.subr.mxu0 0.0
    %4351 = vmatpush2.msra.mxu0 0.0
    %4352 = vmatprep.subr.mxu0 0.0
    %4353 = vmatpush2.msra.mxu0 0.0
    %4354 = vmatprep.subr.mxu0 0.0
    %4355 = vmatpush2.msra.mxu0 0.0
    %4356 = vmatprep.subr.mxu0 0.0
    %4357 = vmatpush2.msra.mxu0 0.0
    %4358 = vmatprep.subr.mxu0 0.0
    %4359 = vmatpush2.msra.mxu0 0.0
    %4360 = vmatprep.subr.mxu0 0.0
    %4361 = vmatpush2.msra.mxu0 0.0
    %4362 = vmatprep.subr.mxu0 0.0
    %4363 = vmatpush2.msra.mxu0 0.0
    %4364 = vmatprep.subr.mxu0 0.0
    %4365 = vmatpush2.msra.mxu0 0.0
    %4366 = vmatprep.subr.mxu0 0.0
    %4367 = vmatpush2.msra.mxu0 0.0
    %4368 = vmatprep.subr.mxu0 0.0
    %4369 = vmatpush2.msra.mxu0 0.0
    %4370 = vmatprep.subr.mxu0 0.0
    %4371 = vmatpush2.msra.mxu0 0.0
    %4372 = vmatprep.subr.mxu0 0.0
    %4373 = vmatpush2.msra.mxu0 0.0
    %4374 = vmatprep.mubr.f32.mxu0 0.0
    %4375 = vmatmul.mubr.f32.gmra.mxu0 %v4308
    %v4376 = vpop.f32.mrf.mxu0
    %v4377 = vadd.f32 %v4306, %v4376
    %v4378 = vpop.f32.mrf.mxu0
    %4379 = vdwg.mxu0
    %v4380 = vmax.f32 %v4377, 0.0
    %v4381 = vld [vmem:[#allocation2] sm:$0xff]
    %v4382 = vld [vmem:[#allocation2 + $0x8] sm:$0xff]
    %v4383 = vld [vmem:[#allocation2 + $0x10] sm:$0xff]
    %v4384 = vld [vmem:[#allocation2 + $0x18] sm:$0xff]
    %v4385 = vld [vmem:[%s5] sm:$0x1]
    %v4386 = vlaneseq
    %v4387 = vshrl.u32 %v4386, 7
    %v4388 = vsub.s32 0, %v4387
    %v4389 = vrot.slane %v4385, %v4388
    %v4391 = vsel %vm4222, %v501, 0
    %v4394 = vsel %vm4222, %v502, 0
    %4396 = vmatprep.subr.mxu0 0.0
    %4397 = vmatpush1.msra.mxu0 0.0
    %4398 = vmatprep.subr.mxu0 0.0
    %4399 = vmatpush1.msra.mxu0 0.0
    %4400 = vmatprep.subr.mxu0 0.0
    %4401 = vmatpush1.msra.mxu0 0.0
    %4402 = vmatprep.subr.mxu0 0.0
    %4403 = vmatpush1.msra.mxu0 0.0
    %4404 = vmatprep.subr.mxu0 0.0
    %4405 = vmatpush1.msra.mxu0 0.0
    %4406 = vmatprep.subr.mxu0 0.0
    %4407 = vmatpush1.msra.mxu0 0.0
    %4408 = vmatprep.subr.mxu0 0.0
    %4409 = vmatpush1.msra.mxu0 0.0
    %4410 = vmatprep.subr.mxu0 0.0
    %4411 = vmatpush1.msra.mxu0 0.0
    %4412 = vmatprep.subr.mxu0 0.0
    %4413 = vmatpush1.msra.mxu0 0.0
    %4414 = vmatprep.subr.mxu0 0.0
    %4415 = vmatpush1.msra.mxu0 0.0
    %4416 = vmatprep.subr.mxu0 0.0
    %4417 = vmatpush1.msra.mxu0 0.0
    %4418 = vmatprep.subr.mxu0 0.0
    %4419 = vmatpush1.msra.mxu0 0.0
    %4420 = vmatprep.subr.mxu0 0.0
    %4421 = vmatpush1.msra.mxu0 %v4384
    %4422 = vmatprep.subr.mxu0 0.0
    %4423 = vmatpush1.msra.mxu0 %v4383
    %4424 = vmatprep.subr.mxu0 0.0
    %4425 = vmatpush1.msra.mxu0 %v4382
    %4426 = vmatprep.subr.mxu0 0.0
    %4427 = vmatpush1.msra.mxu0 %v4381
    %4428 = vmatprep.subr.mxu0 0.0
    %4429 = vmatpush2.msra.mxu0 0.0
    %4430 = vmatprep.subr.mxu0 0.0
    %4431 = vmatpush2.msra.mxu0 0.0
    %4432 = vmatprep.subr.mxu0 0.0
    %4433 = vmatpush2.msra.mxu0 0.0
    %4434 = vmatprep.subr.mxu0 0.0
    %4435 = vmatpush2.msra.mxu0 0.0
    %4436 = vmatprep.subr.mxu0 0.0
    %4437 = vmatpush2.msra.mxu0 0.0
    %4438 = vmatprep.subr.mxu0 0.0
    %4439 = vmatpush2.msra.mxu0 0.0
    %4440 = vmatprep.subr.mxu0 0.0
    %4441 = vmatpush2.msra.mxu0 0.0
    %4442 = vmatprep.subr.mxu0 0.0
    %4443 = vmatpush2.msra.mxu0 0.0
    %4444 = vmatprep.subr.mxu0 0.0
    %4445 = vmatpush2.msra.mxu0 0.0
    %4446 = vmatprep.subr.mxu0 0.0
    %4447 = vmatpush2.msra.mxu0 0.0
    %4448 = vmatprep.subr.mxu0 0.0
    %4449 = vmatpush2.msra.mxu0 0.0
    %4450 = vmatprep.subr.mxu0 0.0
    %4451 = vmatpush2.msra.mxu0 0.0
    %4452 = vmatprep.subr.mxu0 0.0
    %4453 = vmatpush2.msra.mxu0 0.0
    %4454 = vmatprep.subr.mxu0 0.0
    %4455 = vmatpush2.msra.mxu0 0.0
    %4456 = vmatprep.subr.mxu0 0.0
    %4457 = vmatpush2.msra.mxu0 0.0
    %4458 = vmatprep.subr.mxu0 0.0
    %4459 = vmatpush2.msra.mxu0 0.0
    %4460 = vmatprep.mubr.f32.mxu0 0.0
    %4461 = vmatmul.mubr.f32.gmra.mxu0 %v4391
    %v4462 = vpop.f32.mrf.mxu0
    %v4463 = vadd.f32 %v4389, %v4462
    %v4464 = vpop.f32.mrf.mxu0
    %4465 = vmatprep.mubr.f32.mxu0 0.0
    %4466 = vmatmul.mubr.f32.gmra.mxu0 %v4394
    %v4467 = vpop.f32.mrf.mxu0
    %v4468 = vadd.f32 %v4389, %v4467
    %v4469 = vpop.f32.mrf.mxu0
    %4470 = vdwg.mxu0
    %s4471 = scalar_lea.vmem [#allocation2], 32
    %v4472 = vld [vmem:[%s4471] sm:$0xff]
    %v4473 = vld [vmem:[%s4471 + $0x8] sm:$0xff]
    %v4474 = vld [vmem:[%s4471 + $0x10] sm:$0xff]
    %v4475 = vld [vmem:[%s4471 + $0x18] sm:$0xff]
    %v4476 = vld [vmem:[%s5 + $0x1] sm:$0x1]
    %v4477 = vlaneseq
    %v4478 = vshrl.u32 %v4477, 7
    %v4479 = vsub.s32 0, %v4478
    %v4480 = vrot.slane %v4476, %v4479
    %v4482 = vsel %vm4222, %v3964, 0
    %v4485 = vsel %vm4222, %v3965, 0
    %v4488 = vsel %vm4222, %v3966, 0
    %v4491 = vsel %vm4222, %v3967, 0
    %v4494 = vsel %vm4222, %v3968, 0
    %v4497 = vsel %vm4222, %v3969, 0
    %v4500 = vsel %vm4222, %v3970, 0
    %v4503 = vsel %vm4222, %v3971, 0
    %v4506 = vsel %vm4222, %v3972, 0
    %v4509 = vsel %vm4222, %v3973, 0
    %v4512 = vsel %vm4222, %v3974, 0
    %v4515 = vsel %vm4222, %v3975, 0
    %v4518 = vsel %vm4222, %v3976, 0
    %v4521 = vsel %vm4222, %v3977, 0
    %v4524 = vsel %vm4222, %v3978, 0
    %v4527 = vsel %vm4222, %v3979, 0
    %4529 = vmatprep.subr.mxu0 0.0
    %4530 = vmatpush1.msra.mxu0 0.0
    %4531 = vmatprep.subr.mxu0 0.0
    %4532 = vmatpush1.msra.mxu0 0.0
    %4533 = vmatprep.subr.mxu0 0.0
    %4534 = vmatpush1.msra.mxu0 0.0
    %4535 = vmatprep.subr.mxu0 0.0
    %4536 = vmatpush1.msra.mxu0 0.0
    %4537 = vmatprep.subr.mxu0 0.0
    %4538 = vmatpush1.msra.mxu0 0.0
    %4539 = vmatprep.subr.mxu0 0.0
    %4540 = vmatpush1.msra.mxu0 0.0
    %4541 = vmatprep.subr.mxu0 0.0
    %4542 = vmatpush1.msra.mxu0 0.0
    %4543 = vmatprep.subr.mxu0 0.0
    %4544 = vmatpush1.msra.mxu0 0.0
    %4545 = vmatprep.subr.mxu0 0.0
    %4546 = vmatpush1.msra.mxu0 0.0
    %4547 = vmatprep.subr.mxu0 0.0
    %4548 = vmatpush1.msra.mxu0 0.0
    %4549 = vmatprep.subr.mxu0 0.0
    %4550 = vmatpush1.msra.mxu0 0.0
    %4551 = vmatprep.subr.mxu0 0.0
    %4552 = vmatpush1.msra.mxu0 0.0
    %4553 = vmatprep.subr.mxu0 0.0
    %4554 = vmatpush1.msra.mxu0 %v4475
    %4555 = vmatprep.subr.mxu0 0.0
    %4556 = vmatpush1.msra.mxu0 %v4474
    %4557 = vmatprep.subr.mxu0 0.0
    %4558 = vmatpush1.msra.mxu0 %v4473
    %4559 = vmatprep.subr.mxu0 0.0
    %4560 = vmatpush1.msra.mxu0 %v4472
    %4561 = vmatprep.subr.mxu0 0.0
    %4562 = vmatpush2.msra.mxu0 0.0
    %4563 = vmatprep.subr.mxu0 0.0
    %4564 = vmatpush2.msra.mxu0 0.0
    %4565 = vmatprep.subr.mxu0 0.0
    %4566 = vmatpush2.msra.mxu0 0.0
    %4567 = vmatprep.subr.mxu0 0.0
    %4568 = vmatpush2.msra.mxu0 0.0
    %4569 = vmatprep.subr.mxu0 0.0
    %4570 = vmatpush2.msra.mxu0 0.0
    %4571 = vmatprep.subr.mxu0 0.0
    %4572 = vmatpush2.msra.mxu0 0.0
    %4573 = vmatprep.subr.mxu0 0.0
    %4574 = vmatpush2.msra.mxu0 0.0
    %4575 = vmatprep.subr.mxu0 0.0
    %4576 = vmatpush2.msra.mxu0 0.0
    %4577 = vmatprep.subr.mxu0 0.0
    %4578 = vmatpush2.msra.mxu0 0.0
    %4579 = vmatprep.subr.mxu0 0.0
    %4580 = vmatpush2.msra.mxu0 0.0
    %4581 = vmatprep.subr.mxu0 0.0
    %4582 = vmatpush2.msra.mxu0 0.0
    %4583 = vmatprep.subr.mxu0 0.0
    %4584 = vmatpush2.msra.mxu0 0.0
    %4585 = vmatprep.subr.mxu0 0.0
    %4586 = vmatpush2.msra.mxu0 0.0
    %4587 = vmatprep.subr.mxu0 0.0
    %4588 = vmatpush2.msra.mxu0 0.0
    %4589 = vmatprep.subr.mxu0 0.0
    %4590 = vmatpush2.msra.mxu0 0.0
    %4591 = vmatprep.subr.mxu0 0.0
    %4592 = vmatpush2.msra.mxu0 0.0
    %4593 = vmatprep.mubr.f32.mxu0 0.0
    %4594 = vmatmul.mubr.f32.gmra.mxu0 %v4482
    %v4595 = vpop.f32.mrf.mxu0
    %v4596 = vadd.f32 %v4480, %v4595
    %v4597 = vpop.f32.mrf.mxu0
    %4598 = vmatprep.mubr.f32.mxu0 0.0
    %4599 = vmatmul.mubr.f32.gmra.mxu0 %v4485
    %v4600 = vpop.f32.mrf.mxu0
    %v4601 = vadd.f32 %v4480, %v4600
    %v4602 = vpop.f32.mrf.mxu0
    %4603 = vmatprep.mubr.f32.mxu0 0.0
    %4604 = vmatmul.mubr.f32.gmra.mxu0 %v4488
    %v4605 = vpop.f32.mrf.mxu0
    %v4606 = vadd.f32 %v4480, %v4605
    %v4607 = vpop.f32.mrf.mxu0
    %4608 = vmatprep.mubr.f32.mxu0 0.0
    %4609 = vmatmul.mubr.f32.gmra.mxu0 %v4491
    %v4610 = vpop.f32.mrf.mxu0
    %v4611 = vadd.f32 %v4480, %v4610
    %v4612 = vpop.f32.mrf.mxu0
    %4613 = vmatprep.mubr.f32.mxu0 0.0
    %4614 = vmatmul.mubr.f32.gmra.mxu0 %v4494
    %v4615 = vpop.f32.mrf.mxu0
    %v4616 = vadd.f32 %v4480, %v4615
    %v4617 = vpop.f32.mrf.mxu0
    %4618 = vmatprep.mubr.f32.mxu0 0.0
    %4619 = vmatmul.mubr.f32.gmra.mxu0 %v4497
    %v4620 = vpop.f32.mrf.mxu0
    %v4621 = vadd.f32 %v4480, %v4620
    %v4622 = vpop.f32.mrf.mxu0
    %4623 = vmatprep.mubr.f32.mxu0 0.0
    %4624 = vmatmul.mubr.f32.gmra.mxu0 %v4500
    %v4625 = vpop.f32.mrf.mxu0
    %v4626 = vadd.f32 %v4480, %v4625
    %v4627 = vpop.f32.mrf.mxu0
    %4628 = vmatprep.mubr.f32.mxu0 0.0
    %4629 = vmatmul.mubr.f32.gmra.mxu0 %v4503
    %v4630 = vpop.f32.mrf.mxu0
    %v4631 = vadd.f32 %v4480, %v4630
    %v4632 = vpop.f32.mrf.mxu0
    %4633 = vmatprep.mubr.f32.mxu0 0.0
    %4634 = vmatmul.mubr.f32.gmra.mxu0 %v4506
    %v4635 = vpop.f32.mrf.mxu0
    %v4636 = vadd.f32 %v4480, %v4635
    %v4637 = vpop.f32.mrf.mxu0
    %4638 = vmatprep.mubr.f32.mxu0 0.0
    %4639 = vmatmul.mubr.f32.gmra.mxu0 %v4509
    %v4640 = vpop.f32.mrf.mxu0
    %v4641 = vadd.f32 %v4480, %v4640
    %v4642 = vpop.f32.mrf.mxu0
    %4643 = vmatprep.mubr.f32.mxu0 0.0
    %4644 = vmatmul.mubr.f32.gmra.mxu0 %v4512
    %v4645 = vpop.f32.mrf.mxu0
    %v4646 = vadd.f32 %v4480, %v4645
    %v4647 = vpop.f32.mrf.mxu0
    %4648 = vmatprep.mubr.f32.mxu0 0.0
    %4649 = vmatmul.mubr.f32.gmra.mxu0 %v4515
    %v4650 = vpop.f32.mrf.mxu0
    %v4651 = vadd.f32 %v4480, %v4650
    %v4652 = vpop.f32.mrf.mxu0
    %4653 = vmatprep.mubr.f32.mxu0 0.0
    %4654 = vmatmul.mubr.f32.gmra.mxu0 %v4518
    %v4655 = vpop.f32.mrf.mxu0
    %v4656 = vadd.f32 %v4480, %v4655
    %v4657 = vpop.f32.mrf.mxu0
    %4658 = vmatprep.mubr.f32.mxu0 0.0
    %4659 = vmatmul.mubr.f32.gmra.mxu0 %v4521
    %v4660 = vpop.f32.mrf.mxu0
    %v4661 = vadd.f32 %v4480, %v4660
    %v4662 = vpop.f32.mrf.mxu0
    %4663 = vmatprep.mubr.f32.mxu0 0.0
    %4664 = vmatmul.mubr.f32.gmra.mxu0 %v4524
    %v4665 = vpop.f32.mrf.mxu0
    %v4666 = vadd.f32 %v4480, %v4665
    %v4667 = vpop.f32.mrf.mxu0
    %4668 = vmatprep.mubr.f32.mxu0 0.0
    %4669 = vmatmul.mubr.f32.gmra.mxu0 %v4527
    %v4670 = vpop.f32.mrf.mxu0
    %v4671 = vadd.f32 %v4480, %v4670
    %v4672 = vpop.f32.mrf.mxu0
    %4673 = vdwg.mxu0
    %v4674 = vld [vmem:[%s5 + $0xf] sm:$0x1]
    %v4675 = vld [vmem:[%s5 + $0x10] sm:$0x1]
    %v4676 = vld [vmem:[%s5 + $0x11] sm:$0x1]
    %v4677 = vld [vmem:[%s5 + $0x12] sm:$0x1]
    %v4678 = vld [vmem:[%s5 + $0x13] sm:$0x1]
    %v4679 = vld [vmem:[%s5 + $0x14] sm:$0x1]
    %v4680 = vld [vmem:[%s4] sm:$0xff]
    %v4681 = vld [vmem:[%s4 + $0x8] sm:$0xff]
    %v4682 = vld [vmem:[%s4 + $0x10] sm:$0xff]
    %v4683 = vld [vmem:[%s4 + $0x18] sm:$0xff]
    %v4684 = vld [vmem:[%s4 + $0x20] sm:$0x1]
    %v4685 = vlaneseq
    %v4686 = vshrl.u32 %v4685, 7
    %v4687 = vsub.s32 0, %v4686
    %v4688 = vrot.slane %v4684, %v4687
    %v4690 = vsel %vm4222, %v4463, 0
    %v4693 = vsel %vm4222, %v4468, 0
    %4695 = vmatprep.subr.mxu0 0.0
    %4696 = vmatpush1.msra.mxu0 0.0
    %4697 = vmatprep.subr.mxu0 0.0
    %4698 = vmatpush1.msra.mxu0 0.0
    %4699 = vmatprep.subr.mxu0 0.0
    %4700 = vmatpush1.msra.mxu0 0.0
    %4701 = vmatprep.subr.mxu0 0.0
    %4702 = vmatpush1.msra.mxu0 0.0
    %4703 = vmatprep.subr.mxu0 0.0
    %4704 = vmatpush1.msra.mxu0 0.0
    %4705 = vmatprep.subr.mxu0 0.0
    %4706 = vmatpush1.msra.mxu0 0.0
    %4707 = vmatprep.subr.mxu0 0.0
    %4708 = vmatpush1.msra.mxu0 0.0
    %4709 = vmatprep.subr.mxu0 0.0
    %4710 = vmatpush1.msra.mxu0 0.0
    %4711 = vmatprep.subr.mxu0 0.0
    %4712 = vmatpush1.msra.mxu0 0.0
    %4713 = vmatprep.subr.mxu0 0.0
    %4714 = vmatpush1.msra.mxu0 0.0
    %4715 = vmatprep.subr.mxu0 0.0
    %4716 = vmatpush1.msra.mxu0 0.0
    %4717 = vmatprep.subr.mxu0 0.0
    %4718 = vmatpush1.msra.mxu0 0.0
    %4719 = vmatprep.subr.mxu0 0.0
    %4720 = vmatpush1.msra.mxu0 %v4683
    %4721 = vmatprep.subr.mxu0 0.0
    %4722 = vmatpush1.msra.mxu0 %v4682
    %4723 = vmatprep.subr.mxu0 0.0
    %4724 = vmatpush1.msra.mxu0 %v4681
    %4725 = vmatprep.subr.mxu0 0.0
    %4726 = vmatpush1.msra.mxu0 %v4680
    %4727 = vmatprep.subr.mxu0 0.0
    %4728 = vmatpush2.msra.mxu0 0.0
    %4729 = vmatprep.subr.mxu0 0.0
    %4730 = vmatpush2.msra.mxu0 0.0
    %4731 = vmatprep.subr.mxu0 0.0
    %4732 = vmatpush2.msra.mxu0 0.0
    %4733 = vmatprep.subr.mxu0 0.0
    %4734 = vmatpush2.msra.mxu0 0.0
    %4735 = vmatprep.subr.mxu0 0.0
    %4736 = vmatpush2.msra.mxu0 0.0
    %4737 = vmatprep.subr.mxu0 0.0
    %4738 = vmatpush2.msra.mxu0 0.0
    %4739 = vmatprep.subr.mxu0 0.0
    %4740 = vmatpush2.msra.mxu0 0.0
    %4741 = vmatprep.subr.mxu0 0.0
    %4742 = vmatpush2.msra.mxu0 0.0
    %4743 = vmatprep.subr.mxu0 0.0
    %4744 = vmatpush2.msra.mxu0 0.0
    %4745 = vmatprep.subr.mxu0 0.0
    %4746 = vmatpush2.msra.mxu0 0.0
    %4747 = vmatprep.subr.mxu0 0.0
    %4748 = vmatpush2.msra.mxu0 0.0
    %4749 = vmatprep.subr.mxu0 0.0
    %4750 = vmatpush2.msra.mxu0 0.0
    %4751 = vmatprep.subr.mxu0 0.0
    %4752 = vmatpush2.msra.mxu0 0.0
    %4753 = vmatprep.subr.mxu0 0.0
    %4754 = vmatpush2.msra.mxu0 0.0
    %4755 = vmatprep.subr.mxu0 0.0
    %4756 = vmatpush2.msra.mxu0 0.0
    %4757 = vmatprep.subr.mxu0 0.0
    %4758 = vmatpush2.msra.mxu0 0.0
    %4759 = vmatprep.mubr.f32.mxu0 0.0
    %4760 = vmatmul.mubr.f32.gmra.mxu0 %v4690
    %v4761 = vpop.f32.mrf.mxu0
    %v4762 = vadd.f32 %v4688, %v4761
    %v4763 = vpop.f32.mrf.mxu0
    %4764 = vmatprep.mubr.f32.mxu0 0.0
    %4765 = vmatmul.mubr.f32.gmra.mxu0 %v4693
    %v4766 = vpop.f32.mrf.mxu0
    %v4767 = vadd.f32 %v4688, %v4766
    %v4768 = vpop.f32.mrf.mxu0
    %4769 = vdwg.mxu0
    %s4770 = scalar_lea.vmem [#allocation2], 128
    %v4771 = vld [vmem:[%s4770] sm:$0xff]
    %v4772 = vld [vmem:[%s4770 + $0x8] sm:$0xff]
    %v4773 = vld [vmem:[%s4770 + $0x10] sm:$0xff]
    %v4774 = vld [vmem:[%s4770 + $0x18] sm:$0xff]
    %v4775 = vld [vmem:[%s5 + $0xe] sm:$0x1]
    %v4776 = vlaneseq
    %v4777 = vshrl.u32 %v4776, 7
    %v4778 = vsub.s32 0, %v4777
    %v4779 = vrot.slane %v4775, %v4778
    %v4781 = vsel %vm4222, %v4596, 0
    %v4784 = vsel %vm4222, %v4601, 0
    %v4787 = vsel %vm4222, %v4606, 0
    %v4790 = vsel %vm4222, %v4611, 0
    %v4793 = vsel %vm4222, %v4616, 0
    %v4796 = vsel %vm4222, %v4621, 0
    %v4799 = vsel %vm4222, %v4626, 0
    %v4802 = vsel %vm4222, %v4631, 0
    %v4805 = vsel %vm4222, %v4636, 0
    %v4808 = vsel %vm4222, %v4641, 0
    %v4811 = vsel %vm4222, %v4646, 0
    %v4814 = vsel %vm4222, %v4651, 0
    %v4817 = vsel %vm4222, %v4656, 0
    %v4820 = vsel %vm4222, %v4661, 0
    %v4823 = vsel %vm4222, %v4666, 0
    %v4826 = vsel %vm4222, %v4671, 0
    %4828 = vmatprep.subr.mxu0 0.0
    %4829 = vmatpush1.msra.mxu0 0.0
    %4830 = vmatprep.subr.mxu0 0.0
    %4831 = vmatpush1.msra.mxu0 0.0
    %4832 = vmatprep.subr.mxu0 0.0
    %4833 = vmatpush1.msra.mxu0 0.0
    %4834 = vmatprep.subr.mxu0 0.0
    %4835 = vmatpush1.msra.mxu0 0.0
    %4836 = vmatprep.subr.mxu0 0.0
    %4837 = vmatpush1.msra.mxu0 0.0
    %4838 = vmatprep.subr.mxu0 0.0
    %4839 = vmatpush1.msra.mxu0 0.0
    %4840 = vmatprep.subr.mxu0 0.0
    %4841 = vmatpush1.msra.mxu0 0.0
    %4842 = vmatprep.subr.mxu0 0.0
    %4843 = vmatpush1.msra.mxu0 0.0
    %4844 = vmatprep.subr.mxu0 0.0
    %4845 = vmatpush1.msra.mxu0 0.0
    %4846 = vmatprep.subr.mxu0 0.0
    %4847 = vmatpush1.msra.mxu0 0.0
    %4848 = vmatprep.subr.mxu0 0.0
    %4849 = vmatpush1.msra.mxu0 0.0
    %4850 = vmatprep.subr.mxu0 0.0
    %4851 = vmatpush1.msra.mxu0 0.0
    %4852 = vmatprep.subr.mxu0 0.0
    %4853 = vmatpush1.msra.mxu0 %v4774
    %4854 = vmatprep.subr.mxu0 0.0
    %4855 = vmatpush1.msra.mxu0 %v4773
    %4856 = vmatprep.subr.mxu0 0.0
    %4857 = vmatpush1.msra.mxu0 %v4772
    %4858 = vmatprep.subr.mxu0 0.0
    %4859 = vmatpush1.msra.mxu0 %v4771
    %4860 = vmatprep.subr.mxu0 0.0
    %4861 = vmatpush2.msra.mxu0 0.0
    %4862 = vmatprep.subr.mxu0 0.0
    %4863 = vmatpush2.msra.mxu0 0.0
    %4864 = vmatprep.subr.mxu0 0.0
    %4865 = vmatpush2.msra.mxu0 0.0
    %4866 = vmatprep.subr.mxu0 0.0
    %4867 = vmatpush2.msra.mxu0 0.0
    %4868 = vmatprep.subr.mxu0 0.0
    %4869 = vmatpush2.msra.mxu0 0.0
    %4870 = vmatprep.subr.mxu0 0.0
    %4871 = vmatpush2.msra.mxu0 0.0
    %4872 = vmatprep.subr.mxu0 0.0
    %4873 = vmatpush2.msra.mxu0 0.0
    %4874 = vmatprep.subr.mxu0 0.0
    %4875 = vmatpush2.msra.mxu0 0.0
    %4876 = vmatprep.subr.mxu0 0.0
    %4877 = vmatpush2.msra.mxu0 0.0
    %4878 = vmatprep.subr.mxu0 0.0
    %4879 = vmatpush2.msra.mxu0 0.0
    %4880 = vmatprep.subr.mxu0 0.0
    %4881 = vmatpush2.msra.mxu0 0.0
    %4882 = vmatprep.subr.mxu0 0.0
    %4883 = vmatpush2.msra.mxu0 0.0
    %4884 = vmatprep.subr.mxu0 0.0
    %4885 = vmatpush2.msra.mxu0 0.0
    %4886 = vmatprep.subr.mxu0 0.0
    %4887 = vmatpush2.msra.mxu0 0.0
    %4888 = vmatprep.subr.mxu0 0.0
    %4889 = vmatpush2.msra.mxu0 0.0
    %4890 = vmatprep.subr.mxu0 0.0
    %4891 = vmatpush2.msra.mxu0 0.0
    %4892 = vmatprep.mubr.f32.mxu0 0.0
    %4893 = vmatmul.mubr.f32.gmra.mxu0 %v4781
    %v4894 = vpop.f32.mrf.mxu0
    %v4895 = vadd.f32 %v4779, %v4894
    %v4896 = vpop.f32.mrf.mxu0
    %4897 = vmatprep.mubr.f32.mxu0 0.0
    %4898 = vmatmul.mubr.f32.gmra.mxu0 %v4784
    %v4899 = vpop.f32.mrf.mxu0
    %v4900 = vadd.f32 %v4779, %v4899
    %v4901 = vpop.f32.mrf.mxu0
    %4902 = vmatprep.mubr.f32.mxu0 0.0
    %4903 = vmatmul.mubr.f32.gmra.mxu0 %v4787
    %v4904 = vpop.f32.mrf.mxu0
    %v4905 = vadd.f32 %v4779, %v4904
    %v4906 = vpop.f32.mrf.mxu0
    %4907 = vmatprep.mubr.f32.mxu0 0.0
    %4908 = vmatmul.mubr.f32.gmra.mxu0 %v4790
    %v4909 = vpop.f32.mrf.mxu0
    %v4910 = vadd.f32 %v4779, %v4909
    %v4911 = vpop.f32.mrf.mxu0
    %4912 = vmatprep.mubr.f32.mxu0 0.0
    %4913 = vmatmul.mubr.f32.gmra.mxu0 %v4793
    %v4914 = vpop.f32.mrf.mxu0
    %v4915 = vadd.f32 %v4779, %v4914
    %v4916 = vpop.f32.mrf.mxu0
    %4917 = vmatprep.mubr.f32.mxu0 0.0
    %4918 = vmatmul.mubr.f32.gmra.mxu0 %v4796
    %v4919 = vpop.f32.mrf.mxu0
    %v4920 = vadd.f32 %v4779, %v4919
    %v4921 = vpop.f32.mrf.mxu0
    %4922 = vmatprep.mubr.f32.mxu0 0.0
    %4923 = vmatmul.mubr.f32.gmra.mxu0 %v4799
    %v4924 = vpop.f32.mrf.mxu0
    %v4925 = vadd.f32 %v4779, %v4924
    %v4926 = vpop.f32.mrf.mxu0
    %4927 = vmatprep.mubr.f32.mxu0 0.0
    %4928 = vmatmul.mubr.f32.gmra.mxu0 %v4802
    %v4929 = vpop.f32.mrf.mxu0
    %v4930 = vadd.f32 %v4779, %v4929
    %v4931 = vpop.f32.mrf.mxu0
    %4932 = vmatprep.mubr.f32.mxu0 0.0
    %4933 = vmatmul.mubr.f32.gmra.mxu0 %v4805
    %v4934 = vpop.f32.mrf.mxu0
    %v4935 = vadd.f32 %v4779, %v4934
    %v4936 = vpop.f32.mrf.mxu0
    %4937 = vmatprep.mubr.f32.mxu0 0.0
    %4938 = vmatmul.mubr.f32.gmra.mxu0 %v4808
    %v4939 = vpop.f32.mrf.mxu0
    %v4940 = vadd.f32 %v4779, %v4939
    %v4941 = vpop.f32.mrf.mxu0
    %4942 = vmatprep.mubr.f32.mxu0 0.0
    %4943 = vmatmul.mubr.f32.gmra.mxu0 %v4811
    %v4944 = vpop.f32.mrf.mxu0
    %v4945 = vadd.f32 %v4779, %v4944
    %v4946 = vpop.f32.mrf.mxu0
    %4947 = vmatprep.mubr.f32.mxu0 0.0
    %4948 = vmatmul.mubr.f32.gmra.mxu0 %v4814
    %v4949 = vpop.f32.mrf.mxu0
    %v4950 = vadd.f32 %v4779, %v4949
    %v4951 = vpop.f32.mrf.mxu0
    %4952 = vmatprep.mubr.f32.mxu0 0.0
    %4953 = vmatmul.mubr.f32.gmra.mxu0 %v4817
    %v4954 = vpop.f32.mrf.mxu0
    %v4955 = vadd.f32 %v4779, %v4954
    %v4956 = vpop.f32.mrf.mxu0
    %4957 = vmatprep.mubr.f32.mxu0 0.0
    %4958 = vmatmul.mubr.f32.gmra.mxu0 %v4820
    %v4959 = vpop.f32.mrf.mxu0
    %v4960 = vadd.f32 %v4779, %v4959
    %v4961 = vpop.f32.mrf.mxu0
    %4962 = vmatprep.mubr.f32.mxu0 0.0
    %4963 = vmatmul.mubr.f32.gmra.mxu0 %v4823
    %v4964 = vpop.f32.mrf.mxu0
    %v4965 = vadd.f32 %v4779, %v4964
    %v4966 = vpop.f32.mrf.mxu0
    %4967 = vmatprep.mubr.f32.mxu0 0.0
    %4968 = vmatmul.mubr.f32.gmra.mxu0 %v4826
    %v4969 = vpop.f32.mrf.mxu0
    %v4970 = vadd.f32 %v4779, %v4969
    %v4971 = vpop.f32.mrf.mxu0
    %4972 = vdwg.mxu0
    %4975 = vrot.lane.b32.xlu0 %v4762, 64
    %v4976 = vpop.permute.xlu0 %4975
    %4977 = vrot.lane.b32.xlu0 %v4767, 64
    %v4978 = vpop.permute.xlu0 %4977
    %v4981 = vadd.f32 %v4895, %v4976
    %v4982 = vadd.f32 %v4900, %v4976
    %v4983 = vadd.f32 %v4905, %v4976
    %v4984 = vadd.f32 %v4910, %v4976
    %v4985 = vadd.f32 %v4915, %v4976
    %v4986 = vadd.f32 %v4920, %v4976
    %v4987 = vadd.f32 %v4925, %v4976
    %v4988 = vadd.f32 %v4930, %v4976
    %v4989 = vadd.f32 %v4935, %v4978
    %v4990 = vadd.f32 %v4940, %v4978
    %v4991 = vadd.f32 %v4945, %v4978
    %v4992 = vadd.f32 %v4950, %v4978
    %v4993 = vadd.f32 %v4955, %v4978
    %v4994 = vadd.f32 %v4960, %v4978
    %v4995 = vadd.f32 %v4965, %v4978
    %v4996 = vadd.f32 %v4970, %v4978
    %v4997 = vcombine.high %v4762, %v4762
    %v4999 = vunpack.c.l.s4 1966171168
    %v5000 = vunpack.c.0.s8 %v4999
    %v5001 = vlaneseq
    %v5002 = vshrl.u32 %v5001, 7
    %v5003 = vsub.s32 %v5000, %v5002
    %v5004 = vrot.slane %v4762, %v5003
    %v5006 = vunpack.c.l.s4 1966171168
    %v5007 = vunpack.c.0.s8 %v5006
    %v5008 = vlaneseq
    %v5009 = vshrl.u32 %v5008, 7
    %v5010 = vsub.s32 %v5007, %v5009
    %v5011 = vrot.slane %v4997, %v5010
    %v5012 = vcombine.high %v5004, %v5004
    %v5013 = vcombine.high %v5011, %v5011
    %v5015 = vunpack.c.l.s4 1966171168
    %v5016 = vunpack.c.0.s8 %v5015
    %v5017 = vlaneseq
    %v5018 = vshrl.u32 %v5017, 7
    %v5019 = vsub.s32 %v5016, %v5018
    %v5020 = vrot.slane %v5004, %v5019
    %v5022 = vunpack.c.l.s4 1966171168
    %v5023 = vunpack.c.0.s8 %v5022
    %v5024 = vlaneseq
    %v5025 = vshrl.u32 %v5024, 7
    %v5026 = vsub.s32 %v5023, %v5025
    %v5027 = vrot.slane %v5011, %v5026
    %v5029 = vunpack.c.l.s4 1966171168
    %v5030 = vunpack.c.0.s8 %v5029
    %v5031 = vlaneseq
    %v5032 = vshrl.u32 %v5031, 7
    %v5033 = vsub.s32 %v5030, %v5032
    %v5034 = vrot.slane %v5012, %v5033
    %v5036 = vunpack.c.l.s4 1966171168
    %v5037 = vunpack.c.0.s8 %v5036
    %v5038 = vlaneseq
    %v5039 = vshrl.u32 %v5038, 7
    %v5040 = vsub.s32 %v5037, %v5039
    %v5041 = vrot.slane %v5013, %v5040
    %v5042 = vcombine.high %v5020, %v5020
    %v5043 = vcombine.high %v5027, %v5027
    %v5044 = vcombine.high %v5034, %v5034
    %v5045 = vcombine.high %v5041, %v5041
    %v5046 = vcombine.high %v4767, %v4767
    %v5048 = vunpack.c.l.s4 1966171168
    %v5049 = vunpack.c.0.s8 %v5048
    %v5050 = vlaneseq
    %v5051 = vshrl.u32 %v5050, 7
    %v5052 = vsub.s32 %v5049, %v5051
    %v5053 = vrot.slane %v4767, %v5052
    %v5055 = vunpack.c.l.s4 1966171168
    %v5056 = vunpack.c.0.s8 %v5055
    %v5057 = vlaneseq
    %v5058 = vshrl.u32 %v5057, 7
    %v5059 = vsub.s32 %v5056, %v5058
    %v5060 = vrot.slane %v5046, %v5059
    %v5061 = vcombine.high %v5053, %v5053
    %v5062 = vcombine.high %v5060, %v5060
    %v5064 = vunpack.c.l.s4 1966171168
    %v5065 = vunpack.c.0.s8 %v5064
    %v5066 = vlaneseq
    %v5067 = vshrl.u32 %v5066, 7
    %v5068 = vsub.s32 %v5065, %v5067
    %v5069 = vrot.slane %v5053, %v5068
    %v5071 = vunpack.c.l.s4 1966171168
    %v5072 = vunpack.c.0.s8 %v5071
    %v5073 = vlaneseq
    %v5074 = vshrl.u32 %v5073, 7
    %v5075 = vsub.s32 %v5072, %v5074
    %v5076 = vrot.slane %v5060, %v5075
    %v5078 = vunpack.c.l.s4 1966171168
    %v5079 = vunpack.c.0.s8 %v5078
    %v5080 = vlaneseq
    %v5081 = vshrl.u32 %v5080, 7
    %v5082 = vsub.s32 %v5079, %v5081
    %v5083 = vrot.slane %v5061, %v5082
    %v5085 = vunpack.c.l.s4 1966171168
    %v5086 = vunpack.c.0.s8 %v5085
    %v5087 = vlaneseq
    %v5088 = vshrl.u32 %v5087, 7
    %v5089 = vsub.s32 %v5086, %v5088
    %v5090 = vrot.slane %v5062, %v5089
    %v5091 = vcombine.high %v5069, %v5069
    %v5092 = vcombine.high %v5076, %v5076
    %v5093 = vcombine.high %v5083, %v5083
    %v5094 = vcombine.high %v5090, %v5090
    %v5095 = vlaneseq
    %v5096 = vshrl.u32 %v5095, 7
    %v5097 = vsub.s32 0, %v5096
    %v5098 = vrot.slane %v5020, %v5097
    %v5099 = vlaneseq
    %v5100 = vshrl.u32 %v5099, 7
    %v5101 = vsub.s32 0, %v5100
    %v5102 = vrot.slane %v5034, %v5101
    %v5103 = vlaneseq
    %v5104 = vshrl.u32 %v5103, 7
    %v5105 = vsub.s32 0, %v5104
    %v5106 = vrot.slane %v5042, %v5105
    %v5107 = vlaneseq
    %v5108 = vshrl.u32 %v5107, 7
    %v5109 = vsub.s32 0, %v5108
    %v5110 = vrot.slane %v5044, %v5109
    %v5111 = vlaneseq
    %v5112 = vshrl.u32 %v5111, 7
    %v5113 = vsub.s32 0, %v5112
    %v5114 = vrot.slane %v5027, %v5113
    %v5115 = vlaneseq
    %v5116 = vshrl.u32 %v5115, 7
    %v5117 = vsub.s32 0, %v5116
    %v5118 = vrot.slane %v5041, %v5117
    %v5119 = vlaneseq
    %v5120 = vshrl.u32 %v5119, 7
    %v5121 = vsub.s32 0, %v5120
    %v5122 = vrot.slane %v5043, %v5121
    %v5123 = vlaneseq
    %v5124 = vshrl.u32 %v5123, 7
    %v5125 = vsub.s32 0, %v5124
    %v5126 = vrot.slane %v5045, %v5125
    %v5127 = vlaneseq
    %v5128 = vshrl.u32 %v5127, 7
    %v5129 = vsub.s32 0, %v5128
    %v5130 = vrot.slane %v5069, %v5129
    %v5131 = vlaneseq
    %v5132 = vshrl.u32 %v5131, 7
    %v5133 = vsub.s32 0, %v5132
    %v5134 = vrot.slane %v5083, %v5133
    %v5135 = vlaneseq
    %v5136 = vshrl.u32 %v5135, 7
    %v5137 = vsub.s32 0, %v5136
    %v5138 = vrot.slane %v5091, %v5137
    %v5139 = vlaneseq
    %v5140 = vshrl.u32 %v5139, 7
    %v5141 = vsub.s32 0, %v5140
    %v5142 = vrot.slane %v5093, %v5141
    %v5143 = vlaneseq
    %v5144 = vshrl.u32 %v5143, 7
    %v5145 = vsub.s32 0, %v5144
    %v5146 = vrot.slane %v5076, %v5145
    %v5147 = vlaneseq
    %v5148 = vshrl.u32 %v5147, 7
    %v5149 = vsub.s32 0, %v5148
    %v5150 = vrot.slane %v5090, %v5149
    %v5151 = vlaneseq
    %v5152 = vshrl.u32 %v5151, 7
    %v5153 = vsub.s32 0, %v5152
    %v5154 = vrot.slane %v5092, %v5153
    %v5155 = vlaneseq
    %v5156 = vshrl.u32 %v5155, 7
    %v5157 = vsub.s32 0, %v5156
    %v5158 = vrot.slane %v5094, %v5157
    %5159 = vrot.lane.b32.xlu0 %v5098, 32
    %v5160 = vpop.permute.xlu0 %5159
    %5161 = vrot.lane.b32.xlu0 %v5102, 32
    %v5162 = vpop.permute.xlu0 %5161
    %5163 = vrot.lane.b32.xlu0 %v5106, 32
    %v5164 = vpop.permute.xlu0 %5163
    %5165 = vrot.lane.b32.xlu0 %v5110, 32
    %v5166 = vpop.permute.xlu0 %5165
    %5167 = vrot.lane.b32.xlu0 %v5114, 32
    %v5168 = vpop.permute.xlu0 %5167
    %5169 = vrot.lane.b32.xlu0 %v5118, 32
    %v5170 = vpop.permute.xlu0 %5169
    %5171 = vrot.lane.b32.xlu0 %v5122, 32
    %v5172 = vpop.permute.xlu0 %5171
    %5173 = vrot.lane.b32.xlu0 %v5126, 32
    %v5174 = vpop.permute.xlu0 %5173
    %5175 = vrot.lane.b32.xlu0 %v5130, 32
    %v5176 = vpop.permute.xlu0 %5175
    %5177 = vrot.lane.b32.xlu0 %v5134, 32
    %v5178 = vpop.permute.xlu0 %5177
    %5179 = vrot.lane.b32.xlu0 %v5138, 32
    %v5180 = vpop.permute.xlu0 %5179
    %5181 = vrot.lane.b32.xlu0 %v5142, 32
    %v5182 = vpop.permute.xlu0 %5181
    %5183 = vrot.lane.b32.xlu0 %v5146, 32
    %v5184 = vpop.permute.xlu0 %5183
    %5185 = vrot.lane.b32.xlu0 %v5150, 32
    %v5186 = vpop.permute.xlu0 %5185
    %5187 = vrot.lane.b32.xlu0 %v5154, 32
    %v5188 = vpop.permute.xlu0 %5187
    %5189 = vrot.lane.b32.xlu0 %v5158, 32
    %v5190 = vpop.permute.xlu0 %5189
    %v5207 = vadd.f32 %v4981, %v5160
    %v5208 = vadd.f32 %v4982, %v5162
    %v5209 = vadd.f32 %v4983, %v5164
    %v5210 = vadd.f32 %v4984, %v5166
    %v5211 = vadd.f32 %v4985, %v5168
    %v5212 = vadd.f32 %v4986, %v5170
    %v5213 = vadd.f32 %v4987, %v5172
    %v5214 = vadd.f32 %v4988, %v5174
    %v5215 = vadd.f32 %v4989, %v5176
    %v5216 = vadd.f32 %v4990, %v5178
    %v5217 = vadd.f32 %v4991, %v5180
    %v5218 = vadd.f32 %v4992, %v5182
    %v5219 = vadd.f32 %v4993, %v5184
    %v5220 = vadd.f32 %v4994, %v5186
    %v5221 = vadd.f32 %v4995, %v5188
    %v5222 = vadd.f32 %v4996, %v5190
    %v5223 = vxor.u32 %v5207, 2147483648
    %v5224 = vxor.u32 %v5208, 2147483648
    %v5225 = vxor.u32 %v5209, 2147483648
    %v5226 = vxor.u32 %v5210, 2147483648
    %v5227 = vxor.u32 %v5211, 2147483648
    %v5228 = vxor.u32 %v5212, 2147483648
    %v5229 = vxor.u32 %v5213, 2147483648
    %v5230 = vxor.u32 %v5214, 2147483648
    %v5231 = vxor.u32 %v5215, 2147483648
    %v5232 = vxor.u32 %v5216, 2147483648
    %v5233 = vxor.u32 %v5217, 2147483648
    %v5234 = vxor.u32 %v5218, 2147483648
    %v5235 = vxor.u32 %v5219, 2147483648
    %v5236 = vxor.u32 %v5220, 2147483648
    %v5237 = vxor.u32 %v5221, 2147483648
    %v5238 = vxor.u32 %v5222, 2147483648
    %v5239 = vmul.f32 %v5223, 1.442695
    %v5240 = vpow.pop %v5239
    %v5241 = vmul.f32 %v5224, 1.442695
    %v5242 = vpow.pop %v5241
    %v5243 = vmul.f32 %v5225, 1.442695
    %v5244 = vpow.pop %v5243
    %v5245 = vmul.f32 %v5226, 1.442695
    %v5246 = vpow.pop %v5245
    %v5247 = vmul.f32 %v5227, 1.442695
    %v5248 = vpow.pop %v5247
    %v5249 = vmul.f32 %v5228, 1.442695
    %v5250 = vpow.pop %v5249
    %v5251 = vmul.f32 %v5229, 1.442695
    %v5252 = vpow.pop %v5251
    %v5253 = vmul.f32 %v5230, 1.442695
    %v5254 = vpow.pop %v5253
    %v5255 = vmul.f32 %v5231, 1.442695
    %v5256 = vpow.pop %v5255
    %v5257 = vmul.f32 %v5232, 1.442695
    %v5258 = vpow.pop %v5257
    %v5259 = vmul.f32 %v5233, 1.442695
    %v5260 = vpow.pop %v5259
    %v5261 = vmul.f32 %v5234, 1.442695
    %v5262 = vpow.pop %v5261
    %v5263 = vmul.f32 %v5235, 1.442695
    %v5264 = vpow.pop %v5263
    %v5265 = vmul.f32 %v5236, 1.442695
    %v5266 = vpow.pop %v5265
    %v5267 = vmul.f32 %v5237, 1.442695
    %v5268 = vpow.pop %v5267
    %v5269 = vmul.f32 %v5238, 1.442695
    %v5270 = vpow.pop %v5269
    %v5271 = vadd.f32 %v5240, 1.0
    %v5272 = vadd.f32 %v5242, 1.0
    %v5273 = vadd.f32 %v5244, 1.0
    %v5274 = vadd.f32 %v5246, 1.0
    %v5275 = vadd.f32 %v5248, 1.0
    %v5276 = vadd.f32 %v5250, 1.0
    %v5277 = vadd.f32 %v5252, 1.0
    %v5278 = vadd.f32 %v5254, 1.0
    %v5279 = vadd.f32 %v5256, 1.0
    %v5280 = vadd.f32 %v5258, 1.0
    %v5281 = vadd.f32 %v5260, 1.0
    %v5282 = vadd.f32 %v5262, 1.0
    %v5283 = vadd.f32 %v5264, 1.0
    %v5284 = vadd.f32 %v5266, 1.0
    %v5285 = vadd.f32 %v5268, 1.0
    %v5286 = vadd.f32 %v5270, 1.0
    %v5287 = vrcp.pop %v5271
    %v5288 = vmul.f32 1.0, %v5287
    %v5289 = vrcp.pop %v5272
    %v5290 = vmul.f32 1.0, %v5289
    %v5291 = vrcp.pop %v5273
    %v5292 = vmul.f32 1.0, %v5291
    %v5293 = vrcp.pop %v5274
    %v5294 = vmul.f32 1.0, %v5293
    %v5295 = vrcp.pop %v5275
    %v5296 = vmul.f32 1.0, %v5295
    %v5297 = vrcp.pop %v5276
    %v5298 = vmul.f32 1.0, %v5297
    %v5299 = vrcp.pop %v5277
    %v5300 = vmul.f32 1.0, %v5299
    %v5301 = vrcp.pop %v5278
    %v5302 = vmul.f32 1.0, %v5301
    %v5303 = vrcp.pop %v5279
    %v5304 = vmul.f32 1.0, %v5303
    %v5305 = vrcp.pop %v5280
    %v5306 = vmul.f32 1.0, %v5305
    %v5307 = vrcp.pop %v5281
    %v5308 = vmul.f32 1.0, %v5307
    %v5309 = vrcp.pop %v5282
    %v5310 = vmul.f32 1.0, %v5309
    %v5311 = vrcp.pop %v5283
    %v5312 = vmul.f32 1.0, %v5311
    %v5313 = vrcp.pop %v5284
    %v5314 = vmul.f32 1.0, %v5313
    %v5315 = vrcp.pop %v5285
    %v5316 = vmul.f32 1.0, %v5315
    %v5317 = vrcp.pop %v5286
    %v5318 = vmul.f32 1.0, %v5317
    %5319 = vrot.lane.b32.xlu0 %v4762, 96
    %v5320 = vpop.permute.xlu0 %5319
    %5321 = vrot.lane.b32.xlu0 %v4767, 96
    %v5322 = vpop.permute.xlu0 %5321
    %v5325 = vmul.f32 %v5288, %v5320
    %v5326 = vmul.f32 %v5290, %v5320
    %v5327 = vmul.f32 %v5292, %v5320
    %v5328 = vmul.f32 %v5294, %v5320
    %v5329 = vmul.f32 %v5296, %v5320
    %v5330 = vmul.f32 %v5298, %v5320
    %v5331 = vmul.f32 %v5300, %v5320
    %v5332 = vmul.f32 %v5302, %v5320
    %v5333 = vmul.f32 %v5304, %v5322
    %v5334 = vmul.f32 %v5306, %v5322
    %v5335 = vmul.f32 %v5308, %v5322
    %v5336 = vmul.f32 %v5310, %v5322
    %v5337 = vmul.f32 %v5312, %v5322
    %v5338 = vmul.f32 %v5314, %v5322
    %v5339 = vmul.f32 %v5316, %v5322
    %v5340 = vmul.f32 %v5318, %v5322
    %v5341 = vsel %vm4222, %v5325, 0.0
    %v5342 = vrot.slane %v5341, 4
    %v5343 = vadd.f32 %v5341, %v5342
    %v5344 = vrot.slane %v5343, 2
    %v5345 = vadd.f32 %v5343, %v5344
    %v5346 = vrot.slane %v5345, 1
    %v5347 = vadd.f32 %v5345, %v5346
    %v5348 = vsel %vm4222, %v5326, 0.0
    %v5349 = vrot.slane %v5348, 4
    %v5350 = vadd.f32 %v5348, %v5349
    %v5351 = vrot.slane %v5350, 2
    %v5352 = vadd.f32 %v5350, %v5351
    %v5353 = vrot.slane %v5352, 1
    %v5354 = vadd.f32 %v5352, %v5353
    %v5355 = vsel %vm4222, %v5327, 0.0
    %v5356 = vrot.slane %v5355, 4
    %v5357 = vadd.f32 %v5355, %v5356
    %v5358 = vrot.slane %v5357, 2
    %v5359 = vadd.f32 %v5357, %v5358
    %v5360 = vrot.slane %v5359, 1
    %v5361 = vadd.f32 %v5359, %v5360
    %v5362 = vsel %vm4222, %v5328, 0.0
    %v5363 = vrot.slane %v5362, 4
    %v5364 = vadd.f32 %v5362, %v5363
    %v5365 = vrot.slane %v5364, 2
    %v5366 = vadd.f32 %v5364, %v5365
    %v5367 = vrot.slane %v5366, 1
    %v5368 = vadd.f32 %v5366, %v5367
    %v5369 = vsel %vm4222, %v5329, 0.0
    %v5370 = vrot.slane %v5369, 4
    %v5371 = vadd.f32 %v5369, %v5370
    %v5372 = vrot.slane %v5371, 2
    %v5373 = vadd.f32 %v5371, %v5372
    %v5374 = vrot.slane %v5373, 1
    %v5375 = vadd.f32 %v5373, %v5374
    %v5376 = vsel %vm4222, %v5330, 0.0
    %v5377 = vrot.slane %v5376, 4
    %v5378 = vadd.f32 %v5376, %v5377
    %v5379 = vrot.slane %v5378, 2
    %v5380 = vadd.f32 %v5378, %v5379
    %v5381 = vrot.slane %v5380, 1
    %v5382 = vadd.f32 %v5380, %v5381
    %v5383 = vsel %vm4222, %v5331, 0.0
    %v5384 = vrot.slane %v5383, 4
    %v5385 = vadd.f32 %v5383, %v5384
    %v5386 = vrot.slane %v5385, 2
    %v5387 = vadd.f32 %v5385, %v5386
    %v5388 = vrot.slane %v5387, 1
    %v5389 = vadd.f32 %v5387, %v5388
    %v5390 = vsel %vm4222, %v5332, 0.0
    %v5391 = vrot.slane %v5390, 4
    %v5392 = vadd.f32 %v5390, %v5391
    %v5393 = vrot.slane %v5392, 2
    %v5394 = vadd.f32 %v5392, %v5393
    %v5395 = vrot.slane %v5394, 1
    %v5396 = vadd.f32 %v5394, %v5395
    %v5397 = vsel %vm4222, %v5333, 0.0
    %v5398 = vrot.slane %v5397, 4
    %v5399 = vadd.f32 %v5397, %v5398
    %v5400 = vrot.slane %v5399, 2
    %v5401 = vadd.f32 %v5399, %v5400
    %v5402 = vrot.slane %v5401, 1
    %v5403 = vadd.f32 %v5401, %v5402
    %v5404 = vsel %vm4222, %v5334, 0.0
    %v5405 = vrot.slane %v5404, 4
    %v5406 = vadd.f32 %v5404, %v5405
    %v5407 = vrot.slane %v5406, 2
    %v5408 = vadd.f32 %v5406, %v5407
    %v5409 = vrot.slane %v5408, 1
    %v5410 = vadd.f32 %v5408, %v5409
    %v5411 = vsel %vm4222, %v5335, 0.0
    %v5412 = vrot.slane %v5411, 4
    %v5413 = vadd.f32 %v5411, %v5412
    %v5414 = vrot.slane %v5413, 2
    %v5415 = vadd.f32 %v5413, %v5414
    %v5416 = vrot.slane %v5415, 1
    %v5417 = vadd.f32 %v5415, %v5416
    %v5418 = vsel %vm4222, %v5336, 0.0
    %v5419 = vrot.slane %v5418, 4
    %v5420 = vadd.f32 %v5418, %v5419
    %v5421 = vrot.slane %v5420, 2
    %v5422 = vadd.f32 %v5420, %v5421
    %v5423 = vrot.slane %v5422, 1
    %v5424 = vadd.f32 %v5422, %v5423
    %v5425 = vsel %vm4222, %v5337, 0.0
    %v5426 = vrot.slane %v5425, 4
    %v5427 = vadd.f32 %v5425, %v5426
    %v5428 = vrot.slane %v5427, 2
    %v5429 = vadd.f32 %v5427, %v5428
    %v5430 = vrot.slane %v5429, 1
    %v5431 = vadd.f32 %v5429, %v5430
    %v5432 = vsel %vm4222, %v5338, 0.0
    %v5433 = vrot.slane %v5432, 4
    %v5434 = vadd.f32 %v5432, %v5433
    %v5435 = vrot.slane %v5434, 2
    %v5436 = vadd.f32 %v5434, %v5435
    %v5437 = vrot.slane %v5436, 1
    %v5438 = vadd.f32 %v5436, %v5437
    %v5439 = vsel %vm4222, %v5339, 0.0
    %v5440 = vrot.slane %v5439, 4
    %v5441 = vadd.f32 %v5439, %v5440
    %v5442 = vrot.slane %v5441, 2
    %v5443 = vadd.f32 %v5441, %v5442
    %v5444 = vrot.slane %v5443, 1
    %v5445 = vadd.f32 %v5443, %v5444
    %v5446 = vsel %vm4222, %v5340, 0.0
    %v5447 = vrot.slane %v5446, 4
    %v5448 = vadd.f32 %v5446, %v5447
    %v5449 = vrot.slane %v5448, 2
    %v5450 = vadd.f32 %v5448, %v5449
    %v5451 = vrot.slane %v5450, 1
    %v5452 = vadd.f32 %v5450, %v5451
    %vm5469 = vcmask 1041409
    %v5470 = vsel %vm5469, %v5354, %v5347
    %vm5471 = vcmask 1042434
    %v5472 = vsel %vm5471, %v5361, %v5470
    %vm5473 = vcmask 1043459
    %v5474 = vsel %vm5473, %v5368, %v5472
    %vm5475 = vcmask 1044484
    %v5476 = vsel %vm5475, %v5375, %v5474
    %vm5477 = vcmask 1045509
    %v5478 = vsel %vm5477, %v5382, %v5476
    %vm5479 = vcmask 1046534
    %v5480 = vsel %vm5479, %v5389, %v5478
    %vm5481 = vcmask 1047559
    %v5482 = vsel %vm5481, %v5396, %v5480
    %v5483 = vsel %vm5469, %v5410, %v5403
    %v5484 = vsel %vm5471, %v5417, %v5483
    %v5485 = vsel %vm5473, %v5424, %v5484
    %v5486 = vsel %vm5475, %v5431, %v5485
    %v5487 = vsel %vm5477, %v5438, %v5486
    %v5488 = vsel %vm5479, %v5445, %v5487
    %v5489 = vsel %vm5481, %v5452, %v5488
    %v5492 = vadd.f32 %v4762, %v5482
    %v5493 = vadd.f32 %v4767, %v5489
    %v5494 = vsel %vm4222, %v5492, 0.0
    %5495 = vadd.xlane.f32.xlu0 %v5494
    %v5496 = vpop.xlane.xlu0 %5495
    %v5497 = vsel %vm4222, %v5493, 0.0
    %5498 = vadd.xlane.f32.xlu0 %v5497
    %v5499 = vpop.xlane.xlu0 %5498
    %v5500 = vrcp.pop 32.0
    %v5501 = vmul.f32 %v5496, %v5500
    %v5502 = vmul.f32 %v5499, %v5500
    %v5503 = vsub.f32 %v5492, %v5501
    %v5504 = vsub.f32 %v5493, %v5502
    %v5505 = vmul.f32 %v5503, %v5503
    %v5506 = vmul.f32 %v5504, %v5504
    %v5507 = vsel %vm4222, %v5505, 0.0
    %5508 = vadd.xlane.f32.xlu0 %v5507
    %v5509 = vpop.xlane.xlu0 %5508
    %v5510 = vsel %vm4222, %v5506, 0.0
    %5511 = vadd.xlane.f32.xlu0 %v5510
    %v5512 = vpop.xlane.xlu0 %5511
    %v5513 = vmul.f32 %v5509, %v5500
    %v5514 = vmul.f32 %v5512, %v5500
    %v5515 = vadd.f32 %v5513, 1e-05
    %v5516 = vadd.f32 %v5514, 1e-05
    %v5517 = vrsqrt.pop %v5515
    %v5518 = vrsqrt.pop %v5516
    %v5519 = vmul.f32 %v5503, %v5517
    %v5520 = vmul.f32 %v5504, %v5518
    %v5521 = vlaneseq
    %v5522 = vshrl.u32 %v5521, 7
    %v5523 = vsub.s32 0, %v5522
    %v5524 = vrot.slane %v4674, %v5523
    %v5525 = vmul.f32 %v5519, %v5524
    %v5526 = vmul.f32 %v5520, %v5524
    %v5527 = vlaneseq
    %v5528 = vshrl.u32 %v5527, 7
    %v5529 = vsub.s32 0, %v5528
    %v5530 = vrot.slane %v4675, %v5529
    %v5531 = vadd.f32 %v5525, %v5530
    %v5532 = vadd.f32 %v5526, %v5530
    %v5533 = vmax.f32 %v5531, 0.0
    %v5534 = vmax.f32 %v5532, 0.0
    %v5535 = vsel %vm4222, %v5207, 0.0
    %5536 = vadd.xlane.f32.xlu0 %v5535
    %v5537 = vpop.xlane.xlu0 %5536
    %v5538 = vsel %vm4222, %v5208, 0.0
    %5539 = vadd.xlane.f32.xlu0 %v5538
    %v5540 = vpop.xlane.xlu0 %5539
    %v5541 = vsel %vm4222, %v5209, 0.0
    %5542 = vadd.xlane.f32.xlu0 %v5541
    %v5543 = vpop.xlane.xlu0 %5542
    %v5544 = vsel %vm4222, %v5210, 0.0
    %5545 = vadd.xlane.f32.xlu0 %v5544
    %v5546 = vpop.xlane.xlu0 %5545
    %v5547 = vsel %vm4222, %v5211, 0.0
    %5548 = vadd.xlane.f32.xlu0 %v5547
    %v5549 = vpop.xlane.xlu0 %5548
    %v5550 = vsel %vm4222, %v5212, 0.0
    %5551 = vadd.xlane.f32.xlu0 %v5550
    %v5552 = vpop.xlane.xlu0 %5551
    %v5553 = vsel %vm4222, %v5213, 0.0
    %5554 = vadd.xlane.f32.xlu0 %v5553
    %v5555 = vpop.xlane.xlu0 %5554
    %v5556 = vsel %vm4222, %v5214, 0.0
    %5557 = vadd.xlane.f32.xlu0 %v5556
    %v5558 = vpop.xlane.xlu0 %5557
    %v5559 = vsel %vm4222, %v5215, 0.0
    %5560 = vadd.xlane.f32.xlu0 %v5559
    %v5561 = vpop.xlane.xlu0 %5560
    %v5562 = vsel %vm4222, %v5216, 0.0
    %5563 = vadd.xlane.f32.xlu0 %v5562
    %v5564 = vpop.xlane.xlu0 %5563
    %v5565 = vsel %vm4222, %v5217, 0.0
    %5566 = vadd.xlane.f32.xlu0 %v5565
    %v5567 = vpop.xlane.xlu0 %5566
    %v5568 = vsel %vm4222, %v5218, 0.0
    %5569 = vadd.xlane.f32.xlu0 %v5568
    %v5570 = vpop.xlane.xlu0 %5569
    %v5571 = vsel %vm4222, %v5219, 0.0
    %5572 = vadd.xlane.f32.xlu0 %v5571
    %v5573 = vpop.xlane.xlu0 %5572
    %v5574 = vsel %vm4222, %v5220, 0.0
    %5575 = vadd.xlane.f32.xlu0 %v5574
    %v5576 = vpop.xlane.xlu0 %5575
    %v5577 = vsel %vm4222, %v5221, 0.0
    %5578 = vadd.xlane.f32.xlu0 %v5577
    %v5579 = vpop.xlane.xlu0 %5578
    %v5580 = vsel %vm4222, %v5222, 0.0
    %5581 = vadd.xlane.f32.xlu0 %v5580
    %v5582 = vpop.xlane.xlu0 %5581
    %v5583 = vmul.f32 %v5537, %v5500
    %v5584 = vmul.f32 %v5540, %v5500
    %v5585 = vmul.f32 %v5543, %v5500
    %v5586 = vmul.f32 %v5546, %v5500
    %v5587 = vmul.f32 %v5549, %v5500
    %v5588 = vmul.f32 %v5552, %v5500
    %v5589 = vmul.f32 %v5555, %v5500
    %v5590 = vmul.f32 %v5558, %v5500
    %v5591 = vmul.f32 %v5561, %v5500
    %v5592 = vmul.f32 %v5564, %v5500
    %v5593 = vmul.f32 %v5567, %v5500
    %v5594 = vmul.f32 %v5570, %v5500
    %v5595 = vmul.f32 %v5573, %v5500
    %v5596 = vmul.f32 %v5576, %v5500
    %v5597 = vmul.f32 %v5579, %v5500
    %v5598 = vmul.f32 %v5582, %v5500
    %v5599 = vsub.f32 %v5207, %v5583
    %v5600 = vsub.f32 %v5208, %v5584
    %v5601 = vsub.f32 %v5209, %v5585
    %v5602 = vsub.f32 %v5210, %v5586
    %v5603 = vsub.f32 %v5211, %v5587
    %v5604 = vsub.f32 %v5212, %v5588
    %v5605 = vsub.f32 %v5213, %v5589
    %v5606 = vsub.f32 %v5214, %v5590
    %v5607 = vsub.f32 %v5215, %v5591
    %v5608 = vsub.f32 %v5216, %v5592
    %v5609 = vsub.f32 %v5217, %v5593
    %v5610 = vsub.f32 %v5218, %v5594
    %v5611 = vsub.f32 %v5219, %v5595
    %v5612 = vsub.f32 %v5220, %v5596
    %v5613 = vsub.f32 %v5221, %v5597
    %v5614 = vsub.f32 %v5222, %v5598
    %v5615 = vmul.f32 %v5599, %v5599
    %v5616 = vmul.f32 %v5600, %v5600
    %v5617 = vmul.f32 %v5601, %v5601
    %v5618 = vmul.f32 %v5602, %v5602
    %v5619 = vmul.f32 %v5603, %v5603
    %v5620 = vmul.f32 %v5604, %v5604
    %v5621 = vmul.f32 %v5605, %v5605
    %v5622 = vmul.f32 %v5606, %v5606
    %v5623 = vmul.f32 %v5607, %v5607
    %v5624 = vmul.f32 %v5608, %v5608
    %v5625 = vmul.f32 %v5609, %v5609
    %v5626 = vmul.f32 %v5610, %v5610
    %v5627 = vmul.f32 %v5611, %v5611
    %v5628 = vmul.f32 %v5612, %v5612
    %v5629 = vmul.f32 %v5613, %v5613
    %v5630 = vmul.f32 %v5614, %v5614
    %v5631 = vsel %vm4222, %v5615, 0.0
    %5632 = vadd.xlane.f32.xlu0 %v5631
    %v5633 = vpop.xlane.xlu0 %5632
    %v5634 = vsel %vm4222, %v5616, 0.0
    %5635 = vadd.xlane.f32.xlu0 %v5634
    %v5636 = vpop.xlane.xlu0 %5635
    %v5637 = vsel %vm4222, %v5617, 0.0
    %5638 = vadd.xlane.f32.xlu0 %v5637
    %v5639 = vpop.xlane.xlu0 %5638
    %v5640 = vsel %vm4222, %v5618, 0.0
    %5641 = vadd.xlane.f32.xlu0 %v5640
    %v5642 = vpop.xlane.xlu0 %5641
    %v5643 = vsel %vm4222, %v5619, 0.0
    %5644 = vadd.xlane.f32.xlu0 %v5643
    %v5645 = vpop.xlane.xlu0 %5644
    %v5646 = vsel %vm4222, %v5620, 0.0
    %5647 = vadd.xlane.f32.xlu0 %v5646
    %v5648 = vpop.xlane.xlu0 %5647
    %v5649 = vsel %vm4222, %v5621, 0.0
    %5650 = vadd.xlane.f32.xlu0 %v5649
    %v5651 = vpop.xlane.xlu0 %5650
    %v5652 = vsel %vm4222, %v5622, 0.0
    %5653 = vadd.xlane.f32.xlu0 %v5652
    %v5654 = vpop.xlane.xlu0 %5653
    %v5655 = vsel %vm4222, %v5623, 0.0
    %5656 = vadd.xlane.f32.xlu0 %v5655
    %v5657 = vpop.xlane.xlu0 %5656
    %v5658 = vsel %vm4222, %v5624, 0.0
    %5659 = vadd.xlane.f32.xlu0 %v5658
    %v5660 = vpop.xlane.xlu0 %5659
    %v5661 = vsel %vm4222, %v5625, 0.0
    %5662 = vadd.xlane.f32.xlu0 %v5661
    %v5663 = vpop.xlane.xlu0 %5662
    %v5664 = vsel %vm4222, %v5626, 0.0
    %5665 = vadd.xlane.f32.xlu0 %v5664
    %v5666 = vpop.xlane.xlu0 %5665
    %v5667 = vsel %vm4222, %v5627, 0.0
    %5668 = vadd.xlane.f32.xlu0 %v5667
    %v5669 = vpop.xlane.xlu0 %5668
    %v5670 = vsel %vm4222, %v5628, 0.0
    %5671 = vadd.xlane.f32.xlu0 %v5670
    %v5672 = vpop.xlane.xlu0 %5671
    %v5673 = vsel %vm4222, %v5629, 0.0
    %5674 = vadd.xlane.f32.xlu0 %v5673
    %v5675 = vpop.xlane.xlu0 %5674
    %v5676 = vsel %vm4222, %v5630, 0.0
    %5677 = vadd.xlane.f32.xlu0 %v5676
    %v5678 = vpop.xlane.xlu0 %5677
    %v5679 = vmul.f32 %v5633, %v5500
    %v5680 = vmul.f32 %v5636, %v5500
    %v5681 = vmul.f32 %v5639, %v5500
    %v5682 = vmul.f32 %v5642, %v5500
    %v5683 = vmul.f32 %v5645, %v5500
    %v5684 = vmul.f32 %v5648, %v5500
    %v5685 = vmul.f32 %v5651, %v5500
    %v5686 = vmul.f32 %v5654, %v5500
    %v5687 = vmul.f32 %v5657, %v5500
    %v5688 = vmul.f32 %v5660, %v5500
    %v5689 = vmul.f32 %v5663, %v5500
    %v5690 = vmul.f32 %v5666, %v5500
    %v5691 = vmul.f32 %v5669, %v5500
    %v5692 = vmul.f32 %v5672, %v5500
    %v5693 = vmul.f32 %v5675, %v5500
    %v5694 = vmul.f32 %v5678, %v5500
    %v5695 = vadd.f32 %v5679, 1e-05
    %v5696 = vadd.f32 %v5680, 1e-05
    %v5697 = vadd.f32 %v5681, 1e-05
    %v5698 = vadd.f32 %v5682, 1e-05
    %v5699 = vadd.f32 %v5683, 1e-05
    %v5700 = vadd.f32 %v5684, 1e-05
    %v5701 = vadd.f32 %v5685, 1e-05
    %v5702 = vadd.f32 %v5686, 1e-05
    %v5703 = vadd.f32 %v5687, 1e-05
    %v5704 = vadd.f32 %v5688, 1e-05
    %v5705 = vadd.f32 %v5689, 1e-05
    %v5706 = vadd.f32 %v5690, 1e-05
    %v5707 = vadd.f32 %v5691, 1e-05
    %v5708 = vadd.f32 %v5692, 1e-05
    %v5709 = vadd.f32 %v5693, 1e-05
    %v5710 = vadd.f32 %v5694, 1e-05
    %v5711 = vrsqrt.pop %v5695
    %v5712 = vrsqrt.pop %v5696
    %v5713 = vrsqrt.pop %v5697
    %v5714 = vrsqrt.pop %v5698
    %v5715 = vrsqrt.pop %v5699
    %v5716 = vrsqrt.pop %v5700
    %v5717 = vrsqrt.pop %v5701
    %v5718 = vrsqrt.pop %v5702
    %v5719 = vrsqrt.pop %v5703
    %v5720 = vrsqrt.pop %v5704
    %v5721 = vrsqrt.pop %v5705
    %v5722 = vrsqrt.pop %v5706
    %v5723 = vrsqrt.pop %v5707
    %v5724 = vrsqrt.pop %v5708
    %v5725 = vrsqrt.pop %v5709
    %v5726 = vrsqrt.pop %v5710
    %v5727 = vmul.f32 %v5599, %v5711
    %v5728 = vmul.f32 %v5600, %v5712
    %v5729 = vmul.f32 %v5601, %v5713
    %v5730 = vmul.f32 %v5602, %v5714
    %v5731 = vmul.f32 %v5603, %v5715
    %v5732 = vmul.f32 %v5604, %v5716
    %v5733 = vmul.f32 %v5605, %v5717
    %v5734 = vmul.f32 %v5606, %v5718
    %v5735 = vmul.f32 %v5607, %v5719
    %v5736 = vmul.f32 %v5608, %v5720
    %v5737 = vmul.f32 %v5609, %v5721
    %v5738 = vmul.f32 %v5610, %v5722
    %v5739 = vmul.f32 %v5611, %v5723
    %v5740 = vmul.f32 %v5612, %v5724
    %v5741 = vmul.f32 %v5613, %v5725
    %v5742 = vmul.f32 %v5614, %v5726
    %v5743 = vlaneseq
    %v5744 = vshrl.u32 %v5743, 7
    %v5745 = vsub.s32 0, %v5744
    %v5746 = vrot.slane %v4676, %v5745
    %v5747 = vmul.f32 %v5727, %v5746
    %v5748 = vmul.f32 %v5728, %v5746
    %v5749 = vmul.f32 %v5729, %v5746
    %v5750 = vmul.f32 %v5730, %v5746
    %v5751 = vmul.f32 %v5731, %v5746
    %v5752 = vmul.f32 %v5732, %v5746
    %v5753 = vmul.f32 %v5733, %v5746
    %v5754 = vmul.f32 %v5734, %v5746
    %v5755 = vmul.f32 %v5735, %v5746
    %v5756 = vmul.f32 %v5736, %v5746
    %v5757 = vmul.f32 %v5737, %v5746
    %v5758 = vmul.f32 %v5738, %v5746
    %v5759 = vmul.f32 %v5739, %v5746
    %v5760 = vmul.f32 %v5740, %v5746
    %v5761 = vmul.f32 %v5741, %v5746
    %v5762 = vmul.f32 %v5742, %v5746
    %v5763 = vlaneseq
    %v5764 = vshrl.u32 %v5763, 7
    %v5765 = vsub.s32 0, %v5764
    %v5766 = vrot.slane %v4677, %v5765
    %v5767 = vadd.f32 %v5747, %v5766
    %v5768 = vadd.f32 %v5748, %v5766
    %v5769 = vadd.f32 %v5749, %v5766
    %v5770 = vadd.f32 %v5750, %v5766
    %v5771 = vadd.f32 %v5751, %v5766
    %v5772 = vadd.f32 %v5752, %v5766
    %v5773 = vadd.f32 %v5753, %v5766
    %v5774 = vadd.f32 %v5754, %v5766
    %v5775 = vadd.f32 %v5755, %v5766
    %v5776 = vadd.f32 %v5756, %v5766
    %v5777 = vadd.f32 %v5757, %v5766
    %v5778 = vadd.f32 %v5758, %v5766
    %v5779 = vadd.f32 %v5759, %v5766
    %v5780 = vadd.f32 %v5760, %v5766
    %v5781 = vadd.f32 %v5761, %v5766
    %v5782 = vadd.f32 %v5762, %v5766
    %v5783 = vmax.f32 %v5767, 0.0
    %v5784 = vmax.f32 %v5768, 0.0
    %v5785 = vmax.f32 %v5769, 0.0
    %v5786 = vmax.f32 %v5770, 0.0
    %v5787 = vmax.f32 %v5771, 0.0
    %v5788 = vmax.f32 %v5772, 0.0
    %v5789 = vmax.f32 %v5773, 0.0
    %v5790 = vmax.f32 %v5774, 0.0
    %v5791 = vmax.f32 %v5775, 0.0
    %v5792 = vmax.f32 %v5776, 0.0
    %v5793 = vmax.f32 %v5777, 0.0
    %v5794 = vmax.f32 %v5778, 0.0
    %v5795 = vmax.f32 %v5779, 0.0
    %v5796 = vmax.f32 %v5780, 0.0
    %v5797 = vmax.f32 %v5781, 0.0
    %v5798 = vmax.f32 %v5782, 0.0
    %s5799 = scalar_lea.vmem [#allocation2], 320
    %v5800 = vld [vmem:[%s5799] sm:$0xff]
    %v5801 = vld [vmem:[%s5799 + $0x8] sm:$0xff]
    %v5802 = vld [vmem:[%s5799 + $0x10] sm:$0xff]
    %v5803 = vld [vmem:[%s5799 + $0x18] sm:$0xff]
    %v5804 = vld [vmem:[%s5 + $0x16] sm:$0x1]
    %v5805 = vlaneseq
    %v5806 = vshrl.u32 %v5805, 7
    %v5807 = vsub.s32 0, %v5806
    %v5808 = vrot.slane %v5804, %v5807
    %v5810 = vsel %vm4222, %v4380, 0
    %5812 = vmatprep.subr.mxu0 0.0
    %5813 = vmatpush1.msra.mxu0 0.0
    %5814 = vmatprep.subr.mxu0 0.0
    %5815 = vmatpush1.msra.mxu0 0.0
    %5816 = vmatprep.subr.mxu0 0.0
    %5817 = vmatpush1.msra.mxu0 0.0
    %5818 = vmatprep.subr.mxu0 0.0
    %5819 = vmatpush1.msra.mxu0 0.0
    %5820 = vmatprep.subr.mxu0 0.0
    %5821 = vmatpush1.msra.mxu0 0.0
    %5822 = vmatprep.subr.mxu0 0.0
    %5823 = vmatpush1.msra.mxu0 0.0
    %5824 = vmatprep.subr.mxu0 0.0
    %5825 = vmatpush1.msra.mxu0 0.0
    %5826 = vmatprep.subr.mxu0 0.0
    %5827 = vmatpush1.msra.mxu0 0.0
    %5828 = vmatprep.subr.mxu0 0.0
    %5829 = vmatpush1.msra.mxu0 0.0
    %5830 = vmatprep.subr.mxu0 0.0
    %5831 = vmatpush1.msra.mxu0 0.0
    %5832 = vmatprep.subr.mxu0 0.0
    %5833 = vmatpush1.msra.mxu0 0.0
    %5834 = vmatprep.subr.mxu0 0.0
    %5835 = vmatpush1.msra.mxu0 0.0
    %5836 = vmatprep.subr.mxu0 0.0
    %5837 = vmatpush1.msra.mxu0 %v5803
    %5838 = vmatprep.subr.mxu0 0.0
    %5839 = vmatpush1.msra.mxu0 %v5802
    %5840 = vmatprep.subr.mxu0 0.0
    %5841 = vmatpush1.msra.mxu0 %v5801
    %5842 = vmatprep.subr.mxu0 0.0
    %5843 = vmatpush1.msra.mxu0 %v5800
    %5844 = vmatprep.subr.mxu0 0.0
    %5845 = vmatpush2.msra.mxu0 0.0
    %5846 = vmatprep.subr.mxu0 0.0
    %5847 = vmatpush2.msra.mxu0 0.0
    %5848 = vmatprep.subr.mxu0 0.0
    %5849 = vmatpush2.msra.mxu0 0.0
    %5850 = vmatprep.subr.mxu0 0.0
    %5851 = vmatpush2.msra.mxu0 0.0
    %5852 = vmatprep.subr.mxu0 0.0
    %5853 = vmatpush2.msra.mxu0 0.0
    %5854 = vmatprep.subr.mxu0 0.0
    %5855 = vmatpush2.msra.mxu0 0.0
    %5856 = vmatprep.subr.mxu0 0.0
    %5857 = vmatpush2.msra.mxu0 0.0
    %5858 = vmatprep.subr.mxu0 0.0
    %5859 = vmatpush2.msra.mxu0 0.0
    %5860 = vmatprep.subr.mxu0 0.0
    %5861 = vmatpush2.msra.mxu0 0.0
    %5862 = vmatprep.subr.mxu0 0.0
    %5863 = vmatpush2.msra.mxu0 0.0
    %5864 = vmatprep.subr.mxu0 0.0
    %5865 = vmatpush2.msra.mxu0 0.0
    %5866 = vmatprep.subr.mxu0 0.0
    %5867 = vmatpush2.msra.mxu0 0.0
    %5868 = vmatprep.subr.mxu0 0.0
    %5869 = vmatpush2.msra.mxu0 0.0
    %5870 = vmatprep.subr.mxu0 0.0
    %5871 = vmatpush2.msra.mxu0 0.0
    %5872 = vmatprep.subr.mxu0 0.0
    %5873 = vmatpush2.msra.mxu0 0.0
    %5874 = vmatprep.subr.mxu0 0.0
    %5875 = vmatpush2.msra.mxu0 0.0
    %5876 = vmatprep.mubr.f32.mxu0 0.0
    %5877 = vmatmul.mubr.f32.gmra.mxu0 %v5810
    %v5878 = vpop.f32.mrf.mxu0
    %v5879 = vadd.f32 %v5808, %v5878
    %v5880 = vpop.f32.mrf.mxu0
    %5881 = vdwg.mxu0
    %v5884 = vunpack.c.l.s4 1966171168
    %v5885 = vunpack.c.0.s8 %v5884
    %v5886 = vlaneseq
    %v5887 = vshrl.u32 %v5886, 7
    %v5888 = vsub.s32 %v5885, %v5887
    %v5889 = vrot.slane %v5879, %v5888
    %v5890 = vcombine.high %v5889, %v5889
    %v5892 = vunpack.c.l.s4 1966171168
    %v5893 = vunpack.c.0.s8 %v5892
    %v5894 = vlaneseq
    %v5895 = vshrl.u32 %v5894, 7
    %v5896 = vsub.s32 %v5893, %v5895
    %v5897 = vrot.slane %v5889, %v5896
    %v5899 = vunpack.c.l.s4 1966171168
    %v5900 = vunpack.c.0.s8 %v5899
    %v5901 = vlaneseq
    %v5902 = vshrl.u32 %v5901, 7
    %v5903 = vsub.s32 %v5900, %v5902
    %v5904 = vrot.slane %v5890, %v5903
    %v5905 = vlaneseq
    %v5906 = vshrl.u32 %v5905, 7
    %v5907 = vsub.s32 0, %v5906
    %v5908 = vrot.slane %v5897, %v5907
    %v5909 = vlaneseq
    %v5910 = vshrl.u32 %v5909, 7
    %v5911 = vsub.s32 0, %v5910
    %v5912 = vrot.slane %v5904, %v5911
    %v5915 = vadd.f32 %v5783, %v5908
    %v5916 = vadd.f32 %v5784, %v5908
    %v5917 = vadd.f32 %v5785, %v5908
    %v5918 = vadd.f32 %v5786, %v5908
    %v5919 = vadd.f32 %v5787, %v5908
    %v5920 = vadd.f32 %v5788, %v5908
    %v5921 = vadd.f32 %v5789, %v5908
    %v5922 = vadd.f32 %v5790, %v5908
    %v5923 = vadd.f32 %v5791, %v5912
    %v5924 = vadd.f32 %v5792, %v5912
    %v5925 = vadd.f32 %v5793, %v5912
    %v5926 = vadd.f32 %v5794, %v5912
    %v5927 = vadd.f32 %v5795, %v5912
    %v5928 = vadd.f32 %v5796, %v5912
    %v5929 = vadd.f32 %v5797, %v5912
    %v5930 = vadd.f32 %v5798, %v5912
    %v5931 = vadd.f32 %v4463, %v5533
    %v5932 = vadd.f32 %v4468, %v5534
    %v5933 = vsel %vm4222, %v5915, 0.0
    %5934 = vadd.xlane.f32.xlu0 %v5933
    %v5935 = vpop.xlane.xlu0 %5934
    %v5936 = vsel %vm4222, %v5916, 0.0
    %5937 = vadd.xlane.f32.xlu0 %v5936
    %v5938 = vpop.xlane.xlu0 %5937
    %v5939 = vsel %vm4222, %v5917, 0.0
    %5940 = vadd.xlane.f32.xlu0 %v5939
    %v5941 = vpop.xlane.xlu0 %5940
    %v5942 = vsel %vm4222, %v5918, 0.0
    %5943 = vadd.xlane.f32.xlu0 %v5942
    %v5944 = vpop.xlane.xlu0 %5943
    %v5945 = vsel %vm4222, %v5919, 0.0
    %5946 = vadd.xlane.f32.xlu0 %v5945
    %v5947 = vpop.xlane.xlu0 %5946
    %v5948 = vsel %vm4222, %v5920, 0.0
    %5949 = vadd.xlane.f32.xlu0 %v5948
    %v5950 = vpop.xlane.xlu0 %5949
    %v5951 = vsel %vm4222, %v5921, 0.0
    %5952 = vadd.xlane.f32.xlu0 %v5951
    %v5953 = vpop.xlane.xlu0 %5952
    %v5954 = vsel %vm4222, %v5922, 0.0
    %5955 = vadd.xlane.f32.xlu0 %v5954
    %v5956 = vpop.xlane.xlu0 %5955
    %v5957 = vsel %vm4222, %v5923, 0.0
    %5958 = vadd.xlane.f32.xlu0 %v5957
    %v5959 = vpop.xlane.xlu0 %5958
    %v5960 = vsel %vm4222, %v5924, 0.0
    %5961 = vadd.xlane.f32.xlu0 %v5960
    %v5962 = vpop.xlane.xlu0 %5961
    %v5963 = vsel %vm4222, %v5925, 0.0
    %5964 = vadd.xlane.f32.xlu0 %v5963
    %v5965 = vpop.xlane.xlu0 %5964
    %v5966 = vsel %vm4222, %v5926, 0.0
    %5967 = vadd.xlane.f32.xlu0 %v5966
    %v5968 = vpop.xlane.xlu0 %5967
    %v5969 = vsel %vm4222, %v5927, 0.0
    %5970 = vadd.xlane.f32.xlu0 %v5969
    %v5971 = vpop.xlane.xlu0 %5970
    %v5972 = vsel %vm4222, %v5928, 0.0
    %5973 = vadd.xlane.f32.xlu0 %v5972
    %v5974 = vpop.xlane.xlu0 %5973
    %v5975 = vsel %vm4222, %v5929, 0.0
    %5976 = vadd.xlane.f32.xlu0 %v5975
    %v5977 = vpop.xlane.xlu0 %5976
    %v5978 = vsel %vm4222, %v5930, 0.0
    %5979 = vadd.xlane.f32.xlu0 %v5978
    %v5980 = vpop.xlane.xlu0 %5979
    %v5981 = vmul.f32 %v5935, %v5500
    %v5982 = vmul.f32 %v5938, %v5500
    %v5983 = vmul.f32 %v5941, %v5500
    %v5984 = vmul.f32 %v5944, %v5500
    %v5985 = vmul.f32 %v5947, %v5500
    %v5986 = vmul.f32 %v5950, %v5500
    %v5987 = vmul.f32 %v5953, %v5500
    %v5988 = vmul.f32 %v5956, %v5500
    %v5989 = vmul.f32 %v5959, %v5500
    %v5990 = vmul.f32 %v5962, %v5500
    %v5991 = vmul.f32 %v5965, %v5500
    %v5992 = vmul.f32 %v5968, %v5500
    %v5993 = vmul.f32 %v5971, %v5500
    %v5994 = vmul.f32 %v5974, %v5500
    %v5995 = vmul.f32 %v5977, %v5500
    %v5996 = vmul.f32 %v5980, %v5500
    %v5997 = vsub.f32 %v5915, %v5981
    %v5998 = vsub.f32 %v5916, %v5982
    %v5999 = vsub.f32 %v5917, %v5983
    %v6000 = vsub.f32 %v5918, %v5984
    %v6001 = vsub.f32 %v5919, %v5985
    %v6002 = vsub.f32 %v5920, %v5986
    %v6003 = vsub.f32 %v5921, %v5987
    %v6004 = vsub.f32 %v5922, %v5988
    %v6005 = vsub.f32 %v5923, %v5989
    %v6006 = vsub.f32 %v5924, %v5990
    %v6007 = vsub.f32 %v5925, %v5991
    %v6008 = vsub.f32 %v5926, %v5992
    %v6009 = vsub.f32 %v5927, %v5993
    %v6010 = vsub.f32 %v5928, %v5994
    %v6011 = vsub.f32 %v5929, %v5995
    %v6012 = vsub.f32 %v5930, %v5996
    %v6013 = vmul.f32 %v5997, %v5997
    %v6014 = vmul.f32 %v5998, %v5998
    %v6015 = vmul.f32 %v5999, %v5999
    %v6016 = vmul.f32 %v6000, %v6000
    %v6017 = vmul.f32 %v6001, %v6001
    %v6018 = vmul.f32 %v6002, %v6002
    %v6019 = vmul.f32 %v6003, %v6003
    %v6020 = vmul.f32 %v6004, %v6004
    %v6021 = vmul.f32 %v6005, %v6005
    %v6022 = vmul.f32 %v6006, %v6006
    %v6023 = vmul.f32 %v6007, %v6007
    %v6024 = vmul.f32 %v6008, %v6008
    %v6025 = vmul.f32 %v6009, %v6009
    %v6026 = vmul.f32 %v6010, %v6010
    %v6027 = vmul.f32 %v6011, %v6011
    %v6028 = vmul.f32 %v6012, %v6012
    %v6029 = vsel %vm4222, %v6013, 0.0
    %6030 = vadd.xlane.f32.xlu0 %v6029
    %v6031 = vpop.xlane.xlu0 %6030
    %v6032 = vsel %vm4222, %v6014, 0.0
    %6033 = vadd.xlane.f32.xlu0 %v6032
    %v6034 = vpop.xlane.xlu0 %6033
    %v6035 = vsel %vm4222, %v6015, 0.0
    %6036 = vadd.xlane.f32.xlu0 %v6035
    %v6037 = vpop.xlane.xlu0 %6036
    %v6038 = vsel %vm4222, %v6016, 0.0
    %6039 = vadd.xlane.f32.xlu0 %v6038
    %v6040 = vpop.xlane.xlu0 %6039
    %v6041 = vsel %vm4222, %v6017, 0.0
    %6042 = vadd.xlane.f32.xlu0 %v6041
    %v6043 = vpop.xlane.xlu0 %6042
    %v6044 = vsel %vm4222, %v6018, 0.0
    %6045 = vadd.xlane.f32.xlu0 %v6044
    %v6046 = vpop.xlane.xlu0 %6045
    %v6047 = vsel %vm4222, %v6019, 0.0
    %6048 = vadd.xlane.f32.xlu0 %v6047
    %v6049 = vpop.xlane.xlu0 %6048
    %v6050 = vsel %vm4222, %v6020, 0.0
    %6051 = vadd.xlane.f32.xlu0 %v6050
    %v6052 = vpop.xlane.xlu0 %6051
    %v6053 = vsel %vm4222, %v6021, 0.0
    %6054 = vadd.xlane.f32.xlu0 %v6053
    %v6055 = vpop.xlane.xlu0 %6054
    %v6056 = vsel %vm4222, %v6022, 0.0
    %6057 = vadd.xlane.f32.xlu0 %v6056
    %v6058 = vpop.xlane.xlu0 %6057
    %v6059 = vsel %vm4222, %v6023, 0.0
    %6060 = vadd.xlane.f32.xlu0 %v6059
    %v6061 = vpop.xlane.xlu0 %6060
    %v6062 = vsel %vm4222, %v6024, 0.0
    %6063 = vadd.xlane.f32.xlu0 %v6062
    %v6064 = vpop.xlane.xlu0 %6063
    %v6065 = vsel %vm4222, %v6025, 0.0
    %6066 = vadd.xlane.f32.xlu0 %v6065
    %v6067 = vpop.xlane.xlu0 %6066
    %v6068 = vsel %vm4222, %v6026, 0.0
    %6069 = vadd.xlane.f32.xlu0 %v6068
    %v6070 = vpop.xlane.xlu0 %6069
    %v6071 = vsel %vm4222, %v6027, 0.0
    %6072 = vadd.xlane.f32.xlu0 %v6071
    %v6073 = vpop.xlane.xlu0 %6072
    %v6074 = vsel %vm4222, %v6028, 0.0
    %6075 = vadd.xlane.f32.xlu0 %v6074
    %v6076 = vpop.xlane.xlu0 %6075
    %v6077 = vmul.f32 %v6031, %v5500
    %v6078 = vmul.f32 %v6034, %v5500
    %v6079 = vmul.f32 %v6037, %v5500
    %v6080 = vmul.f32 %v6040, %v5500
    %v6081 = vmul.f32 %v6043, %v5500
    %v6082 = vmul.f32 %v6046, %v5500
    %v6083 = vmul.f32 %v6049, %v5500
    %v6084 = vmul.f32 %v6052, %v5500
    %v6085 = vmul.f32 %v6055, %v5500
    %v6086 = vmul.f32 %v6058, %v5500
    %v6087 = vmul.f32 %v6061, %v5500
    %v6088 = vmul.f32 %v6064, %v5500
    %v6089 = vmul.f32 %v6067, %v5500
    %v6090 = vmul.f32 %v6070, %v5500
    %v6091 = vmul.f32 %v6073, %v5500
    %v6092 = vmul.f32 %v6076, %v5500
    %v6093 = vadd.f32 %v6077, 1e-05
    %v6094 = vadd.f32 %v6078, 1e-05
    %v6095 = vadd.f32 %v6079, 1e-05
    %v6096 = vadd.f32 %v6080, 1e-05
    %v6097 = vadd.f32 %v6081, 1e-05
    %v6098 = vadd.f32 %v6082, 1e-05
    %v6099 = vadd.f32 %v6083, 1e-05
    %v6100 = vadd.f32 %v6084, 1e-05
    %v6101 = vadd.f32 %v6085, 1e-05
    %v6102 = vadd.f32 %v6086, 1e-05
    %v6103 = vadd.f32 %v6087, 1e-05
    %v6104 = vadd.f32 %v6088, 1e-05
    %v6105 = vadd.f32 %v6089, 1e-05
    %v6106 = vadd.f32 %v6090, 1e-05
    %v6107 = vadd.f32 %v6091, 1e-05
    %v6108 = vadd.f32 %v6092, 1e-05
    %v6109 = vrsqrt.pop %v6093
    %v6110 = vrsqrt.pop %v6094
    %v6111 = vrsqrt.pop %v6095
    %v6112 = vrsqrt.pop %v6096
    %v6113 = vrsqrt.pop %v6097
    %v6114 = vrsqrt.pop %v6098
    %v6115 = vrsqrt.pop %v6099
    %v6116 = vrsqrt.pop %v6100
    %v6117 = vrsqrt.pop %v6101
    %v6118 = vrsqrt.pop %v6102
    %v6119 = vrsqrt.pop %v6103
    %v6120 = vrsqrt.pop %v6104
    %v6121 = vrsqrt.pop %v6105
    %v6122 = vrsqrt.pop %v6106
    %v6123 = vrsqrt.pop %v6107
    %v6124 = vrsqrt.pop %v6108
    %v6125 = vmul.f32 %v5997, %v6109
    %v6126 = vmul.f32 %v5998, %v6110
    %v6127 = vmul.f32 %v5999, %v6111
    %v6128 = vmul.f32 %v6000, %v6112
    %v6129 = vmul.f32 %v6001, %v6113
    %v6130 = vmul.f32 %v6002, %v6114
    %v6131 = vmul.f32 %v6003, %v6115
    %v6132 = vmul.f32 %v6004, %v6116
    %v6133 = vmul.f32 %v6005, %v6117
    %v6134 = vmul.f32 %v6006, %v6118
    %v6135 = vmul.f32 %v6007, %v6119
    %v6136 = vmul.f32 %v6008, %v6120
    %v6137 = vmul.f32 %v6009, %v6121
    %v6138 = vmul.f32 %v6010, %v6122
    %v6139 = vmul.f32 %v6011, %v6123
    %v6140 = vmul.f32 %v6012, %v6124
    %v6141 = vlaneseq
    %v6142 = vshrl.u32 %v6141, 7
    %v6143 = vsub.s32 0, %v6142
    %v6144 = vrot.slane %v4678, %v6143
    %v6145 = vmul.f32 %v6125, %v6144
    %v6146 = vmul.f32 %v6126, %v6144
    %v6147 = vmul.f32 %v6127, %v6144
    %v6148 = vmul.f32 %v6128, %v6144
    %v6149 = vmul.f32 %v6129, %v6144
    %v6150 = vmul.f32 %v6130, %v6144
    %v6151 = vmul.f32 %v6131, %v6144
    %v6152 = vmul.f32 %v6132, %v6144
    %v6153 = vmul.f32 %v6133, %v6144
    %v6154 = vmul.f32 %v6134, %v6144
    %v6155 = vmul.f32 %v6135, %v6144
    %v6156 = vmul.f32 %v6136, %v6144
    %v6157 = vmul.f32 %v6137, %v6144
    %v6158 = vmul.f32 %v6138, %v6144
    %v6159 = vmul.f32 %v6139, %v6144
    %v6160 = vmul.f32 %v6140, %v6144
    %v6161 = vlaneseq
    %v6162 = vshrl.u32 %v6161, 7
    %v6163 = vsub.s32 0, %v6162
    %v6164 = vrot.slane %v4679, %v6163
    %v6165 = vadd.f32 %v6145, %v6164
    %v6166 = vadd.f32 %v6146, %v6164
    %v6167 = vadd.f32 %v6147, %v6164
    %v6168 = vadd.f32 %v6148, %v6164
    %v6169 = vadd.f32 %v6149, %v6164
    %v6170 = vadd.f32 %v6150, %v6164
    %v6171 = vadd.f32 %v6151, %v6164
    %v6172 = vadd.f32 %v6152, %v6164
    %v6173 = vadd.f32 %v6153, %v6164
    %v6174 = vadd.f32 %v6154, %v6164
    %v6175 = vadd.f32 %v6155, %v6164
    %v6176 = vadd.f32 %v6156, %v6164
    %v6177 = vadd.f32 %v6157, %v6164
    %v6178 = vadd.f32 %v6158, %v6164
    %v6179 = vadd.f32 %v6159, %v6164
    %v6180 = vadd.f32 %v6160, %v6164
    %v6181 = vxor.u32 %v6165, 2147483648
    %v6182 = vxor.u32 %v6166, 2147483648
    %v6183 = vxor.u32 %v6167, 2147483648
    %v6184 = vxor.u32 %v6168, 2147483648
    %v6185 = vxor.u32 %v6169, 2147483648
    %v6186 = vxor.u32 %v6170, 2147483648
    %v6187 = vxor.u32 %v6171, 2147483648
    %v6188 = vxor.u32 %v6172, 2147483648
    %v6189 = vxor.u32 %v6173, 2147483648
    %v6190 = vxor.u32 %v6174, 2147483648
    %v6191 = vxor.u32 %v6175, 2147483648
    %v6192 = vxor.u32 %v6176, 2147483648
    %v6193 = vxor.u32 %v6177, 2147483648
    %v6194 = vxor.u32 %v6178, 2147483648
    %v6195 = vxor.u32 %v6179, 2147483648
    %v6196 = vxor.u32 %v6180, 2147483648
    %v6197 = vmul.f32 %v6181, 1.442695
    %v6198 = vpow.pop %v6197
    %v6199 = vmul.f32 %v6182, 1.442695
    %v6200 = vpow.pop %v6199
    %v6201 = vmul.f32 %v6183, 1.442695
    %v6202 = vpow.pop %v6201
    %v6203 = vmul.f32 %v6184, 1.442695
    %v6204 = vpow.pop %v6203
    %v6205 = vmul.f32 %v6185, 1.442695
    %v6206 = vpow.pop %v6205
    %v6207 = vmul.f32 %v6186, 1.442695
    %v6208 = vpow.pop %v6207
    %v6209 = vmul.f32 %v6187, 1.442695
    %v6210 = vpow.pop %v6209
    %v6211 = vmul.f32 %v6188, 1.442695
    %v6212 = vpow.pop %v6211
    %v6213 = vmul.f32 %v6189, 1.442695
    %v6214 = vpow.pop %v6213
    %v6215 = vmul.f32 %v6190, 1.442695
    %v6216 = vpow.pop %v6215
    %v6217 = vmul.f32 %v6191, 1.442695
    %v6218 = vpow.pop %v6217
    %v6219 = vmul.f32 %v6192, 1.442695
    %v6220 = vpow.pop %v6219
    %v6221 = vmul.f32 %v6193, 1.442695
    %v6222 = vpow.pop %v6221
    %v6223 = vmul.f32 %v6194, 1.442695
    %v6224 = vpow.pop %v6223
    %v6225 = vmul.f32 %v6195, 1.442695
    %v6226 = vpow.pop %v6225
    %v6227 = vmul.f32 %v6196, 1.442695
    %v6228 = vpow.pop %v6227
    %v6229 = vadd.f32 %v6198, 1.0
    %v6230 = vadd.f32 %v6200, 1.0
    %v6231 = vadd.f32 %v6202, 1.0
    %v6232 = vadd.f32 %v6204, 1.0
    %v6233 = vadd.f32 %v6206, 1.0
    %v6234 = vadd.f32 %v6208, 1.0
    %v6235 = vadd.f32 %v6210, 1.0
    %v6236 = vadd.f32 %v6212, 1.0
    %v6237 = vadd.f32 %v6214, 1.0
    %v6238 = vadd.f32 %v6216, 1.0
    %v6239 = vadd.f32 %v6218, 1.0
    %v6240 = vadd.f32 %v6220, 1.0
    %v6241 = vadd.f32 %v6222, 1.0
    %v6242 = vadd.f32 %v6224, 1.0
    %v6243 = vadd.f32 %v6226, 1.0
    %v6244 = vadd.f32 %v6228, 1.0
    %v6245 = vrcp.pop %v6229
    %v6246 = vmul.f32 1.0, %v6245
    %v6247 = vrcp.pop %v6230
    %v6248 = vmul.f32 1.0, %v6247
    %v6249 = vrcp.pop %v6231
    %v6250 = vmul.f32 1.0, %v6249
    %v6251 = vrcp.pop %v6232
    %v6252 = vmul.f32 1.0, %v6251
    %v6253 = vrcp.pop %v6233
    %v6254 = vmul.f32 1.0, %v6253
    %v6255 = vrcp.pop %v6234
    %v6256 = vmul.f32 1.0, %v6255
    %v6257 = vrcp.pop %v6235
    %v6258 = vmul.f32 1.0, %v6257
    %v6259 = vrcp.pop %v6236
    %v6260 = vmul.f32 1.0, %v6259
    %v6261 = vrcp.pop %v6237
    %v6262 = vmul.f32 1.0, %v6261
    %v6263 = vrcp.pop %v6238
    %v6264 = vmul.f32 1.0, %v6263
    %v6265 = vrcp.pop %v6239
    %v6266 = vmul.f32 1.0, %v6265
    %v6267 = vrcp.pop %v6240
    %v6268 = vmul.f32 1.0, %v6267
    %v6269 = vrcp.pop %v6241
    %v6270 = vmul.f32 1.0, %v6269
    %v6271 = vrcp.pop %v6242
    %v6272 = vmul.f32 1.0, %v6271
    %v6273 = vrcp.pop %v6243
    %v6274 = vmul.f32 1.0, %v6273
    %v6275 = vrcp.pop %v6244
    %v6276 = vmul.f32 1.0, %v6275
    %v6277 = vmul.f32 %v6165, %v6246
    %v6278 = vmul.f32 %v6166, %v6248
    %v6279 = vmul.f32 %v6167, %v6250
    %v6280 = vmul.f32 %v6168, %v6252
    %v6281 = vmul.f32 %v6169, %v6254
    %v6282 = vmul.f32 %v6170, %v6256
    %v6283 = vmul.f32 %v6171, %v6258
    %v6284 = vmul.f32 %v6172, %v6260
    %v6285 = vmul.f32 %v6173, %v6262
    %v6286 = vmul.f32 %v6174, %v6264
    %v6287 = vmul.f32 %v6175, %v6266
    %v6288 = vmul.f32 %v6176, %v6268
    %v6289 = vmul.f32 %v6177, %v6270
    %v6290 = vmul.f32 %v6178, %v6272
    %v6291 = vmul.f32 %v6179, %v6274
    %v6292 = vmul.f32 %v6180, %v6276
    %s6293 = scalar_lea.vmem [#allocation2], 224
    %v6294 = vld [vmem:[%s6293] sm:$0xff]
    %v6295 = vld [vmem:[%s6293 + $0x8] sm:$0xff]
    %v6296 = vld [vmem:[%s6293 + $0x10] sm:$0xff]
    %v6297 = vld [vmem:[%s6293 + $0x18] sm:$0xff]
    %v6299 = vsel %vm4222, %v6277, 0
    %v6302 = vsel %vm4222, %v6278, 0
    %v6305 = vsel %vm4222, %v6279, 0
    %v6308 = vsel %vm4222, %v6280, 0
    %v6311 = vsel %vm4222, %v6281, 0
    %v6314 = vsel %vm4222, %v6282, 0
    %v6317 = vsel %vm4222, %v6283, 0
    %v6320 = vsel %vm4222, %v6284, 0
    %v6323 = vsel %vm4222, %v6285, 0
    %v6326 = vsel %vm4222, %v6286, 0
    %v6329 = vsel %vm4222, %v6287, 0
    %v6332 = vsel %vm4222, %v6288, 0
    %v6335 = vsel %vm4222, %v6289, 0
    %v6338 = vsel %vm4222, %v6290, 0
    %v6341 = vsel %vm4222, %v6291, 0
    %v6344 = vsel %vm4222, %v6292, 0
    %6346 = vmatprep.subr.mxu0 0.0
    %6347 = vmatpush1.msra.mxu0 0.0
    %6348 = vmatprep.subr.mxu0 0.0
    %6349 = vmatpush1.msra.mxu0 0.0
    %6350 = vmatprep.subr.mxu0 0.0
    %6351 = vmatpush1.msra.mxu0 0.0
    %6352 = vmatprep.subr.mxu0 0.0
    %6353 = vmatpush1.msra.mxu0 0.0
    %6354 = vmatprep.subr.mxu0 0.0
    %6355 = vmatpush1.msra.mxu0 0.0
    %6356 = vmatprep.subr.mxu0 0.0
    %6357 = vmatpush1.msra.mxu0 0.0
    %6358 = vmatprep.subr.mxu0 0.0
    %6359 = vmatpush1.msra.mxu0 0.0
    %6360 = vmatprep.subr.mxu0 0.0
    %6361 = vmatpush1.msra.mxu0 0.0
    %6362 = vmatprep.subr.mxu0 0.0
    %6363 = vmatpush1.msra.mxu0 0.0
    %6364 = vmatprep.subr.mxu0 0.0
    %6365 = vmatpush1.msra.mxu0 0.0
    %6366 = vmatprep.subr.mxu0 0.0
    %6367 = vmatpush1.msra.mxu0 0.0
    %6368 = vmatprep.subr.mxu0 0.0
    %6369 = vmatpush1.msra.mxu0 0.0
    %6370 = vmatprep.subr.mxu0 0.0
    %6371 = vmatpush1.msra.mxu0 %v6297
    %6372 = vmatprep.subr.mxu0 0.0
    %6373 = vmatpush1.msra.mxu0 %v6296
    %6374 = vmatprep.subr.mxu0 0.0
    %6375 = vmatpush1.msra.mxu0 %v6295
    %6376 = vmatprep.subr.mxu0 0.0
    %6377 = vmatpush1.msra.mxu0 %v6294
    %6378 = vmatprep.subr.mxu0 0.0
    %6379 = vmatpush2.msra.mxu0 0.0
    %6380 = vmatprep.subr.mxu0 0.0
    %6381 = vmatpush2.msra.mxu0 0.0
    %6382 = vmatprep.subr.mxu0 0.0
    %6383 = vmatpush2.msra.mxu0 0.0
    %6384 = vmatprep.subr.mxu0 0.0
    %6385 = vmatpush2.msra.mxu0 0.0
    %6386 = vmatprep.subr.mxu0 0.0
    %6387 = vmatpush2.msra.mxu0 0.0
    %6388 = vmatprep.subr.mxu0 0.0
    %6389 = vmatpush2.msra.mxu0 0.0
    %6390 = vmatprep.subr.mxu0 0.0
    %6391 = vmatpush2.msra.mxu0 0.0
    %6392 = vmatprep.subr.mxu0 0.0
    %6393 = vmatpush2.msra.mxu0 0.0
    %6394 = vmatprep.subr.mxu0 0.0
    %6395 = vmatpush2.msra.mxu0 0.0
    %6396 = vmatprep.subr.mxu0 0.0
    %6397 = vmatpush2.msra.mxu0 0.0
    %6398 = vmatprep.subr.mxu0 0.0
    %6399 = vmatpush2.msra.mxu0 0.0
    %6400 = vmatprep.subr.mxu0 0.0
    %6401 = vmatpush2.msra.mxu0 0.0
    %6402 = vmatprep.subr.mxu0 0.0
    %6403 = vmatpush2.msra.mxu0 0.0
    %6404 = vmatprep.subr.mxu0 0.0
    %6405 = vmatpush2.msra.mxu0 0.0
    %6406 = vmatprep.subr.mxu0 0.0
    %6407 = vmatpush2.msra.mxu0 0.0
    %6408 = vmatprep.subr.mxu0 0.0
    %6409 = vmatpush2.msra.mxu0 0.0
    %6410 = vmatprep.mubr.f32.mxu0 0.0
    %6411 = vmatmul.mubr.f32.gmra.mxu0 %v6299
    %v6412 = vpop.f32.mrf.mxu0
    %v6413 = vadd.f32 0.0, %v6412
    %v6414 = vpop.f32.mrf.mxu0
    %6415 = vmatprep.mubr.f32.mxu0 0.0
    %6416 = vmatmul.mubr.f32.gmra.mxu0 %v6302
    %v6417 = vpop.f32.mrf.mxu0
    %v6418 = vadd.f32 0.0, %v6417
    %v6419 = vpop.f32.mrf.mxu0
    %6420 = vmatprep.mubr.f32.mxu0 0.0
    %6421 = vmatmul.mubr.f32.gmra.mxu0 %v6305
    %v6422 = vpop.f32.mrf.mxu0
    %v6423 = vadd.f32 0.0, %v6422
    %v6424 = vpop.f32.mrf.mxu0
    %6425 = vmatprep.mubr.f32.mxu0 0.0
    %6426 = vmatmul.mubr.f32.gmra.mxu0 %v6308
    %v6427 = vpop.f32.mrf.mxu0
    %v6428 = vadd.f32 0.0, %v6427
    %v6429 = vpop.f32.mrf.mxu0
    %6430 = vmatprep.mubr.f32.mxu0 0.0
    %6431 = vmatmul.mubr.f32.gmra.mxu0 %v6311
    %v6432 = vpop.f32.mrf.mxu0
    %v6433 = vadd.f32 0.0, %v6432
    %v6434 = vpop.f32.mrf.mxu0
    %6435 = vmatprep.mubr.f32.mxu0 0.0
    %6436 = vmatmul.mubr.f32.gmra.mxu0 %v6314
    %v6437 = vpop.f32.mrf.mxu0
    %v6438 = vadd.f32 0.0, %v6437
    %v6439 = vpop.f32.mrf.mxu0
    %6440 = vmatprep.mubr.f32.mxu0 0.0
    %6441 = vmatmul.mubr.f32.gmra.mxu0 %v6317
    %v6442 = vpop.f32.mrf.mxu0
    %v6443 = vadd.f32 0.0, %v6442
    %v6444 = vpop.f32.mrf.mxu0
    %6445 = vmatprep.mubr.f32.mxu0 0.0
    %6446 = vmatmul.mubr.f32.gmra.mxu0 %v6320
    %v6447 = vpop.f32.mrf.mxu0
    %v6448 = vadd.f32 0.0, %v6447
    %v6449 = vpop.f32.mrf.mxu0
    %6450 = vmatprep.mubr.f32.mxu0 0.0
    %6451 = vmatmul.mubr.f32.gmra.mxu0 %v6323
    %v6452 = vpop.f32.mrf.mxu0
    %v6453 = vadd.f32 0.0, %v6452
    %v6454 = vpop.f32.mrf.mxu0
    %6455 = vmatprep.mubr.f32.mxu0 0.0
    %6456 = vmatmul.mubr.f32.gmra.mxu0 %v6326
    %v6457 = vpop.f32.mrf.mxu0
    %v6458 = vadd.f32 0.0, %v6457
    %v6459 = vpop.f32.mrf.mxu0
    %6460 = vmatprep.mubr.f32.mxu0 0.0
    %6461 = vmatmul.mubr.f32.gmra.mxu0 %v6329
    %v6462 = vpop.f32.mrf.mxu0
    %v6463 = vadd.f32 0.0, %v6462
    %v6464 = vpop.f32.mrf.mxu0
    %6465 = vmatprep.mubr.f32.mxu0 0.0
    %6466 = vmatmul.mubr.f32.gmra.mxu0 %v6332
    %v6467 = vpop.f32.mrf.mxu0
    %v6468 = vadd.f32 0.0, %v6467
    %v6469 = vpop.f32.mrf.mxu0
    %6470 = vmatprep.mubr.f32.mxu0 0.0
    %6471 = vmatmul.mubr.f32.gmra.mxu0 %v6335
    %v6472 = vpop.f32.mrf.mxu0
    %v6473 = vadd.f32 0.0, %v6472
    %v6474 = vpop.f32.mrf.mxu0
    %6475 = vmatprep.mubr.f32.mxu0 0.0
    %6476 = vmatmul.mubr.f32.gmra.mxu0 %v6338
    %v6477 = vpop.f32.mrf.mxu0
    %v6478 = vadd.f32 0.0, %v6477
    %v6479 = vpop.f32.mrf.mxu0
    %6480 = vmatprep.mubr.f32.mxu0 0.0
    %6481 = vmatmul.mubr.f32.gmra.mxu0 %v6341
    %v6482 = vpop.f32.mrf.mxu0
    %v6483 = vadd.f32 0.0, %v6482
    %v6484 = vpop.f32.mrf.mxu0
    %6485 = vmatprep.mubr.f32.mxu0 0.0
    %6486 = vmatmul.mubr.f32.gmra.mxu0 %v6344
    %v6487 = vpop.f32.mrf.mxu0
    %v6488 = vadd.f32 0.0, %v6487
    %v6489 = vpop.f32.mrf.mxu0
    %6490 = vdwg.mxu0
    %v6491 = vadd.f32 %v4596, %v6413
    %v6492 = vadd.f32 %v4601, %v6418
    %v6493 = vadd.f32 %v4606, %v6423
    %v6494 = vadd.f32 %v4611, %v6428
    %v6495 = vadd.f32 %v4616, %v6433
    %v6496 = vadd.f32 %v4621, %v6438
    %v6497 = vadd.f32 %v4626, %v6443
    %v6498 = vadd.f32 %v4631, %v6448
    %v6499 = vadd.f32 %v4636, %v6453
    %v6500 = vadd.f32 %v4641, %v6458
    %v6501 = vadd.f32 %v4646, %v6463
    %v6502 = vadd.f32 %v4651, %v6468
    %v6503 = vadd.f32 %v4656, %v6473
    %v6504 = vadd.f32 %v4661, %v6478
    %v6505 = vadd.f32 %v4666, %v6483
    %v6506 = vadd.f32 %v4671, %v6488
    %v6507 = vld [vmem:[%s5 + $0x15] sm:$0x1]
    %v6508 = vlaneseq
    %v6509 = vshrl.u32 %v6508, 7
    %v6510 = vsub.s32 0, %v6509
    %v6511 = vrot.slane %v6507, %v6510
    %v6512 = vadd.f32 %v6491, %v6511
    %v6513 = vadd.f32 %v6492, %v6511
    %v6514 = vadd.f32 %v6493, %v6511
    %v6515 = vadd.f32 %v6494, %v6511
    %v6516 = vadd.f32 %v6495, %v6511
    %v6517 = vadd.f32 %v6496, %v6511
    %v6518 = vadd.f32 %v6497, %v6511
    %v6519 = vadd.f32 %v6498, %v6511
    %v6520 = vadd.f32 %v6499, %v6511
    %v6521 = vadd.f32 %v6500, %v6511
    %v6522 = vadd.f32 %v6501, %v6511
    %v6523 = vadd.f32 %v6502, %v6511
    %v6524 = vadd.f32 %v6503, %v6511
    %v6525 = vadd.f32 %v6504, %v6511
    %v6526 = vadd.f32 %v6505, %v6511
    %v6527 = vadd.f32 %v6506, %v6511
    %v6528 = vld [vmem:[%s5 + $0x18] sm:$0x1]
    %v6529 = vld [vmem:[%s5 + $0x19] sm:$0x1]
    %v6530 = vld [vmem:[%s5 + $0x1a] sm:$0x1]
    %v6531 = vld [vmem:[%s5 + $0x1b] sm:$0x1]
    %v6532 = vld [vmem:[%s5 + $0x1c] sm:$0x1]
    %v6533 = vld [vmem:[%s5 + $0x1d] sm:$0x1]
    %s6534 = scalar_lea.vmem %s4, 40
    %v6535 = vld [vmem:[%s6534] sm:$0xff]
    %v6536 = vld [vmem:[%s6534 + $0x8] sm:$0xff]
    %v6537 = vld [vmem:[%s6534 + $0x10] sm:$0xff]
    %v6538 = vld [vmem:[%s6534 + $0x18] sm:$0xff]
    %v6539 = vld [vmem:[%s6534 + $0x20] sm:$0x1]
    %v6540 = vlaneseq
    %v6541 = vshrl.u32 %v6540, 7
    %v6542 = vsub.s32 0, %v6541
    %v6543 = vrot.slane %v6539, %v6542
    %v6545 = vsel %vm4222, %v5931, 0
    %v6548 = vsel %vm4222, %v5932, 0
    %6550 = vmatprep.subr.mxu0 0.0
    %6551 = vmatpush1.msra.mxu0 0.0
    %6552 = vmatprep.subr.mxu0 0.0
    %6553 = vmatpush1.msra.mxu0 0.0
    %6554 = vmatprep.subr.mxu0 0.0
    %6555 = vmatpush1.msra.mxu0 0.0
    %6556 = vmatprep.subr.mxu0 0.0
    %6557 = vmatpush1.msra.mxu0 0.0
    %6558 = vmatprep.subr.mxu0 0.0
    %6559 = vmatpush1.msra.mxu0 0.0
    %6560 = vmatprep.subr.mxu0 0.0
    %6561 = vmatpush1.msra.mxu0 0.0
    %6562 = vmatprep.subr.mxu0 0.0
    %6563 = vmatpush1.msra.mxu0 0.0
    %6564 = vmatprep.subr.mxu0 0.0
    %6565 = vmatpush1.msra.mxu0 0.0
    %6566 = vmatprep.subr.mxu0 0.0
    %6567 = vmatpush1.msra.mxu0 0.0
    %6568 = vmatprep.subr.mxu0 0.0
    %6569 = vmatpush1.msra.mxu0 0.0
    %6570 = vmatprep.subr.mxu0 0.0
    %6571 = vmatpush1.msra.mxu0 0.0
    %6572 = vmatprep.subr.mxu0 0.0
    %6573 = vmatpush1.msra.mxu0 0.0
    %6574 = vmatprep.subr.mxu0 0.0
    %6575 = vmatpush1.msra.mxu0 %v6538
    %6576 = vmatprep.subr.mxu0 0.0
    %6577 = vmatpush1.msra.mxu0 %v6537
    %6578 = vmatprep.subr.mxu0 0.0
    %6579 = vmatpush1.msra.mxu0 %v6536
    %6580 = vmatprep.subr.mxu0 0.0
    %6581 = vmatpush1.msra.mxu0 %v6535
    %6582 = vmatprep.subr.mxu0 0.0
    %6583 = vmatpush2.msra.mxu0 0.0
    %6584 = vmatprep.subr.mxu0 0.0
    %6585 = vmatpush2.msra.mxu0 0.0
    %6586 = vmatprep.subr.mxu0 0.0
    %6587 = vmatpush2.msra.mxu0 0.0
    %6588 = vmatprep.subr.mxu0 0.0
    %6589 = vmatpush2.msra.mxu0 0.0
    %6590 = vmatprep.subr.mxu0 0.0
    %6591 = vmatpush2.msra.mxu0 0.0
    %6592 = vmatprep.subr.mxu0 0.0
    %6593 = vmatpush2.msra.mxu0 0.0
    %6594 = vmatprep.subr.mxu0 0.0
    %6595 = vmatpush2.msra.mxu0 0.0
    %6596 = vmatprep.subr.mxu0 0.0
    %6597 = vmatpush2.msra.mxu0 0.0
    %6598 = vmatprep.subr.mxu0 0.0
    %6599 = vmatpush2.msra.mxu0 0.0
    %6600 = vmatprep.subr.mxu0 0.0
    %6601 = vmatpush2.msra.mxu0 0.0
    %6602 = vmatprep.subr.mxu0 0.0
    %6603 = vmatpush2.msra.mxu0 0.0
    %6604 = vmatprep.subr.mxu0 0.0
    %6605 = vmatpush2.msra.mxu0 0.0
    %6606 = vmatprep.subr.mxu0 0.0
    %6607 = vmatpush2.msra.mxu0 0.0
    %6608 = vmatprep.subr.mxu0 0.0
    %6609 = vmatpush2.msra.mxu0 0.0
    %6610 = vmatprep.subr.mxu0 0.0
    %6611 = vmatpush2.msra.mxu0 0.0
    %6612 = vmatprep.subr.mxu0 0.0
    %6613 = vmatpush2.msra.mxu0 0.0
    %6614 = vmatprep.mubr.f32.mxu0 0.0
    %6615 = vmatmul.mubr.f32.gmra.mxu0 %v6545
    %v6616 = vpop.f32.mrf.mxu0
    %v6617 = vadd.f32 %v6543, %v6616
    %v6618 = vpop.f32.mrf.mxu0
    %6619 = vmatprep.mubr.f32.mxu0 0.0
    %6620 = vmatmul.mubr.f32.gmra.mxu0 %v6548
    %v6621 = vpop.f32.mrf.mxu0
    %v6622 = vadd.f32 %v6543, %v6621
    %v6623 = vpop.f32.mrf.mxu0
    %6624 = vdwg.mxu0
    %s6625 = scalar_lea.vmem [#allocation2], 160
    %v6626 = vld [vmem:[%s6625] sm:$0xff]
    %v6627 = vld [vmem:[%s6625 + $0x8] sm:$0xff]
    %v6628 = vld [vmem:[%s6625 + $0x10] sm:$0xff]
    %v6629 = vld [vmem:[%s6625 + $0x18] sm:$0xff]
    %v6630 = vld [vmem:[%s5 + $0x17] sm:$0x1]
    %v6631 = vlaneseq
    %v6632 = vshrl.u32 %v6631, 7
    %v6633 = vsub.s32 0, %v6632
    %v6634 = vrot.slane %v6630, %v6633
    %v6636 = vsel %vm4222, %v6512, 0
    %v6639 = vsel %vm4222, %v6513, 0
    %v6642 = vsel %vm4222, %v6514, 0
    %v6645 = vsel %vm4222, %v6515, 0
    %v6648 = vsel %vm4222, %v6516, 0
    %v6651 = vsel %vm4222, %v6517, 0
    %v6654 = vsel %vm4222, %v6518, 0
    %v6657 = vsel %vm4222, %v6519, 0
    %v6660 = vsel %vm4222, %v6520, 0
    %v6663 = vsel %vm4222, %v6521, 0
    %v6666 = vsel %vm4222, %v6522, 0
    %v6669 = vsel %vm4222, %v6523, 0
    %v6672 = vsel %vm4222, %v6524, 0
    %v6675 = vsel %vm4222, %v6525, 0
    %v6678 = vsel %vm4222, %v6526, 0
    %v6681 = vsel %vm4222, %v6527, 0
    %6683 = vmatprep.subr.mxu0 0.0
    %6684 = vmatpush1.msra.mxu0 0.0
    %6685 = vmatprep.subr.mxu0 0.0
    %6686 = vmatpush1.msra.mxu0 0.0
    %6687 = vmatprep.subr.mxu0 0.0
    %6688 = vmatpush1.msra.mxu0 0.0
    %6689 = vmatprep.subr.mxu0 0.0
    %6690 = vmatpush1.msra.mxu0 0.0
    %6691 = vmatprep.subr.mxu0 0.0
    %6692 = vmatpush1.msra.mxu0 0.0
    %6693 = vmatprep.subr.mxu0 0.0
    %6694 = vmatpush1.msra.mxu0 0.0
    %6695 = vmatprep.subr.mxu0 0.0
    %6696 = vmatpush1.msra.mxu0 0.0
    %6697 = vmatprep.subr.mxu0 0.0
    %6698 = vmatpush1.msra.mxu0 0.0
    %6699 = vmatprep.subr.mxu0 0.0
    %6700 = vmatpush1.msra.mxu0 0.0
    %6701 = vmatprep.subr.mxu0 0.0
    %6702 = vmatpush1.msra.mxu0 0.0
    %6703 = vmatprep.subr.mxu0 0.0
    %6704 = vmatpush1.msra.mxu0 0.0
    %6705 = vmatprep.subr.mxu0 0.0
    %6706 = vmatpush1.msra.mxu0 0.0
    %6707 = vmatprep.subr.mxu0 0.0
    %6708 = vmatpush1.msra.mxu0 %v6629
    %6709 = vmatprep.subr.mxu0 0.0
    %6710 = vmatpush1.msra.mxu0 %v6628
    %6711 = vmatprep.subr.mxu0 0.0
    %6712 = vmatpush1.msra.mxu0 %v6627
    %6713 = vmatprep.subr.mxu0 0.0
    %6714 = vmatpush1.msra.mxu0 %v6626
    %6715 = vmatprep.subr.mxu0 0.0
    %6716 = vmatpush2.msra.mxu0 0.0
    %6717 = vmatprep.subr.mxu0 0.0
    %6718 = vmatpush2.msra.mxu0 0.0
    %6719 = vmatprep.subr.mxu0 0.0
    %6720 = vmatpush2.msra.mxu0 0.0
    %6721 = vmatprep.subr.mxu0 0.0
    %6722 = vmatpush2.msra.mxu0 0.0
    %6723 = vmatprep.subr.mxu0 0.0
    %6724 = vmatpush2.msra.mxu0 0.0
    %6725 = vmatprep.subr.mxu0 0.0
    %6726 = vmatpush2.msra.mxu0 0.0
    %6727 = vmatprep.subr.mxu0 0.0
    %6728 = vmatpush2.msra.mxu0 0.0
    %6729 = vmatprep.subr.mxu0 0.0
    %6730 = vmatpush2.msra.mxu0 0.0
    %6731 = vmatprep.subr.mxu0 0.0
    %6732 = vmatpush2.msra.mxu0 0.0
    %6733 = vmatprep.subr.mxu0 0.0
    %6734 = vmatpush2.msra.mxu0 0.0
    %6735 = vmatprep.subr.mxu0 0.0
    %6736 = vmatpush2.msra.mxu0 0.0
    %6737 = vmatprep.subr.mxu0 0.0
    %6738 = vmatpush2.msra.mxu0 0.0
    %6739 = vmatprep.subr.mxu0 0.0
    %6740 = vmatpush2.msra.mxu0 0.0
    %6741 = vmatprep.subr.mxu0 0.0
    %6742 = vmatpush2.msra.mxu0 0.0
    %6743 = vmatprep.subr.mxu0 0.0
    %6744 = vmatpush2.msra.mxu0 0.0
    %6745 = vmatprep.subr.mxu0 0.0
    %6746 = vmatpush2.msra.mxu0 0.0
    %6747 = vmatprep.mubr.f32.mxu0 0.0
    %6748 = vmatmul.mubr.f32.gmra.mxu0 %v6636
    %v6749 = vpop.f32.mrf.mxu0
    %v6750 = vadd.f32 %v6634, %v6749
    %v6751 = vpop.f32.mrf.mxu0
    %6752 = vmatprep.mubr.f32.mxu0 0.0
    %6753 = vmatmul.mubr.f32.gmra.mxu0 %v6639
    %v6754 = vpop.f32.mrf.mxu0
    %v6755 = vadd.f32 %v6634, %v6754
    %v6756 = vpop.f32.mrf.mxu0
    %6757 = vmatprep.mubr.f32.mxu0 0.0
    %6758 = vmatmul.mubr.f32.gmra.mxu0 %v6642
    %v6759 = vpop.f32.mrf.mxu0
    %v6760 = vadd.f32 %v6634, %v6759
    %v6761 = vpop.f32.mrf.mxu0
    %6762 = vmatprep.mubr.f32.mxu0 0.0
    %6763 = vmatmul.mubr.f32.gmra.mxu0 %v6645
    %v6764 = vpop.f32.mrf.mxu0
    %v6765 = vadd.f32 %v6634, %v6764
    %v6766 = vpop.f32.mrf.mxu0
    %6767 = vmatprep.mubr.f32.mxu0 0.0
    %6768 = vmatmul.mubr.f32.gmra.mxu0 %v6648
    %v6769 = vpop.f32.mrf.mxu0
    %v6770 = vadd.f32 %v6634, %v6769
    %v6771 = vpop.f32.mrf.mxu0
    %6772 = vmatprep.mubr.f32.mxu0 0.0
    %6773 = vmatmul.mubr.f32.gmra.mxu0 %v6651
    %v6774 = vpop.f32.mrf.mxu0
    %v6775 = vadd.f32 %v6634, %v6774
    %v6776 = vpop.f32.mrf.mxu0
    %6777 = vmatprep.mubr.f32.mxu0 0.0
    %6778 = vmatmul.mubr.f32.gmra.mxu0 %v6654
    %v6779 = vpop.f32.mrf.mxu0
    %v6780 = vadd.f32 %v6634, %v6779
    %v6781 = vpop.f32.mrf.mxu0
    %6782 = vmatprep.mubr.f32.mxu0 0.0
    %6783 = vmatmul.mubr.f32.gmra.mxu0 %v6657
    %v6784 = vpop.f32.mrf.mxu0
    %v6785 = vadd.f32 %v6634, %v6784
    %v6786 = vpop.f32.mrf.mxu0
    %6787 = vmatprep.mubr.f32.mxu0 0.0
    %6788 = vmatmul.mubr.f32.gmra.mxu0 %v6660
    %v6789 = vpop.f32.mrf.mxu0
    %v6790 = vadd.f32 %v6634, %v6789
    %v6791 = vpop.f32.mrf.mxu0
    %6792 = vmatprep.mubr.f32.mxu0 0.0
    %6793 = vmatmul.mubr.f32.gmra.mxu0 %v6663
    %v6794 = vpop.f32.mrf.mxu0
    %v6795 = vadd.f32 %v6634, %v6794
    %v6796 = vpop.f32.mrf.mxu0
    %6797 = vmatprep.mubr.f32.mxu0 0.0
    %6798 = vmatmul.mubr.f32.gmra.mxu0 %v6666
    %v6799 = vpop.f32.mrf.mxu0
    %v6800 = vadd.f32 %v6634, %v6799
    %v6801 = vpop.f32.mrf.mxu0
    %6802 = vmatprep.mubr.f32.mxu0 0.0
    %6803 = vmatmul.mubr.f32.gmra.mxu0 %v6669
    %v6804 = vpop.f32.mrf.mxu0
    %v6805 = vadd.f32 %v6634, %v6804
    %v6806 = vpop.f32.mrf.mxu0
    %6807 = vmatprep.mubr.f32.mxu0 0.0
    %6808 = vmatmul.mubr.f32.gmra.mxu0 %v6672
    %v6809 = vpop.f32.mrf.mxu0
    %v6810 = vadd.f32 %v6634, %v6809
    %v6811 = vpop.f32.mrf.mxu0
    %6812 = vmatprep.mubr.f32.mxu0 0.0
    %6813 = vmatmul.mubr.f32.gmra.mxu0 %v6675
    %v6814 = vpop.f32.mrf.mxu0
    %v6815 = vadd.f32 %v6634, %v6814
    %v6816 = vpop.f32.mrf.mxu0
    %6817 = vmatprep.mubr.f32.mxu0 0.0
    %6818 = vmatmul.mubr.f32.gmra.mxu0 %v6678
    %v6819 = vpop.f32.mrf.mxu0
    %v6820 = vadd.f32 %v6634, %v6819
    %v6821 = vpop.f32.mrf.mxu0
    %6822 = vmatprep.mubr.f32.mxu0 0.0
    %6823 = vmatmul.mubr.f32.gmra.mxu0 %v6681
    %v6824 = vpop.f32.mrf.mxu0
    %v6825 = vadd.f32 %v6634, %v6824
    %v6826 = vpop.f32.mrf.mxu0
    %6827 = vdwg.mxu0
    %6830 = vrot.lane.b32.xlu0 %v6617, 64
    %v6831 = vpop.permute.xlu0 %6830
    %6832 = vrot.lane.b32.xlu0 %v6622, 64
    %v6833 = vpop.permute.xlu0 %6832
    %v6836 = vadd.f32 %v6750, %v6831
    %v6837 = vadd.f32 %v6755, %v6831
    %v6838 = vadd.f32 %v6760, %v6831
    %v6839 = vadd.f32 %v6765, %v6831
    %v6840 = vadd.f32 %v6770, %v6831
    %v6841 = vadd.f32 %v6775, %v6831
    %v6842 = vadd.f32 %v6780, %v6831
    %v6843 = vadd.f32 %v6785, %v6831
    %v6844 = vadd.f32 %v6790, %v6833
    %v6845 = vadd.f32 %v6795, %v6833
    %v6846 = vadd.f32 %v6800, %v6833
    %v6847 = vadd.f32 %v6805, %v6833
    %v6848 = vadd.f32 %v6810, %v6833
    %v6849 = vadd.f32 %v6815, %v6833
    %v6850 = vadd.f32 %v6820, %v6833
    %v6851 = vadd.f32 %v6825, %v6833
    %v6852 = vcombine.high %v6617, %v6617
    %v6854 = vunpack.c.l.s4 1966171168
    %v6855 = vunpack.c.0.s8 %v6854
    %v6856 = vlaneseq
    %v6857 = vshrl.u32 %v6856, 7
    %v6858 = vsub.s32 %v6855, %v6857
    %v6859 = vrot.slane %v6617, %v6858
    %v6861 = vunpack.c.l.s4 1966171168
    %v6862 = vunpack.c.0.s8 %v6861
    %v6863 = vlaneseq
    %v6864 = vshrl.u32 %v6863, 7
    %v6865 = vsub.s32 %v6862, %v6864
    %v6866 = vrot.slane %v6852, %v6865
    %v6867 = vcombine.high %v6859, %v6859
    %v6868 = vcombine.high %v6866, %v6866
    %v6870 = vunpack.c.l.s4 1966171168
    %v6871 = vunpack.c.0.s8 %v6870
    %v6872 = vlaneseq
    %v6873 = vshrl.u32 %v6872, 7
    %v6874 = vsub.s32 %v6871, %v6873
    %v6875 = vrot.slane %v6859, %v6874
    %v6877 = vunpack.c.l.s4 1966171168
    %v6878 = vunpack.c.0.s8 %v6877
    %v6879 = vlaneseq
    %v6880 = vshrl.u32 %v6879, 7
    %v6881 = vsub.s32 %v6878, %v6880
    %v6882 = vrot.slane %v6866, %v6881
    %v6884 = vunpack.c.l.s4 1966171168
    %v6885 = vunpack.c.0.s8 %v6884
    %v6886 = vlaneseq
    %v6887 = vshrl.u32 %v6886, 7
    %v6888 = vsub.s32 %v6885, %v6887
    %v6889 = vrot.slane %v6867, %v6888
    %v6891 = vunpack.c.l.s4 1966171168
    %v6892 = vunpack.c.0.s8 %v6891
    %v6893 = vlaneseq
    %v6894 = vshrl.u32 %v6893, 7
    %v6895 = vsub.s32 %v6892, %v6894
    %v6896 = vrot.slane %v6868, %v6895
    %v6897 = vcombine.high %v6875, %v6875
    %v6898 = vcombine.high %v6882, %v6882
    %v6899 = vcombine.high %v6889, %v6889
    %v6900 = vcombine.high %v6896, %v6896
    %v6901 = vcombine.high %v6622, %v6622
    %v6903 = vunpack.c.l.s4 1966171168
    %v6904 = vunpack.c.0.s8 %v6903
    %v6905 = vlaneseq
    %v6906 = vshrl.u32 %v6905, 7
    %v6907 = vsub.s32 %v6904, %v6906
    %v6908 = vrot.slane %v6622, %v6907
    %v6910 = vunpack.c.l.s4 1966171168
    %v6911 = vunpack.c.0.s8 %v6910
    %v6912 = vlaneseq
    %v6913 = vshrl.u32 %v6912, 7
    %v6914 = vsub.s32 %v6911, %v6913
    %v6915 = vrot.slane %v6901, %v6914
    %v6916 = vcombine.high %v6908, %v6908
    %v6917 = vcombine.high %v6915, %v6915
    %v6919 = vunpack.c.l.s4 1966171168
    %v6920 = vunpack.c.0.s8 %v6919
    %v6921 = vlaneseq
    %v6922 = vshrl.u32 %v6921, 7
    %v6923 = vsub.s32 %v6920, %v6922
    %v6924 = vrot.slane %v6908, %v6923
    %v6926 = vunpack.c.l.s4 1966171168
    %v6927 = vunpack.c.0.s8 %v6926
    %v6928 = vlaneseq
    %v6929 = vshrl.u32 %v6928, 7
    %v6930 = vsub.s32 %v6927, %v6929
    %v6931 = vrot.slane %v6915, %v6930
    %v6933 = vunpack.c.l.s4 1966171168
    %v6934 = vunpack.c.0.s8 %v6933
    %v6935 = vlaneseq
    %v6936 = vshrl.u32 %v6935, 7
    %v6937 = vsub.s32 %v6934, %v6936
    %v6938 = vrot.slane %v6916, %v6937
    %v6940 = vunpack.c.l.s4 1966171168
    %v6941 = vunpack.c.0.s8 %v6940
    %v6942 = vlaneseq
    %v6943 = vshrl.u32 %v6942, 7
    %v6944 = vsub.s32 %v6941, %v6943
    %v6945 = vrot.slane %v6917, %v6944
    %v6946 = vcombine.high %v6924, %v6924
    %v6947 = vcombine.high %v6931, %v6931
    %v6948 = vcombine.high %v6938, %v6938
    %v6949 = vcombine.high %v6945, %v6945
    %v6950 = vlaneseq
    %v6951 = vshrl.u32 %v6950, 7
    %v6952 = vsub.s32 0, %v6951
    %v6953 = vrot.slane %v6875, %v6952
    %v6954 = vlaneseq
    %v6955 = vshrl.u32 %v6954, 7
    %v6956 = vsub.s32 0, %v6955
    %v6957 = vrot.slane %v6889, %v6956
    %v6958 = vlaneseq
    %v6959 = vshrl.u32 %v6958, 7
    %v6960 = vsub.s32 0, %v6959
    %v6961 = vrot.slane %v6897, %v6960
    %v6962 = vlaneseq
    %v6963 = vshrl.u32 %v6962, 7
    %v6964 = vsub.s32 0, %v6963
    %v6965 = vrot.slane %v6899, %v6964
    %v6966 = vlaneseq
    %v6967 = vshrl.u32 %v6966, 7
    %v6968 = vsub.s32 0, %v6967
    %v6969 = vrot.slane %v6882, %v6968
    %v6970 = vlaneseq
    %v6971 = vshrl.u32 %v6970, 7
    %v6972 = vsub.s32 0, %v6971
    %v6973 = vrot.slane %v6896, %v6972
    %v6974 = vlaneseq
    %v6975 = vshrl.u32 %v6974, 7
    %v6976 = vsub.s32 0, %v6975
    %v6977 = vrot.slane %v6898, %v6976
    %v6978 = vlaneseq
    %v6979 = vshrl.u32 %v6978, 7
    %v6980 = vsub.s32 0, %v6979
    %v6981 = vrot.slane %v6900, %v6980
    %v6982 = vlaneseq
    %v6983 = vshrl.u32 %v6982, 7
    %v6984 = vsub.s32 0, %v6983
    %v6985 = vrot.slane %v6924, %v6984
    %v6986 = vlaneseq
    %v6987 = vshrl.u32 %v6986, 7
    %v6988 = vsub.s32 0, %v6987
    %v6989 = vrot.slane %v6938, %v6988
    %v6990 = vlaneseq
    %v6991 = vshrl.u32 %v6990, 7
    %v6992 = vsub.s32 0, %v6991
    %v6993 = vrot.slane %v6946, %v6992
    %v6994 = vlaneseq
    %v6995 = vshrl.u32 %v6994, 7
    %v6996 = vsub.s32 0, %v6995
    %v6997 = vrot.slane %v6948, %v6996
    %v6998 = vlaneseq
    %v6999 = vshrl.u32 %v6998, 7
    %v7000 = vsub.s32 0, %v6999
    %v7001 = vrot.slane %v6931, %v7000
    %v7002 = vlaneseq
    %v7003 = vshrl.u32 %v7002, 7
    %v7004 = vsub.s32 0, %v7003
    %v7005 = vrot.slane %v6945, %v7004
    %v7006 = vlaneseq
    %v7007 = vshrl.u32 %v7006, 7
    %v7008 = vsub.s32 0, %v7007
    %v7009 = vrot.slane %v6947, %v7008
    %v7010 = vlaneseq
    %v7011 = vshrl.u32 %v7010, 7
    %v7012 = vsub.s32 0, %v7011
    %v7013 = vrot.slane %v6949, %v7012
    %7014 = vrot.lane.b32.xlu0 %v6953, 32
    %v7015 = vpop.permute.xlu0 %7014
    %7016 = vrot.lane.b32.xlu0 %v6957, 32
    %v7017 = vpop.permute.xlu0 %7016
    %7018 = vrot.lane.b32.xlu0 %v6961, 32
    %v7019 = vpop.permute.xlu0 %7018
    %7020 = vrot.lane.b32.xlu0 %v6965, 32
    %v7021 = vpop.permute.xlu0 %7020
    %7022 = vrot.lane.b32.xlu0 %v6969, 32
    %v7023 = vpop.permute.xlu0 %7022
    %7024 = vrot.lane.b32.xlu0 %v6973, 32
    %v7025 = vpop.permute.xlu0 %7024
    %7026 = vrot.lane.b32.xlu0 %v6977, 32
    %v7027 = vpop.permute.xlu0 %7026
    %7028 = vrot.lane.b32.xlu0 %v6981, 32
    %v7029 = vpop.permute.xlu0 %7028
    %7030 = vrot.lane.b32.xlu0 %v6985, 32
    %v7031 = vpop.permute.xlu0 %7030
    %7032 = vrot.lane.b32.xlu0 %v6989, 32
    %v7033 = vpop.permute.xlu0 %7032
    %7034 = vrot.lane.b32.xlu0 %v6993, 32
    %v7035 = vpop.permute.xlu0 %7034
    %7036 = vrot.lane.b32.xlu0 %v6997, 32
    %v7037 = vpop.permute.xlu0 %7036
    %7038 = vrot.lane.b32.xlu0 %v7001, 32
    %v7039 = vpop.permute.xlu0 %7038
    %7040 = vrot.lane.b32.xlu0 %v7005, 32
    %v7041 = vpop.permute.xlu0 %7040
    %7042 = vrot.lane.b32.xlu0 %v7009, 32
    %v7043 = vpop.permute.xlu0 %7042
    %7044 = vrot.lane.b32.xlu0 %v7013, 32
    %v7045 = vpop.permute.xlu0 %7044
    %v7062 = vadd.f32 %v6836, %v7015
    %v7063 = vadd.f32 %v6837, %v7017
    %v7064 = vadd.f32 %v6838, %v7019
    %v7065 = vadd.f32 %v6839, %v7021
    %v7066 = vadd.f32 %v6840, %v7023
    %v7067 = vadd.f32 %v6841, %v7025
    %v7068 = vadd.f32 %v6842, %v7027
    %v7069 = vadd.f32 %v6843, %v7029
    %v7070 = vadd.f32 %v6844, %v7031
    %v7071 = vadd.f32 %v6845, %v7033
    %v7072 = vadd.f32 %v6846, %v7035
    %v7073 = vadd.f32 %v6847, %v7037
    %v7074 = vadd.f32 %v6848, %v7039
    %v7075 = vadd.f32 %v6849, %v7041
    %v7076 = vadd.f32 %v6850, %v7043
    %v7077 = vadd.f32 %v6851, %v7045
    %v7078 = vxor.u32 %v7062, 2147483648
    %v7079 = vxor.u32 %v7063, 2147483648
    %v7080 = vxor.u32 %v7064, 2147483648
    %v7081 = vxor.u32 %v7065, 2147483648
    %v7082 = vxor.u32 %v7066, 2147483648
    %v7083 = vxor.u32 %v7067, 2147483648
    %v7084 = vxor.u32 %v7068, 2147483648
    %v7085 = vxor.u32 %v7069, 2147483648
    %v7086 = vxor.u32 %v7070, 2147483648
    %v7087 = vxor.u32 %v7071, 2147483648
    %v7088 = vxor.u32 %v7072, 2147483648
    %v7089 = vxor.u32 %v7073, 2147483648
    %v7090 = vxor.u32 %v7074, 2147483648
    %v7091 = vxor.u32 %v7075, 2147483648
    %v7092 = vxor.u32 %v7076, 2147483648
    %v7093 = vxor.u32 %v7077, 2147483648
    %v7094 = vmul.f32 %v7078, 1.442695
    %v7095 = vpow.pop %v7094
    %v7096 = vmul.f32 %v7079, 1.442695
    %v7097 = vpow.pop %v7096
    %v7098 = vmul.f32 %v7080, 1.442695
    %v7099 = vpow.pop %v7098
    %v7100 = vmul.f32 %v7081, 1.442695
    %v7101 = vpow.pop %v7100
    %v7102 = vmul.f32 %v7082, 1.442695
    %v7103 = vpow.pop %v7102
    %v7104 = vmul.f32 %v7083, 1.442695
    %v7105 = vpow.pop %v7104
    %v7106 = vmul.f32 %v7084, 1.442695
    %v7107 = vpow.pop %v7106
    %v7108 = vmul.f32 %v7085, 1.442695
    %v7109 = vpow.pop %v7108
    %v7110 = vmul.f32 %v7086, 1.442695
    %v7111 = vpow.pop %v7110
    %v7112 = vmul.f32 %v7087, 1.442695
    %v7113 = vpow.pop %v7112
    %v7114 = vmul.f32 %v7088, 1.442695
    %v7115 = vpow.pop %v7114
    %v7116 = vmul.f32 %v7089, 1.442695
    %v7117 = vpow.pop %v7116
    %v7118 = vmul.f32 %v7090, 1.442695
    %v7119 = vpow.pop %v7118
    %v7120 = vmul.f32 %v7091, 1.442695
    %v7121 = vpow.pop %v7120
    %v7122 = vmul.f32 %v7092, 1.442695
    %v7123 = vpow.pop %v7122
    %v7124 = vmul.f32 %v7093, 1.442695
    %v7125 = vpow.pop %v7124
    %v7126 = vadd.f32 %v7095, 1.0
    %v7127 = vadd.f32 %v7097, 1.0
    %v7128 = vadd.f32 %v7099, 1.0
    %v7129 = vadd.f32 %v7101, 1.0
    %v7130 = vadd.f32 %v7103, 1.0
    %v7131 = vadd.f32 %v7105, 1.0
    %v7132 = vadd.f32 %v7107, 1.0
    %v7133 = vadd.f32 %v7109, 1.0
    %v7134 = vadd.f32 %v7111, 1.0
    %v7135 = vadd.f32 %v7113, 1.0
    %v7136 = vadd.f32 %v7115, 1.0
    %v7137 = vadd.f32 %v7117, 1.0
    %v7138 = vadd.f32 %v7119, 1.0
    %v7139 = vadd.f32 %v7121, 1.0
    %v7140 = vadd.f32 %v7123, 1.0
    %v7141 = vadd.f32 %v7125, 1.0
    %v7142 = vrcp.pop %v7126
    %v7143 = vmul.f32 1.0, %v7142
    %v7144 = vrcp.pop %v7127
    %v7145 = vmul.f32 1.0, %v7144
    %v7146 = vrcp.pop %v7128
    %v7147 = vmul.f32 1.0, %v7146
    %v7148 = vrcp.pop %v7129
    %v7149 = vmul.f32 1.0, %v7148
    %v7150 = vrcp.pop %v7130
    %v7151 = vmul.f32 1.0, %v7150
    %v7152 = vrcp.pop %v7131
    %v7153 = vmul.f32 1.0, %v7152
    %v7154 = vrcp.pop %v7132
    %v7155 = vmul.f32 1.0, %v7154
    %v7156 = vrcp.pop %v7133
    %v7157 = vmul.f32 1.0, %v7156
    %v7158 = vrcp.pop %v7134
    %v7159 = vmul.f32 1.0, %v7158
    %v7160 = vrcp.pop %v7135
    %v7161 = vmul.f32 1.0, %v7160
    %v7162 = vrcp.pop %v7136
    %v7163 = vmul.f32 1.0, %v7162
    %v7164 = vrcp.pop %v7137
    %v7165 = vmul.f32 1.0, %v7164
    %v7166 = vrcp.pop %v7138
    %v7167 = vmul.f32 1.0, %v7166
    %v7168 = vrcp.pop %v7139
    %v7169 = vmul.f32 1.0, %v7168
    %v7170 = vrcp.pop %v7140
    %v7171 = vmul.f32 1.0, %v7170
    %v7172 = vrcp.pop %v7141
    %v7173 = vmul.f32 1.0, %v7172
    %7174 = vrot.lane.b32.xlu0 %v6617, 96
    %v7175 = vpop.permute.xlu0 %7174
    %7176 = vrot.lane.b32.xlu0 %v6622, 96
    %v7177 = vpop.permute.xlu0 %7176
    %v7180 = vmul.f32 %v7143, %v7175
    %v7181 = vmul.f32 %v7145, %v7175
    %v7182 = vmul.f32 %v7147, %v7175
    %v7183 = vmul.f32 %v7149, %v7175
    %v7184 = vmul.f32 %v7151, %v7175
    %v7185 = vmul.f32 %v7153, %v7175
    %v7186 = vmul.f32 %v7155, %v7175
    %v7187 = vmul.f32 %v7157, %v7175
    %v7188 = vmul.f32 %v7159, %v7177
    %v7189 = vmul.f32 %v7161, %v7177
    %v7190 = vmul.f32 %v7163, %v7177
    %v7191 = vmul.f32 %v7165, %v7177
    %v7192 = vmul.f32 %v7167, %v7177
    %v7193 = vmul.f32 %v7169, %v7177
    %v7194 = vmul.f32 %v7171, %v7177
    %v7195 = vmul.f32 %v7173, %v7177
    %v7196 = vsel %vm4222, %v7180, 0.0
    %v7197 = vrot.slane %v7196, 4
    %v7198 = vadd.f32 %v7196, %v7197
    %v7199 = vrot.slane %v7198, 2
    %v7200 = vadd.f32 %v7198, %v7199
    %v7201 = vrot.slane %v7200, 1
    %v7202 = vadd.f32 %v7200, %v7201
    %v7203 = vsel %vm4222, %v7181, 0.0
    %v7204 = vrot.slane %v7203, 4
    %v7205 = vadd.f32 %v7203, %v7204
    %v7206 = vrot.slane %v7205, 2
    %v7207 = vadd.f32 %v7205, %v7206
    %v7208 = vrot.slane %v7207, 1
    %v7209 = vadd.f32 %v7207, %v7208
    %v7210 = vsel %vm4222, %v7182, 0.0
    %v7211 = vrot.slane %v7210, 4
    %v7212 = vadd.f32 %v7210, %v7211
    %v7213 = vrot.slane %v7212, 2
    %v7214 = vadd.f32 %v7212, %v7213
    %v7215 = vrot.slane %v7214, 1
    %v7216 = vadd.f32 %v7214, %v7215
    %v7217 = vsel %vm4222, %v7183, 0.0
    %v7218 = vrot.slane %v7217, 4
    %v7219 = vadd.f32 %v7217, %v7218
    %v7220 = vrot.slane %v7219, 2
    %v7221 = vadd.f32 %v7219, %v7220
    %v7222 = vrot.slane %v7221, 1
    %v7223 = vadd.f32 %v7221, %v7222
    %v7224 = vsel %vm4222, %v7184, 0.0
    %v7225 = vrot.slane %v7224, 4
    %v7226 = vadd.f32 %v7224, %v7225
    %v7227 = vrot.slane %v7226, 2
    %v7228 = vadd.f32 %v7226, %v7227
    %v7229 = vrot.slane %v7228, 1
    %v7230 = vadd.f32 %v7228, %v7229
    %v7231 = vsel %vm4222, %v7185, 0.0
    %v7232 = vrot.slane %v7231, 4
    %v7233 = vadd.f32 %v7231, %v7232
    %v7234 = vrot.slane %v7233, 2
    %v7235 = vadd.f32 %v7233, %v7234
    %v7236 = vrot.slane %v7235, 1
    %v7237 = vadd.f32 %v7235, %v7236
    %v7238 = vsel %vm4222, %v7186, 0.0
    %v7239 = vrot.slane %v7238, 4
    %v7240 = vadd.f32 %v7238, %v7239
    %v7241 = vrot.slane %v7240, 2
    %v7242 = vadd.f32 %v7240, %v7241
    %v7243 = vrot.slane %v7242, 1
    %v7244 = vadd.f32 %v7242, %v7243
    %v7245 = vsel %vm4222, %v7187, 0.0
    %v7246 = vrot.slane %v7245, 4
    %v7247 = vadd.f32 %v7245, %v7246
    %v7248 = vrot.slane %v7247, 2
    %v7249 = vadd.f32 %v7247, %v7248
    %v7250 = vrot.slane %v7249, 1
    %v7251 = vadd.f32 %v7249, %v7250
    %v7252 = vsel %vm4222, %v7188, 0.0
    %v7253 = vrot.slane %v7252, 4
    %v7254 = vadd.f32 %v7252, %v7253
    %v7255 = vrot.slane %v7254, 2
    %v7256 = vadd.f32 %v7254, %v7255
    %v7257 = vrot.slane %v7256, 1
    %v7258 = vadd.f32 %v7256, %v7257
    %v7259 = vsel %vm4222, %v7189, 0.0
    %v7260 = vrot.slane %v7259, 4
    %v7261 = vadd.f32 %v7259, %v7260
    %v7262 = vrot.slane %v7261, 2
    %v7263 = vadd.f32 %v7261, %v7262
    %v7264 = vrot.slane %v7263, 1
    %v7265 = vadd.f32 %v7263, %v7264
    %v7266 = vsel %vm4222, %v7190, 0.0
    %v7267 = vrot.slane %v7266, 4
    %v7268 = vadd.f32 %v7266, %v7267
    %v7269 = vrot.slane %v7268, 2
    %v7270 = vadd.f32 %v7268, %v7269
    %v7271 = vrot.slane %v7270, 1
    %v7272 = vadd.f32 %v7270, %v7271
    %v7273 = vsel %vm4222, %v7191, 0.0
    %v7274 = vrot.slane %v7273, 4
    %v7275 = vadd.f32 %v7273, %v7274
    %v7276 = vrot.slane %v7275, 2
    %v7277 = vadd.f32 %v7275, %v7276
    %v7278 = vrot.slane %v7277, 1
    %v7279 = vadd.f32 %v7277, %v7278
    %v7280 = vsel %vm4222, %v7192, 0.0
    %v7281 = vrot.slane %v7280, 4
    %v7282 = vadd.f32 %v7280, %v7281
    %v7283 = vrot.slane %v7282, 2
    %v7284 = vadd.f32 %v7282, %v7283
    %v7285 = vrot.slane %v7284, 1
    %v7286 = vadd.f32 %v7284, %v7285
    %v7287 = vsel %vm4222, %v7193, 0.0
    %v7288 = vrot.slane %v7287, 4
    %v7289 = vadd.f32 %v7287, %v7288
    %v7290 = vrot.slane %v7289, 2
    %v7291 = vadd.f32 %v7289, %v7290
    %v7292 = vrot.slane %v7291, 1
    %v7293 = vadd.f32 %v7291, %v7292
    %v7294 = vsel %vm4222, %v7194, 0.0
    %v7295 = vrot.slane %v7294, 4
    %v7296 = vadd.f32 %v7294, %v7295
    %v7297 = vrot.slane %v7296, 2
    %v7298 = vadd.f32 %v7296, %v7297
    %v7299 = vrot.slane %v7298, 1
    %v7300 = vadd.f32 %v7298, %v7299
    %v7301 = vsel %vm4222, %v7195, 0.0
    %v7302 = vrot.slane %v7301, 4
    %v7303 = vadd.f32 %v7301, %v7302
    %v7304 = vrot.slane %v7303, 2
    %v7305 = vadd.f32 %v7303, %v7304
    %v7306 = vrot.slane %v7305, 1
    %v7307 = vadd.f32 %v7305, %v7306
    %v7324 = vsel %vm5469, %v7209, %v7202
    %v7325 = vsel %vm5471, %v7216, %v7324
    %v7326 = vsel %vm5473, %v7223, %v7325
    %v7327 = vsel %vm5475, %v7230, %v7326
    %v7328 = vsel %vm5477, %v7237, %v7327
    %v7329 = vsel %vm5479, %v7244, %v7328
    %v7330 = vsel %vm5481, %v7251, %v7329
    %v7331 = vsel %vm5469, %v7265, %v7258
    %v7332 = vsel %vm5471, %v7272, %v7331
    %v7333 = vsel %vm5473, %v7279, %v7332
    %v7334 = vsel %vm5475, %v7286, %v7333
    %v7335 = vsel %vm5477, %v7293, %v7334
    %v7336 = vsel %vm5479, %v7300, %v7335
    %v7337 = vsel %vm5481, %v7307, %v7336
    %v7340 = vadd.f32 %v6617, %v7330
    %v7341 = vadd.f32 %v6622, %v7337
    %v7342 = vsel %vm4222, %v7340, 0.0
    %7343 = vadd.xlane.f32.xlu0 %v7342
    %v7344 = vpop.xlane.xlu0 %7343
    %v7345 = vsel %vm4222, %v7341, 0.0
    %7346 = vadd.xlane.f32.xlu0 %v7345
    %v7347 = vpop.xlane.xlu0 %7346
    %v7348 = vmul.f32 %v7344, %v5500
    %v7349 = vmul.f32 %v7347, %v5500
    %v7350 = vsub.f32 %v7340, %v7348
    %v7351 = vsub.f32 %v7341, %v7349
    %v7352 = vmul.f32 %v7350, %v7350
    %v7353 = vmul.f32 %v7351, %v7351
    %v7354 = vsel %vm4222, %v7352, 0.0
    %7355 = vadd.xlane.f32.xlu0 %v7354
    %v7356 = vpop.xlane.xlu0 %7355
    %v7357 = vsel %vm4222, %v7353, 0.0
    %7358 = vadd.xlane.f32.xlu0 %v7357
    %v7359 = vpop.xlane.xlu0 %7358
    %v7360 = vmul.f32 %v7356, %v5500
    %v7361 = vmul.f32 %v7359, %v5500
    %v7362 = vadd.f32 %v7360, 1e-05
    %v7363 = vadd.f32 %v7361, 1e-05
    %v7364 = vrsqrt.pop %v7362
    %v7365 = vrsqrt.pop %v7363
    %v7366 = vmul.f32 %v7350, %v7364
    %v7367 = vmul.f32 %v7351, %v7365
    %v7368 = vlaneseq
    %v7369 = vshrl.u32 %v7368, 7
    %v7370 = vsub.s32 0, %v7369
    %v7371 = vrot.slane %v6528, %v7370
    %v7372 = vmul.f32 %v7366, %v7371
    %v7373 = vmul.f32 %v7367, %v7371
    %v7374 = vlaneseq
    %v7375 = vshrl.u32 %v7374, 7
    %v7376 = vsub.s32 0, %v7375
    %v7377 = vrot.slane %v6529, %v7376
    %v7378 = vadd.f32 %v7372, %v7377
    %v7379 = vadd.f32 %v7373, %v7377
    %v7380 = vmax.f32 %v7378, 0.0
    %v7381 = vmax.f32 %v7379, 0.0
    %v7382 = vsel %vm4222, %v7062, 0.0
    %7383 = vadd.xlane.f32.xlu0 %v7382
    %v7384 = vpop.xlane.xlu0 %7383
    %v7385 = vsel %vm4222, %v7063, 0.0
    %7386 = vadd.xlane.f32.xlu0 %v7385
    %v7387 = vpop.xlane.xlu0 %7386
    %v7388 = vsel %vm4222, %v7064, 0.0
    %7389 = vadd.xlane.f32.xlu0 %v7388
    %v7390 = vpop.xlane.xlu0 %7389
    %v7391 = vsel %vm4222, %v7065, 0.0
    %7392 = vadd.xlane.f32.xlu0 %v7391
    %v7393 = vpop.xlane.xlu0 %7392
    %v7394 = vsel %vm4222, %v7066, 0.0
    %7395 = vadd.xlane.f32.xlu0 %v7394
    %v7396 = vpop.xlane.xlu0 %7395
    %v7397 = vsel %vm4222, %v7067, 0.0
    %7398 = vadd.xlane.f32.xlu0 %v7397
    %v7399 = vpop.xlane.xlu0 %7398
    %v7400 = vsel %vm4222, %v7068, 0.0
    %7401 = vadd.xlane.f32.xlu0 %v7400
    %v7402 = vpop.xlane.xlu0 %7401
    %v7403 = vsel %vm4222, %v7069, 0.0
    %7404 = vadd.xlane.f32.xlu0 %v7403
    %v7405 = vpop.xlane.xlu0 %7404
    %v7406 = vsel %vm4222, %v7070, 0.0
    %7407 = vadd.xlane.f32.xlu0 %v7406
    %v7408 = vpop.xlane.xlu0 %7407
    %v7409 = vsel %vm4222, %v7071, 0.0
    %7410 = vadd.xlane.f32.xlu0 %v7409
    %v7411 = vpop.xlane.xlu0 %7410
    %v7412 = vsel %vm4222, %v7072, 0.0
    %7413 = vadd.xlane.f32.xlu0 %v7412
    %v7414 = vpop.xlane.xlu0 %7413
    %v7415 = vsel %vm4222, %v7073, 0.0
    %7416 = vadd.xlane.f32.xlu0 %v7415
    %v7417 = vpop.xlane.xlu0 %7416
    %v7418 = vsel %vm4222, %v7074, 0.0
    %7419 = vadd.xlane.f32.xlu0 %v7418
    %v7420 = vpop.xlane.xlu0 %7419
    %v7421 = vsel %vm4222, %v7075, 0.0
    %7422 = vadd.xlane.f32.xlu0 %v7421
    %v7423 = vpop.xlane.xlu0 %7422
    %v7424 = vsel %vm4222, %v7076, 0.0
    %7425 = vadd.xlane.f32.xlu0 %v7424
    %v7426 = vpop.xlane.xlu0 %7425
    %v7427 = vsel %vm4222, %v7077, 0.0
    %7428 = vadd.xlane.f32.xlu0 %v7427
    %v7429 = vpop.xlane.xlu0 %7428
    %v7430 = vmul.f32 %v7384, %v5500
    %v7431 = vmul.f32 %v7387, %v5500
    %v7432 = vmul.f32 %v7390, %v5500
    %v7433 = vmul.f32 %v7393, %v5500
    %v7434 = vmul.f32 %v7396, %v5500
    %v7435 = vmul.f32 %v7399, %v5500
    %v7436 = vmul.f32 %v7402, %v5500
    %v7437 = vmul.f32 %v7405, %v5500
    %v7438 = vmul.f32 %v7408, %v5500
    %v7439 = vmul.f32 %v7411, %v5500
    %v7440 = vmul.f32 %v7414, %v5500
    %v7441 = vmul.f32 %v7417, %v5500
    %v7442 = vmul.f32 %v7420, %v5500
    %v7443 = vmul.f32 %v7423, %v5500
    %v7444 = vmul.f32 %v7426, %v5500
    %v7445 = vmul.f32 %v7429, %v5500
    %v7446 = vsub.f32 %v7062, %v7430
    %v7447 = vsub.f32 %v7063, %v7431
    %v7448 = vsub.f32 %v7064, %v7432
    %v7449 = vsub.f32 %v7065, %v7433
    %v7450 = vsub.f32 %v7066, %v7434
    %v7451 = vsub.f32 %v7067, %v7435
    %v7452 = vsub.f32 %v7068, %v7436
    %v7453 = vsub.f32 %v7069, %v7437
    %v7454 = vsub.f32 %v7070, %v7438
    %v7455 = vsub.f32 %v7071, %v7439
    %v7456 = vsub.f32 %v7072, %v7440
    %v7457 = vsub.f32 %v7073, %v7441
    %v7458 = vsub.f32 %v7074, %v7442
    %v7459 = vsub.f32 %v7075, %v7443
    %v7460 = vsub.f32 %v7076, %v7444
    %v7461 = vsub.f32 %v7077, %v7445
    %v7462 = vmul.f32 %v7446, %v7446
    %v7463 = vmul.f32 %v7447, %v7447
    %v7464 = vmul.f32 %v7448, %v7448
    %v7465 = vmul.f32 %v7449, %v7449
    %v7466 = vmul.f32 %v7450, %v7450
    %v7467 = vmul.f32 %v7451, %v7451
    %v7468 = vmul.f32 %v7452, %v7452
    %v7469 = vmul.f32 %v7453, %v7453
    %v7470 = vmul.f32 %v7454, %v7454
    %v7471 = vmul.f32 %v7455, %v7455
    %v7472 = vmul.f32 %v7456, %v7456
    %v7473 = vmul.f32 %v7457, %v7457
    %v7474 = vmul.f32 %v7458, %v7458
    %v7475 = vmul.f32 %v7459, %v7459
    %v7476 = vmul.f32 %v7460, %v7460
    %v7477 = vmul.f32 %v7461, %v7461
    %v7478 = vsel %vm4222, %v7462, 0.0
    %7479 = vadd.xlane.f32.xlu0 %v7478
    %v7480 = vpop.xlane.xlu0 %7479
    %v7481 = vsel %vm4222, %v7463, 0.0
    %7482 = vadd.xlane.f32.xlu0 %v7481
    %v7483 = vpop.xlane.xlu0 %7482
    %v7484 = vsel %vm4222, %v7464, 0.0
    %7485 = vadd.xlane.f32.xlu0 %v7484
    %v7486 = vpop.xlane.xlu0 %7485
    %v7487 = vsel %vm4222, %v7465, 0.0
    %7488 = vadd.xlane.f32.xlu0 %v7487
    %v7489 = vpop.xlane.xlu0 %7488
    %v7490 = vsel %vm4222, %v7466, 0.0
    %7491 = vadd.xlane.f32.xlu0 %v7490
    %v7492 = vpop.xlane.xlu0 %7491
    %v7493 = vsel %vm4222, %v7467, 0.0
    %7494 = vadd.xlane.f32.xlu0 %v7493
    %v7495 = vpop.xlane.xlu0 %7494
    %v7496 = vsel %vm4222, %v7468, 0.0
    %7497 = vadd.xlane.f32.xlu0 %v7496
    %v7498 = vpop.xlane.xlu0 %7497
    %v7499 = vsel %vm4222, %v7469, 0.0
    %7500 = vadd.xlane.f32.xlu0 %v7499
    %v7501 = vpop.xlane.xlu0 %7500
    %v7502 = vsel %vm4222, %v7470, 0.0
    %7503 = vadd.xlane.f32.xlu0 %v7502
    %v7504 = vpop.xlane.xlu0 %7503
    %v7505 = vsel %vm4222, %v7471, 0.0
    %7506 = vadd.xlane.f32.xlu0 %v7505
    %v7507 = vpop.xlane.xlu0 %7506
    %v7508 = vsel %vm4222, %v7472, 0.0
    %7509 = vadd.xlane.f32.xlu0 %v7508
    %v7510 = vpop.xlane.xlu0 %7509
    %v7511 = vsel %vm4222, %v7473, 0.0
    %7512 = vadd.xlane.f32.xlu0 %v7511
    %v7513 = vpop.xlane.xlu0 %7512
    %v7514 = vsel %vm4222, %v7474, 0.0
    %7515 = vadd.xlane.f32.xlu0 %v7514
    %v7516 = vpop.xlane.xlu0 %7515
    %v7517 = vsel %vm4222, %v7475, 0.0
    %7518 = vadd.xlane.f32.xlu0 %v7517
    %v7519 = vpop.xlane.xlu0 %7518
    %v7520 = vsel %vm4222, %v7476, 0.0
    %7521 = vadd.xlane.f32.xlu0 %v7520
    %v7522 = vpop.xlane.xlu0 %7521
    %v7523 = vsel %vm4222, %v7477, 0.0
    %7524 = vadd.xlane.f32.xlu0 %v7523
    %v7525 = vpop.xlane.xlu0 %7524
    %v7526 = vmul.f32 %v7480, %v5500
    %v7527 = vmul.f32 %v7483, %v5500
    %v7528 = vmul.f32 %v7486, %v5500
    %v7529 = vmul.f32 %v7489, %v5500
    %v7530 = vmul.f32 %v7492, %v5500
    %v7531 = vmul.f32 %v7495, %v5500
    %v7532 = vmul.f32 %v7498, %v5500
    %v7533 = vmul.f32 %v7501, %v5500
    %v7534 = vmul.f32 %v7504, %v5500
    %v7535 = vmul.f32 %v7507, %v5500
    %v7536 = vmul.f32 %v7510, %v5500
    %v7537 = vmul.f32 %v7513, %v5500
    %v7538 = vmul.f32 %v7516, %v5500
    %v7539 = vmul.f32 %v7519, %v5500
    %v7540 = vmul.f32 %v7522, %v5500
    %v7541 = vmul.f32 %v7525, %v5500
    %v7542 = vadd.f32 %v7526, 1e-05
    %v7543 = vadd.f32 %v7527, 1e-05
    %v7544 = vadd.f32 %v7528, 1e-05
    %v7545 = vadd.f32 %v7529, 1e-05
    %v7546 = vadd.f32 %v7530, 1e-05
    %v7547 = vadd.f32 %v7531, 1e-05
    %v7548 = vadd.f32 %v7532, 1e-05
    %v7549 = vadd.f32 %v7533, 1e-05
    %v7550 = vadd.f32 %v7534, 1e-05
    %v7551 = vadd.f32 %v7535, 1e-05
    %v7552 = vadd.f32 %v7536, 1e-05
    %v7553 = vadd.f32 %v7537, 1e-05
    %v7554 = vadd.f32 %v7538, 1e-05
    %v7555 = vadd.f32 %v7539, 1e-05
    %v7556 = vadd.f32 %v7540, 1e-05
    %v7557 = vadd.f32 %v7541, 1e-05
    %v7558 = vrsqrt.pop %v7542
    %v7559 = vrsqrt.pop %v7543
    %v7560 = vrsqrt.pop %v7544
    %v7561 = vrsqrt.pop %v7545
    %v7562 = vrsqrt.pop %v7546
    %v7563 = vrsqrt.pop %v7547
    %v7564 = vrsqrt.pop %v7548
    %v7565 = vrsqrt.pop %v7549
    %v7566 = vrsqrt.pop %v7550
    %v7567 = vrsqrt.pop %v7551
    %v7568 = vrsqrt.pop %v7552
    %v7569 = vrsqrt.pop %v7553
    %v7570 = vrsqrt.pop %v7554
    %v7571 = vrsqrt.pop %v7555
    %v7572 = vrsqrt.pop %v7556
    %v7573 = vrsqrt.pop %v7557
    %v7574 = vmul.f32 %v7446, %v7558
    %v7575 = vmul.f32 %v7447, %v7559
    %v7576 = vmul.f32 %v7448, %v7560
    %v7577 = vmul.f32 %v7449, %v7561
    %v7578 = vmul.f32 %v7450, %v7562
    %v7579 = vmul.f32 %v7451, %v7563
    %v7580 = vmul.f32 %v7452, %v7564
    %v7581 = vmul.f32 %v7453, %v7565
    %v7582 = vmul.f32 %v7454, %v7566
    %v7583 = vmul.f32 %v7455, %v7567
    %v7584 = vmul.f32 %v7456, %v7568
    %v7585 = vmul.f32 %v7457, %v7569
    %v7586 = vmul.f32 %v7458, %v7570
    %v7587 = vmul.f32 %v7459, %v7571
    %v7588 = vmul.f32 %v7460, %v7572
    %v7589 = vmul.f32 %v7461, %v7573
    %v7590 = vlaneseq
    %v7591 = vshrl.u32 %v7590, 7
    %v7592 = vsub.s32 0, %v7591
    %v7593 = vrot.slane %v6530, %v7592
    %v7594 = vmul.f32 %v7574, %v7593
    %v7595 = vmul.f32 %v7575, %v7593
    %v7596 = vmul.f32 %v7576, %v7593
    %v7597 = vmul.f32 %v7577, %v7593
    %v7598 = vmul.f32 %v7578, %v7593
    %v7599 = vmul.f32 %v7579, %v7593
    %v7600 = vmul.f32 %v7580, %v7593
    %v7601 = vmul.f32 %v7581, %v7593
    %v7602 = vmul.f32 %v7582, %v7593
    %v7603 = vmul.f32 %v7583, %v7593
    %v7604 = vmul.f32 %v7584, %v7593
    %v7605 = vmul.f32 %v7585, %v7593
    %v7606 = vmul.f32 %v7586, %v7593
    %v7607 = vmul.f32 %v7587, %v7593
    %v7608 = vmul.f32 %v7588, %v7593
    %v7609 = vmul.f32 %v7589, %v7593
    %v7610 = vlaneseq
    %v7611 = vshrl.u32 %v7610, 7
    %v7612 = vsub.s32 0, %v7611
    %v7613 = vrot.slane %v6531, %v7612
    %v7614 = vadd.f32 %v7594, %v7613
    %v7615 = vadd.f32 %v7595, %v7613
    %v7616 = vadd.f32 %v7596, %v7613
    %v7617 = vadd.f32 %v7597, %v7613
    %v7618 = vadd.f32 %v7598, %v7613
    %v7619 = vadd.f32 %v7599, %v7613
    %v7620 = vadd.f32 %v7600, %v7613
    %v7621 = vadd.f32 %v7601, %v7613
    %v7622 = vadd.f32 %v7602, %v7613
    %v7623 = vadd.f32 %v7603, %v7613
    %v7624 = vadd.f32 %v7604, %v7613
    %v7625 = vadd.f32 %v7605, %v7613
    %v7626 = vadd.f32 %v7606, %v7613
    %v7627 = vadd.f32 %v7607, %v7613
    %v7628 = vadd.f32 %v7608, %v7613
    %v7629 = vadd.f32 %v7609, %v7613
    %v7630 = vmax.f32 %v7614, 0.0
    %v7631 = vmax.f32 %v7615, 0.0
    %v7632 = vmax.f32 %v7616, 0.0
    %v7633 = vmax.f32 %v7617, 0.0
    %v7634 = vmax.f32 %v7618, 0.0
    %v7635 = vmax.f32 %v7619, 0.0
    %v7636 = vmax.f32 %v7620, 0.0
    %v7637 = vmax.f32 %v7621, 0.0
    %v7638 = vmax.f32 %v7622, 0.0
    %v7639 = vmax.f32 %v7623, 0.0
    %v7640 = vmax.f32 %v7624, 0.0
    %v7641 = vmax.f32 %v7625, 0.0
    %v7642 = vmax.f32 %v7626, 0.0
    %v7643 = vmax.f32 %v7627, 0.0
    %v7644 = vmax.f32 %v7628, 0.0
    %v7645 = vmax.f32 %v7629, 0.0
    %s7646 = scalar_lea.vmem [#allocation2], 352
    %v7647 = vld [vmem:[%s7646] sm:$0xff]
    %v7648 = vld [vmem:[%s7646 + $0x8] sm:$0xff]
    %v7649 = vld [vmem:[%s7646 + $0x10] sm:$0xff]
    %v7650 = vld [vmem:[%s7646 + $0x18] sm:$0xff]
    %v7651 = vld [vmem:[%s5 + $0x1f] sm:$0x1]
    %v7652 = vlaneseq
    %v7653 = vshrl.u32 %v7652, 7
    %v7654 = vsub.s32 0, %v7653
    %v7655 = vrot.slane %v7651, %v7654
    %7656 = vmatprep.subr.mxu0 0.0
    %7657 = vmatpush1.msra.mxu0 0.0
    %7658 = vmatprep.subr.mxu0 0.0
    %7659 = vmatpush1.msra.mxu0 0.0
    %7660 = vmatprep.subr.mxu0 0.0
    %7661 = vmatpush1.msra.mxu0 0.0
    %7662 = vmatprep.subr.mxu0 0.0
    %7663 = vmatpush1.msra.mxu0 0.0
    %7664 = vmatprep.subr.mxu0 0.0
    %7665 = vmatpush1.msra.mxu0 0.0
    %7666 = vmatprep.subr.mxu0 0.0
    %7667 = vmatpush1.msra.mxu0 0.0
    %7668 = vmatprep.subr.mxu0 0.0
    %7669 = vmatpush1.msra.mxu0 0.0
    %7670 = vmatprep.subr.mxu0 0.0
    %7671 = vmatpush1.msra.mxu0 0.0
    %7672 = vmatprep.subr.mxu0 0.0
    %7673 = vmatpush1.msra.mxu0 0.0
    %7674 = vmatprep.subr.mxu0 0.0
    %7675 = vmatpush1.msra.mxu0 0.0
    %7676 = vmatprep.subr.mxu0 0.0
    %7677 = vmatpush1.msra.mxu0 0.0
    %7678 = vmatprep.subr.mxu0 0.0
    %7679 = vmatpush1.msra.mxu0 0.0
    %7680 = vmatprep.subr.mxu0 0.0
    %7681 = vmatpush1.msra.mxu0 %v7650
    %7682 = vmatprep.subr.mxu0 0.0
    %7683 = vmatpush1.msra.mxu0 %v7649
    %7684 = vmatprep.subr.mxu0 0.0
    %7685 = vmatpush1.msra.mxu0 %v7648
    %7686 = vmatprep.subr.mxu0 0.0
    %7687 = vmatpush1.msra.mxu0 %v7647
    %7688 = vmatprep.subr.mxu0 0.0
    %7689 = vmatpush2.msra.mxu0 0.0
    %7690 = vmatprep.subr.mxu0 0.0
    %7691 = vmatpush2.msra.mxu0 0.0
    %7692 = vmatprep.subr.mxu0 0.0
    %7693 = vmatpush2.msra.mxu0 0.0
    %7694 = vmatprep.subr.mxu0 0.0
    %7695 = vmatpush2.msra.mxu0 0.0
    %7696 = vmatprep.subr.mxu0 0.0
    %7697 = vmatpush2.msra.mxu0 0.0
    %7698 = vmatprep.subr.mxu0 0.0
    %7699 = vmatpush2.msra.mxu0 0.0
    %7700 = vmatprep.subr.mxu0 0.0
    %7701 = vmatpush2.msra.mxu0 0.0
    %7702 = vmatprep.subr.mxu0 0.0
    %7703 = vmatpush2.msra.mxu0 0.0
    %7704 = vmatprep.subr.mxu0 0.0
    %7705 = vmatpush2.msra.mxu0 0.0
    %7706 = vmatprep.subr.mxu0 0.0
    %7707 = vmatpush2.msra.mxu0 0.0
    %7708 = vmatprep.subr.mxu0 0.0
    %7709 = vmatpush2.msra.mxu0 0.0
    %7710 = vmatprep.subr.mxu0 0.0
    %7711 = vmatpush2.msra.mxu0 0.0
    %7712 = vmatprep.subr.mxu0 0.0
    %7713 = vmatpush2.msra.mxu0 0.0
    %7714 = vmatprep.subr.mxu0 0.0
    %7715 = vmatpush2.msra.mxu0 0.0
    %7716 = vmatprep.subr.mxu0 0.0
    %7717 = vmatpush2.msra.mxu0 0.0
    %7718 = vmatprep.subr.mxu0 0.0
    %7719 = vmatpush2.msra.mxu0 0.0
    %7720 = vmatprep.mubr.f32.mxu0 0.0
    %7721 = vmatmul.mubr.f32.gmra.mxu0 %v5810
    %v7722 = vpop.f32.mrf.mxu0
    %v7723 = vadd.f32 %v7655, %v7722
    %v7724 = vpop.f32.mrf.mxu0
    %7725 = vdwg.mxu0
    %v7728 = vunpack.c.l.s4 1966171168
    %v7729 = vunpack.c.0.s8 %v7728
    %v7730 = vlaneseq
    %v7731 = vshrl.u32 %v7730, 7
    %v7732 = vsub.s32 %v7729, %v7731
    %v7733 = vrot.slane %v7723, %v7732
    %v7734 = vcombine.high %v7733, %v7733
    %v7736 = vunpack.c.l.s4 1966171168
    %v7737 = vunpack.c.0.s8 %v7736
    %v7738 = vlaneseq
    %v7739 = vshrl.u32 %v7738, 7
    %v7740 = vsub.s32 %v7737, %v7739
    %v7741 = vrot.slane %v7733, %v7740
    %v7743 = vunpack.c.l.s4 1966171168
    %v7744 = vunpack.c.0.s8 %v7743
    %v7745 = vlaneseq
    %v7746 = vshrl.u32 %v7745, 7
    %v7747 = vsub.s32 %v7744, %v7746
    %v7748 = vrot.slane %v7734, %v7747
    %v7749 = vlaneseq
    %v7750 = vshrl.u32 %v7749, 7
    %v7751 = vsub.s32 0, %v7750
    %v7752 = vrot.slane %v7741, %v7751
    %v7753 = vlaneseq
    %v7754 = vshrl.u32 %v7753, 7
    %v7755 = vsub.s32 0, %v7754
    %v7756 = vrot.slane %v7748, %v7755
    %v7759 = vadd.f32 %v7630, %v7752
    %v7760 = vadd.f32 %v7631, %v7752
    %v7761 = vadd.f32 %v7632, %v7752
    %v7762 = vadd.f32 %v7633, %v7752
    %v7763 = vadd.f32 %v7634, %v7752
    %v7764 = vadd.f32 %v7635, %v7752
    %v7765 = vadd.f32 %v7636, %v7752
    %v7766 = vadd.f32 %v7637, %v7752
    %v7767 = vadd.f32 %v7638, %v7756
    %v7768 = vadd.f32 %v7639, %v7756
    %v7769 = vadd.f32 %v7640, %v7756
    %v7770 = vadd.f32 %v7641, %v7756
    %v7771 = vadd.f32 %v7642, %v7756
    %v7772 = vadd.f32 %v7643, %v7756
    %v7773 = vadd.f32 %v7644, %v7756
    %v7774 = vadd.f32 %v7645, %v7756
    %v7775 = vadd.f32 %v5931, %v7380
    %v7776 = vadd.f32 %v5932, %v7381
    %v7777 = vsel %vm4222, %v7759, 0.0
    %7778 = vadd.xlane.f32.xlu0 %v7777
    %v7779 = vpop.xlane.xlu0 %7778
    %v7780 = vsel %vm4222, %v7760, 0.0
    %7781 = vadd.xlane.f32.xlu0 %v7780
    %v7782 = vpop.xlane.xlu0 %7781
    %v7783 = vsel %vm4222, %v7761, 0.0
    %7784 = vadd.xlane.f32.xlu0 %v7783
    %v7785 = vpop.xlane.xlu0 %7784
    %v7786 = vsel %vm4222, %v7762, 0.0
    %7787 = vadd.xlane.f32.xlu0 %v7786
    %v7788 = vpop.xlane.xlu0 %7787
    %v7789 = vsel %vm4222, %v7763, 0.0
    %7790 = vadd.xlane.f32.xlu0 %v7789
    %v7791 = vpop.xlane.xlu0 %7790
    %v7792 = vsel %vm4222, %v7764, 0.0
    %7793 = vadd.xlane.f32.xlu0 %v7792
    %v7794 = vpop.xlane.xlu0 %7793
    %v7795 = vsel %vm4222, %v7765, 0.0
    %7796 = vadd.xlane.f32.xlu0 %v7795
    %v7797 = vpop.xlane.xlu0 %7796
    %v7798 = vsel %vm4222, %v7766, 0.0
    %7799 = vadd.xlane.f32.xlu0 %v7798
    %v7800 = vpop.xlane.xlu0 %7799
    %v7801 = vsel %vm4222, %v7767, 0.0
    %7802 = vadd.xlane.f32.xlu0 %v7801
    %v7803 = vpop.xlane.xlu0 %7802
    %v7804 = vsel %vm4222, %v7768, 0.0
    %7805 = vadd.xlane.f32.xlu0 %v7804
    %v7806 = vpop.xlane.xlu0 %7805
    %v7807 = vsel %vm4222, %v7769, 0.0
    %7808 = vadd.xlane.f32.xlu0 %v7807
    %v7809 = vpop.xlane.xlu0 %7808
    %v7810 = vsel %vm4222, %v7770, 0.0
    %7811 = vadd.xlane.f32.xlu0 %v7810
    %v7812 = vpop.xlane.xlu0 %7811
    %v7813 = vsel %vm4222, %v7771, 0.0
    %7814 = vadd.xlane.f32.xlu0 %v7813
    %v7815 = vpop.xlane.xlu0 %7814
    %v7816 = vsel %vm4222, %v7772, 0.0
    %7817 = vadd.xlane.f32.xlu0 %v7816
    %v7818 = vpop.xlane.xlu0 %7817
    %v7819 = vsel %vm4222, %v7773, 0.0
    %7820 = vadd.xlane.f32.xlu0 %v7819
    %v7821 = vpop.xlane.xlu0 %7820
    %v7822 = vsel %vm4222, %v7774, 0.0
    %7823 = vadd.xlane.f32.xlu0 %v7822
    %v7824 = vpop.xlane.xlu0 %7823
    %v7825 = vmul.f32 %v7779, %v5500
    %v7826 = vmul.f32 %v7782, %v5500
    %v7827 = vmul.f32 %v7785, %v5500
    %v7828 = vmul.f32 %v7788, %v5500
    %v7829 = vmul.f32 %v7791, %v5500
    %v7830 = vmul.f32 %v7794, %v5500
    %v7831 = vmul.f32 %v7797, %v5500
    %v7832 = vmul.f32 %v7800, %v5500
    %v7833 = vmul.f32 %v7803, %v5500
    %v7834 = vmul.f32 %v7806, %v5500
    %v7835 = vmul.f32 %v7809, %v5500
    %v7836 = vmul.f32 %v7812, %v5500
    %v7837 = vmul.f32 %v7815, %v5500
    %v7838 = vmul.f32 %v7818, %v5500
    %v7839 = vmul.f32 %v7821, %v5500
    %v7840 = vmul.f32 %v7824, %v5500
    %v7841 = vsub.f32 %v7759, %v7825
    %v7842 = vsub.f32 %v7760, %v7826
    %v7843 = vsub.f32 %v7761, %v7827
    %v7844 = vsub.f32 %v7762, %v7828
    %v7845 = vsub.f32 %v7763, %v7829
    %v7846 = vsub.f32 %v7764, %v7830
    %v7847 = vsub.f32 %v7765, %v7831
    %v7848 = vsub.f32 %v7766, %v7832
    %v7849 = vsub.f32 %v7767, %v7833
    %v7850 = vsub.f32 %v7768, %v7834
    %v7851 = vsub.f32 %v7769, %v7835
    %v7852 = vsub.f32 %v7770, %v7836
    %v7853 = vsub.f32 %v7771, %v7837
    %v7854 = vsub.f32 %v7772, %v7838
    %v7855 = vsub.f32 %v7773, %v7839
    %v7856 = vsub.f32 %v7774, %v7840
    %v7857 = vmul.f32 %v7841, %v7841
    %v7858 = vmul.f32 %v7842, %v7842
    %v7859 = vmul.f32 %v7843, %v7843
    %v7860 = vmul.f32 %v7844, %v7844
    %v7861 = vmul.f32 %v7845, %v7845
    %v7862 = vmul.f32 %v7846, %v7846
    %v7863 = vmul.f32 %v7847, %v7847
    %v7864 = vmul.f32 %v7848, %v7848
    %v7865 = vmul.f32 %v7849, %v7849
    %v7866 = vmul.f32 %v7850, %v7850
    %v7867 = vmul.f32 %v7851, %v7851
    %v7868 = vmul.f32 %v7852, %v7852
    %v7869 = vmul.f32 %v7853, %v7853
    %v7870 = vmul.f32 %v7854, %v7854
    %v7871 = vmul.f32 %v7855, %v7855
    %v7872 = vmul.f32 %v7856, %v7856
    %v7873 = vsel %vm4222, %v7857, 0.0
    %7874 = vadd.xlane.f32.xlu0 %v7873
    %v7875 = vpop.xlane.xlu0 %7874
    %v7876 = vsel %vm4222, %v7858, 0.0
    %7877 = vadd.xlane.f32.xlu0 %v7876
    %v7878 = vpop.xlane.xlu0 %7877
    %v7879 = vsel %vm4222, %v7859, 0.0
    %7880 = vadd.xlane.f32.xlu0 %v7879
    %v7881 = vpop.xlane.xlu0 %7880
    %v7882 = vsel %vm4222, %v7860, 0.0
    %7883 = vadd.xlane.f32.xlu0 %v7882
    %v7884 = vpop.xlane.xlu0 %7883
    %v7885 = vsel %vm4222, %v7861, 0.0
    %7886 = vadd.xlane.f32.xlu0 %v7885
    %v7887 = vpop.xlane.xlu0 %7886
    %v7888 = vsel %vm4222, %v7862, 0.0
    %7889 = vadd.xlane.f32.xlu0 %v7888
    %v7890 = vpop.xlane.xlu0 %7889
    %v7891 = vsel %vm4222, %v7863, 0.0
    %7892 = vadd.xlane.f32.xlu0 %v7891
    %v7893 = vpop.xlane.xlu0 %7892
    %v7894 = vsel %vm4222, %v7864, 0.0
    %7895 = vadd.xlane.f32.xlu0 %v7894
    %v7896 = vpop.xlane.xlu0 %7895
    %v7897 = vsel %vm4222, %v7865, 0.0
    %7898 = vadd.xlane.f32.xlu0 %v7897
    %v7899 = vpop.xlane.xlu0 %7898
    %v7900 = vsel %vm4222, %v7866, 0.0
    %7901 = vadd.xlane.f32.xlu0 %v7900
    %v7902 = vpop.xlane.xlu0 %7901
    %v7903 = vsel %vm4222, %v7867, 0.0
    %7904 = vadd.xlane.f32.xlu0 %v7903
    %v7905 = vpop.xlane.xlu0 %7904
    %v7906 = vsel %vm4222, %v7868, 0.0
    %7907 = vadd.xlane.f32.xlu0 %v7906
    %v7908 = vpop.xlane.xlu0 %7907
    %v7909 = vsel %vm4222, %v7869, 0.0
    %7910 = vadd.xlane.f32.xlu0 %v7909
    %v7911 = vpop.xlane.xlu0 %7910
    %v7912 = vsel %vm4222, %v7870, 0.0
    %7913 = vadd.xlane.f32.xlu0 %v7912
    %v7914 = vpop.xlane.xlu0 %7913
    %v7915 = vsel %vm4222, %v7871, 0.0
    %7916 = vadd.xlane.f32.xlu0 %v7915
    %v7917 = vpop.xlane.xlu0 %7916
    %v7918 = vsel %vm4222, %v7872, 0.0
    %7919 = vadd.xlane.f32.xlu0 %v7918
    %v7920 = vpop.xlane.xlu0 %7919
    %v7921 = vmul.f32 %v7875, %v5500
    %v7922 = vmul.f32 %v7878, %v5500
    %v7923 = vmul.f32 %v7881, %v5500
    %v7924 = vmul.f32 %v7884, %v5500
    %v7925 = vmul.f32 %v7887, %v5500
    %v7926 = vmul.f32 %v7890, %v5500
    %v7927 = vmul.f32 %v7893, %v5500
    %v7928 = vmul.f32 %v7896, %v5500
    %v7929 = vmul.f32 %v7899, %v5500
    %v7930 = vmul.f32 %v7902, %v5500
    %v7931 = vmul.f32 %v7905, %v5500
    %v7932 = vmul.f32 %v7908, %v5500
    %v7933 = vmul.f32 %v7911, %v5500
    %v7934 = vmul.f32 %v7914, %v5500
    %v7935 = vmul.f32 %v7917, %v5500
    %v7936 = vmul.f32 %v7920, %v5500
    %v7937 = vadd.f32 %v7921, 1e-05
    %v7938 = vadd.f32 %v7922, 1e-05
    %v7939 = vadd.f32 %v7923, 1e-05
    %v7940 = vadd.f32 %v7924, 1e-05
    %v7941 = vadd.f32 %v7925, 1e-05
    %v7942 = vadd.f32 %v7926, 1e-05
    %v7943 = vadd.f32 %v7927, 1e-05
    %v7944 = vadd.f32 %v7928, 1e-05
    %v7945 = vadd.f32 %v7929, 1e-05
    %v7946 = vadd.f32 %v7930, 1e-05
    %v7947 = vadd.f32 %v7931, 1e-05
    %v7948 = vadd.f32 %v7932, 1e-05
    %v7949 = vadd.f32 %v7933, 1e-05
    %v7950 = vadd.f32 %v7934, 1e-05
    %v7951 = vadd.f32 %v7935, 1e-05
    %v7952 = vadd.f32 %v7936, 1e-05
    %v7953 = vrsqrt.pop %v7937
    %v7954 = vrsqrt.pop %v7938
    %v7955 = vrsqrt.pop %v7939
    %v7956 = vrsqrt.pop %v7940
    %v7957 = vrsqrt.pop %v7941
    %v7958 = vrsqrt.pop %v7942
    %v7959 = vrsqrt.pop %v7943
    %v7960 = vrsqrt.pop %v7944
    %v7961 = vrsqrt.pop %v7945
    %v7962 = vrsqrt.pop %v7946
    %v7963 = vrsqrt.pop %v7947
    %v7964 = vrsqrt.pop %v7948
    %v7965 = vrsqrt.pop %v7949
    %v7966 = vrsqrt.pop %v7950
    %v7967 = vrsqrt.pop %v7951
    %v7968 = vrsqrt.pop %v7952
    %v7969 = vmul.f32 %v7841, %v7953
    %v7970 = vmul.f32 %v7842, %v7954
    %v7971 = vmul.f32 %v7843, %v7955
    %v7972 = vmul.f32 %v7844, %v7956
    %v7973 = vmul.f32 %v7845, %v7957
    %v7974 = vmul.f32 %v7846, %v7958
    %v7975 = vmul.f32 %v7847, %v7959
    %v7976 = vmul.f32 %v7848, %v7960
    %v7977 = vmul.f32 %v7849, %v7961
    %v7978 = vmul.f32 %v7850, %v7962
    %v7979 = vmul.f32 %v7851, %v7963
    %v7980 = vmul.f32 %v7852, %v7964
    %v7981 = vmul.f32 %v7853, %v7965
    %v7982 = vmul.f32 %v7854, %v7966
    %v7983 = vmul.f32 %v7855, %v7967
    %v7984 = vmul.f32 %v7856, %v7968
    %v7985 = vlaneseq
    %v7986 = vshrl.u32 %v7985, 7
    %v7987 = vsub.s32 0, %v7986
    %v7988 = vrot.slane %v6532, %v7987
    %v7989 = vmul.f32 %v7969, %v7988
    %v7990 = vmul.f32 %v7970, %v7988
    %v7991 = vmul.f32 %v7971, %v7988
    %v7992 = vmul.f32 %v7972, %v7988
    %v7993 = vmul.f32 %v7973, %v7988
    %v7994 = vmul.f32 %v7974, %v7988
    %v7995 = vmul.f32 %v7975, %v7988
    %v7996 = vmul.f32 %v7976, %v7988
    %v7997 = vmul.f32 %v7977, %v7988
    %v7998 = vmul.f32 %v7978, %v7988
    %v7999 = vmul.f32 %v7979, %v7988
    %v8000 = vmul.f32 %v7980, %v7988
    %v8001 = vmul.f32 %v7981, %v7988
    %v8002 = vmul.f32 %v7982, %v7988
    %v8003 = vmul.f32 %v7983, %v7988
    %v8004 = vmul.f32 %v7984, %v7988
    %v8005 = vlaneseq
    %v8006 = vshrl.u32 %v8005, 7
    %v8007 = vsub.s32 0, %v8006
    %v8008 = vrot.slane %v6533, %v8007
    %v8009 = vadd.f32 %v7989, %v8008
    %v8010 = vadd.f32 %v7990, %v8008
    %v8011 = vadd.f32 %v7991, %v8008
    %v8012 = vadd.f32 %v7992, %v8008
    %v8013 = vadd.f32 %v7993, %v8008
    %v8014 = vadd.f32 %v7994, %v8008
    %v8015 = vadd.f32 %v7995, %v8008
    %v8016 = vadd.f32 %v7996, %v8008
    %v8017 = vadd.f32 %v7997, %v8008
    %v8018 = vadd.f32 %v7998, %v8008
    %v8019 = vadd.f32 %v7999, %v8008
    %v8020 = vadd.f32 %v8000, %v8008
    %v8021 = vadd.f32 %v8001, %v8008
    %v8022 = vadd.f32 %v8002, %v8008
    %v8023 = vadd.f32 %v8003, %v8008
    %v8024 = vadd.f32 %v8004, %v8008
    %v8025 = vxor.u32 %v8009, 2147483648
    %v8026 = vxor.u32 %v8010, 2147483648
    %v8027 = vxor.u32 %v8011, 2147483648
    %v8028 = vxor.u32 %v8012, 2147483648
    %v8029 = vxor.u32 %v8013, 2147483648
    %v8030 = vxor.u32 %v8014, 2147483648
    %v8031 = vxor.u32 %v8015, 2147483648
    %v8032 = vxor.u32 %v8016, 2147483648
    %v8033 = vxor.u32 %v8017, 2147483648
    %v8034 = vxor.u32 %v8018, 2147483648
    %v8035 = vxor.u32 %v8019, 2147483648
    %v8036 = vxor.u32 %v8020, 2147483648
    %v8037 = vxor.u32 %v8021, 2147483648
    %v8038 = vxor.u32 %v8022, 2147483648
    %v8039 = vxor.u32 %v8023, 2147483648
    %v8040 = vxor.u32 %v8024, 2147483648
    %v8041 = vmul.f32 %v8025, 1.442695
    %v8042 = vpow.pop %v8041
    %v8043 = vmul.f32 %v8026, 1.442695
    %v8044 = vpow.pop %v8043
    %v8045 = vmul.f32 %v8027, 1.442695
    %v8046 = vpow.pop %v8045
    %v8047 = vmul.f32 %v8028, 1.442695
    %v8048 = vpow.pop %v8047
    %v8049 = vmul.f32 %v8029, 1.442695
    %v8050 = vpow.pop %v8049
    %v8051 = vmul.f32 %v8030, 1.442695
    %v8052 = vpow.pop %v8051
    %v8053 = vmul.f32 %v8031, 1.442695
    %v8054 = vpow.pop %v8053
    %v8055 = vmul.f32 %v8032, 1.442695
    %v8056 = vpow.pop %v8055
    %v8057 = vmul.f32 %v8033, 1.442695
    %v8058 = vpow.pop %v8057
    %v8059 = vmul.f32 %v8034, 1.442695
    %v8060 = vpow.pop %v8059
    %v8061 = vmul.f32 %v8035, 1.442695
    %v8062 = vpow.pop %v8061
    %v8063 = vmul.f32 %v8036, 1.442695
    %v8064 = vpow.pop %v8063
    %v8065 = vmul.f32 %v8037, 1.442695
    %v8066 = vpow.pop %v8065
    %v8067 = vmul.f32 %v8038, 1.442695
    %v8068 = vpow.pop %v8067
    %v8069 = vmul.f32 %v8039, 1.442695
    %v8070 = vpow.pop %v8069
    %v8071 = vmul.f32 %v8040, 1.442695
    %v8072 = vpow.pop %v8071
    %v8073 = vadd.f32 %v8042, 1.0
    %v8074 = vadd.f32 %v8044, 1.0
    %v8075 = vadd.f32 %v8046, 1.0
    %v8076 = vadd.f32 %v8048, 1.0
    %v8077 = vadd.f32 %v8050, 1.0
    %v8078 = vadd.f32 %v8052, 1.0
    %v8079 = vadd.f32 %v8054, 1.0
    %v8080 = vadd.f32 %v8056, 1.0
    %v8081 = vadd.f32 %v8058, 1.0
    %v8082 = vadd.f32 %v8060, 1.0
    %v8083 = vadd.f32 %v8062, 1.0
    %v8084 = vadd.f32 %v8064, 1.0
    %v8085 = vadd.f32 %v8066, 1.0
    %v8086 = vadd.f32 %v8068, 1.0
    %v8087 = vadd.f32 %v8070, 1.0
    %v8088 = vadd.f32 %v8072, 1.0
    %v8089 = vrcp.pop %v8073
    %v8090 = vmul.f32 1.0, %v8089
    %v8091 = vrcp.pop %v8074
    %v8092 = vmul.f32 1.0, %v8091
    %v8093 = vrcp.pop %v8075
    %v8094 = vmul.f32 1.0, %v8093
    %v8095 = vrcp.pop %v8076
    %v8096 = vmul.f32 1.0, %v8095
    %v8097 = vrcp.pop %v8077
    %v8098 = vmul.f32 1.0, %v8097
    %v8099 = vrcp.pop %v8078
    %v8100 = vmul.f32 1.0, %v8099
    %v8101 = vrcp.pop %v8079
    %v8102 = vmul.f32 1.0, %v8101
    %v8103 = vrcp.pop %v8080
    %v8104 = vmul.f32 1.0, %v8103
    %v8105 = vrcp.pop %v8081
    %v8106 = vmul.f32 1.0, %v8105
    %v8107 = vrcp.pop %v8082
    %v8108 = vmul.f32 1.0, %v8107
    %v8109 = vrcp.pop %v8083
    %v8110 = vmul.f32 1.0, %v8109
    %v8111 = vrcp.pop %v8084
    %v8112 = vmul.f32 1.0, %v8111
    %v8113 = vrcp.pop %v8085
    %v8114 = vmul.f32 1.0, %v8113
    %v8115 = vrcp.pop %v8086
    %v8116 = vmul.f32 1.0, %v8115
    %v8117 = vrcp.pop %v8087
    %v8118 = vmul.f32 1.0, %v8117
    %v8119 = vrcp.pop %v8088
    %v8120 = vmul.f32 1.0, %v8119
    %v8121 = vmul.f32 %v8009, %v8090
    %v8122 = vmul.f32 %v8010, %v8092
    %v8123 = vmul.f32 %v8011, %v8094
    %v8124 = vmul.f32 %v8012, %v8096
    %v8125 = vmul.f32 %v8013, %v8098
    %v8126 = vmul.f32 %v8014, %v8100
    %v8127 = vmul.f32 %v8015, %v8102
    %v8128 = vmul.f32 %v8016, %v8104
    %v8129 = vmul.f32 %v8017, %v8106
    %v8130 = vmul.f32 %v8018, %v8108
    %v8131 = vmul.f32 %v8019, %v8110
    %v8132 = vmul.f32 %v8020, %v8112
    %v8133 = vmul.f32 %v8021, %v8114
    %v8134 = vmul.f32 %v8022, %v8116
    %v8135 = vmul.f32 %v8023, %v8118
    %v8136 = vmul.f32 %v8024, %v8120
    %s8137 = scalar_lea.vmem [#allocation2], 256
    %v8138 = vld [vmem:[%s8137] sm:$0xff]
    %v8139 = vld [vmem:[%s8137 + $0x8] sm:$0xff]
    %v8140 = vld [vmem:[%s8137 + $0x10] sm:$0xff]
    %v8141 = vld [vmem:[%s8137 + $0x18] sm:$0xff]
    %v8143 = vsel %vm4222, %v8121, 0
    %v8146 = vsel %vm4222, %v8122, 0
    %v8149 = vsel %vm4222, %v8123, 0
    %v8152 = vsel %vm4222, %v8124, 0
    %v8155 = vsel %vm4222, %v8125, 0
    %v8158 = vsel %vm4222, %v8126, 0
    %v8161 = vsel %vm4222, %v8127, 0
    %v8164 = vsel %vm4222, %v8128, 0
    %v8167 = vsel %vm4222, %v8129, 0
    %v8170 = vsel %vm4222, %v8130, 0
    %v8173 = vsel %vm4222, %v8131, 0
    %v8176 = vsel %vm4222, %v8132, 0
    %v8179 = vsel %vm4222, %v8133, 0
    %v8182 = vsel %vm4222, %v8134, 0
    %v8185 = vsel %vm4222, %v8135, 0
    %v8188 = vsel %vm4222, %v8136, 0
    %8190 = vmatprep.subr.mxu0 0.0
    %8191 = vmatpush1.msra.mxu0 0.0
    %8192 = vmatprep.subr.mxu0 0.0
    %8193 = vmatpush1.msra.mxu0 0.0
    %8194 = vmatprep.subr.mxu0 0.0
    %8195 = vmatpush1.msra.mxu0 0.0
    %8196 = vmatprep.subr.mxu0 0.0
    %8197 = vmatpush1.msra.mxu0 0.0
    %8198 = vmatprep.subr.mxu0 0.0
    %8199 = vmatpush1.msra.mxu0 0.0
    %8200 = vmatprep.subr.mxu0 0.0
    %8201 = vmatpush1.msra.mxu0 0.0
    %8202 = vmatprep.subr.mxu0 0.0
    %8203 = vmatpush1.msra.mxu0 0.0
    %8204 = vmatprep.subr.mxu0 0.0
    %8205 = vmatpush1.msra.mxu0 0.0
    %8206 = vmatprep.subr.mxu0 0.0
    %8207 = vmatpush1.msra.mxu0 0.0
    %8208 = vmatprep.subr.mxu0 0.0
    %8209 = vmatpush1.msra.mxu0 0.0
    %8210 = vmatprep.subr.mxu0 0.0
    %8211 = vmatpush1.msra.mxu0 0.0
    %8212 = vmatprep.subr.mxu0 0.0
    %8213 = vmatpush1.msra.mxu0 0.0
    %8214 = vmatprep.subr.mxu0 0.0
    %8215 = vmatpush1.msra.mxu0 %v8141
    %8216 = vmatprep.subr.mxu0 0.0
    %8217 = vmatpush1.msra.mxu0 %v8140
    %8218 = vmatprep.subr.mxu0 0.0
    %8219 = vmatpush1.msra.mxu0 %v8139
    %8220 = vmatprep.subr.mxu0 0.0
    %8221 = vmatpush1.msra.mxu0 %v8138
    %8222 = vmatprep.subr.mxu0 0.0
    %8223 = vmatpush2.msra.mxu0 0.0
    %8224 = vmatprep.subr.mxu0 0.0
    %8225 = vmatpush2.msra.mxu0 0.0
    %8226 = vmatprep.subr.mxu0 0.0
    %8227 = vmatpush2.msra.mxu0 0.0
    %8228 = vmatprep.subr.mxu0 0.0
    %8229 = vmatpush2.msra.mxu0 0.0
    %8230 = vmatprep.subr.mxu0 0.0
    %8231 = vmatpush2.msra.mxu0 0.0
    %8232 = vmatprep.subr.mxu0 0.0
    %8233 = vmatpush2.msra.mxu0 0.0
    %8234 = vmatprep.subr.mxu0 0.0
    %8235 = vmatpush2.msra.mxu0 0.0
    %8236 = vmatprep.subr.mxu0 0.0
    %8237 = vmatpush2.msra.mxu0 0.0
    %8238 = vmatprep.subr.mxu0 0.0
    %8239 = vmatpush2.msra.mxu0 0.0
    %8240 = vmatprep.subr.mxu0 0.0
    %8241 = vmatpush2.msra.mxu0 0.0
    %8242 = vmatprep.subr.mxu0 0.0
    %8243 = vmatpush2.msra.mxu0 0.0
    %8244 = vmatprep.subr.mxu0 0.0
    %8245 = vmatpush2.msra.mxu0 0.0
    %8246 = vmatprep.subr.mxu0 0.0
    %8247 = vmatpush2.msra.mxu0 0.0
    %8248 = vmatprep.subr.mxu0 0.0
    %8249 = vmatpush2.msra.mxu0 0.0
    %8250 = vmatprep.subr.mxu0 0.0
    %8251 = vmatpush2.msra.mxu0 0.0
    %8252 = vmatprep.subr.mxu0 0.0
    %8253 = vmatpush2.msra.mxu0 0.0
    %8254 = vmatprep.mubr.f32.mxu0 0.0
    %8255 = vmatmul.mubr.f32.gmra.mxu0 %v8143
    %v8256 = vpop.f32.mrf.mxu0
    %v8257 = vadd.f32 0.0, %v8256
    %v8258 = vpop.f32.mrf.mxu0
    %8259 = vmatprep.mubr.f32.mxu0 0.0
    %8260 = vmatmul.mubr.f32.gmra.mxu0 %v8146
    %v8261 = vpop.f32.mrf.mxu0
    %v8262 = vadd.f32 0.0, %v8261
    %v8263 = vpop.f32.mrf.mxu0
    %8264 = vmatprep.mubr.f32.mxu0 0.0
    %8265 = vmatmul.mubr.f32.gmra.mxu0 %v8149
    %v8266 = vpop.f32.mrf.mxu0
    %v8267 = vadd.f32 0.0, %v8266
    %v8268 = vpop.f32.mrf.mxu0
    %8269 = vmatprep.mubr.f32.mxu0 0.0
    %8270 = vmatmul.mubr.f32.gmra.mxu0 %v8152
    %v8271 = vpop.f32.mrf.mxu0
    %v8272 = vadd.f32 0.0, %v8271
    %v8273 = vpop.f32.mrf.mxu0
    %8274 = vmatprep.mubr.f32.mxu0 0.0
    %8275 = vmatmul.mubr.f32.gmra.mxu0 %v8155
    %v8276 = vpop.f32.mrf.mxu0
    %v8277 = vadd.f32 0.0, %v8276
    %v8278 = vpop.f32.mrf.mxu0
    %8279 = vmatprep.mubr.f32.mxu0 0.0
    %8280 = vmatmul.mubr.f32.gmra.mxu0 %v8158
    %v8281 = vpop.f32.mrf.mxu0
    %v8282 = vadd.f32 0.0, %v8281
    %v8283 = vpop.f32.mrf.mxu0
    %8284 = vmatprep.mubr.f32.mxu0 0.0
    %8285 = vmatmul.mubr.f32.gmra.mxu0 %v8161
    %v8286 = vpop.f32.mrf.mxu0
    %v8287 = vadd.f32 0.0, %v8286
    %v8288 = vpop.f32.mrf.mxu0
    %8289 = vmatprep.mubr.f32.mxu0 0.0
    %8290 = vmatmul.mubr.f32.gmra.mxu0 %v8164
    %v8291 = vpop.f32.mrf.mxu0
    %v8292 = vadd.f32 0.0, %v8291
    %v8293 = vpop.f32.mrf.mxu0
    %8294 = vmatprep.mubr.f32.mxu0 0.0
    %8295 = vmatmul.mubr.f32.gmra.mxu0 %v8167
    %v8296 = vpop.f32.mrf.mxu0
    %v8297 = vadd.f32 0.0, %v8296
    %v8298 = vpop.f32.mrf.mxu0
    %8299 = vmatprep.mubr.f32.mxu0 0.0
    %8300 = vmatmul.mubr.f32.gmra.mxu0 %v8170
    %v8301 = vpop.f32.mrf.mxu0
    %v8302 = vadd.f32 0.0, %v8301
    %v8303 = vpop.f32.mrf.mxu0
    %8304 = vmatprep.mubr.f32.mxu0 0.0
    %8305 = vmatmul.mubr.f32.gmra.mxu0 %v8173
    %v8306 = vpop.f32.mrf.mxu0
    %v8307 = vadd.f32 0.0, %v8306
    %v8308 = vpop.f32.mrf.mxu0
    %8309 = vmatprep.mubr.f32.mxu0 0.0
    %8310 = vmatmul.mubr.f32.gmra.mxu0 %v8176
    %v8311 = vpop.f32.mrf.mxu0
    %v8312 = vadd.f32 0.0, %v8311
    %v8313 = vpop.f32.mrf.mxu0
    %8314 = vmatprep.mubr.f32.mxu0 0.0
    %8315 = vmatmul.mubr.f32.gmra.mxu0 %v8179
    %v8316 = vpop.f32.mrf.mxu0
    %v8317 = vadd.f32 0.0, %v8316
    %v8318 = vpop.f32.mrf.mxu0
    %8319 = vmatprep.mubr.f32.mxu0 0.0
    %8320 = vmatmul.mubr.f32.gmra.mxu0 %v8182
    %v8321 = vpop.f32.mrf.mxu0
    %v8322 = vadd.f32 0.0, %v8321
    %v8323 = vpop.f32.mrf.mxu0
    %8324 = vmatprep.mubr.f32.mxu0 0.0
    %8325 = vmatmul.mubr.f32.gmra.mxu0 %v8185
    %v8326 = vpop.f32.mrf.mxu0
    %v8327 = vadd.f32 0.0, %v8326
    %v8328 = vpop.f32.mrf.mxu0
    %8329 = vmatprep.mubr.f32.mxu0 0.0
    %8330 = vmatmul.mubr.f32.gmra.mxu0 %v8188
    %v8331 = vpop.f32.mrf.mxu0
    %v8332 = vadd.f32 0.0, %v8331
    %v8333 = vpop.f32.mrf.mxu0
    %8334 = vdwg.mxu0
    %v8335 = vadd.f32 %v6512, %v8257
    %v8336 = vadd.f32 %v6513, %v8262
    %v8337 = vadd.f32 %v6514, %v8267
    %v8338 = vadd.f32 %v6515, %v8272
    %v8339 = vadd.f32 %v6516, %v8277
    %v8340 = vadd.f32 %v6517, %v8282
    %v8341 = vadd.f32 %v6518, %v8287
    %v8342 = vadd.f32 %v6519, %v8292
    %v8343 = vadd.f32 %v6520, %v8297
    %v8344 = vadd.f32 %v6521, %v8302
    %v8345 = vadd.f32 %v6522, %v8307
    %v8346 = vadd.f32 %v6523, %v8312
    %v8347 = vadd.f32 %v6524, %v8317
    %v8348 = vadd.f32 %v6525, %v8322
    %v8349 = vadd.f32 %v6526, %v8327
    %v8350 = vadd.f32 %v6527, %v8332
    %v8351 = vld [vmem:[%s5 + $0x1e] sm:$0x1]
    %v8352 = vlaneseq
    %v8353 = vshrl.u32 %v8352, 7
    %v8354 = vsub.s32 0, %v8353
    %v8355 = vrot.slane %v8351, %v8354
    %v8356 = vadd.f32 %v8335, %v8355
    %v8357 = vadd.f32 %v8336, %v8355
    %v8358 = vadd.f32 %v8337, %v8355
    %v8359 = vadd.f32 %v8338, %v8355
    %v8360 = vadd.f32 %v8339, %v8355
    %v8361 = vadd.f32 %v8340, %v8355
    %v8362 = vadd.f32 %v8341, %v8355
    %v8363 = vadd.f32 %v8342, %v8355
    %v8364 = vadd.f32 %v8343, %v8355
    %v8365 = vadd.f32 %v8344, %v8355
    %v8366 = vadd.f32 %v8345, %v8355
    %v8367 = vadd.f32 %v8346, %v8355
    %v8368 = vadd.f32 %v8347, %v8355
    %v8369 = vadd.f32 %v8348, %v8355
    %v8370 = vadd.f32 %v8349, %v8355
    %v8371 = vadd.f32 %v8350, %v8355
    %v8372 = vld [vmem:[%s5 + $0x23] sm:$0x1]
    %v8373 = vld [vmem:[%s5 + $0x24] sm:$0x1]
    %v8374 = vld [vmem:[%s5 + $0x25] sm:$0x1]
    %v8375 = vld [vmem:[%s5 + $0x26] sm:$0x1]
    %s8376 = scalar_lea.vmem %s4, 80
    %v8377 = vld [vmem:[%s8376] sm:$0xff]
    %v8378 = vld [vmem:[%s8376 + $0x8] sm:$0xff]
    %v8379 = vld [vmem:[%s8376 + $0x10] sm:$0xff]
    %v8380 = vld [vmem:[%s8376 + $0x18] sm:$0xff]
    %v8381 = vld [vmem:[%s8376 + $0x20] sm:$0x1]
    %v8382 = vlaneseq
    %v8383 = vshrl.u32 %v8382, 7
    %v8384 = vsub.s32 0, %v8383
    %v8385 = vrot.slane %v8381, %v8384
    %v8387 = vsel %vm4222, %v7775, 0
    %v8390 = vsel %vm4222, %v7776, 0
    %8392 = vmatprep.subr.mxu0 0.0
    %8393 = vmatpush1.msra.mxu0 0.0
    %8394 = vmatprep.subr.mxu0 0.0
    %8395 = vmatpush1.msra.mxu0 0.0
    %8396 = vmatprep.subr.mxu0 0.0
    %8397 = vmatpush1.msra.mxu0 0.0
    %8398 = vmatprep.subr.mxu0 0.0
    %8399 = vmatpush1.msra.mxu0 0.0
    %8400 = vmatprep.subr.mxu0 0.0
    %8401 = vmatpush1.msra.mxu0 0.0
    %8402 = vmatprep.subr.mxu0 0.0
    %8403 = vmatpush1.msra.mxu0 0.0
    %8404 = vmatprep.subr.mxu0 0.0
    %8405 = vmatpush1.msra.mxu0 0.0
    %8406 = vmatprep.subr.mxu0 0.0
    %8407 = vmatpush1.msra.mxu0 0.0
    %8408 = vmatprep.subr.mxu0 0.0
    %8409 = vmatpush1.msra.mxu0 0.0
    %8410 = vmatprep.subr.mxu0 0.0
    %8411 = vmatpush1.msra.mxu0 0.0
    %8412 = vmatprep.subr.mxu0 0.0
    %8413 = vmatpush1.msra.mxu0 0.0
    %8414 = vmatprep.subr.mxu0 0.0
    %8415 = vmatpush1.msra.mxu0 0.0
    %8416 = vmatprep.subr.mxu0 0.0
    %8417 = vmatpush1.msra.mxu0 %v8380
    %8418 = vmatprep.subr.mxu0 0.0
    %8419 = vmatpush1.msra.mxu0 %v8379
    %8420 = vmatprep.subr.mxu0 0.0
    %8421 = vmatpush1.msra.mxu0 %v8378
    %8422 = vmatprep.subr.mxu0 0.0
    %8423 = vmatpush1.msra.mxu0 %v8377
    %8424 = vmatprep.subr.mxu0 0.0
    %8425 = vmatpush2.msra.mxu0 0.0
    %8426 = vmatprep.subr.mxu0 0.0
    %8427 = vmatpush2.msra.mxu0 0.0
    %8428 = vmatprep.subr.mxu0 0.0
    %8429 = vmatpush2.msra.mxu0 0.0
    %8430 = vmatprep.subr.mxu0 0.0
    %8431 = vmatpush2.msra.mxu0 0.0
    %8432 = vmatprep.subr.mxu0 0.0
    %8433 = vmatpush2.msra.mxu0 0.0
    %8434 = vmatprep.subr.mxu0 0.0
    %8435 = vmatpush2.msra.mxu0 0.0
    %8436 = vmatprep.subr.mxu0 0.0
    %8437 = vmatpush2.msra.mxu0 0.0
    %8438 = vmatprep.subr.mxu0 0.0
    %8439 = vmatpush2.msra.mxu0 0.0
    %8440 = vmatprep.subr.mxu0 0.0
    %8441 = vmatpush2.msra.mxu0 0.0
    %8442 = vmatprep.subr.mxu0 0.0
    %8443 = vmatpush2.msra.mxu0 0.0
    %8444 = vmatprep.subr.mxu0 0.0
    %8445 = vmatpush2.msra.mxu0 0.0
    %8446 = vmatprep.subr.mxu0 0.0
    %8447 = vmatpush2.msra.mxu0 0.0
    %8448 = vmatprep.subr.mxu0 0.0
    %8449 = vmatpush2.msra.mxu0 0.0
    %8450 = vmatprep.subr.mxu0 0.0
    %8451 = vmatpush2.msra.mxu0 0.0
    %8452 = vmatprep.subr.mxu0 0.0
    %8453 = vmatpush2.msra.mxu0 0.0
    %8454 = vmatprep.subr.mxu0 0.0
    %8455 = vmatpush2.msra.mxu0 0.0
    %8456 = vmatprep.mubr.f32.mxu0 0.0
    %8457 = vmatmul.mubr.f32.gmra.mxu0 %v8387
    %v8458 = vpop.f32.mrf.mxu0
    %v8459 = vadd.f32 %v8385, %v8458
    %v8460 = vpop.f32.mrf.mxu0
    %8461 = vmatprep.mubr.f32.mxu0 0.0
    %8462 = vmatmul.mubr.f32.gmra.mxu0 %v8390
    %v8463 = vpop.f32.mrf.mxu0
    %v8464 = vadd.f32 %v8385, %v8463
    %v8465 = vpop.f32.mrf.mxu0
    %8466 = vdwg.mxu0
    %s8467 = scalar_lea.vmem [#allocation2], 192
    %v8468 = vld [vmem:[%s8467] sm:$0xff]
    %v8469 = vld [vmem:[%s8467 + $0x8] sm:$0xff]
    %v8470 = vld [vmem:[%s8467 + $0x10] sm:$0xff]
    %v8471 = vld [vmem:[%s8467 + $0x18] sm:$0xff]
    %v8472 = vld [vmem:[%s5 + $0x20] sm:$0x1]
    %v8473 = vlaneseq
    %v8474 = vshrl.u32 %v8473, 7
    %v8475 = vsub.s32 0, %v8474
    %v8476 = vrot.slane %v8472, %v8475
    %v8478 = vsel %vm4222, %v8356, 0
    %v8481 = vsel %vm4222, %v8357, 0
    %v8484 = vsel %vm4222, %v8358, 0
    %v8487 = vsel %vm4222, %v8359, 0
    %v8490 = vsel %vm4222, %v8360, 0
    %v8493 = vsel %vm4222, %v8361, 0
    %v8496 = vsel %vm4222, %v8362, 0
    %v8499 = vsel %vm4222, %v8363, 0
    %v8502 = vsel %vm4222, %v8364, 0
    %v8505 = vsel %vm4222, %v8365, 0
    %v8508 = vsel %vm4222, %v8366, 0
    %v8511 = vsel %vm4222, %v8367, 0
    %v8514 = vsel %vm4222, %v8368, 0
    %v8517 = vsel %vm4222, %v8369, 0
    %v8520 = vsel %vm4222, %v8370, 0
    %v8523 = vsel %vm4222, %v8371, 0
    %8525 = vmatprep.subr.mxu0 0.0
    %8526 = vmatpush1.msra.mxu0 0.0
    %8527 = vmatprep.subr.mxu0 0.0
    %8528 = vmatpush1.msra.mxu0 0.0
    %8529 = vmatprep.subr.mxu0 0.0
    %8530 = vmatpush1.msra.mxu0 0.0
    %8531 = vmatprep.subr.mxu0 0.0
    %8532 = vmatpush1.msra.mxu0 0.0
    %8533 = vmatprep.subr.mxu0 0.0
    %8534 = vmatpush1.msra.mxu0 0.0
    %8535 = vmatprep.subr.mxu0 0.0
    %8536 = vmatpush1.msra.mxu0 0.0
    %8537 = vmatprep.subr.mxu0 0.0
    %8538 = vmatpush1.msra.mxu0 0.0
    %8539 = vmatprep.subr.mxu0 0.0
    %8540 = vmatpush1.msra.mxu0 0.0
    %8541 = vmatprep.subr.mxu0 0.0
    %8542 = vmatpush1.msra.mxu0 0.0
    %8543 = vmatprep.subr.mxu0 0.0
    %8544 = vmatpush1.msra.mxu0 0.0
    %8545 = vmatprep.subr.mxu0 0.0
    %8546 = vmatpush1.msra.mxu0 0.0
    %8547 = vmatprep.subr.mxu0 0.0
    %8548 = vmatpush1.msra.mxu0 0.0
    %8549 = vmatprep.subr.mxu0 0.0
    %8550 = vmatpush1.msra.mxu0 %v8471
    %8551 = vmatprep.subr.mxu0 0.0
    %8552 = vmatpush1.msra.mxu0 %v8470
    %8553 = vmatprep.subr.mxu0 0.0
    %8554 = vmatpush1.msra.mxu0 %v8469
    %8555 = vmatprep.subr.mxu0 0.0
    %8556 = vmatpush1.msra.mxu0 %v8468
    %8557 = vmatprep.subr.mxu0 0.0
    %8558 = vmatpush2.msra.mxu0 0.0
    %8559 = vmatprep.subr.mxu0 0.0
    %8560 = vmatpush2.msra.mxu0 0.0
    %8561 = vmatprep.subr.mxu0 0.0
    %8562 = vmatpush2.msra.mxu0 0.0
    %8563 = vmatprep.subr.mxu0 0.0
    %8564 = vmatpush2.msra.mxu0 0.0
    %8565 = vmatprep.subr.mxu0 0.0
    %8566 = vmatpush2.msra.mxu0 0.0
    %8567 = vmatprep.subr.mxu0 0.0
    %8568 = vmatpush2.msra.mxu0 0.0
    %8569 = vmatprep.subr.mxu0 0.0
    %8570 = vmatpush2.msra.mxu0 0.0
    %8571 = vmatprep.subr.mxu0 0.0
    %8572 = vmatpush2.msra.mxu0 0.0
    %8573 = vmatprep.subr.mxu0 0.0
    %8574 = vmatpush2.msra.mxu0 0.0
    %8575 = vmatprep.subr.mxu0 0.0
    %8576 = vmatpush2.msra.mxu0 0.0
    %8577 = vmatprep.subr.mxu0 0.0
    %8578 = vmatpush2.msra.mxu0 0.0
    %8579 = vmatprep.subr.mxu0 0.0
    %8580 = vmatpush2.msra.mxu0 0.0
    %8581 = vmatprep.subr.mxu0 0.0
    %8582 = vmatpush2.msra.mxu0 0.0
    %8583 = vmatprep.subr.mxu0 0.0
    %8584 = vmatpush2.msra.mxu0 0.0
    %8585 = vmatprep.subr.mxu0 0.0
    %8586 = vmatpush2.msra.mxu0 0.0
    %8587 = vmatprep.subr.mxu0 0.0
    %8588 = vmatpush2.msra.mxu0 0.0
    %8589 = vmatprep.mubr.f32.mxu0 0.0
    %8590 = vmatmul.mubr.f32.gmra.mxu0 %v8478
    %v8591 = vpop.f32.mrf.mxu0
    %v8592 = vadd.f32 %v8476, %v8591
    %v8593 = vpop.f32.mrf.mxu0
    %8594 = vmatprep.mubr.f32.mxu0 0.0
    %8595 = vmatmul.mubr.f32.gmra.mxu0 %v8481
    %v8596 = vpop.f32.mrf.mxu0
    %v8597 = vadd.f32 %v8476, %v8596
    %v8598 = vpop.f32.mrf.mxu0
    %8599 = vmatprep.mubr.f32.mxu0 0.0
    %8600 = vmatmul.mubr.f32.gmra.mxu0 %v8484
    %v8601 = vpop.f32.mrf.mxu0
    %v8602 = vadd.f32 %v8476, %v8601
    %v8603 = vpop.f32.mrf.mxu0
    %8604 = vmatprep.mubr.f32.mxu0 0.0
    %8605 = vmatmul.mubr.f32.gmra.mxu0 %v8487
    %v8606 = vpop.f32.mrf.mxu0
    %v8607 = vadd.f32 %v8476, %v8606
    %v8608 = vpop.f32.mrf.mxu0
    %8609 = vmatprep.mubr.f32.mxu0 0.0
    %8610 = vmatmul.mubr.f32.gmra.mxu0 %v8490
    %v8611 = vpop.f32.mrf.mxu0
    %v8612 = vadd.f32 %v8476, %v8611
    %v8613 = vpop.f32.mrf.mxu0
    %8614 = vmatprep.mubr.f32.mxu0 0.0
    %8615 = vmatmul.mubr.f32.gmra.mxu0 %v8493
    %v8616 = vpop.f32.mrf.mxu0
    %v8617 = vadd.f32 %v8476, %v8616
    %v8618 = vpop.f32.mrf.mxu0
    %8619 = vmatprep.mubr.f32.mxu0 0.0
    %8620 = vmatmul.mubr.f32.gmra.mxu0 %v8496
    %v8621 = vpop.f32.mrf.mxu0
    %v8622 = vadd.f32 %v8476, %v8621
    %v8623 = vpop.f32.mrf.mxu0
    %8624 = vmatprep.mubr.f32.mxu0 0.0
    %8625 = vmatmul.mubr.f32.gmra.mxu0 %v8499
    %v8626 = vpop.f32.mrf.mxu0
    %v8627 = vadd.f32 %v8476, %v8626
    %v8628 = vpop.f32.mrf.mxu0
    %8629 = vmatprep.mubr.f32.mxu0 0.0
    %8630 = vmatmul.mubr.f32.gmra.mxu0 %v8502
    %v8631 = vpop.f32.mrf.mxu0
    %v8632 = vadd.f32 %v8476, %v8631
    %v8633 = vpop.f32.mrf.mxu0
    %8634 = vmatprep.mubr.f32.mxu0 0.0
    %8635 = vmatmul.mubr.f32.gmra.mxu0 %v8505
    %v8636 = vpop.f32.mrf.mxu0
    %v8637 = vadd.f32 %v8476, %v8636
    %v8638 = vpop.f32.mrf.mxu0
    %8639 = vmatprep.mubr.f32.mxu0 0.0
    %8640 = vmatmul.mubr.f32.gmra.mxu0 %v8508
    %v8641 = vpop.f32.mrf.mxu0
    %v8642 = vadd.f32 %v8476, %v8641
    %v8643 = vpop.f32.mrf.mxu0
    %8644 = vmatprep.mubr.f32.mxu0 0.0
    %8645 = vmatmul.mubr.f32.gmra.mxu0 %v8511
    %v8646 = vpop.f32.mrf.mxu0
    %v8647 = vadd.f32 %v8476, %v8646
    %v8648 = vpop.f32.mrf.mxu0
    %8649 = vmatprep.mubr.f32.mxu0 0.0
    %8650 = vmatmul.mubr.f32.gmra.mxu0 %v8514
    %v8651 = vpop.f32.mrf.mxu0
    %v8652 = vadd.f32 %v8476, %v8651
    %v8653 = vpop.f32.mrf.mxu0
    %8654 = vmatprep.mubr.f32.mxu0 0.0
    %8655 = vmatmul.mubr.f32.gmra.mxu0 %v8517
    %v8656 = vpop.f32.mrf.mxu0
    %v8657 = vadd.f32 %v8476, %v8656
    %v8658 = vpop.f32.mrf.mxu0
    %8659 = vmatprep.mubr.f32.mxu0 0.0
    %8660 = vmatmul.mubr.f32.gmra.mxu0 %v8520
    %v8661 = vpop.f32.mrf.mxu0
    %v8662 = vadd.f32 %v8476, %v8661
    %v8663 = vpop.f32.mrf.mxu0
    %8664 = vmatprep.mubr.f32.mxu0 0.0
    %8665 = vmatmul.mubr.f32.gmra.mxu0 %v8523
    %v8666 = vpop.f32.mrf.mxu0
    %v8667 = vadd.f32 %v8476, %v8666
    %v8668 = vpop.f32.mrf.mxu0
    %8669 = vdwg.mxu0
    %8672 = vrot.lane.b32.xlu0 %v8459, 64
    %v8673 = vpop.permute.xlu0 %8672
    %8674 = vrot.lane.b32.xlu0 %v8464, 64
    %v8675 = vpop.permute.xlu0 %8674
    %v8678 = vadd.f32 %v8592, %v8673
    %v8679 = vadd.f32 %v8597, %v8673
    %v8680 = vadd.f32 %v8602, %v8673
    %v8681 = vadd.f32 %v8607, %v8673
    %v8682 = vadd.f32 %v8612, %v8673
    %v8683 = vadd.f32 %v8617, %v8673
    %v8684 = vadd.f32 %v8622, %v8673
    %v8685 = vadd.f32 %v8627, %v8673
    %v8686 = vadd.f32 %v8632, %v8675
    %v8687 = vadd.f32 %v8637, %v8675
    %v8688 = vadd.f32 %v8642, %v8675
    %v8689 = vadd.f32 %v8647, %v8675
    %v8690 = vadd.f32 %v8652, %v8675
    %v8691 = vadd.f32 %v8657, %v8675
    %v8692 = vadd.f32 %v8662, %v8675
    %v8693 = vadd.f32 %v8667, %v8675
    %v8694 = vcombine.high %v8459, %v8459
    %v8696 = vunpack.c.l.s4 1966171168
    %v8697 = vunpack.c.0.s8 %v8696
    %v8698 = vlaneseq
    %v8699 = vshrl.u32 %v8698, 7
    %v8700 = vsub.s32 %v8697, %v8699
    %v8701 = vrot.slane %v8459, %v8700
    %v8703 = vunpack.c.l.s4 1966171168
    %v8704 = vunpack.c.0.s8 %v8703
    %v8705 = vlaneseq
    %v8706 = vshrl.u32 %v8705, 7
    %v8707 = vsub.s32 %v8704, %v8706
    %v8708 = vrot.slane %v8694, %v8707
    %v8709 = vcombine.high %v8701, %v8701
    %v8710 = vcombine.high %v8708, %v8708
    %v8712 = vunpack.c.l.s4 1966171168
    %v8713 = vunpack.c.0.s8 %v8712
    %v8714 = vlaneseq
    %v8715 = vshrl.u32 %v8714, 7
    %v8716 = vsub.s32 %v8713, %v8715
    %v8717 = vrot.slane %v8701, %v8716
    %v8719 = vunpack.c.l.s4 1966171168
    %v8720 = vunpack.c.0.s8 %v8719
    %v8721 = vlaneseq
    %v8722 = vshrl.u32 %v8721, 7
    %v8723 = vsub.s32 %v8720, %v8722
    %v8724 = vrot.slane %v8708, %v8723
    %v8726 = vunpack.c.l.s4 1966171168
    %v8727 = vunpack.c.0.s8 %v8726
    %v8728 = vlaneseq
    %v8729 = vshrl.u32 %v8728, 7
    %v8730 = vsub.s32 %v8727, %v8729
    %v8731 = vrot.slane %v8709, %v8730
    %v8733 = vunpack.c.l.s4 1966171168
    %v8734 = vunpack.c.0.s8 %v8733
    %v8735 = vlaneseq
    %v8736 = vshrl.u32 %v8735, 7
    %v8737 = vsub.s32 %v8734, %v8736
    %v8738 = vrot.slane %v8710, %v8737
    %v8739 = vcombine.high %v8717, %v8717
    %v8740 = vcombine.high %v8724, %v8724
    %v8741 = vcombine.high %v8731, %v8731
    %v8742 = vcombine.high %v8738, %v8738
    %v8743 = vcombine.high %v8464, %v8464
    %v8745 = vunpack.c.l.s4 1966171168
    %v8746 = vunpack.c.0.s8 %v8745
    %v8747 = vlaneseq
    %v8748 = vshrl.u32 %v8747, 7
    %v8749 = vsub.s32 %v8746, %v8748
    %v8750 = vrot.slane %v8464, %v8749
    %v8752 = vunpack.c.l.s4 1966171168
    %v8753 = vunpack.c.0.s8 %v8752
    %v8754 = vlaneseq
    %v8755 = vshrl.u32 %v8754, 7
    %v8756 = vsub.s32 %v8753, %v8755
    %v8757 = vrot.slane %v8743, %v8756
    %v8758 = vcombine.high %v8750, %v8750
    %v8759 = vcombine.high %v8757, %v8757
    %v8761 = vunpack.c.l.s4 1966171168
    %v8762 = vunpack.c.0.s8 %v8761
    %v8763 = vlaneseq
    %v8764 = vshrl.u32 %v8763, 7
    %v8765 = vsub.s32 %v8762, %v8764
    %v8766 = vrot.slane %v8750, %v8765
    %v8768 = vunpack.c.l.s4 1966171168
    %v8769 = vunpack.c.0.s8 %v8768
    %v8770 = vlaneseq
    %v8771 = vshrl.u32 %v8770, 7
    %v8772 = vsub.s32 %v8769, %v8771
    %v8773 = vrot.slane %v8757, %v8772
    %v8775 = vunpack.c.l.s4 1966171168
    %v8776 = vunpack.c.0.s8 %v8775
    %v8777 = vlaneseq
    %v8778 = vshrl.u32 %v8777, 7
    %v8779 = vsub.s32 %v8776, %v8778
    %v8780 = vrot.slane %v8758, %v8779
    %v8782 = vunpack.c.l.s4 1966171168
    %v8783 = vunpack.c.0.s8 %v8782
    %v8784 = vlaneseq
    %v8785 = vshrl.u32 %v8784, 7
    %v8786 = vsub.s32 %v8783, %v8785
    %v8787 = vrot.slane %v8759, %v8786
    %v8788 = vcombine.high %v8766, %v8766
    %v8789 = vcombine.high %v8773, %v8773
    %v8790 = vcombine.high %v8780, %v8780
    %v8791 = vcombine.high %v8787, %v8787
    %v8792 = vlaneseq
    %v8793 = vshrl.u32 %v8792, 7
    %v8794 = vsub.s32 0, %v8793
    %v8795 = vrot.slane %v8717, %v8794
    %v8796 = vlaneseq
    %v8797 = vshrl.u32 %v8796, 7
    %v8798 = vsub.s32 0, %v8797
    %v8799 = vrot.slane %v8731, %v8798
    %v8800 = vlaneseq
    %v8801 = vshrl.u32 %v8800, 7
    %v8802 = vsub.s32 0, %v8801
    %v8803 = vrot.slane %v8739, %v8802
    %v8804 = vlaneseq
    %v8805 = vshrl.u32 %v8804, 7
    %v8806 = vsub.s32 0, %v8805
    %v8807 = vrot.slane %v8741, %v8806
    %v8808 = vlaneseq
    %v8809 = vshrl.u32 %v8808, 7
    %v8810 = vsub.s32 0, %v8809
    %v8811 = vrot.slane %v8724, %v8810
    %v8812 = vlaneseq
    %v8813 = vshrl.u32 %v8812, 7
    %v8814 = vsub.s32 0, %v8813
    %v8815 = vrot.slane %v8738, %v8814
    %v8816 = vlaneseq
    %v8817 = vshrl.u32 %v8816, 7
    %v8818 = vsub.s32 0, %v8817
    %v8819 = vrot.slane %v8740, %v8818
    %v8820 = vlaneseq
    %v8821 = vshrl.u32 %v8820, 7
    %v8822 = vsub.s32 0, %v8821
    %v8823 = vrot.slane %v8742, %v8822
    %v8824 = vlaneseq
    %v8825 = vshrl.u32 %v8824, 7
    %v8826 = vsub.s32 0, %v8825
    %v8827 = vrot.slane %v8766, %v8826
    %v8828 = vlaneseq
    %v8829 = vshrl.u32 %v8828, 7
    %v8830 = vsub.s32 0, %v8829
    %v8831 = vrot.slane %v8780, %v8830
    %v8832 = vlaneseq
    %v8833 = vshrl.u32 %v8832, 7
    %v8834 = vsub.s32 0, %v8833
    %v8835 = vrot.slane %v8788, %v8834
    %v8836 = vlaneseq
    %v8837 = vshrl.u32 %v8836, 7
    %v8838 = vsub.s32 0, %v8837
    %v8839 = vrot.slane %v8790, %v8838
    %v8840 = vlaneseq
    %v8841 = vshrl.u32 %v8840, 7
    %v8842 = vsub.s32 0, %v8841
    %v8843 = vrot.slane %v8773, %v8842
    %v8844 = vlaneseq
    %v8845 = vshrl.u32 %v8844, 7
    %v8846 = vsub.s32 0, %v8845
    %v8847 = vrot.slane %v8787, %v8846
    %v8848 = vlaneseq
    %v8849 = vshrl.u32 %v8848, 7
    %v8850 = vsub.s32 0, %v8849
    %v8851 = vrot.slane %v8789, %v8850
    %v8852 = vlaneseq
    %v8853 = vshrl.u32 %v8852, 7
    %v8854 = vsub.s32 0, %v8853
    %v8855 = vrot.slane %v8791, %v8854
    %8856 = vrot.lane.b32.xlu0 %v8795, 32
    %v8857 = vpop.permute.xlu0 %8856
    %8858 = vrot.lane.b32.xlu0 %v8799, 32
    %v8859 = vpop.permute.xlu0 %8858
    %8860 = vrot.lane.b32.xlu0 %v8803, 32
    %v8861 = vpop.permute.xlu0 %8860
    %8862 = vrot.lane.b32.xlu0 %v8807, 32
    %v8863 = vpop.permute.xlu0 %8862
    %8864 = vrot.lane.b32.xlu0 %v8811, 32
    %v8865 = vpop.permute.xlu0 %8864
    %8866 = vrot.lane.b32.xlu0 %v8815, 32
    %v8867 = vpop.permute.xlu0 %8866
    %8868 = vrot.lane.b32.xlu0 %v8819, 32
    %v8869 = vpop.permute.xlu0 %8868
    %8870 = vrot.lane.b32.xlu0 %v8823, 32
    %v8871 = vpop.permute.xlu0 %8870
    %8872 = vrot.lane.b32.xlu0 %v8827, 32
    %v8873 = vpop.permute.xlu0 %8872
    %8874 = vrot.lane.b32.xlu0 %v8831, 32
    %v8875 = vpop.permute.xlu0 %8874
    %8876 = vrot.lane.b32.xlu0 %v8835, 32
    %v8877 = vpop.permute.xlu0 %8876
    %8878 = vrot.lane.b32.xlu0 %v8839, 32
    %v8879 = vpop.permute.xlu0 %8878
    %8880 = vrot.lane.b32.xlu0 %v8843, 32
    %v8881 = vpop.permute.xlu0 %8880
    %8882 = vrot.lane.b32.xlu0 %v8847, 32
    %v8883 = vpop.permute.xlu0 %8882
    %8884 = vrot.lane.b32.xlu0 %v8851, 32
    %v8885 = vpop.permute.xlu0 %8884
    %8886 = vrot.lane.b32.xlu0 %v8855, 32
    %v8887 = vpop.permute.xlu0 %8886
    %v8904 = vadd.f32 %v8678, %v8857
    %v8905 = vadd.f32 %v8679, %v8859
    %v8906 = vadd.f32 %v8680, %v8861
    %v8907 = vadd.f32 %v8681, %v8863
    %v8908 = vadd.f32 %v8682, %v8865
    %v8909 = vadd.f32 %v8683, %v8867
    %v8910 = vadd.f32 %v8684, %v8869
    %v8911 = vadd.f32 %v8685, %v8871
    %v8912 = vadd.f32 %v8686, %v8873
    %v8913 = vadd.f32 %v8687, %v8875
    %v8914 = vadd.f32 %v8688, %v8877
    %v8915 = vadd.f32 %v8689, %v8879
    %v8916 = vadd.f32 %v8690, %v8881
    %v8917 = vadd.f32 %v8691, %v8883
    %v8918 = vadd.f32 %v8692, %v8885
    %v8919 = vadd.f32 %v8693, %v8887
    %v8920 = vsel %vm4222, %v8904, 0.0
    %8921 = vadd.xlane.f32.xlu0 %v8920
    %v8922 = vpop.xlane.xlu0 %8921
    %v8923 = vsel %vm4222, %v8905, 0.0
    %8924 = vadd.xlane.f32.xlu0 %v8923
    %v8925 = vpop.xlane.xlu0 %8924
    %v8926 = vsel %vm4222, %v8906, 0.0
    %8927 = vadd.xlane.f32.xlu0 %v8926
    %v8928 = vpop.xlane.xlu0 %8927
    %v8929 = vsel %vm4222, %v8907, 0.0
    %8930 = vadd.xlane.f32.xlu0 %v8929
    %v8931 = vpop.xlane.xlu0 %8930
    %v8932 = vsel %vm4222, %v8908, 0.0
    %8933 = vadd.xlane.f32.xlu0 %v8932
    %v8934 = vpop.xlane.xlu0 %8933
    %v8935 = vsel %vm4222, %v8909, 0.0
    %8936 = vadd.xlane.f32.xlu0 %v8935
    %v8937 = vpop.xlane.xlu0 %8936
    %v8938 = vsel %vm4222, %v8910, 0.0
    %8939 = vadd.xlane.f32.xlu0 %v8938
    %v8940 = vpop.xlane.xlu0 %8939
    %v8941 = vsel %vm4222, %v8911, 0.0
    %8942 = vadd.xlane.f32.xlu0 %v8941
    %v8943 = vpop.xlane.xlu0 %8942
    %v8944 = vsel %vm4222, %v8912, 0.0
    %8945 = vadd.xlane.f32.xlu0 %v8944
    %v8946 = vpop.xlane.xlu0 %8945
    %v8947 = vsel %vm4222, %v8913, 0.0
    %8948 = vadd.xlane.f32.xlu0 %v8947
    %v8949 = vpop.xlane.xlu0 %8948
    %v8950 = vsel %vm4222, %v8914, 0.0
    %8951 = vadd.xlane.f32.xlu0 %v8950
    %v8952 = vpop.xlane.xlu0 %8951
    %v8953 = vsel %vm4222, %v8915, 0.0
    %8954 = vadd.xlane.f32.xlu0 %v8953
    %v8955 = vpop.xlane.xlu0 %8954
    %v8956 = vsel %vm4222, %v8916, 0.0
    %8957 = vadd.xlane.f32.xlu0 %v8956
    %v8958 = vpop.xlane.xlu0 %8957
    %v8959 = vsel %vm4222, %v8917, 0.0
    %8960 = vadd.xlane.f32.xlu0 %v8959
    %v8961 = vpop.xlane.xlu0 %8960
    %v8962 = vsel %vm4222, %v8918, 0.0
    %8963 = vadd.xlane.f32.xlu0 %v8962
    %v8964 = vpop.xlane.xlu0 %8963
    %v8965 = vsel %vm4222, %v8919, 0.0
    %8966 = vadd.xlane.f32.xlu0 %v8965
    %v8967 = vpop.xlane.xlu0 %8966
    %v8968 = vmul.f32 %v8922, %v5500
    %v8969 = vmul.f32 %v8925, %v5500
    %v8970 = vmul.f32 %v8928, %v5500
    %v8971 = vmul.f32 %v8931, %v5500
    %v8972 = vmul.f32 %v8934, %v5500
    %v8973 = vmul.f32 %v8937, %v5500
    %v8974 = vmul.f32 %v8940, %v5500
    %v8975 = vmul.f32 %v8943, %v5500
    %v8976 = vmul.f32 %v8946, %v5500
    %v8977 = vmul.f32 %v8949, %v5500
    %v8978 = vmul.f32 %v8952, %v5500
    %v8979 = vmul.f32 %v8955, %v5500
    %v8980 = vmul.f32 %v8958, %v5500
    %v8981 = vmul.f32 %v8961, %v5500
    %v8982 = vmul.f32 %v8964, %v5500
    %v8983 = vmul.f32 %v8967, %v5500
    %v8984 = vsub.f32 %v8904, %v8968
    %v8985 = vsub.f32 %v8905, %v8969
    %v8986 = vsub.f32 %v8906, %v8970
    %v8987 = vsub.f32 %v8907, %v8971
    %v8988 = vsub.f32 %v8908, %v8972
    %v8989 = vsub.f32 %v8909, %v8973
    %v8990 = vsub.f32 %v8910, %v8974
    %v8991 = vsub.f32 %v8911, %v8975
    %v8992 = vsub.f32 %v8912, %v8976
    %v8993 = vsub.f32 %v8913, %v8977
    %v8994 = vsub.f32 %v8914, %v8978
    %v8995 = vsub.f32 %v8915, %v8979
    %v8996 = vsub.f32 %v8916, %v8980
    %v8997 = vsub.f32 %v8917, %v8981
    %v8998 = vsub.f32 %v8918, %v8982
    %v8999 = vsub.f32 %v8919, %v8983
    %v9000 = vmul.f32 %v8984, %v8984
    %v9001 = vmul.f32 %v8985, %v8985
    %v9002 = vmul.f32 %v8986, %v8986
    %v9003 = vmul.f32 %v8987, %v8987
    %v9004 = vmul.f32 %v8988, %v8988
    %v9005 = vmul.f32 %v8989, %v8989
    %v9006 = vmul.f32 %v8990, %v8990
    %v9007 = vmul.f32 %v8991, %v8991
    %v9008 = vmul.f32 %v8992, %v8992
    %v9009 = vmul.f32 %v8993, %v8993
    %v9010 = vmul.f32 %v8994, %v8994
    %v9011 = vmul.f32 %v8995, %v8995
    %v9012 = vmul.f32 %v8996, %v8996
    %v9013 = vmul.f32 %v8997, %v8997
    %v9014 = vmul.f32 %v8998, %v8998
    %v9015 = vmul.f32 %v8999, %v8999
    %v9016 = vsel %vm4222, %v9000, 0.0
    %9017 = vadd.xlane.f32.xlu0 %v9016
    %v9018 = vpop.xlane.xlu0 %9017
    %v9019 = vsel %vm4222, %v9001, 0.0
    %9020 = vadd.xlane.f32.xlu0 %v9019
    %v9021 = vpop.xlane.xlu0 %9020
    %v9022 = vsel %vm4222, %v9002, 0.0
    %9023 = vadd.xlane.f32.xlu0 %v9022
    %v9024 = vpop.xlane.xlu0 %9023
    %v9025 = vsel %vm4222, %v9003, 0.0
    %9026 = vadd.xlane.f32.xlu0 %v9025
    %v9027 = vpop.xlane.xlu0 %9026
    %v9028 = vsel %vm4222, %v9004, 0.0
    %9029 = vadd.xlane.f32.xlu0 %v9028
    %v9030 = vpop.xlane.xlu0 %9029
    %v9031 = vsel %vm4222, %v9005, 0.0
    %9032 = vadd.xlane.f32.xlu0 %v9031
    %v9033 = vpop.xlane.xlu0 %9032
    %v9034 = vsel %vm4222, %v9006, 0.0
    %9035 = vadd.xlane.f32.xlu0 %v9034
    %v9036 = vpop.xlane.xlu0 %9035
    %v9037 = vsel %vm4222, %v9007, 0.0
    %9038 = vadd.xlane.f32.xlu0 %v9037
    %v9039 = vpop.xlane.xlu0 %9038
    %v9040 = vsel %vm4222, %v9008, 0.0
    %9041 = vadd.xlane.f32.xlu0 %v9040
    %v9042 = vpop.xlane.xlu0 %9041
    %v9043 = vsel %vm4222, %v9009, 0.0
    %9044 = vadd.xlane.f32.xlu0 %v9043
    %v9045 = vpop.xlane.xlu0 %9044
    %v9046 = vsel %vm4222, %v9010, 0.0
    %9047 = vadd.xlane.f32.xlu0 %v9046
    %v9048 = vpop.xlane.xlu0 %9047
    %v9049 = vsel %vm4222, %v9011, 0.0
    %9050 = vadd.xlane.f32.xlu0 %v9049
    %v9051 = vpop.xlane.xlu0 %9050
    %v9052 = vsel %vm4222, %v9012, 0.0
    %9053 = vadd.xlane.f32.xlu0 %v9052
    %v9054 = vpop.xlane.xlu0 %9053
    %v9055 = vsel %vm4222, %v9013, 0.0
    %9056 = vadd.xlane.f32.xlu0 %v9055
    %v9057 = vpop.xlane.xlu0 %9056
    %v9058 = vsel %vm4222, %v9014, 0.0
    %9059 = vadd.xlane.f32.xlu0 %v9058
    %v9060 = vpop.xlane.xlu0 %9059
    %v9061 = vsel %vm4222, %v9015, 0.0
    %9062 = vadd.xlane.f32.xlu0 %v9061
    %v9063 = vpop.xlane.xlu0 %9062
    %v9064 = vmul.f32 %v9018, %v5500
    %v9065 = vmul.f32 %v9021, %v5500
    %v9066 = vmul.f32 %v9024, %v5500
    %v9067 = vmul.f32 %v9027, %v5500
    %v9068 = vmul.f32 %v9030, %v5500
    %v9069 = vmul.f32 %v9033, %v5500
    %v9070 = vmul.f32 %v9036, %v5500
    %v9071 = vmul.f32 %v9039, %v5500
    %v9072 = vmul.f32 %v9042, %v5500
    %v9073 = vmul.f32 %v9045, %v5500
    %v9074 = vmul.f32 %v9048, %v5500
    %v9075 = vmul.f32 %v9051, %v5500
    %v9076 = vmul.f32 %v9054, %v5500
    %v9077 = vmul.f32 %v9057, %v5500
    %v9078 = vmul.f32 %v9060, %v5500
    %v9079 = vmul.f32 %v9063, %v5500
    %v9080 = vadd.f32 %v9064, 1e-05
    %v9081 = vadd.f32 %v9065, 1e-05
    %v9082 = vadd.f32 %v9066, 1e-05
    %v9083 = vadd.f32 %v9067, 1e-05
    %v9084 = vadd.f32 %v9068, 1e-05
    %v9085 = vadd.f32 %v9069, 1e-05
    %v9086 = vadd.f32 %v9070, 1e-05
    %v9087 = vadd.f32 %v9071, 1e-05
    %v9088 = vadd.f32 %v9072, 1e-05
    %v9089 = vadd.f32 %v9073, 1e-05
    %v9090 = vadd.f32 %v9074, 1e-05
    %v9091 = vadd.f32 %v9075, 1e-05
    %v9092 = vadd.f32 %v9076, 1e-05
    %v9093 = vadd.f32 %v9077, 1e-05
    %v9094 = vadd.f32 %v9078, 1e-05
    %v9095 = vadd.f32 %v9079, 1e-05
    %v9096 = vrsqrt.pop %v9080
    %v9097 = vrsqrt.pop %v9081
    %v9098 = vrsqrt.pop %v9082
    %v9099 = vrsqrt.pop %v9083
    %v9100 = vrsqrt.pop %v9084
    %v9101 = vrsqrt.pop %v9085
    %v9102 = vrsqrt.pop %v9086
    %v9103 = vrsqrt.pop %v9087
    %v9104 = vrsqrt.pop %v9088
    %v9105 = vrsqrt.pop %v9089
    %v9106 = vrsqrt.pop %v9090
    %v9107 = vrsqrt.pop %v9091
    %v9108 = vrsqrt.pop %v9092
    %v9109 = vrsqrt.pop %v9093
    %v9110 = vrsqrt.pop %v9094
    %v9111 = vrsqrt.pop %v9095
    %v9112 = vmul.f32 %v8984, %v9096
    %v9113 = vmul.f32 %v8985, %v9097
    %v9114 = vmul.f32 %v8986, %v9098
    %v9115 = vmul.f32 %v8987, %v9099
    %v9116 = vmul.f32 %v8988, %v9100
    %v9117 = vmul.f32 %v8989, %v9101
    %v9118 = vmul.f32 %v8990, %v9102
    %v9119 = vmul.f32 %v8991, %v9103
    %v9120 = vmul.f32 %v8992, %v9104
    %v9121 = vmul.f32 %v8993, %v9105
    %v9122 = vmul.f32 %v8994, %v9106
    %v9123 = vmul.f32 %v8995, %v9107
    %v9124 = vmul.f32 %v8996, %v9108
    %v9125 = vmul.f32 %v8997, %v9109
    %v9126 = vmul.f32 %v8998, %v9110
    %v9127 = vmul.f32 %v8999, %v9111
    %v9128 = vlaneseq
    %v9129 = vshrl.u32 %v9128, 7
    %v9130 = vsub.s32 0, %v9129
    %v9131 = vrot.slane %v8372, %v9130
    %v9132 = vmul.f32 %v9112, %v9131
    %v9133 = vmul.f32 %v9113, %v9131
    %v9134 = vmul.f32 %v9114, %v9131
    %v9135 = vmul.f32 %v9115, %v9131
    %v9136 = vmul.f32 %v9116, %v9131
    %v9137 = vmul.f32 %v9117, %v9131
    %v9138 = vmul.f32 %v9118, %v9131
    %v9139 = vmul.f32 %v9119, %v9131
    %v9140 = vmul.f32 %v9120, %v9131
    %v9141 = vmul.f32 %v9121, %v9131
    %v9142 = vmul.f32 %v9122, %v9131
    %v9143 = vmul.f32 %v9123, %v9131
    %v9144 = vmul.f32 %v9124, %v9131
    %v9145 = vmul.f32 %v9125, %v9131
    %v9146 = vmul.f32 %v9126, %v9131
    %v9147 = vmul.f32 %v9127, %v9131
    %v9148 = vlaneseq
    %v9149 = vshrl.u32 %v9148, 7
    %v9150 = vsub.s32 0, %v9149
    %v9151 = vrot.slane %v8373, %v9150
    %v9152 = vadd.f32 %v9132, %v9151
    %v9153 = vadd.f32 %v9133, %v9151
    %v9154 = vadd.f32 %v9134, %v9151
    %v9155 = vadd.f32 %v9135, %v9151
    %v9156 = vadd.f32 %v9136, %v9151
    %v9157 = vadd.f32 %v9137, %v9151
    %v9158 = vadd.f32 %v9138, %v9151
    %v9159 = vadd.f32 %v9139, %v9151
    %v9160 = vadd.f32 %v9140, %v9151
    %v9161 = vadd.f32 %v9141, %v9151
    %v9162 = vadd.f32 %v9142, %v9151
    %v9163 = vadd.f32 %v9143, %v9151
    %v9164 = vadd.f32 %v9144, %v9151
    %v9165 = vadd.f32 %v9145, %v9151
    %v9166 = vadd.f32 %v9146, %v9151
    %v9167 = vadd.f32 %v9147, %v9151
    %v9168 = vmax.f32 %v9152, 0.0
    %v9169 = vmax.f32 %v9153, 0.0
    %v9170 = vmax.f32 %v9154, 0.0
    %v9171 = vmax.f32 %v9155, 0.0
    %v9172 = vmax.f32 %v9156, 0.0
    %v9173 = vmax.f32 %v9157, 0.0
    %v9174 = vmax.f32 %v9158, 0.0
    %v9175 = vmax.f32 %v9159, 0.0
    %v9176 = vmax.f32 %v9160, 0.0
    %v9177 = vmax.f32 %v9161, 0.0
    %v9178 = vmax.f32 %v9162, 0.0
    %v9179 = vmax.f32 %v9163, 0.0
    %v9180 = vmax.f32 %v9164, 0.0
    %v9181 = vmax.f32 %v9165, 0.0
    %v9182 = vmax.f32 %v9166, 0.0
    %v9183 = vmax.f32 %v9167, 0.0
    %s9184 = scalar_lea.vmem [#allocation2], 384
    %v9185 = vld [vmem:[%s9184] sm:$0xff]
    %v9186 = vld [vmem:[%s9184 + $0x8] sm:$0xff]
    %v9187 = vld [vmem:[%s9184 + $0x10] sm:$0xff]
    %v9188 = vld [vmem:[%s9184 + $0x18] sm:$0xff]
    %v9189 = vld [vmem:[%s5 + $0x28] sm:$0x1]
    %v9190 = vlaneseq
    %v9191 = vshrl.u32 %v9190, 7
    %v9192 = vsub.s32 0, %v9191
    %v9193 = vrot.slane %v9189, %v9192
    %9194 = vmatprep.subr.mxu0 0.0
    %9195 = vmatpush1.msra.mxu0 0.0
    %9196 = vmatprep.subr.mxu0 0.0
    %9197 = vmatpush1.msra.mxu0 0.0
    %9198 = vmatprep.subr.mxu0 0.0
    %9199 = vmatpush1.msra.mxu0 0.0
    %9200 = vmatprep.subr.mxu0 0.0
    %9201 = vmatpush1.msra.mxu0 0.0
    %9202 = vmatprep.subr.mxu0 0.0
    %9203 = vmatpush1.msra.mxu0 0.0
    %9204 = vmatprep.subr.mxu0 0.0
    %9205 = vmatpush1.msra.mxu0 0.0
    %9206 = vmatprep.subr.mxu0 0.0
    %9207 = vmatpush1.msra.mxu0 0.0
    %9208 = vmatprep.subr.mxu0 0.0
    %9209 = vmatpush1.msra.mxu0 0.0
    %9210 = vmatprep.subr.mxu0 0.0
    %9211 = vmatpush1.msra.mxu0 0.0
    %9212 = vmatprep.subr.mxu0 0.0
    %9213 = vmatpush1.msra.mxu0 0.0
    %9214 = vmatprep.subr.mxu0 0.0
    %9215 = vmatpush1.msra.mxu0 0.0
    %9216 = vmatprep.subr.mxu0 0.0
    %9217 = vmatpush1.msra.mxu0 0.0
    %9218 = vmatprep.subr.mxu0 0.0
    %9219 = vmatpush1.msra.mxu0 %v9188
    %9220 = vmatprep.subr.mxu0 0.0
    %9221 = vmatpush1.msra.mxu0 %v9187
    %9222 = vmatprep.subr.mxu0 0.0
    %9223 = vmatpush1.msra.mxu0 %v9186
    %9224 = vmatprep.subr.mxu0 0.0
    %9225 = vmatpush1.msra.mxu0 %v9185
    %9226 = vmatprep.subr.mxu0 0.0
    %9227 = vmatpush2.msra.mxu0 0.0
    %9228 = vmatprep.subr.mxu0 0.0
    %9229 = vmatpush2.msra.mxu0 0.0
    %9230 = vmatprep.subr.mxu0 0.0
    %9231 = vmatpush2.msra.mxu0 0.0
    %9232 = vmatprep.subr.mxu0 0.0
    %9233 = vmatpush2.msra.mxu0 0.0
    %9234 = vmatprep.subr.mxu0 0.0
    %9235 = vmatpush2.msra.mxu0 0.0
    %9236 = vmatprep.subr.mxu0 0.0
    %9237 = vmatpush2.msra.mxu0 0.0
    %9238 = vmatprep.subr.mxu0 0.0
    %9239 = vmatpush2.msra.mxu0 0.0
    %9240 = vmatprep.subr.mxu0 0.0
    %9241 = vmatpush2.msra.mxu0 0.0
    %9242 = vmatprep.subr.mxu0 0.0
    %9243 = vmatpush2.msra.mxu0 0.0
    %9244 = vmatprep.subr.mxu0 0.0
    %9245 = vmatpush2.msra.mxu0 0.0
    %9246 = vmatprep.subr.mxu0 0.0
    %9247 = vmatpush2.msra.mxu0 0.0
    %9248 = vmatprep.subr.mxu0 0.0
    %9249 = vmatpush2.msra.mxu0 0.0
    %9250 = vmatprep.subr.mxu0 0.0
    %9251 = vmatpush2.msra.mxu0 0.0
    %9252 = vmatprep.subr.mxu0 0.0
    %9253 = vmatpush2.msra.mxu0 0.0
    %9254 = vmatprep.subr.mxu0 0.0
    %9255 = vmatpush2.msra.mxu0 0.0
    %9256 = vmatprep.subr.mxu0 0.0
    %9257 = vmatpush2.msra.mxu0 0.0
    %9258 = vmatprep.mubr.f32.mxu0 0.0
    %9259 = vmatmul.mubr.f32.gmra.mxu0 %v5810
    %v9260 = vpop.f32.mrf.mxu0
    %v9261 = vadd.f32 %v9193, %v9260
    %v9262 = vpop.f32.mrf.mxu0
    %9263 = vdwg.mxu0
    %v9266 = vunpack.c.l.s4 1966171168
    %v9267 = vunpack.c.0.s8 %v9266
    %v9268 = vlaneseq
    %v9269 = vshrl.u32 %v9268, 7
    %v9270 = vsub.s32 %v9267, %v9269
    %v9271 = vrot.slane %v9261, %v9270
    %v9272 = vcombine.high %v9271, %v9271
    %v9274 = vunpack.c.l.s4 1966171168
    %v9275 = vunpack.c.0.s8 %v9274
    %v9276 = vlaneseq
    %v9277 = vshrl.u32 %v9276, 7
    %v9278 = vsub.s32 %v9275, %v9277
    %v9279 = vrot.slane %v9271, %v9278
    %v9281 = vunpack.c.l.s4 1966171168
    %v9282 = vunpack.c.0.s8 %v9281
    %v9283 = vlaneseq
    %v9284 = vshrl.u32 %v9283, 7
    %v9285 = vsub.s32 %v9282, %v9284
    %v9286 = vrot.slane %v9272, %v9285
    %v9287 = vlaneseq
    %v9288 = vshrl.u32 %v9287, 7
    %v9289 = vsub.s32 0, %v9288
    %v9290 = vrot.slane %v9279, %v9289
    %v9291 = vlaneseq
    %v9292 = vshrl.u32 %v9291, 7
    %v9293 = vsub.s32 0, %v9292
    %v9294 = vrot.slane %v9286, %v9293
    %v9297 = vadd.f32 %v9168, %v9290
    %v9298 = vadd.f32 %v9169, %v9290
    %v9299 = vadd.f32 %v9170, %v9290
    %v9300 = vadd.f32 %v9171, %v9290
    %v9301 = vadd.f32 %v9172, %v9290
    %v9302 = vadd.f32 %v9173, %v9290
    %v9303 = vadd.f32 %v9174, %v9290
    %v9304 = vadd.f32 %v9175, %v9290
    %v9305 = vadd.f32 %v9176, %v9294
    %v9306 = vadd.f32 %v9177, %v9294
    %v9307 = vadd.f32 %v9178, %v9294
    %v9308 = vadd.f32 %v9179, %v9294
    %v9309 = vadd.f32 %v9180, %v9294
    %v9310 = vadd.f32 %v9181, %v9294
    %v9311 = vadd.f32 %v9182, %v9294
    %v9312 = vadd.f32 %v9183, %v9294
    %v9313 = vsel %vm4222, %v9297, 0.0
    %9314 = vadd.xlane.f32.xlu0 %v9313
    %v9315 = vpop.xlane.xlu0 %9314
    %v9316 = vsel %vm4222, %v9298, 0.0
    %9317 = vadd.xlane.f32.xlu0 %v9316
    %v9318 = vpop.xlane.xlu0 %9317
    %v9319 = vsel %vm4222, %v9299, 0.0
    %9320 = vadd.xlane.f32.xlu0 %v9319
    %v9321 = vpop.xlane.xlu0 %9320
    %v9322 = vsel %vm4222, %v9300, 0.0
    %9323 = vadd.xlane.f32.xlu0 %v9322
    %v9324 = vpop.xlane.xlu0 %9323
    %v9325 = vsel %vm4222, %v9301, 0.0
    %9326 = vadd.xlane.f32.xlu0 %v9325
    %v9327 = vpop.xlane.xlu0 %9326
    %v9328 = vsel %vm4222, %v9302, 0.0
    %9329 = vadd.xlane.f32.xlu0 %v9328
    %v9330 = vpop.xlane.xlu0 %9329
    %v9331 = vsel %vm4222, %v9303, 0.0
    %9332 = vadd.xlane.f32.xlu0 %v9331
    %v9333 = vpop.xlane.xlu0 %9332
    %v9334 = vsel %vm4222, %v9304, 0.0
    %9335 = vadd.xlane.f32.xlu0 %v9334
    %v9336 = vpop.xlane.xlu0 %9335
    %v9337 = vsel %vm4222, %v9305, 0.0
    %9338 = vadd.xlane.f32.xlu0 %v9337
    %v9339 = vpop.xlane.xlu0 %9338
    %v9340 = vsel %vm4222, %v9306, 0.0
    %9341 = vadd.xlane.f32.xlu0 %v9340
    %v9342 = vpop.xlane.xlu0 %9341
    %v9343 = vsel %vm4222, %v9307, 0.0
    %9344 = vadd.xlane.f32.xlu0 %v9343
    %v9345 = vpop.xlane.xlu0 %9344
    %v9346 = vsel %vm4222, %v9308, 0.0
    %9347 = vadd.xlane.f32.xlu0 %v9346
    %v9348 = vpop.xlane.xlu0 %9347
    %v9349 = vsel %vm4222, %v9309, 0.0
    %9350 = vadd.xlane.f32.xlu0 %v9349
    %v9351 = vpop.xlane.xlu0 %9350
    %v9352 = vsel %vm4222, %v9310, 0.0
    %9353 = vadd.xlane.f32.xlu0 %v9352
    %v9354 = vpop.xlane.xlu0 %9353
    %v9355 = vsel %vm4222, %v9311, 0.0
    %9356 = vadd.xlane.f32.xlu0 %v9355
    %v9357 = vpop.xlane.xlu0 %9356
    %v9358 = vsel %vm4222, %v9312, 0.0
    %9359 = vadd.xlane.f32.xlu0 %v9358
    %v9360 = vpop.xlane.xlu0 %9359
    %v9361 = vmul.f32 %v9315, %v5500
    %v9362 = vmul.f32 %v9318, %v5500
    %v9363 = vmul.f32 %v9321, %v5500
    %v9364 = vmul.f32 %v9324, %v5500
    %v9365 = vmul.f32 %v9327, %v5500
    %v9366 = vmul.f32 %v9330, %v5500
    %v9367 = vmul.f32 %v9333, %v5500
    %v9368 = vmul.f32 %v9336, %v5500
    %v9369 = vmul.f32 %v9339, %v5500
    %v9370 = vmul.f32 %v9342, %v5500
    %v9371 = vmul.f32 %v9345, %v5500
    %v9372 = vmul.f32 %v9348, %v5500
    %v9373 = vmul.f32 %v9351, %v5500
    %v9374 = vmul.f32 %v9354, %v5500
    %v9375 = vmul.f32 %v9357, %v5500
    %v9376 = vmul.f32 %v9360, %v5500
    %v9377 = vsub.f32 %v9297, %v9361
    %v9378 = vsub.f32 %v9298, %v9362
    %v9379 = vsub.f32 %v9299, %v9363
    %v9380 = vsub.f32 %v9300, %v9364
    %v9381 = vsub.f32 %v9301, %v9365
    %v9382 = vsub.f32 %v9302, %v9366
    %v9383 = vsub.f32 %v9303, %v9367
    %v9384 = vsub.f32 %v9304, %v9368
    %v9385 = vsub.f32 %v9305, %v9369
    %v9386 = vsub.f32 %v9306, %v9370
    %v9387 = vsub.f32 %v9307, %v9371
    %v9388 = vsub.f32 %v9308, %v9372
    %v9389 = vsub.f32 %v9309, %v9373
    %v9390 = vsub.f32 %v9310, %v9374
    %v9391 = vsub.f32 %v9311, %v9375
    %v9392 = vsub.f32 %v9312, %v9376
    %v9393 = vmul.f32 %v9377, %v9377
    %v9394 = vmul.f32 %v9378, %v9378
    %v9395 = vmul.f32 %v9379, %v9379
    %v9396 = vmul.f32 %v9380, %v9380
    %v9397 = vmul.f32 %v9381, %v9381
    %v9398 = vmul.f32 %v9382, %v9382
    %v9399 = vmul.f32 %v9383, %v9383
    %v9400 = vmul.f32 %v9384, %v9384
    %v9401 = vmul.f32 %v9385, %v9385
    %v9402 = vmul.f32 %v9386, %v9386
    %v9403 = vmul.f32 %v9387, %v9387
    %v9404 = vmul.f32 %v9388, %v9388
    %v9405 = vmul.f32 %v9389, %v9389
    %v9406 = vmul.f32 %v9390, %v9390
    %v9407 = vmul.f32 %v9391, %v9391
    %v9408 = vmul.f32 %v9392, %v9392
    %v9409 = vsel %vm4222, %v9393, 0.0
    %9410 = vadd.xlane.f32.xlu0 %v9409
    %v9411 = vpop.xlane.xlu0 %9410
    %v9412 = vsel %vm4222, %v9394, 0.0
    %9413 = vadd.xlane.f32.xlu0 %v9412
    %v9414 = vpop.xlane.xlu0 %9413
    %v9415 = vsel %vm4222, %v9395, 0.0
    %9416 = vadd.xlane.f32.xlu0 %v9415
    %v9417 = vpop.xlane.xlu0 %9416
    %v9418 = vsel %vm4222, %v9396, 0.0
    %9419 = vadd.xlane.f32.xlu0 %v9418
    %v9420 = vpop.xlane.xlu0 %9419
    %v9421 = vsel %vm4222, %v9397, 0.0
    %9422 = vadd.xlane.f32.xlu0 %v9421
    %v9423 = vpop.xlane.xlu0 %9422
    %v9424 = vsel %vm4222, %v9398, 0.0
    %9425 = vadd.xlane.f32.xlu0 %v9424
    %v9426 = vpop.xlane.xlu0 %9425
    %v9427 = vsel %vm4222, %v9399, 0.0
    %9428 = vadd.xlane.f32.xlu0 %v9427
    %v9429 = vpop.xlane.xlu0 %9428
    %v9430 = vsel %vm4222, %v9400, 0.0
    %9431 = vadd.xlane.f32.xlu0 %v9430
    %v9432 = vpop.xlane.xlu0 %9431
    %v9433 = vsel %vm4222, %v9401, 0.0
    %9434 = vadd.xlane.f32.xlu0 %v9433
    %v9435 = vpop.xlane.xlu0 %9434
    %v9436 = vsel %vm4222, %v9402, 0.0
    %9437 = vadd.xlane.f32.xlu0 %v9436
    %v9438 = vpop.xlane.xlu0 %9437
    %v9439 = vsel %vm4222, %v9403, 0.0
    %9440 = vadd.xlane.f32.xlu0 %v9439
    %v9441 = vpop.xlane.xlu0 %9440
    %v9442 = vsel %vm4222, %v9404, 0.0
    %9443 = vadd.xlane.f32.xlu0 %v9442
    %v9444 = vpop.xlane.xlu0 %9443
    %v9445 = vsel %vm4222, %v9405, 0.0
    %9446 = vadd.xlane.f32.xlu0 %v9445
    %v9447 = vpop.xlane.xlu0 %9446
    %v9448 = vsel %vm4222, %v9406, 0.0
    %9449 = vadd.xlane.f32.xlu0 %v9448
    %v9450 = vpop.xlane.xlu0 %9449
    %v9451 = vsel %vm4222, %v9407, 0.0
    %9452 = vadd.xlane.f32.xlu0 %v9451
    %v9453 = vpop.xlane.xlu0 %9452
    %v9454 = vsel %vm4222, %v9408, 0.0
    %9455 = vadd.xlane.f32.xlu0 %v9454
    %v9456 = vpop.xlane.xlu0 %9455
    %v9457 = vmul.f32 %v9411, %v5500
    %v9458 = vmul.f32 %v9414, %v5500
    %v9459 = vmul.f32 %v9417, %v5500
    %v9460 = vmul.f32 %v9420, %v5500
    %v9461 = vmul.f32 %v9423, %v5500
    %v9462 = vmul.f32 %v9426, %v5500
    %v9463 = vmul.f32 %v9429, %v5500
    %v9464 = vmul.f32 %v9432, %v5500
    %v9465 = vmul.f32 %v9435, %v5500
    %v9466 = vmul.f32 %v9438, %v5500
    %v9467 = vmul.f32 %v9441, %v5500
    %v9468 = vmul.f32 %v9444, %v5500
    %v9469 = vmul.f32 %v9447, %v5500
    %v9470 = vmul.f32 %v9450, %v5500
    %v9471 = vmul.f32 %v9453, %v5500
    %v9472 = vmul.f32 %v9456, %v5500
    %v9473 = vadd.f32 %v9457, 1e-05
    %v9474 = vadd.f32 %v9458, 1e-05
    %v9475 = vadd.f32 %v9459, 1e-05
    %v9476 = vadd.f32 %v9460, 1e-05
    %v9477 = vadd.f32 %v9461, 1e-05
    %v9478 = vadd.f32 %v9462, 1e-05
    %v9479 = vadd.f32 %v9463, 1e-05
    %v9480 = vadd.f32 %v9464, 1e-05
    %v9481 = vadd.f32 %v9465, 1e-05
    %v9482 = vadd.f32 %v9466, 1e-05
    %v9483 = vadd.f32 %v9467, 1e-05
    %v9484 = vadd.f32 %v9468, 1e-05
    %v9485 = vadd.f32 %v9469, 1e-05
    %v9486 = vadd.f32 %v9470, 1e-05
    %v9487 = vadd.f32 %v9471, 1e-05
    %v9488 = vadd.f32 %v9472, 1e-05
    %v9489 = vrsqrt.pop %v9473
    %v9490 = vrsqrt.pop %v9474
    %v9491 = vrsqrt.pop %v9475
    %v9492 = vrsqrt.pop %v9476
    %v9493 = vrsqrt.pop %v9477
    %v9494 = vrsqrt.pop %v9478
    %v9495 = vrsqrt.pop %v9479
    %v9496 = vrsqrt.pop %v9480
    %v9497 = vrsqrt.pop %v9481
    %v9498 = vrsqrt.pop %v9482
    %v9499 = vrsqrt.pop %v9483
    %v9500 = vrsqrt.pop %v9484
    %v9501 = vrsqrt.pop %v9485
    %v9502 = vrsqrt.pop %v9486
    %v9503 = vrsqrt.pop %v9487
    %v9504 = vrsqrt.pop %v9488
    %v9505 = vmul.f32 %v9377, %v9489
    %v9506 = vmul.f32 %v9378, %v9490
    %v9507 = vmul.f32 %v9379, %v9491
    %v9508 = vmul.f32 %v9380, %v9492
    %v9509 = vmul.f32 %v9381, %v9493
    %v9510 = vmul.f32 %v9382, %v9494
    %v9511 = vmul.f32 %v9383, %v9495
    %v9512 = vmul.f32 %v9384, %v9496
    %v9513 = vmul.f32 %v9385, %v9497
    %v9514 = vmul.f32 %v9386, %v9498
    %v9515 = vmul.f32 %v9387, %v9499
    %v9516 = vmul.f32 %v9388, %v9500
    %v9517 = vmul.f32 %v9389, %v9501
    %v9518 = vmul.f32 %v9390, %v9502
    %v9519 = vmul.f32 %v9391, %v9503
    %v9520 = vmul.f32 %v9392, %v9504
    %v9521 = vlaneseq
    %v9522 = vshrl.u32 %v9521, 7
    %v9523 = vsub.s32 0, %v9522
    %v9524 = vrot.slane %v8374, %v9523
    %v9525 = vmul.f32 %v9505, %v9524
    %v9526 = vmul.f32 %v9506, %v9524
    %v9527 = vmul.f32 %v9507, %v9524
    %v9528 = vmul.f32 %v9508, %v9524
    %v9529 = vmul.f32 %v9509, %v9524
    %v9530 = vmul.f32 %v9510, %v9524
    %v9531 = vmul.f32 %v9511, %v9524
    %v9532 = vmul.f32 %v9512, %v9524
    %v9533 = vmul.f32 %v9513, %v9524
    %v9534 = vmul.f32 %v9514, %v9524
    %v9535 = vmul.f32 %v9515, %v9524
    %v9536 = vmul.f32 %v9516, %v9524
    %v9537 = vmul.f32 %v9517, %v9524
    %v9538 = vmul.f32 %v9518, %v9524
    %v9539 = vmul.f32 %v9519, %v9524
    %v9540 = vmul.f32 %v9520, %v9524
    %v9541 = vlaneseq
    %v9542 = vshrl.u32 %v9541, 7
    %v9543 = vsub.s32 0, %v9542
    %v9544 = vrot.slane %v8375, %v9543
    %v9545 = vadd.f32 %v9525, %v9544
    %v9546 = vadd.f32 %v9526, %v9544
    %v9547 = vadd.f32 %v9527, %v9544
    %v9548 = vadd.f32 %v9528, %v9544
    %v9549 = vadd.f32 %v9529, %v9544
    %v9550 = vadd.f32 %v9530, %v9544
    %v9551 = vadd.f32 %v9531, %v9544
    %v9552 = vadd.f32 %v9532, %v9544
    %v9553 = vadd.f32 %v9533, %v9544
    %v9554 = vadd.f32 %v9534, %v9544
    %v9555 = vadd.f32 %v9535, %v9544
    %v9556 = vadd.f32 %v9536, %v9544
    %v9557 = vadd.f32 %v9537, %v9544
    %v9558 = vadd.f32 %v9538, %v9544
    %v9559 = vadd.f32 %v9539, %v9544
    %v9560 = vadd.f32 %v9540, %v9544
    %v9561 = vxor.u32 %v9545, 2147483648
    %v9562 = vxor.u32 %v9546, 2147483648
    %v9563 = vxor.u32 %v9547, 2147483648
    %v9564 = vxor.u32 %v9548, 2147483648
    %v9565 = vxor.u32 %v9549, 2147483648
    %v9566 = vxor.u32 %v9550, 2147483648
    %v9567 = vxor.u32 %v9551, 2147483648
    %v9568 = vxor.u32 %v9552, 2147483648
    %v9569 = vxor.u32 %v9553, 2147483648
    %v9570 = vxor.u32 %v9554, 2147483648
    %v9571 = vxor.u32 %v9555, 2147483648
    %v9572 = vxor.u32 %v9556, 2147483648
    %v9573 = vxor.u32 %v9557, 2147483648
    %v9574 = vxor.u32 %v9558, 2147483648
    %v9575 = vxor.u32 %v9559, 2147483648
    %v9576 = vxor.u32 %v9560, 2147483648
    %v9577 = vmul.f32 %v9561, 1.442695
    %v9578 = vpow.pop %v9577
    %v9579 = vmul.f32 %v9562, 1.442695
    %v9580 = vpow.pop %v9579
    %v9581 = vmul.f32 %v9563, 1.442695
    %v9582 = vpow.pop %v9581
    %v9583 = vmul.f32 %v9564, 1.442695
    %v9584 = vpow.pop %v9583
    %v9585 = vmul.f32 %v9565, 1.442695
    %v9586 = vpow.pop %v9585
    %v9587 = vmul.f32 %v9566, 1.442695
    %v9588 = vpow.pop %v9587
    %v9589 = vmul.f32 %v9567, 1.442695
    %v9590 = vpow.pop %v9589
    %v9591 = vmul.f32 %v9568, 1.442695
    %v9592 = vpow.pop %v9591
    %v9593 = vmul.f32 %v9569, 1.442695
    %v9594 = vpow.pop %v9593
    %v9595 = vmul.f32 %v9570, 1.442695
    %v9596 = vpow.pop %v9595
    %v9597 = vmul.f32 %v9571, 1.442695
    %v9598 = vpow.pop %v9597
    %v9599 = vmul.f32 %v9572, 1.442695
    %v9600 = vpow.pop %v9599
    %v9601 = vmul.f32 %v9573, 1.442695
    %v9602 = vpow.pop %v9601
    %v9603 = vmul.f32 %v9574, 1.442695
    %v9604 = vpow.pop %v9603
    %v9605 = vmul.f32 %v9575, 1.442695
    %v9606 = vpow.pop %v9605
    %v9607 = vmul.f32 %v9576, 1.442695
    %v9608 = vpow.pop %v9607
    %v9609 = vadd.f32 %v9578, 1.0
    %v9610 = vadd.f32 %v9580, 1.0
    %v9611 = vadd.f32 %v9582, 1.0
    %v9612 = vadd.f32 %v9584, 1.0
    %v9613 = vadd.f32 %v9586, 1.0
    %v9614 = vadd.f32 %v9588, 1.0
    %v9615 = vadd.f32 %v9590, 1.0
    %v9616 = vadd.f32 %v9592, 1.0
    %v9617 = vadd.f32 %v9594, 1.0
    %v9618 = vadd.f32 %v9596, 1.0
    %v9619 = vadd.f32 %v9598, 1.0
    %v9620 = vadd.f32 %v9600, 1.0
    %v9621 = vadd.f32 %v9602, 1.0
    %v9622 = vadd.f32 %v9604, 1.0
    %v9623 = vadd.f32 %v9606, 1.0
    %v9624 = vadd.f32 %v9608, 1.0
    %v9625 = vrcp.pop %v9609
    %v9626 = vmul.f32 1.0, %v9625
    %v9627 = vrcp.pop %v9610
    %v9628 = vmul.f32 1.0, %v9627
    %v9629 = vrcp.pop %v9611
    %v9630 = vmul.f32 1.0, %v9629
    %v9631 = vrcp.pop %v9612
    %v9632 = vmul.f32 1.0, %v9631
    %v9633 = vrcp.pop %v9613
    %v9634 = vmul.f32 1.0, %v9633
    %v9635 = vrcp.pop %v9614
    %v9636 = vmul.f32 1.0, %v9635
    %v9637 = vrcp.pop %v9615
    %v9638 = vmul.f32 1.0, %v9637
    %v9639 = vrcp.pop %v9616
    %v9640 = vmul.f32 1.0, %v9639
    %v9641 = vrcp.pop %v9617
    %v9642 = vmul.f32 1.0, %v9641
    %v9643 = vrcp.pop %v9618
    %v9644 = vmul.f32 1.0, %v9643
    %v9645 = vrcp.pop %v9619
    %v9646 = vmul.f32 1.0, %v9645
    %v9647 = vrcp.pop %v9620
    %v9648 = vmul.f32 1.0, %v9647
    %v9649 = vrcp.pop %v9621
    %v9650 = vmul.f32 1.0, %v9649
    %v9651 = vrcp.pop %v9622
    %v9652 = vmul.f32 1.0, %v9651
    %v9653 = vrcp.pop %v9623
    %v9654 = vmul.f32 1.0, %v9653
    %v9655 = vrcp.pop %v9624
    %v9656 = vmul.f32 1.0, %v9655
    %v9657 = vmul.f32 %v9545, %v9626
    %v9658 = vmul.f32 %v9546, %v9628
    %v9659 = vmul.f32 %v9547, %v9630
    %v9660 = vmul.f32 %v9548, %v9632
    %v9661 = vmul.f32 %v9549, %v9634
    %v9662 = vmul.f32 %v9550, %v9636
    %v9663 = vmul.f32 %v9551, %v9638
    %v9664 = vmul.f32 %v9552, %v9640
    %v9665 = vmul.f32 %v9553, %v9642
    %v9666 = vmul.f32 %v9554, %v9644
    %v9667 = vmul.f32 %v9555, %v9646
    %v9668 = vmul.f32 %v9556, %v9648
    %v9669 = vmul.f32 %v9557, %v9650
    %v9670 = vmul.f32 %v9558, %v9652
    %v9671 = vmul.f32 %v9559, %v9654
    %v9672 = vmul.f32 %v9560, %v9656
    %s9673 = scalar_lea.vmem [#allocation2], 288
    %v9674 = vld [vmem:[%s9673] sm:$0xff]
    %v9675 = vld [vmem:[%s9673 + $0x8] sm:$0xff]
    %v9676 = vld [vmem:[%s9673 + $0x10] sm:$0xff]
    %v9677 = vld [vmem:[%s9673 + $0x18] sm:$0xff]
    %v9679 = vsel %vm4222, %v9657, 0
    %v9682 = vsel %vm4222, %v9658, 0
    %v9685 = vsel %vm4222, %v9659, 0
    %v9688 = vsel %vm4222, %v9660, 0
    %v9691 = vsel %vm4222, %v9661, 0
    %v9694 = vsel %vm4222, %v9662, 0
    %v9697 = vsel %vm4222, %v9663, 0
    %v9700 = vsel %vm4222, %v9664, 0
    %v9703 = vsel %vm4222, %v9665, 0
    %v9706 = vsel %vm4222, %v9666, 0
    %v9709 = vsel %vm4222, %v9667, 0
    %v9712 = vsel %vm4222, %v9668, 0
    %v9715 = vsel %vm4222, %v9669, 0
    %v9718 = vsel %vm4222, %v9670, 0
    %v9721 = vsel %vm4222, %v9671, 0
    %v9724 = vsel %vm4222, %v9672, 0
    %9726 = vmatprep.subr.mxu0 0.0
    %9727 = vmatpush1.msra.mxu0 0.0
    %9728 = vmatprep.subr.mxu0 0.0
    %9729 = vmatpush1.msra.mxu0 0.0
    %9730 = vmatprep.subr.mxu0 0.0
    %9731 = vmatpush1.msra.mxu0 0.0
    %9732 = vmatprep.subr.mxu0 0.0
    %9733 = vmatpush1.msra.mxu0 0.0
    %9734 = vmatprep.subr.mxu0 0.0
    %9735 = vmatpush1.msra.mxu0 0.0
    %9736 = vmatprep.subr.mxu0 0.0
    %9737 = vmatpush1.msra.mxu0 0.0
    %9738 = vmatprep.subr.mxu0 0.0
    %9739 = vmatpush1.msra.mxu0 0.0
    %9740 = vmatprep.subr.mxu0 0.0
    %9741 = vmatpush1.msra.mxu0 0.0
    %9742 = vmatprep.subr.mxu0 0.0
    %9743 = vmatpush1.msra.mxu0 0.0
    %9744 = vmatprep.subr.mxu0 0.0
    %9745 = vmatpush1.msra.mxu0 0.0
    %9746 = vmatprep.subr.mxu0 0.0
    %9747 = vmatpush1.msra.mxu0 0.0
    %9748 = vmatprep.subr.mxu0 0.0
    %9749 = vmatpush1.msra.mxu0 0.0
    %9750 = vmatprep.subr.mxu0 0.0
    %9751 = vmatpush1.msra.mxu0 %v9677
    %9752 = vmatprep.subr.mxu0 0.0
    %9753 = vmatpush1.msra.mxu0 %v9676
    %9754 = vmatprep.subr.mxu0 0.0
    %9755 = vmatpush1.msra.mxu0 %v9675
    %9756 = vmatprep.subr.mxu0 0.0
    %9757 = vmatpush1.msra.mxu0 %v9674
    %9758 = vmatprep.subr.mxu0 0.0
    %9759 = vmatpush2.msra.mxu0 0.0
    %9760 = vmatprep.subr.mxu0 0.0
    %9761 = vmatpush2.msra.mxu0 0.0
    %9762 = vmatprep.subr.mxu0 0.0
    %9763 = vmatpush2.msra.mxu0 0.0
    %9764 = vmatprep.subr.mxu0 0.0
    %9765 = vmatpush2.msra.mxu0 0.0
    %9766 = vmatprep.subr.mxu0 0.0
    %9767 = vmatpush2.msra.mxu0 0.0
    %9768 = vmatprep.subr.mxu0 0.0
    %9769 = vmatpush2.msra.mxu0 0.0
    %9770 = vmatprep.subr.mxu0 0.0
    %9771 = vmatpush2.msra.mxu0 0.0
    %9772 = vmatprep.subr.mxu0 0.0
    %9773 = vmatpush2.msra.mxu0 0.0
    %9774 = vmatprep.subr.mxu0 0.0
    %9775 = vmatpush2.msra.mxu0 0.0
    %9776 = vmatprep.subr.mxu0 0.0
    %9777 = vmatpush2.msra.mxu0 0.0
    %9778 = vmatprep.subr.mxu0 0.0
    %9779 = vmatpush2.msra.mxu0 0.0
    %9780 = vmatprep.subr.mxu0 0.0
    %9781 = vmatpush2.msra.mxu0 0.0
    %9782 = vmatprep.subr.mxu0 0.0
    %9783 = vmatpush2.msra.mxu0 0.0
    %9784 = vmatprep.subr.mxu0 0.0
    %9785 = vmatpush2.msra.mxu0 0.0
    %9786 = vmatprep.subr.mxu0 0.0
    %9787 = vmatpush2.msra.mxu0 0.0
    %9788 = vmatprep.subr.mxu0 0.0
    %9789 = vmatpush2.msra.mxu0 0.0
    %9790 = vmatprep.mubr.f32.mxu0 0.0
    %9791 = vmatmul.mubr.f32.gmra.mxu0 %v9679
    %v9792 = vpop.f32.mrf.mxu0
    %v9793 = vadd.f32 0.0, %v9792
    %v9794 = vpop.f32.mrf.mxu0
    %9795 = vmatprep.mubr.f32.mxu0 0.0
    %9796 = vmatmul.mubr.f32.gmra.mxu0 %v9682
    %v9797 = vpop.f32.mrf.mxu0
    %v9798 = vadd.f32 0.0, %v9797
    %v9799 = vpop.f32.mrf.mxu0
    %9800 = vmatprep.mubr.f32.mxu0 0.0
    %9801 = vmatmul.mubr.f32.gmra.mxu0 %v9685
    %v9802 = vpop.f32.mrf.mxu0
    %v9803 = vadd.f32 0.0, %v9802
    %v9804 = vpop.f32.mrf.mxu0
    %9805 = vmatprep.mubr.f32.mxu0 0.0
    %9806 = vmatmul.mubr.f32.gmra.mxu0 %v9688
    %v9807 = vpop.f32.mrf.mxu0
    %v9808 = vadd.f32 0.0, %v9807
    %v9809 = vpop.f32.mrf.mxu0
    %9810 = vmatprep.mubr.f32.mxu0 0.0
    %9811 = vmatmul.mubr.f32.gmra.mxu0 %v9691
    %v9812 = vpop.f32.mrf.mxu0
    %v9813 = vadd.f32 0.0, %v9812
    %v9814 = vpop.f32.mrf.mxu0
    %9815 = vmatprep.mubr.f32.mxu0 0.0
    %9816 = vmatmul.mubr.f32.gmra.mxu0 %v9694
    %v9817 = vpop.f32.mrf.mxu0
    %v9818 = vadd.f32 0.0, %v9817
    %v9819 = vpop.f32.mrf.mxu0
    %9820 = vmatprep.mubr.f32.mxu0 0.0
    %9821 = vmatmul.mubr.f32.gmra.mxu0 %v9697
    %v9822 = vpop.f32.mrf.mxu0
    %v9823 = vadd.f32 0.0, %v9822
    %v9824 = vpop.f32.mrf.mxu0
    %9825 = vmatprep.mubr.f32.mxu0 0.0
    %9826 = vmatmul.mubr.f32.gmra.mxu0 %v9700
    %v9827 = vpop.f32.mrf.mxu0
    %v9828 = vadd.f32 0.0, %v9827
    %v9829 = vpop.f32.mrf.mxu0
    %9830 = vmatprep.mubr.f32.mxu0 0.0
    %9831 = vmatmul.mubr.f32.gmra.mxu0 %v9703
    %v9832 = vpop.f32.mrf.mxu0
    %v9833 = vadd.f32 0.0, %v9832
    %v9834 = vpop.f32.mrf.mxu0
    %9835 = vmatprep.mubr.f32.mxu0 0.0
    %9836 = vmatmul.mubr.f32.gmra.mxu0 %v9706
    %v9837 = vpop.f32.mrf.mxu0
    %v9838 = vadd.f32 0.0, %v9837
    %v9839 = vpop.f32.mrf.mxu0
    %9840 = vmatprep.mubr.f32.mxu0 0.0
    %9841 = vmatmul.mubr.f32.gmra.mxu0 %v9709
    %v9842 = vpop.f32.mrf.mxu0
    %v9843 = vadd.f32 0.0, %v9842
    %v9844 = vpop.f32.mrf.mxu0
    %9845 = vmatprep.mubr.f32.mxu0 0.0
    %9846 = vmatmul.mubr.f32.gmra.mxu0 %v9712
    %v9847 = vpop.f32.mrf.mxu0
    %v9848 = vadd.f32 0.0, %v9847
    %v9849 = vpop.f32.mrf.mxu0
    %9850 = vmatprep.mubr.f32.mxu0 0.0
    %9851 = vmatmul.mubr.f32.gmra.mxu0 %v9715
    %v9852 = vpop.f32.mrf.mxu0
    %v9853 = vadd.f32 0.0, %v9852
    %v9854 = vpop.f32.mrf.mxu0
    %9855 = vmatprep.mubr.f32.mxu0 0.0
    %9856 = vmatmul.mubr.f32.gmra.mxu0 %v9718
    %v9857 = vpop.f32.mrf.mxu0
    %v9858 = vadd.f32 0.0, %v9857
    %v9859 = vpop.f32.mrf.mxu0
    %9860 = vmatprep.mubr.f32.mxu0 0.0
    %9861 = vmatmul.mubr.f32.gmra.mxu0 %v9721
    %v9862 = vpop.f32.mrf.mxu0
    %v9863 = vadd.f32 0.0, %v9862
    %v9864 = vpop.f32.mrf.mxu0
    %9865 = vmatprep.mubr.f32.mxu0 0.0
    %9866 = vmatmul.mubr.f32.gmra.mxu0 %v9724
    %v9867 = vpop.f32.mrf.mxu0
    %v9868 = vadd.f32 0.0, %v9867
    %v9869 = vpop.f32.mrf.mxu0
    %9870 = vdwg.mxu0
    %v9871 = vadd.f32 %v8356, %v9793
    %v9872 = vadd.f32 %v8357, %v9798
    %v9873 = vadd.f32 %v8358, %v9803
    %v9874 = vadd.f32 %v8359, %v9808
    %v9875 = vadd.f32 %v8360, %v9813
    %v9876 = vadd.f32 %v8361, %v9818
    %v9877 = vadd.f32 %v8362, %v9823
    %v9878 = vadd.f32 %v8363, %v9828
    %v9879 = vadd.f32 %v8364, %v9833
    %v9880 = vadd.f32 %v8365, %v9838
    %v9881 = vadd.f32 %v8366, %v9843
    %v9882 = vadd.f32 %v8367, %v9848
    %v9883 = vadd.f32 %v8368, %v9853
    %v9884 = vadd.f32 %v8369, %v9858
    %v9885 = vadd.f32 %v8370, %v9863
    %v9886 = vadd.f32 %v8371, %v9868
    %v9887 = vld [vmem:[%s5 + $0x27] sm:$0x1]
    %v9888 = vlaneseq
    %v9889 = vshrl.u32 %v9888, 7
    %v9890 = vsub.s32 0, %v9889
    %v9891 = vrot.slane %v9887, %v9890
    %v9892 = vadd.f32 %v9871, %v9891
    %v9893 = vadd.f32 %v9872, %v9891
    %v9894 = vadd.f32 %v9873, %v9891
    %v9895 = vadd.f32 %v9874, %v9891
    %v9896 = vadd.f32 %v9875, %v9891
    %v9897 = vadd.f32 %v9876, %v9891
    %v9898 = vadd.f32 %v9877, %v9891
    %v9899 = vadd.f32 %v9878, %v9891
    %v9900 = vadd.f32 %v9879, %v9891
    %v9901 = vadd.f32 %v9880, %v9891
    %v9902 = vadd.f32 %v9881, %v9891
    %v9903 = vadd.f32 %v9882, %v9891
    %v9904 = vadd.f32 %v9883, %v9891
    %v9905 = vadd.f32 %v9884, %v9891
    %v9906 = vadd.f32 %v9885, %v9891
    %v9907 = vadd.f32 %v9886, %v9891
    %v9908 = vld [vmem:[%s5 + $0x4] sm:$0x1]
    %v9909 = vld [vmem:[%s5 + $0x5] sm:$0x1]
    %v9910 = vsel %vm4222, %v9892, 0.0
    %v9911 = vsel %vm4222, %v9893, 0.0
    %v9912 = vadd.f32 %v9910, %v9911
    %v9913 = vsel %vm4222, %v9894, 0.0
    %v9914 = vadd.f32 %v9912, %v9913
    %v9915 = vsel %vm4222, %v9895, 0.0
    %v9916 = vadd.f32 %v9914, %v9915
    %v9917 = vsel %vm4222, %v9896, 0.0
    %v9918 = vadd.f32 %v9916, %v9917
    %v9919 = vsel %vm4222, %v9897, 0.0
    %v9920 = vadd.f32 %v9918, %v9919
    %v9921 = vsel %vm4222, %v9898, 0.0
    %v9922 = vadd.f32 %v9920, %v9921
    %v9923 = vsel %vm4222, %v9899, 0.0
    %v9924 = vadd.f32 %v9922, %v9923
    %v9925 = vrot.slane %v9924, 4
    %v9926 = vadd.f32 %v9924, %v9925
    %v9927 = vrot.slane %v9926, 2
    %v9928 = vadd.f32 %v9926, %v9927
    %v9929 = vrot.slane %v9928, 1
    %v9930 = vadd.f32 %v9928, %v9929
    %v9931 = vsel %vm4222, %v9900, 0.0
    %v9932 = vsel %vm4222, %v9901, 0.0
    %v9933 = vadd.f32 %v9931, %v9932
    %v9934 = vsel %vm4222, %v9902, 0.0
    %v9935 = vadd.f32 %v9933, %v9934
    %v9936 = vsel %vm4222, %v9903, 0.0
    %v9937 = vadd.f32 %v9935, %v9936
    %v9938 = vsel %vm4222, %v9904, 0.0
    %v9939 = vadd.f32 %v9937, %v9938
    %v9940 = vsel %vm4222, %v9905, 0.0
    %v9941 = vadd.f32 %v9939, %v9940
    %v9942 = vsel %vm4222, %v9906, 0.0
    %v9943 = vadd.f32 %v9941, %v9942
    %v9944 = vsel %vm4222, %v9907, 0.0
    %v9945 = vadd.f32 %v9943, %v9944
    %v9946 = vrot.slane %v9945, 4
    %v9947 = vadd.f32 %v9945, %v9946
    %v9948 = vrot.slane %v9947, 2
    %v9949 = vadd.f32 %v9947, %v9948
    %v9950 = vrot.slane %v9949, 1
    %v9951 = vadd.f32 %v9949, %v9950
    %v9952 = vrcp.pop 64.0
    %v9953 = vmul.f32 %v9930, %v9952
    %v9954 = vmul.f32 %v9951, %v9952
    %v9955 = vsub.f32 %v9892, %v9953
    %v9956 = vsub.f32 %v9893, %v9953
    %v9957 = vsub.f32 %v9894, %v9953
    %v9958 = vsub.f32 %v9895, %v9953
    %v9959 = vsub.f32 %v9896, %v9953
    %v9960 = vsub.f32 %v9897, %v9953
    %v9961 = vsub.f32 %v9898, %v9953
    %v9962 = vsub.f32 %v9899, %v9953
    %v9963 = vsub.f32 %v9900, %v9954
    %v9964 = vsub.f32 %v9901, %v9954
    %v9965 = vsub.f32 %v9902, %v9954
    %v9966 = vsub.f32 %v9903, %v9954
    %v9967 = vsub.f32 %v9904, %v9954
    %v9968 = vsub.f32 %v9905, %v9954
    %v9969 = vsub.f32 %v9906, %v9954
    %v9970 = vsub.f32 %v9907, %v9954
    %v9971 = vmul.f32 %v9955, %v9955
    %v9972 = vmul.f32 %v9956, %v9956
    %v9973 = vmul.f32 %v9957, %v9957
    %v9974 = vmul.f32 %v9958, %v9958
    %v9975 = vmul.f32 %v9959, %v9959
    %v9976 = vmul.f32 %v9960, %v9960
    %v9977 = vmul.f32 %v9961, %v9961
    %v9978 = vmul.f32 %v9962, %v9962
    %v9979 = vmul.f32 %v9963, %v9963
    %v9980 = vmul.f32 %v9964, %v9964
    %v9981 = vmul.f32 %v9965, %v9965
    %v9982 = vmul.f32 %v9966, %v9966
    %v9983 = vmul.f32 %v9967, %v9967
    %v9984 = vmul.f32 %v9968, %v9968
    %v9985 = vmul.f32 %v9969, %v9969
    %v9986 = vmul.f32 %v9970, %v9970
    %v9987 = vsel %vm4222, %v9971, 0.0
    %v9988 = vsel %vm4222, %v9972, 0.0
    %v9989 = vadd.f32 %v9987, %v9988
    %v9990 = vsel %vm4222, %v9973, 0.0
    %v9991 = vadd.f32 %v9989, %v9990
    %v9992 = vsel %vm4222, %v9974, 0.0
    %v9993 = vadd.f32 %v9991, %v9992
    %v9994 = vsel %vm4222, %v9975, 0.0
    %v9995 = vadd.f32 %v9993, %v9994
    %v9996 = vsel %vm4222, %v9976, 0.0
    %v9997 = vadd.f32 %v9995, %v9996
    %v9998 = vsel %vm4222, %v9977, 0.0
    %v9999 = vadd.f32 %v9997, %v9998
    %v10000 = vsel %vm4222, %v9978, 0.0
    %v10001 = vadd.f32 %v9999, %v10000
    %v10002 = vrot.slane %v10001, 4
    %v10003 = vadd.f32 %v10001, %v10002
    %v10004 = vrot.slane %v10003, 2
    %v10005 = vadd.f32 %v10003, %v10004
    %v10006 = vrot.slane %v10005, 1
    %v10007 = vadd.f32 %v10005, %v10006
    %v10008 = vsel %vm4222, %v9979, 0.0
    %v10009 = vsel %vm4222, %v9980, 0.0
    %v10010 = vadd.f32 %v10008, %v10009
    %v10011 = vsel %vm4222, %v9981, 0.0
    %v10012 = vadd.f32 %v10010, %v10011
    %v10013 = vsel %vm4222, %v9982, 0.0
    %v10014 = vadd.f32 %v10012, %v10013
    %v10015 = vsel %vm4222, %v9983, 0.0
    %v10016 = vadd.f32 %v10014, %v10015
    %v10017 = vsel %vm4222, %v9984, 0.0
    %v10018 = vadd.f32 %v10016, %v10017
    %v10019 = vsel %vm4222, %v9985, 0.0
    %v10020 = vadd.f32 %v10018, %v10019
    %v10021 = vsel %vm4222, %v9986, 0.0
    %v10022 = vadd.f32 %v10020, %v10021
    %v10023 = vrot.slane %v10022, 4
    %v10024 = vadd.f32 %v10022, %v10023
    %v10025 = vrot.slane %v10024, 2
    %v10026 = vadd.f32 %v10024, %v10025
    %v10027 = vrot.slane %v10026, 1
    %v10028 = vadd.f32 %v10026, %v10027
    %v10029 = vmul.f32 %v10007, %v9952
    %v10030 = vmul.f32 %v10028, %v9952
    %v10031 = vadd.f32 %v10029, 1e-05
    %v10032 = vadd.f32 %v10030, 1e-05
    %v10033 = vrsqrt.pop %v10031
    %v10034 = vrsqrt.pop %v10032
    %v10035 = vmul.f32 %v9955, %v10033
    %v10036 = vmul.f32 %v9956, %v10033
    %v10037 = vmul.f32 %v9957, %v10033
    %v10038 = vmul.f32 %v9958, %v10033
    %v10039 = vmul.f32 %v9959, %v10033
    %v10040 = vmul.f32 %v9960, %v10033
    %v10041 = vmul.f32 %v9961, %v10033
    %v10042 = vmul.f32 %v9962, %v10033
    %v10043 = vmul.f32 %v9963, %v10034
    %v10044 = vmul.f32 %v9964, %v10034
    %v10045 = vmul.f32 %v9965, %v10034
    %v10046 = vmul.f32 %v9966, %v10034
    %v10047 = vmul.f32 %v9967, %v10034
    %v10048 = vmul.f32 %v9968, %v10034
    %v10049 = vmul.f32 %v9969, %v10034
    %v10050 = vmul.f32 %v9970, %v10034
    %v10051 = vlaneseq
    %v10052 = vshrl.u32 %v10051, 7
    %v10053 = vsub.s32 0, %v10052
    %v10054 = vrot.slane %v9908, %v10053
    %v10055 = vmul.f32 %v10035, %v10054
    %v10056 = vmul.f32 %v10036, %v10054
    %v10057 = vmul.f32 %v10037, %v10054
    %v10058 = vmul.f32 %v10038, %v10054
    %v10059 = vmul.f32 %v10039, %v10054
    %v10060 = vmul.f32 %v10040, %v10054
    %v10061 = vmul.f32 %v10041, %v10054
    %v10062 = vmul.f32 %v10042, %v10054
    %v10063 = vmul.f32 %v10043, %v10054
    %v10064 = vmul.f32 %v10044, %v10054
    %v10065 = vmul.f32 %v10045, %v10054
    %v10066 = vmul.f32 %v10046, %v10054
    %v10067 = vmul.f32 %v10047, %v10054
    %v10068 = vmul.f32 %v10048, %v10054
    %v10069 = vmul.f32 %v10049, %v10054
    %v10070 = vmul.f32 %v10050, %v10054
    %v10071 = vlaneseq
    %v10072 = vshrl.u32 %v10071, 7
    %v10073 = vsub.s32 0, %v10072
    %v10074 = vrot.slane %v9909, %v10073
    %v10075 = vadd.f32 %v10055, %v10074
    %v10076 = vadd.f32 %v10056, %v10074
    %v10077 = vadd.f32 %v10057, %v10074
    %v10078 = vadd.f32 %v10058, %v10074
    %v10079 = vadd.f32 %v10059, %v10074
    %v10080 = vadd.f32 %v10060, %v10074
    %v10081 = vadd.f32 %v10061, %v10074
    %v10082 = vadd.f32 %v10062, %v10074
    %v10083 = vadd.f32 %v10063, %v10074
    %v10084 = vadd.f32 %v10064, %v10074
    %v10085 = vadd.f32 %v10065, %v10074
    %v10086 = vadd.f32 %v10066, %v10074
    %v10087 = vadd.f32 %v10067, %v10074
    %v10088 = vadd.f32 %v10068, %v10074
    %v10089 = vadd.f32 %v10069, %v10074
    %v10090 = vadd.f32 %v10070, %v10074
    %v10091 = vmax.f32 %v10075, 0.0
    %v10092 = vmax.f32 %v10076, 0.0
    %v10093 = vmax.f32 %v10077, 0.0
    %v10094 = vmax.f32 %v10078, 0.0
    %v10095 = vmax.f32 %v10079, 0.0
    %v10096 = vmax.f32 %v10080, 0.0
    %v10097 = vmax.f32 %v10081, 0.0
    %v10098 = vmax.f32 %v10082, 0.0
    %v10099 = vmax.f32 %v10083, 0.0
    %v10100 = vmax.f32 %v10084, 0.0
    %v10101 = vmax.f32 %v10085, 0.0
    %v10102 = vmax.f32 %v10086, 0.0
    %v10103 = vmax.f32 %v10087, 0.0
    %v10104 = vmax.f32 %v10088, 0.0
    %v10105 = vmax.f32 %v10089, 0.0
    %v10106 = vmax.f32 %v10090, 0.0
    %v10107 = vld [vmem:[%s5 + $0xc] sm:$0x1]
    %v10108 = vld [vmem:[%s5 + $0xd] sm:$0x1]
    %10110 = vset.pattern.permute.xlu0 0
    %10111 = vperm.xlu0 %10110, %v10108
    %v10112 = vpop.permute.xlu0 %10111
    %v10115 = vsel %vm4222, %v10107, 0
    %v10118 = vsel %vm4222, %v10091, 0
    %v10121 = vsel %vm4222, %v10092, 0
    %v10124 = vsel %vm4222, %v10093, 0
    %v10127 = vsel %vm4222, %v10094, 0
    %v10130 = vsel %vm4222, %v10095, 0
    %v10133 = vsel %vm4222, %v10096, 0
    %v10136 = vsel %vm4222, %v10097, 0
    %v10139 = vsel %vm4222, %v10098, 0
    %v10142 = vsel %vm4222, %v10099, 0
    %v10145 = vsel %vm4222, %v10100, 0
    %v10148 = vsel %vm4222, %v10101, 0
    %v10151 = vsel %vm4222, %v10102, 0
    %v10154 = vsel %vm4222, %v10103, 0
    %v10157 = vsel %vm4222, %v10104, 0
    %v10160 = vsel %vm4222, %v10105, 0
    %v10163 = vsel %vm4222, %v10106, 0
    %10165 = vmatprep.subr.mxu0 0.0
    %10166 = vmatpush1.xpose.msra.mxu0 %v10163
    %10167 = vmatprep.subr.mxu0 0.0
    %10168 = vmatpush1.xpose.msra.mxu0 %v10160
    %10169 = vmatprep.subr.mxu0 0.0
    %10170 = vmatpush1.xpose.msra.mxu0 %v10157
    %10171 = vmatprep.subr.mxu0 0.0
    %10172 = vmatpush1.xpose.msra.mxu0 %v10154
    %10173 = vmatprep.subr.mxu0 0.0
    %10174 = vmatpush1.xpose.msra.mxu0 %v10151
    %10175 = vmatprep.subr.mxu0 0.0
    %10176 = vmatpush1.xpose.msra.mxu0 %v10148
    %10177 = vmatprep.subr.mxu0 0.0
    %10178 = vmatpush1.xpose.msra.mxu0 %v10145
    %10179 = vmatprep.subr.mxu0 0.0
    %10180 = vmatpush1.xpose.msra.mxu0 %v10142
    %10181 = vmatprep.subr.mxu0 0.0
    %10182 = vmatpush1.xpose.msra.mxu0 %v10139
    %10183 = vmatprep.subr.mxu0 0.0
    %10184 = vmatpush1.xpose.msra.mxu0 %v10136
    %10185 = vmatprep.subr.mxu0 0.0
    %10186 = vmatpush1.xpose.msra.mxu0 %v10133
    %10187 = vmatprep.subr.mxu0 0.0
    %10188 = vmatpush1.xpose.msra.mxu0 %v10130
    %10189 = vmatprep.subr.mxu0 0.0
    %10190 = vmatpush1.xpose.msra.mxu0 %v10127
    %10191 = vmatprep.subr.mxu0 0.0
    %10192 = vmatpush1.xpose.msra.mxu0 %v10124
    %10193 = vmatprep.subr.mxu0 0.0
    %10194 = vmatpush1.xpose.msra.mxu0 %v10121
    %10195 = vmatprep.subr.mxu0 0.0
    %10196 = vmatpush1.xpose.msra.mxu0 %v10118
    %10197 = vmatprep.subr.mxu0 0.0
    %10198 = vmatpush2.xpose.msra.mxu0 0.0
    %10199 = vmatprep.subr.mxu0 0.0
    %10200 = vmatpush2.xpose.msra.mxu0 0.0
    %10201 = vmatprep.subr.mxu0 0.0
    %10202 = vmatpush2.xpose.msra.mxu0 0.0
    %10203 = vmatprep.subr.mxu0 0.0
    %10204 = vmatpush2.xpose.msra.mxu0 0.0
    %10205 = vmatprep.subr.mxu0 0.0
    %10206 = vmatpush2.xpose.msra.mxu0 0.0
    %10207 = vmatprep.subr.mxu0 0.0
    %10208 = vmatpush2.xpose.msra.mxu0 0.0
    %10209 = vmatprep.subr.mxu0 0.0
    %10210 = vmatpush2.xpose.msra.mxu0 0.0
    %10211 = vmatprep.subr.mxu0 0.0
    %10212 = vmatpush2.xpose.msra.mxu0 0.0
    %10213 = vmatprep.subr.mxu0 0.0
    %10214 = vmatpush2.xpose.msra.mxu0 0.0
    %10215 = vmatprep.subr.mxu0 0.0
    %10216 = vmatpush2.xpose.msra.mxu0 0.0
    %10217 = vmatprep.subr.mxu0 0.0
    %10218 = vmatpush2.xpose.msra.mxu0 0.0
    %10219 = vmatprep.subr.mxu0 0.0
    %10220 = vmatpush2.xpose.msra.mxu0 0.0
    %10221 = vmatprep.subr.mxu0 0.0
    %10222 = vmatpush2.xpose.msra.mxu0 0.0
    %10223 = vmatprep.subr.mxu0 0.0
    %10224 = vmatpush2.xpose.msra.mxu0 0.0
    %10225 = vmatprep.subr.mxu0 0.0
    %10226 = vmatpush2.xpose.msra.mxu0 0.0
    %10227 = vmatprep.subr.mxu0 0.0
    %10228 = vmatpush2.xpose.msra.mxu0 0.0
    %10229 = vmatprep.mubr.f32.mxu0 0.0
    %10230 = vmatmul.mubr.f32.gmra.mxu0 %v10115
    %v10231 = vpop.f32.mrf.mxu0
    %v10232 = vadd.f32 %v10112, %v10231
    %v10233 = vpop.f32.mrf.mxu0
    %10234 = vdwg.mxu0
    %10235 = vst [vmem:[%s6] sm:$0x1] %v10232
    // Predicated region
    $region30: #{gnn_encoder_forward.1} parent=1 // pred_check
      _
    $region31: #{gnn_encoder_forward.1} parent=1 // pred_check_branch
      %10237 = sbr.rel (0) target = $region33
    $region32: #{gnn_encoder_forward.1} parent=1 // pred_region
      _
    $region33: #{gnn_encoder_forward.1} parent=1 // pred_fallthru
      _
    // Predicated region
    $region34: #{gnn_encoder_forward.1} parent=1 // pred_check
      _
    $region35: #{gnn_encoder_forward.1} parent=1 // pred_check_branch
      %10239 = sbr.rel (0) target = $region37
    $region36: #{gnn_encoder_forward.1} parent=1 // pred_region
      _
    $region37: #{gnn_encoder_forward.1} parent=1 // pred_fallthru
      _
    %10240 = vsyncpa [#allocation3], 1

</llo_original>
